<compile_context>
chip_gen: v7x
topology: tpu7x:2x2x1
jax: 0.10.0
libtpu: 0.0.40
codegen_flags: <defaults>
</compile_context>

<pallas_src>
import math

import jax
import jax.numpy as jnp
from jax.experimental import pallas as pl
from jax.experimental.pallas import tpu as pltpu


_NEG_SLOPE = 0.01  # torch.nn.functional.leaky_relu default


def _leaky_relu(x):
    # Valid for slope in (0, 1): max(x, slope*x) == leaky_relu(x).
    return jnp.maximum(x, _NEG_SLOPE * x)


def _round_up(n, m):
    return ((n + m - 1) // m) * m


def _vmem_block_bytes(shape, dtype):
    """Approximate VMEM footprint of one block with (8, 128) tile padding."""
    s = list(shape)
    s[-1] = _round_up(s[-1], 128)
    if len(s) >= 2:
        s[-2] = _round_up(s[-2], 8)
    return math.prod(s) * jnp.dtype(dtype).itemsize


# ----------------------------------------------------------------------------
# Fused kernel: one row-tile of tokens per grid step, weights VMEM-resident.
#   x_ref    : (TILE_M, in_dim)                          (f32 or bf16)
#   w_in_ref : (in_dim, dim)                             (f32 or bf16)
#   w_ref    : (7, dim, dim)  [w2, wrA0, wrB0, wrA1, wrB1, wrA2, wrB2]
#   b_ref    : (8, 1, dim)    [b_in, b2, brA0, brB0, brA1, brB1, brA2, brB2] f32
#   o_ref    : (TILE_M, dim)
# ----------------------------------------------------------------------------
def _deep_encoder_kernel(x_ref, w_in_ref, w_ref, b_ref, o_ref):
    cdt = w_ref.dtype                     # matmul input dtype (f32 or bf16)
    b = b_ref[...]                        # (8, 1, dim) f32 biases

    # linear_in + leaky_relu
    h = jnp.dot(x_ref[...], w_in_ref[...],
                preferred_element_type=jnp.float32) + b[0]
    h = _leaky_relu(h)

    # linear2 + leaky_relu
    h = jnp.dot(h.astype(cdt), w_ref[0],
                preferred_element_type=jnp.float32) + b[1]
    h = _leaky_relu(h)

    # 3 x Residual(MLP(dim)) -- static unroll, weights stay VMEM-resident.
    num_res = (w_ref.shape[0] - 1) // 2
    for i in range(num_res):
        t = jnp.dot(h.astype(cdt), w_ref[1 + 2 * i],
                    preferred_element_type=jnp.float32) + b[2 + 2 * i]
        t = jnp.maximum(t, 0.0)           # ReLU inside assumed MLP
        t = jnp.dot(t.astype(cdt), w_ref[2 + 2 * i],
                    preferred_element_type=jnp.float32) + b[3 + 2 * i]
        h = h + t                         # Residual

    o_ref[...] = h.astype(o_ref.dtype)


def deep_encoder_forward(feature, params, *, tile_m=1024, matmul_dtype=None,
                         out_dtype=None, single_buffer_weights=True):
    """feature: (..., in_dim) -> (..., dim).

    matmul_dtype: None keeps f32 matmuls (matches PyTorch numerics);
                  jnp.bfloat16 uses the bf16-native MXU path (v6e/v7x).
    """
    lead_shape = feature.shape[:-1]
    in_dim = feature.shape[-1]
    dim = params["w_in"].shape[1]
    out_dtype = feature.dtype if out_dtype is None else out_dtype

    x = feature.reshape(-1, in_dim)
    n = x.shape[0]

    w_in, w_stack, b_stack = params["w_in"], params["w_stack"], params["b_stack"]
    if matmul_dtype is not None:
        x = x.astype(matmul_dtype)
        w_in = w_in.astype(matmul_dtype)
        w_stack = w_stack.astype(matmul_dtype)
        # biases stay f32; bias add / activations / residuals run in f32.

    # ---- row tiling (no padding: ragged last tile is masked by Pallas) ----
    tile_m = max(8, min(tile_m, _round_up(n, 8)))
    if n > 8 and pl.cdiv(n, tile_m) < 2:
        # Give the "parallel" axis at least 2 tiles (both TensorCores on v7x).
        tile_m = max(8, _round_up(pl.cdiv(n, 2), 8))
    grid = (pl.cdiv(n, tile_m),)

    x_spec = pl.BlockSpec((tile_m, in_dim), lambda i: (i, 0))
    o_spec = pl.BlockSpec((tile_m, dim), lambda i: (i, 0))

    def _const_spec(shape, single_buffer):
        ndim = len(shape)
        index_map = lambda i, _nd=ndim: (0,) * _nd
        if single_buffer and hasattr(pl, "Buffered"):
            # Weights never change across the grid -> single buffer is enough.
            return pl.BlockSpec(shape, index_map, pipeline_mode=pl.Buffered(1))
        return pl.BlockSpec(shape, index_map)

    # ---- cost estimate + VMEM budget (computed, not hardcoded) ----
    n_mats = w_stack.shape[0]  # 7 dim x dim matmuls + 1 in_dim x dim matmul
    flops = 2 * n * (in_dim * dim + n_mats * dim * dim)
    bytes_accessed = (x.nbytes + n * dim * jnp.dtype(out_dtype).itemsize
                      + w_in.nbytes + w_stack.nbytes + b_stack.nbytes)
    cost = pl.CostEstimate(flops=flops, transcendentals=0,
                           bytes_accessed=bytes_accessed)

    vmem_bytes = (2 * _vmem_block_bytes((tile_m, in_dim), x.dtype)     # x dbl-buf
                  + 2 * _vmem_block_bytes((tile_m, dim), out_dtype)    # out dbl-buf
                  + 2 * (_vmem_block_bytes(w_in.shape, w_in.dtype)     # weights
                         + _vmem_block_bytes(w_stack.shape, w_stack.dtype)
                         + _vmem_block_bytes(b_stack.shape, b_stack.dtype)))
    vmem_limit = min(100 * 1024 * 1024,
                     max(32 * 1024 * 1024, 2 * vmem_bytes + (8 << 20)))

    compiler_params = pltpu.CompilerParams(
        dimension_semantics=("parallel",),   # megacore sharding on v7x
        vmem_limit_bytes=int(vmem_limit),
    )

    def _run(single_buffer):
        in_specs = [x_spec,
                    _const_spec(w_in.shape, single_buffer),
                    _const_spec(w_stack.shape, single_buffer),
                    _const_spec(b_stack.shape, single_buffer)]
        return pl.pallas_call(
            _deep_encoder_kernel,
            out_shape=jax.ShapeDtypeStruct((n, dim), out_dtype),
            grid=grid,
            in_specs=in_specs,
            out_specs=o_spec,
            compiler_params=compiler_params,
            cost_estimate=cost,
        )(x, w_in, w_stack, b_stack)

    if single_buffer_weights:
        try:
            out = _run(True)
        except Exception:
            # pipeline_mode=pl.Buffered(1) not supported on this jax version.
            out = _run(False)
    else:
        out = _run(False)

    return out.reshape(*lead_shape, dim)


# ----------------------------------------------------------------------------
# Pure-JAX reference (same math, no Pallas) for correctness check.
# ----------------------------------------------------------------------------
def deep_encoder_reference(feature, params):
    w, b = params["w_stack"], params["b_stack"]
    h = feature @ params["w_in"] + b[0, 0]
    h = _leaky_relu(h)
    h = h @ w[0] + b[1, 0]
    h = _leaky_relu(h)
    num_res = (w.shape[0] - 1) // 2
    for i in range(num_res):
        t = h @ w[1 + 2 * i] + b[2 + 2 * i, 0]
        t = jnp.maximum(t, 0.0)
        t = t @ w[2 + 2 * i] + b[3 + 2 * i, 0]
        h = h + t
    return h


# ----------------------------------------------------------------------------
# Parameter init (PyTorch nn.Linear default: U(-1/sqrt(fan_in), 1/sqrt(fan_in)))
# Weights stored stacked: w_stack (7, dim, dim), b_stack (8, 1, dim).
# ----------------------------------------------------------------------------
def init_params(key, in_dim, dim, num_layers=3):
    n_lin = 2 + 2 * num_layers           # linear_in, linear2, 2 per res block
    keys = jax.random.split(key, 2 * n_lin)
    u = jax.random.uniform
    k_in = 1.0 / math.sqrt(in_dim)
    k_d = 1.0 / math.sqrt(dim)

    w_in = u(keys[0], (in_dim, dim), jnp.float32, -k_in, k_in)
    b_in = u(keys[1], (1, dim), jnp.float32, -k_in, k_in)
    ws = [u(keys[2 + 2 * i], (dim, dim), jnp.float32, -k_d, k_d)
          for i in range(n_lin - 1)]
    bs = [u(keys[3 + 2 * i], (1, dim), jnp.float32, -k_d, k_d)
          for i in range(n_lin - 1)]
    return {
        "w_in": w_in,
        "w_stack": jnp.stack(ws),                                    # (7, dim, dim)
        "b_stack": jnp.concatenate([b_in[None], jnp.stack(bs)], 0),  # (8, 1, dim)
    }


if __name__ == "__main__":
    # 1024 tokens, dim=128 (lane-dense output, full MXU columns on v5e).
    B, G, L, in_dim, dim = 2, 8, 64, 16, 128

    key = jax.random.PRNGKey(0)
    k_feat, k_par, k_rag = jax.random.split(key, 3)
    feature = jax.random.normal(k_feat, (B, G, L, in_dim), dtype=jnp.float32)
    params = init_params(k_par, in_dim, dim)

    # --- f32 matmul path (matches PyTorch numerics) ---
    out = deep_encoder_forward(feature, params)
    out = jax.block_until_ready(out)
    assert out.shape == (B, G, L, dim), out.shape
    assert bool(jnp.all(jnp.isfinite(out)))
    ref = deep_encoder_reference(feature, params)
    assert bool(jnp.allclose(out, ref, atol=1e-4, rtol=1e-4)), (
        float(jnp.max(jnp.abs(out - ref))))

    # --- ragged N (not a multiple of tile_m): masked last-tile stores ---
    feat_r = jax.random.normal(k_rag, (530, in_dim), dtype=jnp.float32)
    out_r = jax.block_until_ready(deep_encoder_forward(feat_r, params))
    ref_r = deep_encoder_reference(feat_r, params)
    assert out_r.shape == (530, dim), out_r.shape
    assert bool(jnp.allclose(out_r, ref_r, atol=1e-4, rtol=1e-4)), (
        float(jnp.max(jnp.abs(out_r - ref_r))))

    # --- bf16 matmul path (MXU-native on v6e/v7x); looser tolerance vs f32 ---
    out_bf = jax.block_until_ready(
        deep_encoder_forward(feature, params, matmul_dtype=jnp.bfloat16))
    assert out_bf.shape == (B, G, L, dim)
    assert out_bf.dtype == jnp.float32
    assert bool(jnp.all(jnp.isfinite(out_bf)))
    assert bool(jnp.allclose(out_bf, ref, atol=5e-2, rtol=5e-2)), (
        float(jnp.max(jnp.abs(out_bf - ref))))

    print("KERNEL_OK")
</pallas_src>

<mosaic_0001>
module attributes {stable_mosaic.version = 11 : i64} {
  func.func @_deep_encoder_kernel(%arg0: i32, %arg1: memref<512x16xf32, #tpu.memory_space<vmem>>, %arg2: memref<16x128xf32, #tpu.memory_space<vmem>>, %arg3: memref<7x128x128xf32, #tpu.memory_space<vmem>>, %arg4: memref<8x1x128xf32, #tpu.memory_space<vmem>>, %arg5: memref<512x128xf32, #tpu.memory_space<vmem>>) attributes {dimension_semantics = [#tpu.dimension_semantics<parallel>], iteration_bounds = array<i64: 2>, scalar_prefetch = 0 : i64, scratch_operands = 0 : i64, tpu.core_type = #tpu.core_type<tc>, window_params = [{transform_indices = @transform_0, window_bounds = array<i64: 512, 16>}, {pipeline_mode = #tpu.pipeline_mode<synchronous>, transform_indices = @transform_1, window_bounds = array<i64: 16, 128>}, {pipeline_mode = #tpu.pipeline_mode<synchronous>, transform_indices = @transform_2, window_bounds = array<i64: 7, 128, 128>}, {pipeline_mode = #tpu.pipeline_mode<synchronous>, transform_indices = @transform_3, window_bounds = array<i64: 8, 1, 128>}, {transform_indices = @transform_4, window_bounds = array<i64: 512, 128>}]} {
    %c0 = arith.constant 0 : index
    %c0_0 = arith.constant 0 : index
    %c0_1 = arith.constant 0 : index
    %0 = vector.load %arg4[%c0, %c0_0, %c0_1] : memref<8x1x128xf32, #tpu.memory_space<vmem>>, vector<8x1x128xf32>
    %c0_2 = arith.constant 0 : index
    %c0_3 = arith.constant 0 : index
    %1 = vector.load %arg1[%c0_2, %c0_3] : memref<512x16xf32, #tpu.memory_space<vmem>>, vector<512x16xf32>
    %c0_4 = arith.constant 0 : index
    %c0_5 = arith.constant 0 : index
    %2 = vector.load %arg2[%c0_4, %c0_5] : memref<16x128xf32, #tpu.memory_space<vmem>>, vector<16x128xf32>
    %cst = arith.constant dense<0.000000e+00> : vector<512x128xf32>
    %3 = tpu.matmul %1, %2, %cst {dimension_numbers = #tpu.dot_dimension_numbers<[1], [0], [0], [1], [0, 0, 1, 1], [], []>} : vector<512x16xf32>, vector<16x128xf32>, vector<512x128xf32> -> vector<512x128xf32>
    %4 = vector.extract_strided_slice %0 {offsets = [0, 0, 0], sizes = [1, 1, 128], strides = [1, 1, 1]} : vector<8x1x128xf32> to vector<1x1x128xf32>
    %5 = vector.shape_cast %4 : vector<1x1x128xf32> to vector<1x128xf32>
    %6 = vector.broadcast %5 : vector<1x128xf32> to vector<512x128xf32>
    %7 = arith.addf %3, %6 : vector<512x128xf32>
    %cst_6 = arith.constant 0.00999999977 : f32
    %8 = vector.broadcast %cst_6 : f32 to vector<512x128xf32>
    %9 = arith.mulf %8, %7 : vector<512x128xf32>
    %10 = arith.maximumf %7, %9 : vector<512x128xf32>
    %c0_7 = arith.constant 0 : index
    %c0_8 = arith.constant 0 : index
    %c0_9 = arith.constant 0 : index
    %11 = vector.load %arg3[%c0_7, %c0_8, %c0_9] : memref<7x128x128xf32, #tpu.memory_space<vmem>>, vector<1x128x128xf32>
    %12 = vector.shape_cast %11 : vector<1x128x128xf32> to vector<128x128xf32>
    %cst_10 = arith.constant dense<0.000000e+00> : vector<512x128xf32>
    %13 = tpu.matmul %10, %12, %cst_10 {dimension_numbers = #tpu.dot_dimension_numbers<[1], [0], [0], [1], [0, 0, 1, 1], [], []>} : vector<512x128xf32>, vector<128x128xf32>, vector<512x128xf32> -> vector<512x128xf32>
    %14 = vector.extract_strided_slice %0 {offsets = [1, 0, 0], sizes = [1, 1, 128], strides = [1, 1, 1]} : vector<8x1x128xf32> to vector<1x1x128xf32>
    %15 = vector.shape_cast %14 : vector<1x1x128xf32> to vector<1x128xf32>
    %16 = vector.broadcast %15 : vector<1x128xf32> to vector<512x128xf32>
    %17 = arith.addf %13, %16 : vector<512x128xf32>
    %cst_11 = arith.constant 0.00999999977 : f32
    %18 = vector.broadcast %cst_11 : f32 to vector<512x128xf32>
    %19 = arith.mulf %18, %17 : vector<512x128xf32>
    %20 = arith.maximumf %17, %19 : vector<512x128xf32>
    %c1 = arith.constant 1 : index
    %c0_12 = arith.constant 0 : index
    %c0_13 = arith.constant 0 : index
    %21 = vector.load %arg3[%c1, %c0_12, %c0_13] : memref<7x128x128xf32, #tpu.memory_space<vmem>>, vector<1x128x128xf32>
    %22 = vector.shape_cast %21 : vector<1x128x128xf32> to vector<128x128xf32>
    %cst_14 = arith.constant dense<0.000000e+00> : vector<512x128xf32>
    %23 = tpu.matmul %20, %22, %cst_14 {dimension_numbers = #tpu.dot_dimension_numbers<[1], [0], [0], [1], [0, 0, 1, 1], [], []>} : vector<512x128xf32>, vector<128x128xf32>, vector<512x128xf32> -> vector<512x128xf32>
    %24 = vector.extract_strided_slice %0 {offsets = [2, 0, 0], sizes = [1, 1, 128], strides = [1, 1, 1]} : vector<8x1x128xf32> to vector<1x1x128xf32>
    %25 = vector.shape_cast %24 : vector<1x1x128xf32> to vector<1x128xf32>
    %26 = vector.broadcast %25 : vector<1x128xf32> to vector<512x128xf32>
    %27 = arith.addf %23, %26 : vector<512x128xf32>
    %cst_15 = arith.constant 0.000000e+00 : f32
    %28 = vector.broadcast %cst_15 : f32 to vector<512x128xf32>
    %29 = arith.maximumf %27, %28 : vector<512x128xf32>
    %c2 = arith.constant 2 : index
    %c0_16 = arith.constant 0 : index
    %c0_17 = arith.constant 0 : index
    %30 = vector.load %arg3[%c2, %c0_16, %c0_17] : memref<7x128x128xf32, #tpu.memory_space<vmem>>, vector<1x128x128xf32>
    %31 = vector.shape_cast %30 : vector<1x128x128xf32> to vector<128x128xf32>
    %cst_18 = arith.constant dense<0.000000e+00> : vector<512x128xf32>
    %32 = tpu.matmul %29, %31, %cst_18 {dimension_numbers = #tpu.dot_dimension_numbers<[1], [0], [0], [1], [0, 0, 1, 1], [], []>} : vector<512x128xf32>, vector<128x128xf32>, vector<512x128xf32> -> vector<512x128xf32>
    %33 = vector.extract_strided_slice %0 {offsets = [3, 0, 0], sizes = [1, 1, 128], strides = [1, 1, 1]} : vector<8x1x128xf32> to vector<1x1x128xf32>
    %34 = vector.shape_cast %33 : vector<1x1x128xf32> to vector<1x128xf32>
    %35 = vector.broadcast %34 : vector<1x128xf32> to vector<512x128xf32>
    %36 = arith.addf %32, %35 : vector<512x128xf32>
    %37 = arith.addf %20, %36 : vector<512x128xf32>
    %c3 = arith.constant 3 : index
    %c0_19 = arith.constant 0 : index
    %c0_20 = arith.constant 0 : index
    %38 = vector.load %arg3[%c3, %c0_19, %c0_20] : memref<7x128x128xf32, #tpu.memory_space<vmem>>, vector<1x128x128xf32>
    %39 = vector.shape_cast %38 : vector<1x128x128xf32> to vector<128x128xf32>
    %cst_21 = arith.constant dense<0.000000e+00> : vector<512x128xf32>
    %40 = tpu.matmul %37, %39, %cst_21 {dimension_numbers = #tpu.dot_dimension_numbers<[1], [0], [0], [1], [0, 0, 1, 1], [], []>} : vector<512x128xf32>, vector<128x128xf32>, vector<512x128xf32> -> vector<512x128xf32>
    %41 = vector.extract_strided_slice %0 {offsets = [4, 0, 0], sizes = [1, 1, 128], strides = [1, 1, 1]} : vector<8x1x128xf32> to vector<1x1x128xf32>
    %42 = vector.shape_cast %41 : vector<1x1x128xf32> to vector<1x128xf32>
    %43 = vector.broadcast %42 : vector<1x128xf32> to vector<512x128xf32>
    %44 = arith.addf %40, %43 : vector<512x128xf32>
    %cst_22 = arith.constant 0.000000e+00 : f32
    %45 = vector.broadcast %cst_22 : f32 to vector<512x128xf32>
    %46 = arith.maximumf %44, %45 : vector<512x128xf32>
    %c4 = arith.constant 4 : index
    %c0_23 = arith.constant 0 : index
    %c0_24 = arith.constant 0 : index
    %47 = vector.load %arg3[%c4, %c0_23, %c0_24] : memref<7x128x128xf32, #tpu.memory_space<vmem>>, vector<1x128x128xf32>
    %48 = vector.shape_cast %47 : vector<1x128x128xf32> to vector<128x128xf32>
    %cst_25 = arith.constant dense<0.000000e+00> : vector<512x128xf32>
    %49 = tpu.matmul %46, %48, %cst_25 {dimension_numbers = #tpu.dot_dimension_numbers<[1], [0], [0], [1], [0, 0, 1, 1], [], []>} : vector<512x128xf32>, vector<128x128xf32>, vector<512x128xf32> -> vector<512x128xf32>
    %50 = vector.extract_strided_slice %0 {offsets = [5, 0, 0], sizes = [1, 1, 128], strides = [1, 1, 1]} : vector<8x1x128xf32> to vector<1x1x128xf32>
    %51 = vector.shape_cast %50 : vector<1x1x128xf32> to vector<1x128xf32>
    %52 = vector.broadcast %51 : vector<1x128xf32> to vector<512x128xf32>
    %53 = arith.addf %49, %52 : vector<512x128xf32>
    %54 = arith.addf %37, %53 : vector<512x128xf32>
    %c5 = arith.constant 5 : index
    %c0_26 = arith.constant 0 : index
    %c0_27 = arith.constant 0 : index
    %55 = vector.load %arg3[%c5, %c0_26, %c0_27] : memref<7x128x128xf32, #tpu.memory_space<vmem>>, vector<1x128x128xf32>
    %56 = vector.shape_cast %55 : vector<1x128x128xf32> to vector<128x128xf32>
    %cst_28 = arith.constant dense<0.000000e+00> : vector<512x128xf32>
    %57 = tpu.matmul %54, %56, %cst_28 {dimension_numbers = #tpu.dot_dimension_numbers<[1], [0], [0], [1], [0, 0, 1, 1], [], []>} : vector<512x128xf32>, vector<128x128xf32>, vector<512x128xf32> -> vector<512x128xf32>
    %58 = vector.extract_strided_slice %0 {offsets = [6, 0, 0], sizes = [1, 1, 128], strides = [1, 1, 1]} : vector<8x1x128xf32> to vector<1x1x128xf32>
    %59 = vector.shape_cast %58 : vector<1x1x128xf32> to vector<1x128xf32>
    %60 = vector.broadcast %59 : vector<1x128xf32> to vector<512x128xf32>
    %61 = arith.addf %57, %60 : vector<512x128xf32>
    %cst_29 = arith.constant 0.000000e+00 : f32
    %62 = vector.broadcast %cst_29 : f32 to vector<512x128xf32>
    %63 = arith.maximumf %61, %62 : vector<512x128xf32>
    %c6 = arith.constant 6 : index
    %c0_30 = arith.constant 0 : index
    %c0_31 = arith.constant 0 : index
    %64 = vector.load %arg3[%c6, %c0_30, %c0_31] : memref<7x128x128xf32, #tpu.memory_space<vmem>>, vector<1x128x128xf32>
    %65 = vector.shape_cast %64 : vector<1x128x128xf32> to vector<128x128xf32>
    %cst_32 = arith.constant dense<0.000000e+00> : vector<512x128xf32>
    %66 = tpu.matmul %63, %65, %cst_32 {dimension_numbers = #tpu.dot_dimension_numbers<[1], [0], [0], [1], [0, 0, 1, 1], [], []>} : vector<512x128xf32>, vector<128x128xf32>, vector<512x128xf32> -> vector<512x128xf32>
    %67 = vector.extract_strided_slice %0 {offsets = [7, 0, 0], sizes = [1, 1, 128], strides = [1, 1, 1]} : vector<8x1x128xf32> to vector<1x1x128xf32>
    %68 = vector.shape_cast %67 : vector<1x1x128xf32> to vector<1x128xf32>
    %69 = vector.broadcast %68 : vector<1x128xf32> to vector<512x128xf32>
    %70 = arith.addf %66, %69 : vector<512x128xf32>
    %71 = arith.addf %54, %70 : vector<512x128xf32>
    %c0_33 = arith.constant 0 : index
    %c0_34 = arith.constant 0 : index
    %72 = vector.load %arg5[%c0_33, %c0_34] : memref<512x128xf32, #tpu.memory_space<vmem>>, vector<512x128xf32>
    tpu.vector_store %arg5[%c0_33, %c0_34], %71 {strides = array<i32>} : memref<512x128xf32, #tpu.memory_space<vmem>>, vector<512x128xf32>,
    return
  }
  func.func @transform_0(%arg0: i32) -> (i32, i32) {
    %c0_i32 = arith.constant 0 : i32
    %c0_i32_0 = arith.constant 0 : i32
    return %arg0, %c0_i32 : i32, i32
  }
  func.func @transform_1(%arg0: i32) -> (i32, i32) {
    %c0_i32 = arith.constant 0 : i32
    %c0_i32_0 = arith.constant 0 : i32
    %c0_i32_1 = arith.constant 0 : i32
    return %c0_i32, %c0_i32_0 : i32, i32
  }
  func.func @transform_2(%arg0: i32) -> (i32, i32, i32) {
    %c0_i32 = arith.constant 0 : i32
    %c0_i32_0 = arith.constant 0 : i32
    %c0_i32_1 = arith.constant 0 : i32
    %c0_i32_2 = arith.constant 0 : i32
    return %c0_i32, %c0_i32_0, %c0_i32_1 : i32, i32, i32
  }
  func.func @transform_3(%arg0: i32) -> (i32, i32, i32) {
    %c0_i32 = arith.constant 0 : i32
    %c0_i32_0 = arith.constant 0 : i32
    %c0_i32_1 = arith.constant 0 : i32
    %c0_i32_2 = arith.constant 0 : i32
    return %c0_i32, %c0_i32_0, %c0_i32_1 : i32, i32, i32
  }
  func.func @transform_4(%arg0: i32) -> (i32, i32) {
    %c0_i32 = arith.constant 0 : i32
    %c0_i32_0 = arith.constant 0 : i32
    return %arg0, %c0_i32 : i32, i32
  }
}

module attributes {stable_mosaic.version = 11 : i64} {
  func.func @_deep_encoder_kernel(%arg0: i32, %arg1: memref<512x16xf32, #tpu.memory_space<vmem>>, %arg2: memref<16x128xf32, #tpu.memory_space<vmem>>, %arg3: memref<7x128x128xf32, #tpu.memory_space<vmem>>, %arg4: memref<8x1x128xf32, #tpu.memory_space<vmem>>, %arg5: memref<512x128xf32, #tpu.memory_space<vmem>>) attributes {dimension_semantics = [#tpu.dimension_semantics<parallel>], iteration_bounds = array<i64: 2>, scalar_prefetch = 0 : i64, scratch_operands = 0 : i64, tpu.core_type = #tpu.core_type<tc>, window_params = [{transform_indices = @transform_0, window_bounds = array<i64: 512, 16>}, {pipeline_mode = #tpu.pipeline_mode<synchronous>, transform_indices = @transform_1, window_bounds = array<i64: 16, 128>}, {pipeline_mode = #tpu.pipeline_mode<synchronous>, transform_indices = @transform_2, window_bounds = array<i64: 7, 128, 128>}, {pipeline_mode = #tpu.pipeline_mode<synchronous>, transform_indices = @transform_3, window_bounds = array<i64: 8, 1, 128>}, {transform_indices = @transform_4, window_bounds = array<i64: 512, 128>}]} {
    %c0 = arith.constant 0 : index
    %c0_0 = arith.constant 0 : index
    %c0_1 = arith.constant 0 : index
    %0 = vector.load %arg4[%c0, %c0_0, %c0_1] : memref<8x1x128xf32, #tpu.memory_space<vmem>>, vector<8x1x128xf32>
    %c0_2 = arith.constant 0 : index
    %c0_3 = arith.constant 0 : index
    %1 = vector.load %arg1[%c0_2, %c0_3] : memref<512x16xf32, #tpu.memory_space<vmem>>, vector<512x16xf32>
    %c0_4 = arith.constant 0 : index
    %c0_5 = arith.constant 0 : index
    %2 = vector.load %arg2[%c0_4, %c0_5] : memref<16x128xf32, #tpu.memory_space<vmem>>, vector<16x128xf32>
    %cst = arith.constant dense<0.000000e+00> : vector<512x128xf32>
    %3 = tpu.matmul %1, %2, %cst {dimension_numbers = #tpu.dot_dimension_numbers<[1], [0], [0], [1], [0, 0, 1, 1], [], []>} : vector<512x16xf32>, vector<16x128xf32>, vector<512x128xf32> -> vector<512x128xf32>
    %4 = vector.extract_strided_slice %0 {offsets = [0, 0, 0], sizes = [1, 1, 128], strides = [1, 1, 1]} : vector<8x1x128xf32> to vector<1x1x128xf32>
    %5 = vector.shape_cast %4 : vector<1x1x128xf32> to vector<1x128xf32>
    %6 = vector.broadcast %5 : vector<1x128xf32> to vector<512x128xf32>
    %7 = arith.addf %3, %6 : vector<512x128xf32>
    %cst_6 = arith.constant 0.00999999977 : f32
    %8 = vector.broadcast %cst_6 : f32 to vector<512x128xf32>
    %9 = arith.mulf %8, %7 : vector<512x128xf32>
    %10 = arith.maximumf %7, %9 : vector<512x128xf32>
    %c0_7 = arith.constant 0 : index
    %c0_8 = arith.constant 0 : index
    %c0_9 = arith.constant 0 : index
    %11 = vector.load %arg3[%c0_7, %c0_8, %c0_9] : memref<7x128x128xf32, #tpu.memory_space<vmem>>, vector<1x128x128xf32>
    %12 = vector.shape_cast %11 : vector<1x128x128xf32> to vector<128x128xf32>
    %cst_10 = arith.constant dense<0.000000e+00> : vector<512x128xf32>
    %13 = tpu.matmul %10, %12, %cst_10 {dimension_numbers = #tpu.dot_dimension_numbers<[1], [0], [0], [1], [0, 0, 1, 1], [], []>} : vector<512x128xf32>, vector<128x128xf32>, vector<512x128xf32> -> vector<512x128xf32>
    %14 = vector.extract_strided_slice %0 {offsets = [1, 0, 0], sizes = [1, 1, 128], strides = [1, 1, 1]} : vector<8x1x128xf32> to vector<1x1x128xf32>
    %15 = vector.shape_cast %14 : vector<1x1x128xf32> to vector<1x128xf32>
    %16 = vector.broadcast %15 : vector<1x128xf32> to vector<512x128xf32>
    %17 = arith.addf %13, %16 : vector<512x128xf32>
    %cst_11 = arith.constant 0.00999999977 : f32
    %18 = vector.broadcast %cst_11 : f32 to vector<512x128xf32>
    %19 = arith.mulf %18, %17 : vector<512x128xf32>
    %20 = arith.maximumf %17, %19 : vector<512x128xf32>
    %c1 = arith.constant 1 : index
    %c0_12 = arith.constant 0 : index
    %c0_13 = arith.constant 0 : index
    %21 = vector.load %arg3[%c1, %c0_12, %c0_13] : memref<7x128x128xf32, #tpu.memory_space<vmem>>, vector<1x128x128xf32>
    %22 = vector.shape_cast %21 : vector<1x128x128xf32> to vector<128x128xf32>
    %cst_14 = arith.constant dense<0.000000e+00> : vector<512x128xf32>
    %23 = tpu.matmul %20, %22, %cst_14 {dimension_numbers = #tpu.dot_dimension_numbers<[1], [0], [0], [1], [0, 0, 1, 1], [], []>} : vector<512x128xf32>, vector<128x128xf32>, vector<512x128xf32> -> vector<512x128xf32>
    %24 = vector.extract_strided_slice %0 {offsets = [2, 0, 0], sizes = [1, 1, 128], strides = [1, 1, 1]} : vector<8x1x128xf32> to vector<1x1x128xf32>
    %25 = vector.shape_cast %24 : vector<1x1x128xf32> to vector<1x128xf32>
    %26 = vector.broadcast %25 : vector<1x128xf32> to vector<512x128xf32>
    %27 = arith.addf %23, %26 : vector<512x128xf32>
    %cst_15 = arith.constant 0.000000e+00 : f32
    %28 = vector.broadcast %cst_15 : f32 to vector<512x128xf32>
    %29 = arith.maximumf %27, %28 : vector<512x128xf32>
    %c2 = arith.constant 2 : index
    %c0_16 = arith.constant 0 : index
    %c0_17 = arith.constant 0 : index
    %30 = vector.load %arg3[%c2, %c0_16, %c0_17] : memref<7x128x128xf32, #tpu.memory_space<vmem>>, vector<1x128x128xf32>
    %31 = vector.shape_cast %30 : vector<1x128x128xf32> to vector<128x128xf32>
    %cst_18 = arith.constant dense<0.000000e+00> : vector<512x128xf32>
    %32 = tpu.matmul %29, %31, %cst_18 {dimension_numbers = #tpu.dot_dimension_numbers<[1], [0], [0], [1], [0, 0, 1, 1], [], []>} : vector<512x128xf32>, vector<128x128xf32>, vector<512x128xf32> -> vector<512x128xf32>
    %33 = vector.extract_strided_slice %0 {offsets = [3, 0, 0], sizes = [1, 1, 128], strides = [1, 1, 1]} : vector<8x1x128xf32> to vector<1x1x128xf32>
    %34 = vector.shape_cast %33 : vector<1x1x128xf32> to vector<1x128xf32>
    %35 = vector.broadcast %34 : vector<1x128xf32> to vector<512x128xf32>
    %36 = arith.addf %32, %35 : vector<512x128xf32>
    %37 = arith.addf %20, %36 : vector<512x128xf32>
    %c3 = arith.constant 3 : index
    %c0_19 = arith.constant 0 : index
    %c0_20 = arith.constant 0 : index
    %38 = vector.load %arg3[%c3, %c0_19, %c0_20] : memref<7x128x128xf32, #tpu.memory_space<vmem>>, vector<1x128x128xf32>
    %39 = vector.shape_cast %38 : vector<1x128x128xf32> to vector<128x128xf32>
    %cst_21 = arith.constant dense<0.000000e+00> : vector<512x128xf32>
    %40 = tpu.matmul %37, %39, %cst_21 {dimension_numbers = #tpu.dot_dimension_numbers<[1], [0], [0], [1], [0, 0, 1, 1], [], []>} : vector<512x128xf32>, vector<128x128xf32>, vector<512x128xf32> -> vector<512x128xf32>
    %41 = vector.extract_strided_slice %0 {offsets = [4, 0, 0], sizes = [1, 1, 128], strides = [1, 1, 1]} : vector<8x1x128xf32> to vector<1x1x128xf32>
    %42 = vector.shape_cast %41 : vector<1x1x128xf32> to vector<1x128xf32>
    %43 = vector.broadcast %42 : vector<1x128xf32> to vector<512x128xf32>
    %44 = arith.addf %40, %43 : vector<512x128xf32>
    %cst_22 = arith.constant 0.000000e+00 : f32
    %45 = vector.broadcast %cst_22 : f32 to vector<512x128xf32>
    %46 = arith.maximumf %44, %45 : vector<512x128xf32>
    %c4 = arith.constant 4 : index
    %c0_23 = arith.constant 0 : index
    %c0_24 = arith.constant 0 : index
    %47 = vector.load %arg3[%c4, %c0_23, %c0_24] : memref<7x128x128xf32, #tpu.memory_space<vmem>>, vector<1x128x128xf32>
    %48 = vector.shape_cast %47 : vector<1x128x128xf32> to vector<128x128xf32>
    %cst_25 = arith.constant dense<0.000000e+00> : vector<512x128xf32>
    %49 = tpu.matmul %46, %48, %cst_25 {dimension_numbers = #tpu.dot_dimension_numbers<[1], [0], [0], [1], [0, 0, 1, 1], [], []>} : vector<512x128xf32>, vector<128x128xf32>, vector<512x128xf32> -> vector<512x128xf32>
    %50 = vector.extract_strided_slice %0 {offsets = [5, 0, 0], sizes = [1, 1, 128], strides = [1, 1, 1]} : vector<8x1x128xf32> to vector<1x1x128xf32>
    %51 = vector.shape_cast %50 : vector<1x1x128xf32> to vector<1x128xf32>
    %52 = vector.broadcast %51 : vector<1x128xf32> to vector<512x128xf32>
    %53 = arith.addf %49, %52 : vector<512x128xf32>
    %54 = arith.addf %37, %53 : vector<512x128xf32>
    %c5 = arith.constant 5 : index
    %c0_26 = arith.constant 0 : index
    %c0_27 = arith.constant 0 : index
    %55 = vector.load %arg3[%c5, %c0_26, %c0_27] : memref<7x128x128xf32, #tpu.memory_space<vmem>>, vector<1x128x128xf32>
    %56 = vector.shape_cast %55 : vector<1x128x128xf32> to vector<128x128xf32>
    %cst_28 = arith.constant dense<0.000000e+00> : vector<512x128xf32>
    %57 = tpu.matmul %54, %56, %cst_28 {dimension_numbers = #tpu.dot_dimension_numbers<[1], [0], [0], [1], [0, 0, 1, 1], [], []>} : vector<512x128xf32>, vector<128x128xf32>, vector<512x128xf32> -> vector<512x128xf32>
    %58 = vector.extract_strided_slice %0 {offsets = [6, 0, 0], sizes = [1, 1, 128], strides = [1, 1, 1]} : vector<8x1x128xf32> to vector<1x1x128xf32>
    %59 = vector.shape_cast %58 : vector<1x1x128xf32> to vector<1x128xf32>
    %60 = vector.broadcast %59 : vector<1x128xf32> to vector<512x128xf32>
    %61 = arith.addf %57, %60 : vector<512x128xf32>
    %cst_29 = arith.constant 0.000000e+00 : f32
    %62 = vector.broadcast %cst_29 : f32 to vector<512x128xf32>
    %63 = arith.maximumf %61, %62 : vector<512x128xf32>
    %c6 = arith.constant 6 : index
    %c0_30 = arith.constant 0 : index
    %c0_31 = arith.constant 0 : index
    %64 = vector.load %arg3[%c6, %c0_30, %c0_31] : memref<7x128x128xf32, #tpu.memory_space<vmem>>, vector<1x128x128xf32>
    %65 = vector.shape_cast %64 : vector<1x128x128xf32> to vector<128x128xf32>
    %cst_32 = arith.constant dense<0.000000e+00> : vector<512x128xf32>
    %66 = tpu.matmul %63, %65, %cst_32 {dimension_numbers = #tpu.dot_dimension_numbers<[1], [0], [0], [1], [0, 0, 1, 1], [], []>} : vector<512x128xf32>, vector<128x128xf32>, vector<512x128xf32> -> vector<512x128xf32>
    %67 = vector.extract_strided_slice %0 {offsets = [7, 0, 0], sizes = [1, 1, 128], strides = [1, 1, 1]} : vector<8x1x128xf32> to vector<1x1x128xf32>
    %68 = vector.shape_cast %67 : vector<1x1x128xf32> to vector<1x128xf32>
    %69 = vector.broadcast %68 : vector<1x128xf32> to vector<512x128xf32>
    %70 = arith.addf %66, %69 : vector<512x128xf32>
    %71 = arith.addf %54, %70 : vector<512x128xf32>
    %c0_33 = arith.constant 0 : index
    %c0_34 = arith.constant 0 : index
    %72 = vector.load %arg5[%c0_33, %c0_34] : memref<512x128xf32, #tpu.memory_space<vmem>>, vector<512x128xf32>
    tpu.vector_store %arg5[%c0_33, %c0_34], %71 {strides = array<i32>} : memref<512x128xf32, #tpu.memory_space<vmem>>, vector<512x128xf32>,
    return
  }
  func.func @transform_0(%arg0: i32) -> (i32, i32) {
    %c0_i32 = arith.constant 0 : i32
    %c0_i32_0 = arith.constant 0 : i32
    return %arg0, %c0_i32 : i32, i32
  }
  func.func @transform_1(%arg0: i32) -> (i32, i32) {
    %c0_i32 = arith.constant 0 : i32
    %c0_i32_0 = arith.constant 0 : i32
    %c0_i32_1 = arith.constant 0 : i32
    return %c0_i32, %c0_i32_0 : i32, i32
  }
  func.func @transform_2(%arg0: i32) -> (i32, i32, i32) {
    %c0_i32 = arith.constant 0 : i32
    %c0_i32_0 = arith.constant 0 : i32
    %c0_i32_1 = arith.constant 0 : i32
    %c0_i32_2 = arith.constant 0 : i32
    return %c0_i32, %c0_i32_0, %c0_i32_1 : i32, i32, i32
  }
  func.func @transform_3(%arg0: i32) -> (i32, i32, i32) {
    %c0_i32 = arith.constant 0 : i32
    %c0_i32_0 = arith.constant 0 : i32
    %c0_i32_1 = arith.constant 0 : i32
    %c0_i32_2 = arith.constant 0 : i32
    return %c0_i32, %c0_i32_0, %c0_i32_1 : i32, i32, i32
  }
  func.func @transform_4(%arg0: i32) -> (i32, i32) {
    %c0_i32 = arith.constant 0 : i32
    %c0_i32_0 = arith.constant 0 : i32
    return %arg0, %c0_i32 : i32, i32
  }
}

</mosaic_0001>

<llo_original>
// kernel: tpu_custom_call.1
$region0: #{tpu_custom_call.1}
  #allocation0 [shape = 'u32[]', space=smem, size = 0x4, offset = 0x4, fixed_abs, tag = 'smem constant byte address 0x4 - core index']
  #allocation1 [shape = 'u32[144,128]{1,0:T(1,128)}', space=vmem, size = 0x12000, scoped, tag = 'internal scratch']
  %s0 = inlined_call_operand.vmem [shape: f32[1024,16], index: 0, kind: input, shape index: {}]
  %s1 = inlined_call_operand.vmem [shape: f32[16,128], index: 1, kind: input, shape index: {}]
  %s2 = inlined_call_operand.vmem [shape: f32[7,128,128], index: 2, kind: input, shape index: {}]
  %s3 = inlined_call_operand.vmem [shape: f32[8,1,128], index: 3, kind: input, shape index: {}]
  %s4 = inlined_call_operand.hbm [shape: f32[1024,128], index: 4, kind: output, shape index: {}]
  %s5 = sld [smem:[#allocation0]]
  $region49: #{tpu_custom_call.1} parent=0
    _
  %s7 = ssub.s32 1, %s5
  %s8 = scalar_select 0, %s7, %s5
  $region1: #{tpu_custom_call.1} parent=0
    #allocation2 [shape = 'u8[524288]{0}', space=vmem, size = 0x80000, scoped, tag = 'output window, operand 0']
    #allocation3 [shape = 's32[2]{0}', space=sflag, size = 0x8, scoped, tag = 'scoped memory for tpu_custom_call.1']
    %9 = vsyncpa [#allocation3], 0
    %s10 = scalar_lea.sflag [#allocation3], 1
    %11 = vsyncpa %s10, 0
    loop: start=0, step=1, limit=4
    $region2: #{tpu_custom_call.1} parent=1 // loop_pre_header
      _
    $region3: #{tpu_custom_call.1} parent=1 // loop_header
      %s13 = sphi 0, %s17
      %p14 = scmp.ge.s32.totalorder %s13, 4
      %s23 = sphi 0, %s25
      %s26 = sphi 0, %s23
      %s27 = sphi 0, %s26
      %s43 = sphi 0, %s27
      %s47 = sphi 0, %s47
      %s49 = sphi 0, %s47
      %s50 = sphi 0, %s49
      %s64 = sphi 0, %s50
      %s68 = sphi 0, %s68
      %s70 = sphi 0, %s68
      %s71 = sphi 0, %s70
      %s85 = sphi 0, %s71
      %s89 = sphi 0, %s89
      %s91 = sphi 0, %s89
      %s92 = sphi 0, %s91
      %s106 = sphi 0, %s92
      %s112 = sphi 0, %s114
      %s115 = sphi 0, %s112
      %s116 = sphi 0, %s115
      %s132 = sphi 0, %s116
    $region4: #{tpu_custom_call.1} parent=1 // loop_header_branch
      %16 = sbr.rel (%p14) target = $region8
    $region5: #{tpu_custom_call.1} parent=1 // loop_body
      %s18 = ssub.s32 %s13, 1
      %s19 = ssub.s32 %s13, 2
      %s20 = sadd.s32 %s13, 1
      %s21 = ssub.s32 %s13, %s20
      %p22 = scmp.eq.s32.totalorder %s21, 0
      %s24 = sadd.s32 %s23, 1
      %s25 = scalar_select %p22, %s23, %s24
      %p28 = pneg %p22
      %p29 = scmp.eq.s32.totalorder %s13, 1
      %p30 = por %p28, %p29
      %p31 = scmp.ne.s32.totalorder %s23, %s26
      %p32 = scmp.eq.s32.totalorder %s13, 0
      %p33 = por %p31, %p32
      %p34 = scmp.ne.s32.totalorder %s23, %s26
      %p35 = scmp.eq.s32.totalorder %s18, 1
      %p36 = por %p34, %p35
      %p37 = scmp.ne.s32.totalorder %s26, %s27
      %p38 = scmp.eq.s32.totalorder %s18, 0
      %p39 = por %p37, %p38
      %p40 = scmp.ne.s32.totalorder %s26, %s27
      %p41 = scmp.eq.s32.totalorder %s19, 1
      %p42 = por %p40, %p41
      %p44 = scmp.ne.s32.totalorder %s27, %s43
      %p45 = scmp.eq.s32.totalorder %s19, 0
      %p46 = por %p44, %p45
      %s48 = sadd.s32 %s47, 1
      %p51 = scmp.eq.s32.totalorder %s13, 1
      %p52 = scmp.ne.s32.totalorder %s47, %s49
      %p53 = scmp.eq.s32.totalorder %s13, 0
      %p54 = por %p52, %p53
      %p55 = scmp.ne.s32.totalorder %s47, %s49
      %p56 = scmp.eq.s32.totalorder %s18, 1
      %p57 = por %p55, %p56
      %p58 = scmp.ne.s32.totalorder %s49, %s50
      %p59 = scmp.eq.s32.totalorder %s18, 0
      %p60 = por %p58, %p59
      %p61 = scmp.ne.s32.totalorder %s49, %s50
      %p62 = scmp.eq.s32.totalorder %s19, 1
      %p63 = por %p61, %p62
      %p65 = scmp.ne.s32.totalorder %s50, %s64
      %p66 = scmp.eq.s32.totalorder %s19, 0
      %p67 = por %p65, %p66
      %s69 = sadd.s32 %s68, 1
      %p72 = scmp.eq.s32.totalorder %s13, 1
      %p73 = scmp.ne.s32.totalorder %s68, %s70
      %p74 = scmp.eq.s32.totalorder %s13, 0
      %p75 = por %p73, %p74
      %p76 = scmp.ne.s32.totalorder %s68, %s70
      %p77 = scmp.eq.s32.totalorder %s18, 1
      %p78 = por %p76, %p77
      %p79 = scmp.ne.s32.totalorder %s70, %s71
      %p80 = scmp.eq.s32.totalorder %s18, 0
      %p81 = por %p79, %p80
      %p82 = scmp.ne.s32.totalorder %s70, %s71
      %p83 = scmp.eq.s32.totalorder %s19, 1
      %p84 = por %p82, %p83
      %p86 = scmp.ne.s32.totalorder %s71, %s85
      %p87 = scmp.eq.s32.totalorder %s19, 0
      %p88 = por %p86, %p87
      %s90 = sadd.s32 %s89, 1
      %p93 = scmp.eq.s32.totalorder %s13, 1
      %p94 = scmp.ne.s32.totalorder %s89, %s91
      %p95 = scmp.eq.s32.totalorder %s13, 0
      %p96 = por %p94, %p95
      %p97 = scmp.ne.s32.totalorder %s89, %s91
      %p98 = scmp.eq.s32.totalorder %s18, 1
      %p99 = por %p97, %p98
      %p100 = scmp.ne.s32.totalorder %s91, %s92
      %p101 = scmp.eq.s32.totalorder %s18, 0
      %p102 = por %p100, %p101
      %p103 = scmp.ne.s32.totalorder %s91, %s92
      %p104 = scmp.eq.s32.totalorder %s19, 1
      %p105 = por %p103, %p104
      %p107 = scmp.ne.s32.totalorder %s92, %s106
      %p108 = scmp.eq.s32.totalorder %s19, 0
      %p109 = por %p107, %p108
      %s110 = ssub.s32 %s13, %s20
      %p111 = scmp.eq.s32.totalorder %s110, 0
      %s113 = sadd.s32 %s112, 1
      %s114 = scalar_select %p111, %s112, %s113
      %p117 = pneg %p111
      %p118 = scmp.eq.s32.totalorder %s13, 1
      %p119 = por %p117, %p118
      %p120 = scmp.ne.s32.totalorder %s112, %s115
      %p121 = scmp.eq.s32.totalorder %s13, 0
      %p122 = por %p120, %p121
      %p123 = scmp.ne.s32.totalorder %s112, %s115
      %p124 = scmp.eq.s32.totalorder %s18, 1
      %p125 = por %p123, %p124
      %p126 = scmp.ne.s32.totalorder %s115, %s116
      %p127 = scmp.eq.s32.totalorder %s18, 0
      %p128 = por %p126, %p127
      %p129 = scmp.ne.s32.totalorder %s115, %s116
      %p130 = scmp.eq.s32.totalorder %s19, 1
      %p131 = por %p129, %p130
      %p133 = scmp.ne.s32.totalorder %s116, %s132
      %p134 = scmp.eq.s32.totalorder %s19, 0
      %p135 = por %p133, %p134
      %p136 = scmp.le.s32.totalorder 1, %s13
      %p137 = scmp.lt.s32.totalorder %s13, 3
      %p138 = pnand %p136, %p137
      %p139 = pneg %p138
      // Predicated region
      $region9: #{tpu_custom_call.1} parent=5 // pred_check
        _
      $region10: #{tpu_custom_call.1} parent=5 // pred_check_branch
        %141 = sbr.rel (%p138) target = $region12
      $region11: #{tpu_custom_call.1} parent=5 // pred_region
        %s142 = ssub.s32 %s13, 1
        // Predicated region
        $region13: #{tpu_custom_call.1} parent=11 // pred_check
          %p143 = pneg %p60
        $region14: #{tpu_custom_call.1} parent=11 // pred_check_branch
          %145 = sbr.rel (%p143) target = $region16
        $region15: #{tpu_custom_call.1} parent=11 // pred_region
          _
        $region16: #{tpu_custom_call.1} parent=11 // pred_fallthru
          _
        // Predicated region
        $region17: #{tpu_custom_call.1} parent=11 // pred_check
          %p146 = pneg %p81
        $region18: #{tpu_custom_call.1} parent=11 // pred_check_branch
          %148 = sbr.rel (%p146) target = $region20
        $region19: #{tpu_custom_call.1} parent=11 // pred_region
          _
        $region20: #{tpu_custom_call.1} parent=11 // pred_fallthru
          _
        // Predicated region
        $region21: #{tpu_custom_call.1} parent=11 // pred_check
          %p149 = pneg %p102
        $region22: #{tpu_custom_call.1} parent=11 // pred_check_branch
          %151 = sbr.rel (%p149) target = $region24
        $region23: #{tpu_custom_call.1} parent=11 // pred_region
          _
        $region24: #{tpu_custom_call.1} parent=11 // pred_fallthru
          _
      $region12: #{tpu_custom_call.1} parent=5 // pred_fallthru
        _
      %p152 = scmp.lt.s32.totalorder %s13, 2
      // Predicated region
      $region25: #{tpu_custom_call.1} parent=5 // pred_check
        %p153 = pneg %p152
      $region26: #{tpu_custom_call.1} parent=5 // pred_check_branch
        %155 = sbr.rel (%p153) target = $region28
      $region27: #{tpu_custom_call.1} parent=5 // pred_region
        // Predicated region
        $region29: #{tpu_custom_call.1} parent=27 // pred_check
          %p156 = pneg %p33
        $region30: #{tpu_custom_call.1} parent=27 // pred_check_branch
          %158 = sbr.rel (%p156) target = $region32
        $region31: #{tpu_custom_call.1} parent=27 // pred_region
          %s159 = smul.u32 64, %s13
          %p160 = scmp.lt.s32.totalorder %s159, 127
          %s161 = scalar_select %p160, %s159, 127
          %s162 = smul.addr %s161, 8
          %s163 = scalar_lea.vmem %s0, %s162
          %s164 = smul.u32 64, %s13
        $region32: #{tpu_custom_call.1} parent=27 // pred_fallthru
          _
      $region28: #{tpu_custom_call.1} parent=5 // pred_fallthru
        _
      %p165 = scmp.le.s32.totalorder 1, %s13
      %p166 = scmp.lt.s32.totalorder %s13, 3
      %p167 = pnand %p165, %p166
      %p168 = pneg %p167
      // Predicated region
      $region33: #{tpu_custom_call.1} parent=5 // pred_check
        _
      $region34: #{tpu_custom_call.1} parent=5 // pred_check_branch
        %170 = sbr.rel (%p167) target = $region36
      $region35: #{tpu_custom_call.1} parent=5 // pred_region
        %s171 = ssub.s32 %s13, 1
        %s172 = smul.u32 64, %s18
        %p173 = scmp.lt.s32.totalorder %s172, 127
        %s174 = scalar_select %p173, %s172, 127
        %s175 = smul.addr %s174, 8
        %s176 = scalar_lea.vmem %s0, %s175
        %p177 = pneg %p39
        %p178 = pneg %p36
        %p179 = pneg %p60
        %p180 = pneg %p57
        %p181 = pneg %p81
        %p182 = pneg %p78
        %p183 = pneg %p102
        %p184 = pneg %p99
        %p185 = pneg %p128
        %p186 = pneg %p125
        %s187 = sand.u32 %s115, 1
        %s188 = scalar_lea.sflag [#allocation3], %s187
        %s189 = sand.u32 %s115, 1
        %s190 = smul.addr %s189, 512
        %s191 = scalar_lea.vmem [#allocation2], %s190
        %s192 = smul.u32 64, %s18
        %p193 = scmp.lt.s32.totalorder %s192, 127
        %s194 = scalar_select %p193, %s192, 127
        %s195 = smul.addr %s194, 8
        %s196 = scalar_lea.vmem %s0, %s195
        %s197 = smul.u32 64, %s18
        %s198 = smul.u32 64, %s18
        %v199 = vld [vmem:[%s3] sm:$0x1]
        %v200 = vld [vmem:[%s3 + $0x1] sm:$0x1]
        %v201 = vld [vmem:[%s3 + $0x2] sm:$0x1]
        %v202 = vld [vmem:[%s3 + $0x3] sm:$0x1]
        %v203 = vld [vmem:[%s3 + $0x4] sm:$0x1]
        %v204 = vld [vmem:[%s3 + $0x5] sm:$0x1]
        %v205 = vld [vmem:[%s3 + $0x6] sm:$0x1]
        %v206 = vld [vmem:[%s3 + $0x7] sm:$0x1]
        %v207 = vld [vmem:[%s196] sm:$0xff]
        %v208 = vld [vmem:[%s196 + $0x8] sm:$0xff]
        %v209 = vld [vmem:[%s196 + $0x10] sm:$0xff]
        %v210 = vld [vmem:[%s196 + $0x18] sm:$0xff]
        %v211 = vld [vmem:[%s196 + $0x20] sm:$0xff]
        %v212 = vld [vmem:[%s196 + $0x28] sm:$0xff]
        %v213 = vld [vmem:[%s196 + $0x30] sm:$0xff]
        %v214 = vld [vmem:[%s196 + $0x38] sm:$0xff]
        %v215 = vld [vmem:[%s196 + $0x40] sm:$0xff]
        %v216 = vld [vmem:[%s196 + $0x48] sm:$0xff]
        %v217 = vld [vmem:[%s196 + $0x50] sm:$0xff]
        %v218 = vld [vmem:[%s196 + $0x58] sm:$0xff]
        %v219 = vld [vmem:[%s196 + $0x60] sm:$0xff]
        %v220 = vld [vmem:[%s196 + $0x68] sm:$0xff]
        %v221 = vld [vmem:[%s196 + $0x70] sm:$0xff]
        %v222 = vld [vmem:[%s196 + $0x78] sm:$0xff]
        %v223 = vld [vmem:[%s196 + $0x80] sm:$0xff]
        %v224 = vld [vmem:[%s196 + $0x88] sm:$0xff]
        %v225 = vld [vmem:[%s196 + $0x90] sm:$0xff]
        %v226 = vld [vmem:[%s196 + $0x98] sm:$0xff]
        %v227 = vld [vmem:[%s196 + $0xa0] sm:$0xff]
        %v228 = vld [vmem:[%s196 + $0xa8] sm:$0xff]
        %v229 = vld [vmem:[%s196 + $0xb0] sm:$0xff]
        %v230 = vld [vmem:[%s196 + $0xb8] sm:$0xff]
        %v231 = vld [vmem:[%s196 + $0xc0] sm:$0xff]
        %v232 = vld [vmem:[%s196 + $0xc8] sm:$0xff]
        %v233 = vld [vmem:[%s196 + $0xd0] sm:$0xff]
        %v234 = vld [vmem:[%s196 + $0xd8] sm:$0xff]
        %v235 = vld [vmem:[%s196 + $0xe0] sm:$0xff]
        %v236 = vld [vmem:[%s196 + $0xe8] sm:$0xff]
        %v237 = vld [vmem:[%s196 + $0xf0] sm:$0xff]
        %v238 = vld [vmem:[%s196 + $0xf8] sm:$0xff]
        %v239 = vld [vmem:[%s196 + $0x100] sm:$0xff]
        %v240 = vld [vmem:[%s196 + $0x108] sm:$0xff]
        %v241 = vld [vmem:[%s196 + $0x110] sm:$0xff]
        %v242 = vld [vmem:[%s196 + $0x118] sm:$0xff]
        %v243 = vld [vmem:[%s196 + $0x120] sm:$0xff]
        %v244 = vld [vmem:[%s196 + $0x128] sm:$0xff]
        %v245 = vld [vmem:[%s196 + $0x130] sm:$0xff]
        %v246 = vld [vmem:[%s196 + $0x138] sm:$0xff]
        %v247 = vld [vmem:[%s196 + $0x140] sm:$0xff]
        %v248 = vld [vmem:[%s196 + $0x148] sm:$0xff]
        %v249 = vld [vmem:[%s196 + $0x150] sm:$0xff]
        %v250 = vld [vmem:[%s196 + $0x158] sm:$0xff]
        %v251 = vld [vmem:[%s196 + $0x160] sm:$0xff]
        %v252 = vld [vmem:[%s196 + $0x168] sm:$0xff]
        %v253 = vld [vmem:[%s196 + $0x170] sm:$0xff]
        %v254 = vld [vmem:[%s196 + $0x178] sm:$0xff]
        %v255 = vld [vmem:[%s196 + $0x180] sm:$0xff]
        %v256 = vld [vmem:[%s196 + $0x188] sm:$0xff]
        %v257 = vld [vmem:[%s196 + $0x190] sm:$0xff]
        %v258 = vld [vmem:[%s196 + $0x198] sm:$0xff]
        %v259 = vld [vmem:[%s196 + $0x1a0] sm:$0xff]
        %v260 = vld [vmem:[%s196 + $0x1a8] sm:$0xff]
        %v261 = vld [vmem:[%s196 + $0x1b0] sm:$0xff]
        %v262 = vld [vmem:[%s196 + $0x1b8] sm:$0xff]
        %v263 = vld [vmem:[%s196 + $0x1c0] sm:$0xff]
        %v264 = vld [vmem:[%s196 + $0x1c8] sm:$0xff]
        %v265 = vld [vmem:[%s196 + $0x1d0] sm:$0xff]
        %v266 = vld [vmem:[%s196 + $0x1d8] sm:$0xff]
        %v267 = vld [vmem:[%s196 + $0x1e0] sm:$0xff]
        %v268 = vld [vmem:[%s196 + $0x1e8] sm:$0xff]
        %v269 = vld [vmem:[%s196 + $0x1f0] sm:$0xff]
        %v270 = vld [vmem:[%s196 + $0x1f8] sm:$0xff]
        %v271 = vld [vmem:[%s1] sm:$0xff]
        %v272 = vld [vmem:[%s1 + $0x8] sm:$0xff]
        %v274 = vlaneseq
        %v275 = vshrl.u32 %v274, 7
        %v276 = vsub.s32 0, %v275
        %v277 = vrot.slane %v199, %v276
        %vm279 = vcmask 130048
        %v281 = vsel %vm279, %v207, 0
        %v284 = vsel %vm279, %v208, 0
        %v287 = vsel %vm279, %v209, 0
        %v290 = vsel %vm279, %v210, 0
        %v293 = vsel %vm279, %v211, 0
        %v296 = vsel %vm279, %v212, 0
        %v299 = vsel %vm279, %v213, 0
        %v302 = vsel %vm279, %v214, 0
        %v305 = vsel %vm279, %v215, 0
        %v308 = vsel %vm279, %v216, 0
        %v311 = vsel %vm279, %v217, 0
        %v314 = vsel %vm279, %v218, 0
        %v317 = vsel %vm279, %v219, 0
        %v320 = vsel %vm279, %v220, 0
        %v323 = vsel %vm279, %v221, 0
        %v326 = vsel %vm279, %v222, 0
        %v329 = vsel %vm279, %v223, 0
        %v332 = vsel %vm279, %v224, 0
        %v335 = vsel %vm279, %v225, 0
        %v338 = vsel %vm279, %v226, 0
        %v341 = vsel %vm279, %v227, 0
        %v344 = vsel %vm279, %v228, 0
        %v347 = vsel %vm279, %v229, 0
        %v350 = vsel %vm279, %v230, 0
        %v353 = vsel %vm279, %v231, 0
        %v356 = vsel %vm279, %v232, 0
        %v359 = vsel %vm279, %v233, 0
        %v362 = vsel %vm279, %v234, 0
        %v365 = vsel %vm279, %v235, 0
        %v368 = vsel %vm279, %v236, 0
        %v371 = vsel %vm279, %v237, 0
        %v374 = vsel %vm279, %v238, 0
        %v377 = vsel %vm279, %v239, 0
        %v380 = vsel %vm279, %v240, 0
        %v383 = vsel %vm279, %v241, 0
        %v386 = vsel %vm279, %v242, 0
        %v389 = vsel %vm279, %v243, 0
        %v392 = vsel %vm279, %v244, 0
        %v395 = vsel %vm279, %v245, 0
        %v398 = vsel %vm279, %v246, 0
        %v401 = vsel %vm279, %v247, 0
        %v404 = vsel %vm279, %v248, 0
        %v407 = vsel %vm279, %v249, 0
        %v410 = vsel %vm279, %v250, 0
        %v413 = vsel %vm279, %v251, 0
        %v416 = vsel %vm279, %v252, 0
        %v419 = vsel %vm279, %v253, 0
        %v422 = vsel %vm279, %v254, 0
        %v425 = vsel %vm279, %v255, 0
        %v428 = vsel %vm279, %v256, 0
        %v431 = vsel %vm279, %v257, 0
        %v434 = vsel %vm279, %v258, 0
        %v437 = vsel %vm279, %v259, 0
        %v440 = vsel %vm279, %v260, 0
        %v443 = vsel %vm279, %v261, 0
        %v446 = vsel %vm279, %v262, 0
        %v449 = vsel %vm279, %v263, 0
        %v452 = vsel %vm279, %v264, 0
        %v455 = vsel %vm279, %v265, 0
        %v458 = vsel %vm279, %v266, 0
        %v461 = vsel %vm279, %v267, 0
        %v464 = vsel %vm279, %v268, 0
        %v467 = vsel %vm279, %v269, 0
        %v470 = vsel %vm279, %v270, 0
        %472 = vmatprep.subr.mxu0 0.0
        %473 = vmatpush1.msra.mxu0 %v271
        %474 = vmatprep.subr.mxu0 0.0
        %475 = vmatpush1.msra.mxu0 %v272
        %476 = vmatprep.subr.mxu0 0.0
        %477 = vmatpush1.msra.mxu0 0.0
        %478 = vmatprep.subr.mxu0 0.0
        %479 = vmatpush1.msra.mxu0 0.0
        %480 = vmatprep.subr.mxu0 0.0
        %481 = vmatpush1.msra.mxu0 0.0
        %482 = vmatprep.subr.mxu0 0.0
        %483 = vmatpush1.msra.mxu0 0.0
        %484 = vmatprep.subr.mxu0 0.0
        %485 = vmatpush1.msra.mxu0 0.0
        %486 = vmatprep.subr.mxu0 0.0
        %487 = vmatpush1.msra.mxu0 0.0
        %488 = vmatprep.subr.mxu0 0.0
        %489 = vmatpush1.msra.mxu0 0.0
        %490 = vmatprep.subr.mxu0 0.0
        %491 = vmatpush1.msra.mxu0 0.0
        %492 = vmatprep.subr.mxu0 0.0
        %493 = vmatpush1.msra.mxu0 0.0
        %494 = vmatprep.subr.mxu0 0.0
        %495 = vmatpush1.msra.mxu0 0.0
        %496 = vmatprep.subr.mxu0 0.0
        %497 = vmatpush1.msra.mxu0 0.0
        %498 = vmatprep.subr.mxu0 0.0
        %499 = vmatpush1.msra.mxu0 0.0
        %500 = vmatprep.subr.mxu0 0.0
        %501 = vmatpush1.msra.mxu0 0.0
        %502 = vmatprep.subr.mxu0 0.0
        %503 = vmatpush1.msra.mxu0 0.0
        %504 = vmatprep.subr.mxu0 0.0
        %505 = vmatpush1.msra.mxu0 0.0
        %506 = vmatprep.subr.mxu0 0.0
        %507 = vmatpush1.msra.mxu0 0.0
        %508 = vmatprep.subr.mxu0 0.0
        %509 = vmatpush1.msra.mxu0 0.0
        %510 = vmatprep.subr.mxu0 0.0
        %511 = vmatpush1.msra.mxu0 0.0
        %512 = vmatprep.subr.mxu0 0.0
        %513 = vmatpush1.msra.mxu0 0.0
        %514 = vmatprep.subr.mxu0 0.0
        %515 = vmatpush1.msra.mxu0 0.0
        %516 = vmatprep.subr.mxu0 0.0
        %517 = vmatpush1.msra.mxu0 0.0
        %518 = vmatprep.subr.mxu0 0.0
        %519 = vmatpush1.msra.mxu0 0.0
        %520 = vmatprep.subr.mxu0 0.0
        %521 = vmatpush1.msra.mxu0 0.0
        %522 = vmatprep.subr.mxu0 0.0
        %523 = vmatpush1.msra.mxu0 0.0
        %524 = vmatprep.subr.mxu0 0.0
        %525 = vmatpush1.msra.mxu0 0.0
        %526 = vmatprep.subr.mxu0 0.0
        %527 = vmatpush1.msra.mxu0 0.0
        %528 = vmatprep.subr.mxu0 0.0
        %529 = vmatpush1.msra.mxu0 0.0
        %530 = vmatprep.subr.mxu0 0.0
        %531 = vmatpush1.msra.mxu0 0.0
        %532 = vmatprep.subr.mxu0 0.0
        %533 = vmatpush1.msra.mxu0 0.0
        %534 = vmatprep.subr.mxu0 0.0
        %535 = vmatpush1.msra.mxu0 0.0
        %536 = vmatprep.mubr.f32.mxu0 0.0
        %537 = vmatmul.mubr.f32.gmra.mrb[0].mxu0 %v281
        %v538 = vpop.f32.mrb[0].mxu0
        %v539 = vadd.f32 %v277, %v538
        %v540 = vpop.f32.mrb[0].mxu0
        %541 = vmatprep.mubr.f32.mxu0 0.0
        %542 = vmatmul.mubr.f32.gmra.mrb[0].mxu0 %v284
        %v543 = vpop.f32.mrb[0].mxu0
        %v544 = vadd.f32 %v277, %v543
        %v545 = vpop.f32.mrb[0].mxu0
        %546 = vmatprep.mubr.f32.mxu0 0.0
        %547 = vmatmul.mubr.f32.gmra.mrb[0].mxu0 %v287
        %v548 = vpop.f32.mrb[0].mxu0
        %v549 = vadd.f32 %v277, %v548
        %v550 = vpop.f32.mrb[0].mxu0
        %551 = vmatprep.mubr.f32.mxu0 0.0
        %552 = vmatmul.mubr.f32.gmra.mrb[0].mxu0 %v290
        %v553 = vpop.f32.mrb[0].mxu0
        %v554 = vadd.f32 %v277, %v553
        %v555 = vpop.f32.mrb[0].mxu0
        %556 = vmatprep.mubr.f32.mxu0 0.0
        %557 = vmatmul.mubr.f32.gmra.mrb[0].mxu0 %v293
        %v558 = vpop.f32.mrb[0].mxu0
        %v559 = vadd.f32 %v277, %v558
        %v560 = vpop.f32.mrb[0].mxu0
        %561 = vmatprep.mubr.f32.mxu0 0.0
        %562 = vmatmul.mubr.f32.gmra.mrb[0].mxu0 %v296
        %v563 = vpop.f32.mrb[0].mxu0
        %v564 = vadd.f32 %v277, %v563
        %v565 = vpop.f32.mrb[0].mxu0
        %566 = vmatprep.mubr.f32.mxu0 0.0
        %567 = vmatmul.mubr.f32.gmra.mrb[0].mxu0 %v299
        %v568 = vpop.f32.mrb[0].mxu0
        %v569 = vadd.f32 %v277, %v568
        %v570 = vpop.f32.mrb[0].mxu0
        %571 = vmatprep.mubr.f32.mxu0 0.0
        %572 = vmatmul.mubr.f32.gmra.mrb[0].mxu0 %v302
        %v573 = vpop.f32.mrb[0].mxu0
        %v574 = vadd.f32 %v277, %v573
        %v575 = vpop.f32.mrb[0].mxu0
        %576 = vmatprep.mubr.f32.mxu0 0.0
        %577 = vmatmul.mubr.f32.gmra.mrb[0].mxu0 %v305
        %v578 = vpop.f32.mrb[0].mxu0
        %v579 = vadd.f32 %v277, %v578
        %v580 = vpop.f32.mrb[0].mxu0
        %581 = vmatprep.mubr.f32.mxu0 0.0
        %582 = vmatmul.mubr.f32.gmra.mrb[0].mxu0 %v308
        %v583 = vpop.f32.mrb[0].mxu0
        %v584 = vadd.f32 %v277, %v583
        %v585 = vpop.f32.mrb[0].mxu0
        %586 = vmatprep.mubr.f32.mxu0 0.0
        %587 = vmatmul.mubr.f32.gmra.mrb[0].mxu0 %v311
        %v588 = vpop.f32.mrb[0].mxu0
        %v589 = vadd.f32 %v277, %v588
        %v590 = vpop.f32.mrb[0].mxu0
        %591 = vmatprep.mubr.f32.mxu0 0.0
        %592 = vmatmul.mubr.f32.gmra.mrb[0].mxu0 %v314
        %v593 = vpop.f32.mrb[0].mxu0
        %v594 = vadd.f32 %v277, %v593
        %v595 = vpop.f32.mrb[0].mxu0
        %596 = vmatprep.mubr.f32.mxu0 0.0
        %597 = vmatmul.mubr.f32.gmra.mrb[0].mxu0 %v317
        %v598 = vpop.f32.mrb[0].mxu0
        %v599 = vadd.f32 %v277, %v598
        %v600 = vpop.f32.mrb[0].mxu0
        %601 = vmatprep.mubr.f32.mxu0 0.0
        %602 = vmatmul.mubr.f32.gmra.mrb[0].mxu0 %v320
        %v603 = vpop.f32.mrb[0].mxu0
        %v604 = vadd.f32 %v277, %v603
        %v605 = vpop.f32.mrb[0].mxu0
        %606 = vmatprep.mubr.f32.mxu0 0.0
        %607 = vmatmul.mubr.f32.gmra.mrb[0].mxu0 %v323
        %v608 = vpop.f32.mrb[0].mxu0
        %v609 = vadd.f32 %v277, %v608
        %v610 = vpop.f32.mrb[0].mxu0
        %611 = vmatprep.mubr.f32.mxu0 0.0
        %612 = vmatmul.mubr.f32.gmra.mrb[0].mxu0 %v326
        %v613 = vpop.f32.mrb[0].mxu0
        %v614 = vadd.f32 %v277, %v613
        %v615 = vpop.f32.mrb[0].mxu0
        %616 = vmatprep.mubr.f32.mxu0 0.0
        %617 = vmatmul.mubr.f32.gmra.mrb[0].mxu0 %v329
        %v618 = vpop.f32.mrb[0].mxu0
        %v619 = vadd.f32 %v277, %v618
        %v620 = vpop.f32.mrb[0].mxu0
        %621 = vmatprep.mubr.f32.mxu0 0.0
        %622 = vmatmul.mubr.f32.gmra.mrb[0].mxu0 %v332
        %v623 = vpop.f32.mrb[0].mxu0
        %v624 = vadd.f32 %v277, %v623
        %v625 = vpop.f32.mrb[0].mxu0
        %626 = vmatprep.mubr.f32.mxu0 0.0
        %627 = vmatmul.mubr.f32.gmra.mrb[0].mxu0 %v335
        %v628 = vpop.f32.mrb[0].mxu0
        %v629 = vadd.f32 %v277, %v628
        %v630 = vpop.f32.mrb[0].mxu0
        %631 = vmatprep.mubr.f32.mxu0 0.0
        %632 = vmatmul.mubr.f32.gmra.mrb[0].mxu0 %v338
        %v633 = vpop.f32.mrb[0].mxu0
        %v634 = vadd.f32 %v277, %v633
        %v635 = vpop.f32.mrb[0].mxu0
        %636 = vmatprep.mubr.f32.mxu0 0.0
        %637 = vmatmul.mubr.f32.gmra.mrb[0].mxu0 %v341
        %v638 = vpop.f32.mrb[0].mxu0
        %v639 = vadd.f32 %v277, %v638
        %v640 = vpop.f32.mrb[0].mxu0
        %641 = vmatprep.mubr.f32.mxu0 0.0
        %642 = vmatmul.mubr.f32.gmra.mrb[0].mxu0 %v344
        %v643 = vpop.f32.mrb[0].mxu0
        %v644 = vadd.f32 %v277, %v643
        %v645 = vpop.f32.mrb[0].mxu0
        %646 = vmatprep.mubr.f32.mxu0 0.0
        %647 = vmatmul.mubr.f32.gmra.mrb[0].mxu0 %v347
        %v648 = vpop.f32.mrb[0].mxu0
        %v649 = vadd.f32 %v277, %v648
        %v650 = vpop.f32.mrb[0].mxu0
        %651 = vmatprep.mubr.f32.mxu0 0.0
        %652 = vmatmul.mubr.f32.gmra.mrb[0].mxu0 %v350
        %v653 = vpop.f32.mrb[0].mxu0
        %v654 = vadd.f32 %v277, %v653
        %v655 = vpop.f32.mrb[0].mxu0
        %656 = vmatprep.mubr.f32.mxu0 0.0
        %657 = vmatmul.mubr.f32.gmra.mrb[0].mxu0 %v353
        %v658 = vpop.f32.mrb[0].mxu0
        %v659 = vadd.f32 %v277, %v658
        %v660 = vpop.f32.mrb[0].mxu0
        %661 = vmatprep.mubr.f32.mxu0 0.0
        %662 = vmatmul.mubr.f32.gmra.mrb[0].mxu0 %v356
        %v663 = vpop.f32.mrb[0].mxu0
        %v664 = vadd.f32 %v277, %v663
        %v665 = vpop.f32.mrb[0].mxu0
        %666 = vmatprep.mubr.f32.mxu0 0.0
        %667 = vmatmul.mubr.f32.gmra.mrb[0].mxu0 %v359
        %v668 = vpop.f32.mrb[0].mxu0
        %v669 = vadd.f32 %v277, %v668
        %v670 = vpop.f32.mrb[0].mxu0
        %671 = vmatprep.mubr.f32.mxu0 0.0
        %672 = vmatmul.mubr.f32.gmra.mrb[0].mxu0 %v362
        %v673 = vpop.f32.mrb[0].mxu0
        %v674 = vadd.f32 %v277, %v673
        %v675 = vpop.f32.mrb[0].mxu0
        %676 = vmatprep.mubr.f32.mxu0 0.0
        %677 = vmatmul.mubr.f32.gmra.mrb[0].mxu0 %v365
        %v678 = vpop.f32.mrb[0].mxu0
        %v679 = vadd.f32 %v277, %v678
        %v680 = vpop.f32.mrb[0].mxu0
        %681 = vmatprep.mubr.f32.mxu0 0.0
        %682 = vmatmul.mubr.f32.gmra.mrb[0].mxu0 %v368
        %v683 = vpop.f32.mrb[0].mxu0
        %v684 = vadd.f32 %v277, %v683
        %v685 = vpop.f32.mrb[0].mxu0
        %686 = vmatprep.mubr.f32.mxu0 0.0
        %687 = vmatmul.mubr.f32.gmra.mrb[0].mxu0 %v371
        %v688 = vpop.f32.mrb[0].mxu0
        %v689 = vadd.f32 %v277, %v688
        %v690 = vpop.f32.mrb[0].mxu0
        %691 = vmatprep.mubr.f32.mxu0 0.0
        %692 = vmatmul.mubr.f32.gmra.mrb[0].mxu0 %v374
        %v693 = vpop.f32.mrb[0].mxu0
        %v694 = vadd.f32 %v277, %v693
        %v695 = vpop.f32.mrb[0].mxu0
        %696 = vmatprep.mubr.f32.mxu0 0.0
        %697 = vmatmul.mubr.f32.gmra.mrb[0].mxu0 %v377
        %v698 = vpop.f32.mrb[0].mxu0
        %v699 = vadd.f32 %v277, %v698
        %v700 = vpop.f32.mrb[0].mxu0
        %701 = vmatprep.mubr.f32.mxu0 0.0
        %702 = vmatmul.mubr.f32.gmra.mrb[0].mxu0 %v380
        %v703 = vpop.f32.mrb[0].mxu0
        %v704 = vadd.f32 %v277, %v703
        %v705 = vpop.f32.mrb[0].mxu0
        %706 = vmatprep.mubr.f32.mxu0 0.0
        %707 = vmatmul.mubr.f32.gmra.mrb[0].mxu0 %v383
        %v708 = vpop.f32.mrb[0].mxu0
        %v709 = vadd.f32 %v277, %v708
        %v710 = vpop.f32.mrb[0].mxu0
        %711 = vmatprep.mubr.f32.mxu0 0.0
        %712 = vmatmul.mubr.f32.gmra.mrb[0].mxu0 %v386
        %v713 = vpop.f32.mrb[0].mxu0
        %v714 = vadd.f32 %v277, %v713
        %v715 = vpop.f32.mrb[0].mxu0
        %716 = vmatprep.mubr.f32.mxu0 0.0
        %717 = vmatmul.mubr.f32.gmra.mrb[0].mxu0 %v389
        %v718 = vpop.f32.mrb[0].mxu0
        %v719 = vadd.f32 %v277, %v718
        %v720 = vpop.f32.mrb[0].mxu0
        %721 = vmatprep.mubr.f32.mxu0 0.0
        %722 = vmatmul.mubr.f32.gmra.mrb[0].mxu0 %v392
        %v723 = vpop.f32.mrb[0].mxu0
        %v724 = vadd.f32 %v277, %v723
        %v725 = vpop.f32.mrb[0].mxu0
        %726 = vmatprep.mubr.f32.mxu0 0.0
        %727 = vmatmul.mubr.f32.gmra.mrb[0].mxu0 %v395
        %v728 = vpop.f32.mrb[0].mxu0
        %v729 = vadd.f32 %v277, %v728
        %v730 = vpop.f32.mrb[0].mxu0
        %731 = vmatprep.mubr.f32.mxu0 0.0
        %732 = vmatmul.mubr.f32.gmra.mrb[0].mxu0 %v398
        %v733 = vpop.f32.mrb[0].mxu0
        %v734 = vadd.f32 %v277, %v733
        %v735 = vpop.f32.mrb[0].mxu0
        %736 = vmatprep.mubr.f32.mxu0 0.0
        %737 = vmatmul.mubr.f32.gmra.mrb[0].mxu0 %v401
        %v738 = vpop.f32.mrb[0].mxu0
        %v739 = vadd.f32 %v277, %v738
        %v740 = vpop.f32.mrb[0].mxu0
        %741 = vmatprep.mubr.f32.mxu0 0.0
        %742 = vmatmul.mubr.f32.gmra.mrb[0].mxu0 %v404
        %v743 = vpop.f32.mrb[0].mxu0
        %v744 = vadd.f32 %v277, %v743
        %v745 = vpop.f32.mrb[0].mxu0
        %746 = vmatprep.mubr.f32.mxu0 0.0
        %747 = vmatmul.mubr.f32.gmra.mrb[0].mxu0 %v407
        %v748 = vpop.f32.mrb[0].mxu0
        %v749 = vadd.f32 %v277, %v748
        %v750 = vpop.f32.mrb[0].mxu0
        %751 = vmatprep.mubr.f32.mxu0 0.0
        %752 = vmatmul.mubr.f32.gmra.mrb[0].mxu0 %v410
        %v753 = vpop.f32.mrb[0].mxu0
        %v754 = vadd.f32 %v277, %v753
        %v755 = vpop.f32.mrb[0].mxu0
        %756 = vmatprep.mubr.f32.mxu0 0.0
        %757 = vmatmul.mubr.f32.gmra.mrb[0].mxu0 %v413
        %v758 = vpop.f32.mrb[0].mxu0
        %v759 = vadd.f32 %v277, %v758
        %v760 = vpop.f32.mrb[0].mxu0
        %761 = vmatprep.mubr.f32.mxu0 0.0
        %762 = vmatmul.mubr.f32.gmra.mrb[0].mxu0 %v416
        %v763 = vpop.f32.mrb[0].mxu0
        %v764 = vadd.f32 %v277, %v763
        %v765 = vpop.f32.mrb[0].mxu0
        %766 = vmatprep.mubr.f32.mxu0 0.0
        %767 = vmatmul.mubr.f32.gmra.mrb[0].mxu0 %v419
        %v768 = vpop.f32.mrb[0].mxu0
        %v769 = vadd.f32 %v277, %v768
        %v770 = vpop.f32.mrb[0].mxu0
        %771 = vmatprep.mubr.f32.mxu0 0.0
        %772 = vmatmul.mubr.f32.gmra.mrb[0].mxu0 %v422
        %v773 = vpop.f32.mrb[0].mxu0
        %v774 = vadd.f32 %v277, %v773
        %v775 = vpop.f32.mrb[0].mxu0
        %776 = vmatprep.mubr.f32.mxu0 0.0
        %777 = vmatmul.mubr.f32.gmra.mrb[0].mxu0 %v425
        %v778 = vpop.f32.mrb[0].mxu0
        %v779 = vadd.f32 %v277, %v778
        %v780 = vpop.f32.mrb[0].mxu0
        %781 = vmatprep.mubr.f32.mxu0 0.0
        %782 = vmatmul.mubr.f32.gmra.mrb[0].mxu0 %v428
        %v783 = vpop.f32.mrb[0].mxu0
        %v784 = vadd.f32 %v277, %v783
        %v785 = vpop.f32.mrb[0].mxu0
        %786 = vmatprep.mubr.f32.mxu0 0.0
        %787 = vmatmul.mubr.f32.gmra.mrb[0].mxu0 %v431
        %v788 = vpop.f32.mrb[0].mxu0
        %v789 = vadd.f32 %v277, %v788
        %v790 = vpop.f32.mrb[0].mxu0
        %791 = vmatprep.mubr.f32.mxu0 0.0
        %792 = vmatmul.mubr.f32.gmra.mrb[0].mxu0 %v434
        %v793 = vpop.f32.mrb[0].mxu0
        %v794 = vadd.f32 %v277, %v793
        %v795 = vpop.f32.mrb[0].mxu0
        %796 = vmatprep.mubr.f32.mxu0 0.0
        %797 = vmatmul.mubr.f32.gmra.mrb[0].mxu0 %v437
        %v798 = vpop.f32.mrb[0].mxu0
        %v799 = vadd.f32 %v277, %v798
        %v800 = vpop.f32.mrb[0].mxu0
        %801 = vmatprep.mubr.f32.mxu0 0.0
        %802 = vmatmul.mubr.f32.gmra.mrb[0].mxu0 %v440
        %v803 = vpop.f32.mrb[0].mxu0
        %v804 = vadd.f32 %v277, %v803
        %v805 = vpop.f32.mrb[0].mxu0
        %806 = vmatprep.mubr.f32.mxu0 0.0
        %807 = vmatmul.mubr.f32.gmra.mrb[0].mxu0 %v443
        %v808 = vpop.f32.mrb[0].mxu0
        %v809 = vadd.f32 %v277, %v808
        %v810 = vpop.f32.mrb[0].mxu0
        %811 = vmatprep.mubr.f32.mxu0 0.0
        %812 = vmatmul.mubr.f32.gmra.mrb[0].mxu0 %v446
        %v813 = vpop.f32.mrb[0].mxu0
        %v814 = vadd.f32 %v277, %v813
        %v815 = vpop.f32.mrb[0].mxu0
        %816 = vmatprep.mubr.f32.mxu0 0.0
        %817 = vmatmul.mubr.f32.gmra.mrb[0].mxu0 %v449
        %v818 = vpop.f32.mrb[0].mxu0
        %v819 = vadd.f32 %v277, %v818
        %v820 = vpop.f32.mrb[0].mxu0
        %821 = vmatprep.mubr.f32.mxu0 0.0
        %822 = vmatmul.mubr.f32.gmra.mrb[0].mxu0 %v452
        %v823 = vpop.f32.mrb[0].mxu0
        %v824 = vadd.f32 %v277, %v823
        %v825 = vpop.f32.mrb[0].mxu0
        %826 = vmatprep.mubr.f32.mxu0 0.0
        %827 = vmatmul.mubr.f32.gmra.mrb[0].mxu0 %v455
        %v828 = vpop.f32.mrb[0].mxu0
        %v829 = vadd.f32 %v277, %v828
        %v830 = vpop.f32.mrb[0].mxu0
        %831 = vmatprep.mubr.f32.mxu0 0.0
        %832 = vmatmul.mubr.f32.gmra.mrb[0].mxu0 %v458
        %v833 = vpop.f32.mrb[0].mxu0
        %v834 = vadd.f32 %v277, %v833
        %v835 = vpop.f32.mrb[0].mxu0
        %836 = vmatprep.mubr.f32.mxu0 0.0
        %837 = vmatmul.mubr.f32.gmra.mrb[0].mxu0 %v461
        %v838 = vpop.f32.mrb[0].mxu0
        %v839 = vadd.f32 %v277, %v838
        %v840 = vpop.f32.mrb[0].mxu0
        %841 = vmatprep.mubr.f32.mxu0 0.0
        %842 = vmatmul.mubr.f32.gmra.mrb[0].mxu0 %v464
        %v843 = vpop.f32.mrb[0].mxu0
        %v844 = vadd.f32 %v277, %v843
        %v845 = vpop.f32.mrb[0].mxu0
        %846 = vmatprep.mubr.f32.mxu0 0.0
        %847 = vmatmul.mubr.f32.gmra.mrb[0].mxu0 %v467
        %v848 = vpop.f32.mrb[0].mxu0
        %v849 = vadd.f32 %v277, %v848
        %v850 = vpop.f32.mrb[0].mxu0
        %851 = vmatprep.mubr.f32.mxu0 0.0
        %852 = vmatmul.mubr.f32.gmra.mrb[0].mxu0 %v470
        %v853 = vpop.f32.mrb[0].mxu0
        %v854 = vadd.f32 %v277, %v853
        %v855 = vpop.f32.mrb[0].mxu0
        %856 = vdwg.mxu0
        %v857 = vmul.f32 %v539, 0.01
        %v858 = vmul.f32 %v544, 0.01
        %v859 = vmul.f32 %v549, 0.01
        %v860 = vmul.f32 %v554, 0.01
        %v861 = vmul.f32 %v559, 0.01
        %v862 = vmul.f32 %v564, 0.01
        %v863 = vmul.f32 %v569, 0.01
        %v864 = vmul.f32 %v574, 0.01
        %v865 = vmul.f32 %v579, 0.01
        %v866 = vmul.f32 %v584, 0.01
        %v867 = vmul.f32 %v589, 0.01
        %v868 = vmul.f32 %v594, 0.01
        %v869 = vmul.f32 %v599, 0.01
        %v870 = vmul.f32 %v604, 0.01
        %v871 = vmul.f32 %v609, 0.01
        %v872 = vmul.f32 %v614, 0.01
        %v873 = vmul.f32 %v619, 0.01
        %v874 = vmul.f32 %v624, 0.01
        %v875 = vmul.f32 %v629, 0.01
        %v876 = vmul.f32 %v634, 0.01
        %v877 = vmul.f32 %v639, 0.01
        %v878 = vmul.f32 %v644, 0.01
        %v879 = vmul.f32 %v649, 0.01
        %v880 = vmul.f32 %v654, 0.01
        %v881 = vmul.f32 %v659, 0.01
        %v882 = vmul.f32 %v664, 0.01
        %v883 = vmul.f32 %v669, 0.01
        %v884 = vmul.f32 %v674, 0.01
        %v885 = vmul.f32 %v679, 0.01
        %v886 = vmul.f32 %v684, 0.01
        %v887 = vmul.f32 %v689, 0.01
        %v888 = vmul.f32 %v694, 0.01
        %v889 = vmul.f32 %v699, 0.01
        %v890 = vmul.f32 %v704, 0.01
        %v891 = vmul.f32 %v709, 0.01
        %v892 = vmul.f32 %v714, 0.01
        %v893 = vmul.f32 %v719, 0.01
        %v894 = vmul.f32 %v724, 0.01
        %v895 = vmul.f32 %v729, 0.01
        %v896 = vmul.f32 %v734, 0.01
        %v897 = vmul.f32 %v739, 0.01
        %v898 = vmul.f32 %v744, 0.01
        %v899 = vmul.f32 %v749, 0.01
        %v900 = vmul.f32 %v754, 0.01
        %v901 = vmul.f32 %v759, 0.01
        %v902 = vmul.f32 %v764, 0.01
        %v903 = vmul.f32 %v769, 0.01
        %v904 = vmul.f32 %v774, 0.01
        %v905 = vmul.f32 %v779, 0.01
        %v906 = vmul.f32 %v784, 0.01
        %v907 = vmul.f32 %v789, 0.01
        %v908 = vmul.f32 %v794, 0.01
        %v909 = vmul.f32 %v799, 0.01
        %v910 = vmul.f32 %v804, 0.01
        %v911 = vmul.f32 %v809, 0.01
        %v912 = vmul.f32 %v814, 0.01
        %v913 = vmul.f32 %v819, 0.01
        %v914 = vmul.f32 %v824, 0.01
        %v915 = vmul.f32 %v829, 0.01
        %v916 = vmul.f32 %v834, 0.01
        %v917 = vmul.f32 %v839, 0.01
        %v918 = vmul.f32 %v844, 0.01
        %v919 = vmul.f32 %v849, 0.01
        %v920 = vmul.f32 %v854, 0.01
        %v921 = vmax.f32 %v539, %v857
        %v922 = vmax.f32 %v544, %v858
        %v923 = vmax.f32 %v549, %v859
        %v924 = vmax.f32 %v554, %v860
        %v925 = vmax.f32 %v559, %v861
        %v926 = vmax.f32 %v564, %v862
        %v927 = vmax.f32 %v569, %v863
        %v928 = vmax.f32 %v574, %v864
        %v929 = vmax.f32 %v579, %v865
        %v930 = vmax.f32 %v584, %v866
        %v931 = vmax.f32 %v589, %v867
        %v932 = vmax.f32 %v594, %v868
        %v933 = vmax.f32 %v599, %v869
        %v934 = vmax.f32 %v604, %v870
        %v935 = vmax.f32 %v609, %v871
        %v936 = vmax.f32 %v614, %v872
        %v937 = vmax.f32 %v619, %v873
        %v938 = vmax.f32 %v624, %v874
        %v939 = vmax.f32 %v629, %v875
        %v940 = vmax.f32 %v634, %v876
        %v941 = vmax.f32 %v639, %v877
        %v942 = vmax.f32 %v644, %v878
        %v943 = vmax.f32 %v649, %v879
        %v944 = vmax.f32 %v654, %v880
        %v945 = vmax.f32 %v659, %v881
        %v946 = vmax.f32 %v664, %v882
        %v947 = vmax.f32 %v669, %v883
        %v948 = vmax.f32 %v674, %v884
        %v949 = vmax.f32 %v679, %v885
        %v950 = vmax.f32 %v684, %v886
        %v951 = vmax.f32 %v689, %v887
        %v952 = vmax.f32 %v694, %v888
        %v953 = vmax.f32 %v699, %v889
        %v954 = vmax.f32 %v704, %v890
        %v955 = vmax.f32 %v709, %v891
        %v956 = vmax.f32 %v714, %v892
        %v957 = vmax.f32 %v719, %v893
        %v958 = vmax.f32 %v724, %v894
        %v959 = vmax.f32 %v729, %v895
        %v960 = vmax.f32 %v734, %v896
        %v961 = vmax.f32 %v739, %v897
        %v962 = vmax.f32 %v744, %v898
        %v963 = vmax.f32 %v749, %v899
        %v964 = vmax.f32 %v754, %v900
        %v965 = vmax.f32 %v759, %v901
        %v966 = vmax.f32 %v764, %v902
        %v967 = vmax.f32 %v769, %v903
        %v968 = vmax.f32 %v774, %v904
        %v969 = vmax.f32 %v779, %v905
        %v970 = vmax.f32 %v784, %v906
        %v971 = vmax.f32 %v789, %v907
        %v972 = vmax.f32 %v794, %v908
        %v973 = vmax.f32 %v799, %v909
        %v974 = vmax.f32 %v804, %v910
        %v975 = vmax.f32 %v809, %v911
        %v976 = vmax.f32 %v814, %v912
        %v977 = vmax.f32 %v819, %v913
        %v978 = vmax.f32 %v824, %v914
        %v979 = vmax.f32 %v829, %v915
        %v980 = vmax.f32 %v834, %v916
        %v981 = vmax.f32 %v839, %v917
        %v982 = vmax.f32 %v844, %v918
        %v983 = vmax.f32 %v849, %v919
        %v984 = vmax.f32 %v854, %v920
        %v985 = vld [vmem:[%s2] sm:$0xff]
        %v986 = vld [vmem:[%s2 + $0x8] sm:$0xff]
        %v987 = vld [vmem:[%s2 + $0x10] sm:$0xff]
        %v988 = vld [vmem:[%s2 + $0x18] sm:$0xff]
        %v989 = vld [vmem:[%s2 + $0x20] sm:$0xff]
        %v990 = vld [vmem:[%s2 + $0x28] sm:$0xff]
        %v991 = vld [vmem:[%s2 + $0x30] sm:$0xff]
        %v992 = vld [vmem:[%s2 + $0x38] sm:$0xff]
        %v993 = vld [vmem:[%s2 + $0x40] sm:$0xff]
        %v994 = vld [vmem:[%s2 + $0x48] sm:$0xff]
        %v995 = vld [vmem:[%s2 + $0x50] sm:$0xff]
        %v996 = vld [vmem:[%s2 + $0x58] sm:$0xff]
        %v997 = vld [vmem:[%s2 + $0x60] sm:$0xff]
        %v998 = vld [vmem:[%s2 + $0x68] sm:$0xff]
        %v999 = vld [vmem:[%s2 + $0x70] sm:$0xff]
        %v1000 = vld [vmem:[%s2 + $0x78] sm:$0xff]
        %v1002 = vlaneseq
        %v1003 = vshrl.u32 %v1002, 7
        %v1004 = vsub.s32 0, %v1003
        %v1005 = vrot.slane %v200, %v1004
        %1007 = vmatprep.subr.mxu0 0.0
        %1008 = vmatpush1.msra.mxu0 %v985
        %1009 = vmatprep.subr.mxu0 0.0
        %1010 = vmatpush1.msra.mxu0 %v986
        %1011 = vmatprep.subr.mxu0 0.0
        %1012 = vmatpush1.msra.mxu0 %v987
        %1013 = vmatprep.subr.mxu0 0.0
        %1014 = vmatpush1.msra.mxu0 %v988
        %1015 = vmatprep.subr.mxu0 0.0
        %1016 = vmatpush1.msra.mxu0 %v989
        %1017 = vmatprep.subr.mxu0 0.0
        %1018 = vmatpush1.msra.mxu0 %v990
        %1019 = vmatprep.subr.mxu0 0.0
        %1020 = vmatpush1.msra.mxu0 %v991
        %1021 = vmatprep.subr.mxu0 0.0
        %1022 = vmatpush1.msra.mxu0 %v992
        %1023 = vmatprep.subr.mxu0 0.0
        %1024 = vmatpush1.msra.mxu0 %v993
        %1025 = vmatprep.subr.mxu0 0.0
        %1026 = vmatpush1.msra.mxu0 %v994
        %1027 = vmatprep.subr.mxu0 0.0
        %1028 = vmatpush1.msra.mxu0 %v995
        %1029 = vmatprep.subr.mxu0 0.0
        %1030 = vmatpush1.msra.mxu0 %v996
        %1031 = vmatprep.subr.mxu0 0.0
        %1032 = vmatpush1.msra.mxu0 %v997
        %1033 = vmatprep.subr.mxu0 0.0
        %1034 = vmatpush1.msra.mxu0 %v998
        %1035 = vmatprep.subr.mxu0 0.0
        %1036 = vmatpush1.msra.mxu0 %v999
        %1037 = vmatprep.subr.mxu0 0.0
        %1038 = vmatpush1.msra.mxu0 %v1000
        %1039 = vmatprep.subr.mxu0 0.0
        %1040 = vmatpush1.msra.mxu0 0.0
        %1041 = vmatprep.subr.mxu0 0.0
        %1042 = vmatpush1.msra.mxu0 0.0
        %1043 = vmatprep.subr.mxu0 0.0
        %1044 = vmatpush1.msra.mxu0 0.0
        %1045 = vmatprep.subr.mxu0 0.0
        %1046 = vmatpush1.msra.mxu0 0.0
        %1047 = vmatprep.subr.mxu0 0.0
        %1048 = vmatpush1.msra.mxu0 0.0
        %1049 = vmatprep.subr.mxu0 0.0
        %1050 = vmatpush1.msra.mxu0 0.0
        %1051 = vmatprep.subr.mxu0 0.0
        %1052 = vmatpush1.msra.mxu0 0.0
        %1053 = vmatprep.subr.mxu0 0.0
        %1054 = vmatpush1.msra.mxu0 0.0
        %1055 = vmatprep.subr.mxu0 0.0
        %1056 = vmatpush1.msra.mxu0 0.0
        %1057 = vmatprep.subr.mxu0 0.0
        %1058 = vmatpush1.msra.mxu0 0.0
        %1059 = vmatprep.subr.mxu0 0.0
        %1060 = vmatpush1.msra.mxu0 0.0
        %1061 = vmatprep.subr.mxu0 0.0
        %1062 = vmatpush1.msra.mxu0 0.0
        %1063 = vmatprep.subr.mxu0 0.0
        %1064 = vmatpush1.msra.mxu0 0.0
        %1065 = vmatprep.subr.mxu0 0.0
        %1066 = vmatpush1.msra.mxu0 0.0
        %1067 = vmatprep.subr.mxu0 0.0
        %1068 = vmatpush1.msra.mxu0 0.0
        %1069 = vmatprep.subr.mxu0 0.0
        %1070 = vmatpush1.msra.mxu0 0.0
        %1071 = vmatprep.mubr.f32.mxu0 0.0
        %1072 = vmatmul.mubr.f32.gmra.mrb[0].mxu0 %v921
        %v1073 = vpop.f32.mrb[0].mxu0
        %v1074 = vadd.f32 %v1005, %v1073
        %v1075 = vpop.f32.mrb[0].mxu0
        %1076 = vmatprep.mubr.f32.mxu0 0.0
        %1077 = vmatmul.mubr.f32.gmra.mrb[0].mxu0 %v922
        %v1078 = vpop.f32.mrb[0].mxu0
        %v1079 = vadd.f32 %v1005, %v1078
        %v1080 = vpop.f32.mrb[0].mxu0
        %1081 = vmatprep.mubr.f32.mxu0 0.0
        %1082 = vmatmul.mubr.f32.gmra.mrb[0].mxu0 %v923
        %v1083 = vpop.f32.mrb[0].mxu0
        %v1084 = vadd.f32 %v1005, %v1083
        %v1085 = vpop.f32.mrb[0].mxu0
        %1086 = vmatprep.mubr.f32.mxu0 0.0
        %1087 = vmatmul.mubr.f32.gmra.mrb[0].mxu0 %v924
        %v1088 = vpop.f32.mrb[0].mxu0
        %v1089 = vadd.f32 %v1005, %v1088
        %v1090 = vpop.f32.mrb[0].mxu0
        %1091 = vmatprep.mubr.f32.mxu0 0.0
        %1092 = vmatmul.mubr.f32.gmra.mrb[0].mxu0 %v925
        %v1093 = vpop.f32.mrb[0].mxu0
        %v1094 = vadd.f32 %v1005, %v1093
        %v1095 = vpop.f32.mrb[0].mxu0
        %1096 = vmatprep.mubr.f32.mxu0 0.0
        %1097 = vmatmul.mubr.f32.gmra.mrb[0].mxu0 %v926
        %v1098 = vpop.f32.mrb[0].mxu0
        %v1099 = vadd.f32 %v1005, %v1098
        %v1100 = vpop.f32.mrb[0].mxu0
        %1101 = vmatprep.mubr.f32.mxu0 0.0
        %1102 = vmatmul.mubr.f32.gmra.mrb[0].mxu0 %v927
        %v1103 = vpop.f32.mrb[0].mxu0
        %v1104 = vadd.f32 %v1005, %v1103
        %v1105 = vpop.f32.mrb[0].mxu0
        %1106 = vmatprep.mubr.f32.mxu0 0.0
        %1107 = vmatmul.mubr.f32.gmra.mrb[0].mxu0 %v928
        %v1108 = vpop.f32.mrb[0].mxu0
        %v1109 = vadd.f32 %v1005, %v1108
        %v1110 = vpop.f32.mrb[0].mxu0
        %1111 = vmatprep.mubr.f32.mxu0 0.0
        %1112 = vmatmul.mubr.f32.gmra.mrb[0].mxu0 %v929
        %v1113 = vpop.f32.mrb[0].mxu0
        %v1114 = vadd.f32 %v1005, %v1113
        %v1115 = vpop.f32.mrb[0].mxu0
        %1116 = vmatprep.mubr.f32.mxu0 0.0
        %1117 = vmatmul.mubr.f32.gmra.mrb[0].mxu0 %v930
        %v1118 = vpop.f32.mrb[0].mxu0
        %v1119 = vadd.f32 %v1005, %v1118
        %v1120 = vpop.f32.mrb[0].mxu0
        %1121 = vmatprep.mubr.f32.mxu0 0.0
        %1122 = vmatmul.mubr.f32.gmra.mrb[0].mxu0 %v931
        %v1123 = vpop.f32.mrb[0].mxu0
        %v1124 = vadd.f32 %v1005, %v1123
        %v1125 = vpop.f32.mrb[0].mxu0
        %1126 = vmatprep.mubr.f32.mxu0 0.0
        %1127 = vmatmul.mubr.f32.gmra.mrb[0].mxu0 %v932
        %v1128 = vpop.f32.mrb[0].mxu0
        %v1129 = vadd.f32 %v1005, %v1128
        %v1130 = vpop.f32.mrb[0].mxu0
        %1131 = vmatprep.mubr.f32.mxu0 0.0
        %1132 = vmatmul.mubr.f32.gmra.mrb[0].mxu0 %v933
        %v1133 = vpop.f32.mrb[0].mxu0
        %v1134 = vadd.f32 %v1005, %v1133
        %v1135 = vpop.f32.mrb[0].mxu0
        %1136 = vmatprep.mubr.f32.mxu0 0.0
        %1137 = vmatmul.mubr.f32.gmra.mrb[0].mxu0 %v934
        %v1138 = vpop.f32.mrb[0].mxu0
        %v1139 = vadd.f32 %v1005, %v1138
        %v1140 = vpop.f32.mrb[0].mxu0
        %1141 = vmatprep.mubr.f32.mxu0 0.0
        %1142 = vmatmul.mubr.f32.gmra.mrb[0].mxu0 %v935
        %v1143 = vpop.f32.mrb[0].mxu0
        %v1144 = vadd.f32 %v1005, %v1143
        %v1145 = vpop.f32.mrb[0].mxu0
        %1146 = vmatprep.mubr.f32.mxu0 0.0
        %1147 = vmatmul.mubr.f32.gmra.mrb[0].mxu0 %v936
        %v1148 = vpop.f32.mrb[0].mxu0
        %v1149 = vadd.f32 %v1005, %v1148
        %v1150 = vpop.f32.mrb[0].mxu0
        %1151 = vmatprep.mubr.f32.mxu0 0.0
        %1152 = vmatmul.mubr.f32.gmra.mrb[0].mxu0 %v937
        %v1153 = vpop.f32.mrb[0].mxu0
        %v1154 = vadd.f32 %v1005, %v1153
        %v1155 = vpop.f32.mrb[0].mxu0
        %1156 = vmatprep.mubr.f32.mxu0 0.0
        %1157 = vmatmul.mubr.f32.gmra.mrb[0].mxu0 %v938
        %v1158 = vpop.f32.mrb[0].mxu0
        %v1159 = vadd.f32 %v1005, %v1158
        %v1160 = vpop.f32.mrb[0].mxu0
        %1161 = vmatprep.mubr.f32.mxu0 0.0
        %1162 = vmatmul.mubr.f32.gmra.mrb[0].mxu0 %v939
        %v1163 = vpop.f32.mrb[0].mxu0
        %v1164 = vadd.f32 %v1005, %v1163
        %v1165 = vpop.f32.mrb[0].mxu0
        %1166 = vmatprep.mubr.f32.mxu0 0.0
        %1167 = vmatmul.mubr.f32.gmra.mrb[0].mxu0 %v940
        %v1168 = vpop.f32.mrb[0].mxu0
        %v1169 = vadd.f32 %v1005, %v1168
        %v1170 = vpop.f32.mrb[0].mxu0
        %1171 = vmatprep.mubr.f32.mxu0 0.0
        %1172 = vmatmul.mubr.f32.gmra.mrb[0].mxu0 %v941
        %v1173 = vpop.f32.mrb[0].mxu0
        %v1174 = vadd.f32 %v1005, %v1173
        %v1175 = vpop.f32.mrb[0].mxu0
        %1176 = vmatprep.mubr.f32.mxu0 0.0
        %1177 = vmatmul.mubr.f32.gmra.mrb[0].mxu0 %v942
        %v1178 = vpop.f32.mrb[0].mxu0
        %v1179 = vadd.f32 %v1005, %v1178
        %v1180 = vpop.f32.mrb[0].mxu0
        %1181 = vmatprep.mubr.f32.mxu0 0.0
        %1182 = vmatmul.mubr.f32.gmra.mrb[0].mxu0 %v943
        %v1183 = vpop.f32.mrb[0].mxu0
        %v1184 = vadd.f32 %v1005, %v1183
        %v1185 = vpop.f32.mrb[0].mxu0
        %1186 = vmatprep.mubr.f32.mxu0 0.0
        %1187 = vmatmul.mubr.f32.gmra.mrb[0].mxu0 %v944
        %v1188 = vpop.f32.mrb[0].mxu0
        %v1189 = vadd.f32 %v1005, %v1188
        %v1190 = vpop.f32.mrb[0].mxu0
        %1191 = vmatprep.mubr.f32.mxu0 0.0
        %1192 = vmatmul.mubr.f32.gmra.mrb[0].mxu0 %v945
        %v1193 = vpop.f32.mrb[0].mxu0
        %v1194 = vadd.f32 %v1005, %v1193
        %v1195 = vpop.f32.mrb[0].mxu0
        %1196 = vmatprep.mubr.f32.mxu0 0.0
        %1197 = vmatmul.mubr.f32.gmra.mrb[0].mxu0 %v946
        %v1198 = vpop.f32.mrb[0].mxu0
        %v1199 = vadd.f32 %v1005, %v1198
        %v1200 = vpop.f32.mrb[0].mxu0
        %1201 = vmatprep.mubr.f32.mxu0 0.0
        %1202 = vmatmul.mubr.f32.gmra.mrb[0].mxu0 %v947
        %v1203 = vpop.f32.mrb[0].mxu0
        %v1204 = vadd.f32 %v1005, %v1203
        %v1205 = vpop.f32.mrb[0].mxu0
        %1206 = vmatprep.mubr.f32.mxu0 0.0
        %1207 = vmatmul.mubr.f32.gmra.mrb[0].mxu0 %v948
        %v1208 = vpop.f32.mrb[0].mxu0
        %v1209 = vadd.f32 %v1005, %v1208
        %v1210 = vpop.f32.mrb[0].mxu0
        %1211 = vmatprep.mubr.f32.mxu0 0.0
        %1212 = vmatmul.mubr.f32.gmra.mrb[0].mxu0 %v949
        %v1213 = vpop.f32.mrb[0].mxu0
        %v1214 = vadd.f32 %v1005, %v1213
        %v1215 = vpop.f32.mrb[0].mxu0
        %1216 = vmatprep.mubr.f32.mxu0 0.0
        %1217 = vmatmul.mubr.f32.gmra.mrb[0].mxu0 %v950
        %v1218 = vpop.f32.mrb[0].mxu0
        %v1219 = vadd.f32 %v1005, %v1218
        %v1220 = vpop.f32.mrb[0].mxu0
        %1221 = vmatprep.mubr.f32.mxu0 0.0
        %1222 = vmatmul.mubr.f32.gmra.mrb[0].mxu0 %v951
        %v1223 = vpop.f32.mrb[0].mxu0
        %v1224 = vadd.f32 %v1005, %v1223
        %v1225 = vpop.f32.mrb[0].mxu0
        %1226 = vmatprep.mubr.f32.mxu0 0.0
        %1227 = vmatmul.mubr.f32.gmra.mrb[0].mxu0 %v952
        %v1228 = vpop.f32.mrb[0].mxu0
        %v1229 = vadd.f32 %v1005, %v1228
        %v1230 = vpop.f32.mrb[0].mxu0
        %1231 = vmatprep.mubr.f32.mxu0 0.0
        %1232 = vmatmul.mubr.f32.gmra.mrb[0].mxu0 %v953
        %v1233 = vpop.f32.mrb[0].mxu0
        %v1234 = vadd.f32 %v1005, %v1233
        %v1235 = vpop.f32.mrb[0].mxu0
        %1236 = vmatprep.mubr.f32.mxu0 0.0
        %1237 = vmatmul.mubr.f32.gmra.mrb[0].mxu0 %v954
        %v1238 = vpop.f32.mrb[0].mxu0
        %v1239 = vadd.f32 %v1005, %v1238
        %v1240 = vpop.f32.mrb[0].mxu0
        %1241 = vmatprep.mubr.f32.mxu0 0.0
        %1242 = vmatmul.mubr.f32.gmra.mrb[0].mxu0 %v955
        %v1243 = vpop.f32.mrb[0].mxu0
        %v1244 = vadd.f32 %v1005, %v1243
        %v1245 = vpop.f32.mrb[0].mxu0
        %1246 = vmatprep.mubr.f32.mxu0 0.0
        %1247 = vmatmul.mubr.f32.gmra.mrb[0].mxu0 %v956
        %v1248 = vpop.f32.mrb[0].mxu0
        %v1249 = vadd.f32 %v1005, %v1248
        %v1250 = vpop.f32.mrb[0].mxu0
        %1251 = vmatprep.mubr.f32.mxu0 0.0
        %1252 = vmatmul.mubr.f32.gmra.mrb[0].mxu0 %v957
        %v1253 = vpop.f32.mrb[0].mxu0
        %v1254 = vadd.f32 %v1005, %v1253
        %v1255 = vpop.f32.mrb[0].mxu0
        %1256 = vmatprep.mubr.f32.mxu0 0.0
        %1257 = vmatmul.mubr.f32.gmra.mrb[0].mxu0 %v958
        %v1258 = vpop.f32.mrb[0].mxu0
        %v1259 = vadd.f32 %v1005, %v1258
        %v1260 = vpop.f32.mrb[0].mxu0
        %1261 = vmatprep.mubr.f32.mxu0 0.0
        %1262 = vmatmul.mubr.f32.gmra.mrb[0].mxu0 %v959
        %v1263 = vpop.f32.mrb[0].mxu0
        %v1264 = vadd.f32 %v1005, %v1263
        %v1265 = vpop.f32.mrb[0].mxu0
        %1266 = vmatprep.mubr.f32.mxu0 0.0
        %1267 = vmatmul.mubr.f32.gmra.mrb[0].mxu0 %v960
        %v1268 = vpop.f32.mrb[0].mxu0
        %v1269 = vadd.f32 %v1005, %v1268
        %v1270 = vpop.f32.mrb[0].mxu0
        %1271 = vmatprep.mubr.f32.mxu0 0.0
        %1272 = vmatmul.mubr.f32.gmra.mrb[0].mxu0 %v961
        %v1273 = vpop.f32.mrb[0].mxu0
        %v1274 = vadd.f32 %v1005, %v1273
        %v1275 = vpop.f32.mrb[0].mxu0
        %1276 = vmatprep.mubr.f32.mxu0 0.0
        %1277 = vmatmul.mubr.f32.gmra.mrb[0].mxu0 %v962
        %v1278 = vpop.f32.mrb[0].mxu0
        %v1279 = vadd.f32 %v1005, %v1278
        %v1280 = vpop.f32.mrb[0].mxu0
        %1281 = vmatprep.mubr.f32.mxu0 0.0
        %1282 = vmatmul.mubr.f32.gmra.mrb[0].mxu0 %v963
        %v1283 = vpop.f32.mrb[0].mxu0
        %v1284 = vadd.f32 %v1005, %v1283
        %v1285 = vpop.f32.mrb[0].mxu0
        %1286 = vmatprep.mubr.f32.mxu0 0.0
        %1287 = vmatmul.mubr.f32.gmra.mrb[0].mxu0 %v964
        %v1288 = vpop.f32.mrb[0].mxu0
        %v1289 = vadd.f32 %v1005, %v1288
        %v1290 = vpop.f32.mrb[0].mxu0
        %1291 = vmatprep.mubr.f32.mxu0 0.0
        %1292 = vmatmul.mubr.f32.gmra.mrb[0].mxu0 %v965
        %v1293 = vpop.f32.mrb[0].mxu0
        %v1294 = vadd.f32 %v1005, %v1293
        %v1295 = vpop.f32.mrb[0].mxu0
        %1296 = vmatprep.mubr.f32.mxu0 0.0
        %1297 = vmatmul.mubr.f32.gmra.mrb[0].mxu0 %v966
        %v1298 = vpop.f32.mrb[0].mxu0
        %v1299 = vadd.f32 %v1005, %v1298
        %v1300 = vpop.f32.mrb[0].mxu0
        %1301 = vmatprep.mubr.f32.mxu0 0.0
        %1302 = vmatmul.mubr.f32.gmra.mrb[0].mxu0 %v967
        %v1303 = vpop.f32.mrb[0].mxu0
        %v1304 = vadd.f32 %v1005, %v1303
        %v1305 = vpop.f32.mrb[0].mxu0
        %1306 = vmatprep.mubr.f32.mxu0 0.0
        %1307 = vmatmul.mubr.f32.gmra.mrb[0].mxu0 %v968
        %v1308 = vpop.f32.mrb[0].mxu0
        %v1309 = vadd.f32 %v1005, %v1308
        %v1310 = vpop.f32.mrb[0].mxu0
        %1311 = vmatprep.mubr.f32.mxu0 0.0
        %1312 = vmatmul.mubr.f32.gmra.mrb[0].mxu0 %v969
        %v1313 = vpop.f32.mrb[0].mxu0
        %v1314 = vadd.f32 %v1005, %v1313
        %v1315 = vpop.f32.mrb[0].mxu0
        %1316 = vmatprep.mubr.f32.mxu0 0.0
        %1317 = vmatmul.mubr.f32.gmra.mrb[0].mxu0 %v970
        %v1318 = vpop.f32.mrb[0].mxu0
        %v1319 = vadd.f32 %v1005, %v1318
        %v1320 = vpop.f32.mrb[0].mxu0
        %1321 = vmatprep.mubr.f32.mxu0 0.0
        %1322 = vmatmul.mubr.f32.gmra.mrb[0].mxu0 %v971
        %v1323 = vpop.f32.mrb[0].mxu0
        %v1324 = vadd.f32 %v1005, %v1323
        %v1325 = vpop.f32.mrb[0].mxu0
        %1326 = vmatprep.mubr.f32.mxu0 0.0
        %1327 = vmatmul.mubr.f32.gmra.mrb[0].mxu0 %v972
        %v1328 = vpop.f32.mrb[0].mxu0
        %v1329 = vadd.f32 %v1005, %v1328
        %v1330 = vpop.f32.mrb[0].mxu0
        %1331 = vmatprep.mubr.f32.mxu0 0.0
        %1332 = vmatmul.mubr.f32.gmra.mrb[0].mxu0 %v973
        %v1333 = vpop.f32.mrb[0].mxu0
        %v1334 = vadd.f32 %v1005, %v1333
        %v1335 = vpop.f32.mrb[0].mxu0
        %1336 = vmatprep.mubr.f32.mxu0 0.0
        %1337 = vmatmul.mubr.f32.gmra.mrb[0].mxu0 %v974
        %v1338 = vpop.f32.mrb[0].mxu0
        %v1339 = vadd.f32 %v1005, %v1338
        %v1340 = vpop.f32.mrb[0].mxu0
        %1341 = vmatprep.mubr.f32.mxu0 0.0
        %1342 = vmatmul.mubr.f32.gmra.mrb[0].mxu0 %v975
        %v1343 = vpop.f32.mrb[0].mxu0
        %v1344 = vadd.f32 %v1005, %v1343
        %v1345 = vpop.f32.mrb[0].mxu0
        %1346 = vmatprep.mubr.f32.mxu0 0.0
        %1347 = vmatmul.mubr.f32.gmra.mrb[0].mxu0 %v976
        %v1348 = vpop.f32.mrb[0].mxu0
        %v1349 = vadd.f32 %v1005, %v1348
        %v1350 = vpop.f32.mrb[0].mxu0
        %1351 = vmatprep.mubr.f32.mxu0 0.0
        %1352 = vmatmul.mubr.f32.gmra.mrb[0].mxu0 %v977
        %v1353 = vpop.f32.mrb[0].mxu0
        %v1354 = vadd.f32 %v1005, %v1353
        %v1355 = vpop.f32.mrb[0].mxu0
        %1356 = vmatprep.mubr.f32.mxu0 0.0
        %1357 = vmatmul.mubr.f32.gmra.mrb[0].mxu0 %v978
        %v1358 = vpop.f32.mrb[0].mxu0
        %v1359 = vadd.f32 %v1005, %v1358
        %v1360 = vpop.f32.mrb[0].mxu0
        %1361 = vmatprep.mubr.f32.mxu0 0.0
        %1362 = vmatmul.mubr.f32.gmra.mrb[0].mxu0 %v979
        %v1363 = vpop.f32.mrb[0].mxu0
        %v1364 = vadd.f32 %v1005, %v1363
        %v1365 = vpop.f32.mrb[0].mxu0
        %1366 = vmatprep.mubr.f32.mxu0 0.0
        %1367 = vmatmul.mubr.f32.gmra.mrb[0].mxu0 %v980
        %v1368 = vpop.f32.mrb[0].mxu0
        %v1369 = vadd.f32 %v1005, %v1368
        %v1370 = vpop.f32.mrb[0].mxu0
        %1371 = vmatprep.mubr.f32.mxu0 0.0
        %1372 = vmatmul.mubr.f32.gmra.mrb[0].mxu0 %v981
        %v1373 = vpop.f32.mrb[0].mxu0
        %v1374 = vadd.f32 %v1005, %v1373
        %v1375 = vpop.f32.mrb[0].mxu0
        %1376 = vmatprep.mubr.f32.mxu0 0.0
        %1377 = vmatmul.mubr.f32.gmra.mrb[0].mxu0 %v982
        %v1378 = vpop.f32.mrb[0].mxu0
        %v1379 = vadd.f32 %v1005, %v1378
        %v1380 = vpop.f32.mrb[0].mxu0
        %1381 = vmatprep.mubr.f32.mxu0 0.0
        %1382 = vmatmul.mubr.f32.gmra.mrb[0].mxu0 %v983
        %v1383 = vpop.f32.mrb[0].mxu0
        %v1384 = vadd.f32 %v1005, %v1383
        %v1385 = vpop.f32.mrb[0].mxu0
        %1386 = vmatprep.mubr.f32.mxu0 0.0
        %1387 = vmatmul.mubr.f32.gmra.mrb[0].mxu0 %v984
        %v1388 = vpop.f32.mrb[0].mxu0
        %v1389 = vadd.f32 %v1005, %v1388
        %v1390 = vpop.f32.mrb[0].mxu0
        %1391 = vdwg.mxu0
        %v1392 = vmul.f32 %v1074, 0.01
        %v1393 = vmul.f32 %v1079, 0.01
        %v1394 = vmul.f32 %v1084, 0.01
        %v1395 = vmul.f32 %v1089, 0.01
        %v1396 = vmul.f32 %v1094, 0.01
        %v1397 = vmul.f32 %v1099, 0.01
        %v1398 = vmul.f32 %v1104, 0.01
        %v1399 = vmul.f32 %v1109, 0.01
        %v1400 = vmul.f32 %v1114, 0.01
        %v1401 = vmul.f32 %v1119, 0.01
        %v1402 = vmul.f32 %v1124, 0.01
        %v1403 = vmul.f32 %v1129, 0.01
        %v1404 = vmul.f32 %v1134, 0.01
        %v1405 = vmul.f32 %v1139, 0.01
        %v1406 = vmul.f32 %v1144, 0.01
        %v1407 = vmul.f32 %v1149, 0.01
        %v1408 = vmul.f32 %v1154, 0.01
        %v1409 = vmul.f32 %v1159, 0.01
        %v1410 = vmul.f32 %v1164, 0.01
        %v1411 = vmul.f32 %v1169, 0.01
        %v1412 = vmul.f32 %v1174, 0.01
        %v1413 = vmul.f32 %v1179, 0.01
        %v1414 = vmul.f32 %v1184, 0.01
        %v1415 = vmul.f32 %v1189, 0.01
        %v1416 = vmul.f32 %v1194, 0.01
        %v1417 = vmul.f32 %v1199, 0.01
        %v1418 = vmul.f32 %v1204, 0.01
        %v1419 = vmul.f32 %v1209, 0.01
        %v1420 = vmul.f32 %v1214, 0.01
        %v1421 = vmul.f32 %v1219, 0.01
        %v1422 = vmul.f32 %v1224, 0.01
        %v1423 = vmul.f32 %v1229, 0.01
        %v1424 = vmul.f32 %v1234, 0.01
        %v1425 = vmul.f32 %v1239, 0.01
        %v1426 = vmul.f32 %v1244, 0.01
        %v1427 = vmul.f32 %v1249, 0.01
        %v1428 = vmul.f32 %v1254, 0.01
        %v1429 = vmul.f32 %v1259, 0.01
        %v1430 = vmul.f32 %v1264, 0.01
        %v1431 = vmul.f32 %v1269, 0.01
        %v1432 = vmul.f32 %v1274, 0.01
        %v1433 = vmul.f32 %v1279, 0.01
        %v1434 = vmul.f32 %v1284, 0.01
        %v1435 = vmul.f32 %v1289, 0.01
        %v1436 = vmul.f32 %v1294, 0.01
        %v1437 = vmul.f32 %v1299, 0.01
        %v1438 = vmul.f32 %v1304, 0.01
        %v1439 = vmul.f32 %v1309, 0.01
        %v1440 = vmul.f32 %v1314, 0.01
        %v1441 = vmul.f32 %v1319, 0.01
        %v1442 = vmul.f32 %v1324, 0.01
        %v1443 = vmul.f32 %v1329, 0.01
        %v1444 = vmul.f32 %v1334, 0.01
        %v1445 = vmul.f32 %v1339, 0.01
        %v1446 = vmul.f32 %v1344, 0.01
        %v1447 = vmul.f32 %v1349, 0.01
        %v1448 = vmul.f32 %v1354, 0.01
        %v1449 = vmul.f32 %v1359, 0.01
        %v1450 = vmul.f32 %v1364, 0.01
        %v1451 = vmul.f32 %v1369, 0.01
        %v1452 = vmul.f32 %v1374, 0.01
        %v1453 = vmul.f32 %v1379, 0.01
        %v1454 = vmul.f32 %v1384, 0.01
        %v1455 = vmul.f32 %v1389, 0.01
        %v1456 = vmax.f32 %v1074, %v1392
        %v1457 = vmax.f32 %v1079, %v1393
        %v1458 = vmax.f32 %v1084, %v1394
        %v1459 = vmax.f32 %v1089, %v1395
        %v1460 = vmax.f32 %v1094, %v1396
        %v1461 = vmax.f32 %v1099, %v1397
        %v1462 = vmax.f32 %v1104, %v1398
        %v1463 = vmax.f32 %v1109, %v1399
        %v1464 = vmax.f32 %v1114, %v1400
        %v1465 = vmax.f32 %v1119, %v1401
        %v1466 = vmax.f32 %v1124, %v1402
        %v1467 = vmax.f32 %v1129, %v1403
        %v1468 = vmax.f32 %v1134, %v1404
        %v1469 = vmax.f32 %v1139, %v1405
        %v1470 = vmax.f32 %v1144, %v1406
        %v1471 = vmax.f32 %v1149, %v1407
        %v1472 = vmax.f32 %v1154, %v1408
        %v1473 = vmax.f32 %v1159, %v1409
        %v1474 = vmax.f32 %v1164, %v1410
        %v1475 = vmax.f32 %v1169, %v1411
        %v1476 = vmax.f32 %v1174, %v1412
        %v1477 = vmax.f32 %v1179, %v1413
        %v1478 = vmax.f32 %v1184, %v1414
        %v1479 = vmax.f32 %v1189, %v1415
        %v1480 = vmax.f32 %v1194, %v1416
        %v1481 = vmax.f32 %v1199, %v1417
        %v1482 = vmax.f32 %v1204, %v1418
        %v1483 = vmax.f32 %v1209, %v1419
        %v1484 = vmax.f32 %v1214, %v1420
        %v1485 = vmax.f32 %v1219, %v1421
        %v1486 = vmax.f32 %v1224, %v1422
        %v1487 = vmax.f32 %v1229, %v1423
        %v1488 = vmax.f32 %v1234, %v1424
        %v1489 = vmax.f32 %v1239, %v1425
        %v1490 = vmax.f32 %v1244, %v1426
        %v1491 = vmax.f32 %v1249, %v1427
        %v1492 = vmax.f32 %v1254, %v1428
        %v1493 = vmax.f32 %v1259, %v1429
        %v1494 = vmax.f32 %v1264, %v1430
        %v1495 = vmax.f32 %v1269, %v1431
        %v1496 = vmax.f32 %v1274, %v1432
        %v1497 = vmax.f32 %v1279, %v1433
        %v1498 = vmax.f32 %v1284, %v1434
        %v1499 = vmax.f32 %v1289, %v1435
        %v1500 = vmax.f32 %v1294, %v1436
        %v1501 = vmax.f32 %v1299, %v1437
        %v1502 = vmax.f32 %v1304, %v1438
        %v1503 = vmax.f32 %v1309, %v1439
        %v1504 = vmax.f32 %v1314, %v1440
        %v1505 = vmax.f32 %v1319, %v1441
        %v1506 = vmax.f32 %v1324, %v1442
        %v1507 = vmax.f32 %v1329, %v1443
        %v1508 = vmax.f32 %v1334, %v1444
        %v1509 = vmax.f32 %v1339, %v1445
        %v1510 = vmax.f32 %v1344, %v1446
        %v1511 = vmax.f32 %v1349, %v1447
        %v1512 = vmax.f32 %v1354, %v1448
        %v1513 = vmax.f32 %v1359, %v1449
        %v1514 = vmax.f32 %v1364, %v1450
        %v1515 = vmax.f32 %v1369, %v1451
        %v1516 = vmax.f32 %v1374, %v1452
        %v1517 = vmax.f32 %v1379, %v1453
        %v1518 = vmax.f32 %v1384, %v1454
        %v1519 = vmax.f32 %v1389, %v1455
        %s1520 = scalar_lea.vmem %s2, 128
        %v1521 = vld [vmem:[%s1520] sm:$0xff]
        %v1522 = vld [vmem:[%s1520 + $0x8] sm:$0xff]
        %v1523 = vld [vmem:[%s1520 + $0x10] sm:$0xff]
        %v1524 = vld [vmem:[%s1520 + $0x18] sm:$0xff]
        %v1525 = vld [vmem:[%s1520 + $0x20] sm:$0xff]
        %v1526 = vld [vmem:[%s1520 + $0x28] sm:$0xff]
        %v1527 = vld [vmem:[%s1520 + $0x30] sm:$0xff]
        %v1528 = vld [vmem:[%s1520 + $0x38] sm:$0xff]
        %v1529 = vld [vmem:[%s1520 + $0x40] sm:$0xff]
        %v1530 = vld [vmem:[%s1520 + $0x48] sm:$0xff]
        %v1531 = vld [vmem:[%s1520 + $0x50] sm:$0xff]
        %v1532 = vld [vmem:[%s1520 + $0x58] sm:$0xff]
        %v1533 = vld [vmem:[%s1520 + $0x60] sm:$0xff]
        %v1534 = vld [vmem:[%s1520 + $0x68] sm:$0xff]
        %v1535 = vld [vmem:[%s1520 + $0x70] sm:$0xff]
        %v1536 = vld [vmem:[%s1520 + $0x78] sm:$0xff]
        %v1538 = vlaneseq
        %v1539 = vshrl.u32 %v1538, 7
        %v1540 = vsub.s32 0, %v1539
        %v1541 = vrot.slane %v201, %v1540
        %1543 = vmatprep.subr.mxu0 0.0
        %1544 = vmatpush1.msra.mxu0 %v1521
        %1545 = vmatprep.subr.mxu0 0.0
        %1546 = vmatpush1.msra.mxu0 %v1522
        %1547 = vmatprep.subr.mxu0 0.0
        %1548 = vmatpush1.msra.mxu0 %v1523
        %1549 = vmatprep.subr.mxu0 0.0
        %1550 = vmatpush1.msra.mxu0 %v1524
        %1551 = vmatprep.subr.mxu0 0.0
        %1552 = vmatpush1.msra.mxu0 %v1525
        %1553 = vmatprep.subr.mxu0 0.0
        %1554 = vmatpush1.msra.mxu0 %v1526
        %1555 = vmatprep.subr.mxu0 0.0
        %1556 = vmatpush1.msra.mxu0 %v1527
        %1557 = vmatprep.subr.mxu0 0.0
        %1558 = vmatpush1.msra.mxu0 %v1528
        %1559 = vmatprep.subr.mxu0 0.0
        %1560 = vmatpush1.msra.mxu0 %v1529
        %1561 = vmatprep.subr.mxu0 0.0
        %1562 = vmatpush1.msra.mxu0 %v1530
        %1563 = vmatprep.subr.mxu0 0.0
        %1564 = vmatpush1.msra.mxu0 %v1531
        %1565 = vmatprep.subr.mxu0 0.0
        %1566 = vmatpush1.msra.mxu0 %v1532
        %1567 = vmatprep.subr.mxu0 0.0
        %1568 = vmatpush1.msra.mxu0 %v1533
        %1569 = vmatprep.subr.mxu0 0.0
        %1570 = vmatpush1.msra.mxu0 %v1534
        %1571 = vmatprep.subr.mxu0 0.0
        %1572 = vmatpush1.msra.mxu0 %v1535
        %1573 = vmatprep.subr.mxu0 0.0
        %1574 = vmatpush1.msra.mxu0 %v1536
        %1575 = vmatprep.subr.mxu0 0.0
        %1576 = vmatpush1.msra.mxu0 0.0
        %1577 = vmatprep.subr.mxu0 0.0
        %1578 = vmatpush1.msra.mxu0 0.0
        %1579 = vmatprep.subr.mxu0 0.0
        %1580 = vmatpush1.msra.mxu0 0.0
        %1581 = vmatprep.subr.mxu0 0.0
        %1582 = vmatpush1.msra.mxu0 0.0
        %1583 = vmatprep.subr.mxu0 0.0
        %1584 = vmatpush1.msra.mxu0 0.0
        %1585 = vmatprep.subr.mxu0 0.0
        %1586 = vmatpush1.msra.mxu0 0.0
        %1587 = vmatprep.subr.mxu0 0.0
        %1588 = vmatpush1.msra.mxu0 0.0
        %1589 = vmatprep.subr.mxu0 0.0
        %1590 = vmatpush1.msra.mxu0 0.0
        %1591 = vmatprep.subr.mxu0 0.0
        %1592 = vmatpush1.msra.mxu0 0.0
        %1593 = vmatprep.subr.mxu0 0.0
        %1594 = vmatpush1.msra.mxu0 0.0
        %1595 = vmatprep.subr.mxu0 0.0
        %1596 = vmatpush1.msra.mxu0 0.0
        %1597 = vmatprep.subr.mxu0 0.0
        %1598 = vmatpush1.msra.mxu0 0.0
        %1599 = vmatprep.subr.mxu0 0.0
        %1600 = vmatpush1.msra.mxu0 0.0
        %1601 = vmatprep.subr.mxu0 0.0
        %1602 = vmatpush1.msra.mxu0 0.0
        %1603 = vmatprep.subr.mxu0 0.0
        %1604 = vmatpush1.msra.mxu0 0.0
        %1605 = vmatprep.subr.mxu0 0.0
        %1606 = vmatpush1.msra.mxu0 0.0
        %1607 = vmatprep.mubr.f32.mxu0 0.0
        %1608 = vmatmul.mubr.f32.gmra.mrb[0].mxu0 %v1456
        %v1609 = vpop.f32.mrb[0].mxu0
        %v1610 = vadd.f32 %v1541, %v1609
        %v1611 = vpop.f32.mrb[0].mxu0
        %1612 = vmatprep.mubr.f32.mxu0 0.0
        %1613 = vmatmul.mubr.f32.gmra.mrb[0].mxu0 %v1457
        %v1614 = vpop.f32.mrb[0].mxu0
        %v1615 = vadd.f32 %v1541, %v1614
        %v1616 = vpop.f32.mrb[0].mxu0
        %1617 = vmatprep.mubr.f32.mxu0 0.0
        %1618 = vmatmul.mubr.f32.gmra.mrb[0].mxu0 %v1458
        %v1619 = vpop.f32.mrb[0].mxu0
        %v1620 = vadd.f32 %v1541, %v1619
        %v1621 = vpop.f32.mrb[0].mxu0
        %1622 = vmatprep.mubr.f32.mxu0 0.0
        %1623 = vmatmul.mubr.f32.gmra.mrb[0].mxu0 %v1459
        %v1624 = vpop.f32.mrb[0].mxu0
        %v1625 = vadd.f32 %v1541, %v1624
        %v1626 = vpop.f32.mrb[0].mxu0
        %1627 = vmatprep.mubr.f32.mxu0 0.0
        %1628 = vmatmul.mubr.f32.gmra.mrb[0].mxu0 %v1460
        %v1629 = vpop.f32.mrb[0].mxu0
        %v1630 = vadd.f32 %v1541, %v1629
        %v1631 = vpop.f32.mrb[0].mxu0
        %1632 = vmatprep.mubr.f32.mxu0 0.0
        %1633 = vmatmul.mubr.f32.gmra.mrb[0].mxu0 %v1461
        %v1634 = vpop.f32.mrb[0].mxu0
        %v1635 = vadd.f32 %v1541, %v1634
        %v1636 = vpop.f32.mrb[0].mxu0
        %1637 = vmatprep.mubr.f32.mxu0 0.0
        %1638 = vmatmul.mubr.f32.gmra.mrb[0].mxu0 %v1462
        %v1639 = vpop.f32.mrb[0].mxu0
        %v1640 = vadd.f32 %v1541, %v1639
        %v1641 = vpop.f32.mrb[0].mxu0
        %1642 = vmatprep.mubr.f32.mxu0 0.0
        %1643 = vmatmul.mubr.f32.gmra.mrb[0].mxu0 %v1463
        %v1644 = vpop.f32.mrb[0].mxu0
        %v1645 = vadd.f32 %v1541, %v1644
        %v1646 = vpop.f32.mrb[0].mxu0
        %1647 = vmatprep.mubr.f32.mxu0 0.0
        %1648 = vmatmul.mubr.f32.gmra.mrb[0].mxu0 %v1464
        %v1649 = vpop.f32.mrb[0].mxu0
        %v1650 = vadd.f32 %v1541, %v1649
        %v1651 = vpop.f32.mrb[0].mxu0
        %1652 = vmatprep.mubr.f32.mxu0 0.0
        %1653 = vmatmul.mubr.f32.gmra.mrb[0].mxu0 %v1465
        %v1654 = vpop.f32.mrb[0].mxu0
        %v1655 = vadd.f32 %v1541, %v1654
        %v1656 = vpop.f32.mrb[0].mxu0
        %1657 = vmatprep.mubr.f32.mxu0 0.0
        %1658 = vmatmul.mubr.f32.gmra.mrb[0].mxu0 %v1466
        %v1659 = vpop.f32.mrb[0].mxu0
        %v1660 = vadd.f32 %v1541, %v1659
        %v1661 = vpop.f32.mrb[0].mxu0
        %1662 = vmatprep.mubr.f32.mxu0 0.0
        %1663 = vmatmul.mubr.f32.gmra.mrb[0].mxu0 %v1467
        %v1664 = vpop.f32.mrb[0].mxu0
        %v1665 = vadd.f32 %v1541, %v1664
        %v1666 = vpop.f32.mrb[0].mxu0
        %1667 = vmatprep.mubr.f32.mxu0 0.0
        %1668 = vmatmul.mubr.f32.gmra.mrb[0].mxu0 %v1468
        %v1669 = vpop.f32.mrb[0].mxu0
        %v1670 = vadd.f32 %v1541, %v1669
        %v1671 = vpop.f32.mrb[0].mxu0
        %1672 = vmatprep.mubr.f32.mxu0 0.0
        %1673 = vmatmul.mubr.f32.gmra.mrb[0].mxu0 %v1469
        %v1674 = vpop.f32.mrb[0].mxu0
        %v1675 = vadd.f32 %v1541, %v1674
        %v1676 = vpop.f32.mrb[0].mxu0
        %1677 = vmatprep.mubr.f32.mxu0 0.0
        %1678 = vmatmul.mubr.f32.gmra.mrb[0].mxu0 %v1470
        %v1679 = vpop.f32.mrb[0].mxu0
        %v1680 = vadd.f32 %v1541, %v1679
        %v1681 = vpop.f32.mrb[0].mxu0
        %1682 = vmatprep.mubr.f32.mxu0 0.0
        %1683 = vmatmul.mubr.f32.gmra.mrb[0].mxu0 %v1471
        %v1684 = vpop.f32.mrb[0].mxu0
        %v1685 = vadd.f32 %v1541, %v1684
        %v1686 = vpop.f32.mrb[0].mxu0
        %1687 = vmatprep.mubr.f32.mxu0 0.0
        %1688 = vmatmul.mubr.f32.gmra.mrb[0].mxu0 %v1472
        %v1689 = vpop.f32.mrb[0].mxu0
        %v1690 = vadd.f32 %v1541, %v1689
        %v1691 = vpop.f32.mrb[0].mxu0
        %1692 = vmatprep.mubr.f32.mxu0 0.0
        %1693 = vmatmul.mubr.f32.gmra.mrb[0].mxu0 %v1473
        %v1694 = vpop.f32.mrb[0].mxu0
        %v1695 = vadd.f32 %v1541, %v1694
        %v1696 = vpop.f32.mrb[0].mxu0
        %1697 = vmatprep.mubr.f32.mxu0 0.0
        %1698 = vmatmul.mubr.f32.gmra.mrb[0].mxu0 %v1474
        %v1699 = vpop.f32.mrb[0].mxu0
        %v1700 = vadd.f32 %v1541, %v1699
        %v1701 = vpop.f32.mrb[0].mxu0
        %1702 = vmatprep.mubr.f32.mxu0 0.0
        %1703 = vmatmul.mubr.f32.gmra.mrb[0].mxu0 %v1475
        %v1704 = vpop.f32.mrb[0].mxu0
        %v1705 = vadd.f32 %v1541, %v1704
        %v1706 = vpop.f32.mrb[0].mxu0
        %1707 = vmatprep.mubr.f32.mxu0 0.0
        %1708 = vmatmul.mubr.f32.gmra.mrb[0].mxu0 %v1476
        %v1709 = vpop.f32.mrb[0].mxu0
        %v1710 = vadd.f32 %v1541, %v1709
        %v1711 = vpop.f32.mrb[0].mxu0
        %1712 = vmatprep.mubr.f32.mxu0 0.0
        %1713 = vmatmul.mubr.f32.gmra.mrb[0].mxu0 %v1477
        %v1714 = vpop.f32.mrb[0].mxu0
        %v1715 = vadd.f32 %v1541, %v1714
        %v1716 = vpop.f32.mrb[0].mxu0
        %1717 = vmatprep.mubr.f32.mxu0 0.0
        %1718 = vmatmul.mubr.f32.gmra.mrb[0].mxu0 %v1478
        %v1719 = vpop.f32.mrb[0].mxu0
        %v1720 = vadd.f32 %v1541, %v1719
        %v1721 = vpop.f32.mrb[0].mxu0
        %1722 = vmatprep.mubr.f32.mxu0 0.0
        %1723 = vmatmul.mubr.f32.gmra.mrb[0].mxu0 %v1479
        %v1724 = vpop.f32.mrb[0].mxu0
        %v1725 = vadd.f32 %v1541, %v1724
        %v1726 = vpop.f32.mrb[0].mxu0
        %1727 = vmatprep.mubr.f32.mxu0 0.0
        %1728 = vmatmul.mubr.f32.gmra.mrb[0].mxu0 %v1480
        %v1729 = vpop.f32.mrb[0].mxu0
        %v1730 = vadd.f32 %v1541, %v1729
        %v1731 = vpop.f32.mrb[0].mxu0
        %1732 = vmatprep.mubr.f32.mxu0 0.0
        %1733 = vmatmul.mubr.f32.gmra.mrb[0].mxu0 %v1481
        %v1734 = vpop.f32.mrb[0].mxu0
        %v1735 = vadd.f32 %v1541, %v1734
        %v1736 = vpop.f32.mrb[0].mxu0
        %1737 = vmatprep.mubr.f32.mxu0 0.0
        %1738 = vmatmul.mubr.f32.gmra.mrb[0].mxu0 %v1482
        %v1739 = vpop.f32.mrb[0].mxu0
        %v1740 = vadd.f32 %v1541, %v1739
        %v1741 = vpop.f32.mrb[0].mxu0
        %1742 = vmatprep.mubr.f32.mxu0 0.0
        %1743 = vmatmul.mubr.f32.gmra.mrb[0].mxu0 %v1483
        %v1744 = vpop.f32.mrb[0].mxu0
        %v1745 = vadd.f32 %v1541, %v1744
        %v1746 = vpop.f32.mrb[0].mxu0
        %1747 = vmatprep.mubr.f32.mxu0 0.0
        %1748 = vmatmul.mubr.f32.gmra.mrb[0].mxu0 %v1484
        %v1749 = vpop.f32.mrb[0].mxu0
        %v1750 = vadd.f32 %v1541, %v1749
        %v1751 = vpop.f32.mrb[0].mxu0
        %1752 = vmatprep.mubr.f32.mxu0 0.0
        %1753 = vmatmul.mubr.f32.gmra.mrb[0].mxu0 %v1485
        %v1754 = vpop.f32.mrb[0].mxu0
        %v1755 = vadd.f32 %v1541, %v1754
        %v1756 = vpop.f32.mrb[0].mxu0
        %1757 = vmatprep.mubr.f32.mxu0 0.0
        %1758 = vmatmul.mubr.f32.gmra.mrb[0].mxu0 %v1486
        %v1759 = vpop.f32.mrb[0].mxu0
        %v1760 = vadd.f32 %v1541, %v1759
        %v1761 = vpop.f32.mrb[0].mxu0
        %1762 = vmatprep.mubr.f32.mxu0 0.0
        %1763 = vmatmul.mubr.f32.gmra.mrb[0].mxu0 %v1487
        %v1764 = vpop.f32.mrb[0].mxu0
        %v1765 = vadd.f32 %v1541, %v1764
        %v1766 = vpop.f32.mrb[0].mxu0
        %1767 = vmatprep.mubr.f32.mxu0 0.0
        %1768 = vmatmul.mubr.f32.gmra.mrb[0].mxu0 %v1488
        %v1769 = vpop.f32.mrb[0].mxu0
        %v1770 = vadd.f32 %v1541, %v1769
        %v1771 = vpop.f32.mrb[0].mxu0
        %1772 = vmatprep.mubr.f32.mxu0 0.0
        %1773 = vmatmul.mubr.f32.gmra.mrb[0].mxu0 %v1489
        %v1774 = vpop.f32.mrb[0].mxu0
        %v1775 = vadd.f32 %v1541, %v1774
        %v1776 = vpop.f32.mrb[0].mxu0
        %1777 = vmatprep.mubr.f32.mxu0 0.0
        %1778 = vmatmul.mubr.f32.gmra.mrb[0].mxu0 %v1490
        %v1779 = vpop.f32.mrb[0].mxu0
        %v1780 = vadd.f32 %v1541, %v1779
        %v1781 = vpop.f32.mrb[0].mxu0
        %1782 = vmatprep.mubr.f32.mxu0 0.0
        %1783 = vmatmul.mubr.f32.gmra.mrb[0].mxu0 %v1491
        %v1784 = vpop.f32.mrb[0].mxu0
        %v1785 = vadd.f32 %v1541, %v1784
        %v1786 = vpop.f32.mrb[0].mxu0
        %1787 = vmatprep.mubr.f32.mxu0 0.0
        %1788 = vmatmul.mubr.f32.gmra.mrb[0].mxu0 %v1492
        %v1789 = vpop.f32.mrb[0].mxu0
        %v1790 = vadd.f32 %v1541, %v1789
        %v1791 = vpop.f32.mrb[0].mxu0
        %1792 = vmatprep.mubr.f32.mxu0 0.0
        %1793 = vmatmul.mubr.f32.gmra.mrb[0].mxu0 %v1493
        %v1794 = vpop.f32.mrb[0].mxu0
        %v1795 = vadd.f32 %v1541, %v1794
        %v1796 = vpop.f32.mrb[0].mxu0
        %1797 = vmatprep.mubr.f32.mxu0 0.0
        %1798 = vmatmul.mubr.f32.gmra.mrb[0].mxu0 %v1494
        %v1799 = vpop.f32.mrb[0].mxu0
        %v1800 = vadd.f32 %v1541, %v1799
        %v1801 = vpop.f32.mrb[0].mxu0
        %1802 = vmatprep.mubr.f32.mxu0 0.0
        %1803 = vmatmul.mubr.f32.gmra.mrb[0].mxu0 %v1495
        %v1804 = vpop.f32.mrb[0].mxu0
        %v1805 = vadd.f32 %v1541, %v1804
        %v1806 = vpop.f32.mrb[0].mxu0
        %1807 = vmatprep.mubr.f32.mxu0 0.0
        %1808 = vmatmul.mubr.f32.gmra.mrb[0].mxu0 %v1496
        %v1809 = vpop.f32.mrb[0].mxu0
        %v1810 = vadd.f32 %v1541, %v1809
        %v1811 = vpop.f32.mrb[0].mxu0
        %1812 = vmatprep.mubr.f32.mxu0 0.0
        %1813 = vmatmul.mubr.f32.gmra.mrb[0].mxu0 %v1497
        %v1814 = vpop.f32.mrb[0].mxu0
        %v1815 = vadd.f32 %v1541, %v1814
        %v1816 = vpop.f32.mrb[0].mxu0
        %1817 = vmatprep.mubr.f32.mxu0 0.0
        %1818 = vmatmul.mubr.f32.gmra.mrb[0].mxu0 %v1498
        %v1819 = vpop.f32.mrb[0].mxu0
        %v1820 = vadd.f32 %v1541, %v1819
        %v1821 = vpop.f32.mrb[0].mxu0
        %1822 = vmatprep.mubr.f32.mxu0 0.0
        %1823 = vmatmul.mubr.f32.gmra.mrb[0].mxu0 %v1499
        %v1824 = vpop.f32.mrb[0].mxu0
        %v1825 = vadd.f32 %v1541, %v1824
        %v1826 = vpop.f32.mrb[0].mxu0
        %1827 = vmatprep.mubr.f32.mxu0 0.0
        %1828 = vmatmul.mubr.f32.gmra.mrb[0].mxu0 %v1500
        %v1829 = vpop.f32.mrb[0].mxu0
        %v1830 = vadd.f32 %v1541, %v1829
        %v1831 = vpop.f32.mrb[0].mxu0
        %1832 = vmatprep.mubr.f32.mxu0 0.0
        %1833 = vmatmul.mubr.f32.gmra.mrb[0].mxu0 %v1501
        %v1834 = vpop.f32.mrb[0].mxu0
        %v1835 = vadd.f32 %v1541, %v1834
        %v1836 = vpop.f32.mrb[0].mxu0
        %1837 = vmatprep.mubr.f32.mxu0 0.0
        %1838 = vmatmul.mubr.f32.gmra.mrb[0].mxu0 %v1502
        %v1839 = vpop.f32.mrb[0].mxu0
        %v1840 = vadd.f32 %v1541, %v1839
        %v1841 = vpop.f32.mrb[0].mxu0
        %1842 = vmatprep.mubr.f32.mxu0 0.0
        %1843 = vmatmul.mubr.f32.gmra.mrb[0].mxu0 %v1503
        %v1844 = vpop.f32.mrb[0].mxu0
        %v1845 = vadd.f32 %v1541, %v1844
        %v1846 = vpop.f32.mrb[0].mxu0
        %1847 = vmatprep.mubr.f32.mxu0 0.0
        %1848 = vmatmul.mubr.f32.gmra.mrb[0].mxu0 %v1504
        %v1849 = vpop.f32.mrb[0].mxu0
        %v1850 = vadd.f32 %v1541, %v1849
        %v1851 = vpop.f32.mrb[0].mxu0
        %1852 = vmatprep.mubr.f32.mxu0 0.0
        %1853 = vmatmul.mubr.f32.gmra.mrb[0].mxu0 %v1505
        %v1854 = vpop.f32.mrb[0].mxu0
        %v1855 = vadd.f32 %v1541, %v1854
        %v1856 = vpop.f32.mrb[0].mxu0
        %1857 = vmatprep.mubr.f32.mxu0 0.0
        %1858 = vmatmul.mubr.f32.gmra.mrb[0].mxu0 %v1506
        %v1859 = vpop.f32.mrb[0].mxu0
        %v1860 = vadd.f32 %v1541, %v1859
        %v1861 = vpop.f32.mrb[0].mxu0
        %1862 = vmatprep.mubr.f32.mxu0 0.0
        %1863 = vmatmul.mubr.f32.gmra.mrb[0].mxu0 %v1507
        %v1864 = vpop.f32.mrb[0].mxu0
        %v1865 = vadd.f32 %v1541, %v1864
        %v1866 = vpop.f32.mrb[0].mxu0
        %1867 = vmatprep.mubr.f32.mxu0 0.0
        %1868 = vmatmul.mubr.f32.gmra.mrb[0].mxu0 %v1508
        %v1869 = vpop.f32.mrb[0].mxu0
        %v1870 = vadd.f32 %v1541, %v1869
        %v1871 = vpop.f32.mrb[0].mxu0
        %1872 = vmatprep.mubr.f32.mxu0 0.0
        %1873 = vmatmul.mubr.f32.gmra.mrb[0].mxu0 %v1509
        %v1874 = vpop.f32.mrb[0].mxu0
        %v1875 = vadd.f32 %v1541, %v1874
        %v1876 = vpop.f32.mrb[0].mxu0
        %1877 = vmatprep.mubr.f32.mxu0 0.0
        %1878 = vmatmul.mubr.f32.gmra.mrb[0].mxu0 %v1510
        %v1879 = vpop.f32.mrb[0].mxu0
        %v1880 = vadd.f32 %v1541, %v1879
        %v1881 = vpop.f32.mrb[0].mxu0
        %1882 = vmatprep.mubr.f32.mxu0 0.0
        %1883 = vmatmul.mubr.f32.gmra.mrb[0].mxu0 %v1511
        %v1884 = vpop.f32.mrb[0].mxu0
        %v1885 = vadd.f32 %v1541, %v1884
        %v1886 = vpop.f32.mrb[0].mxu0
        %1887 = vmatprep.mubr.f32.mxu0 0.0
        %1888 = vmatmul.mubr.f32.gmra.mrb[0].mxu0 %v1512
        %v1889 = vpop.f32.mrb[0].mxu0
        %v1890 = vadd.f32 %v1541, %v1889
        %v1891 = vpop.f32.mrb[0].mxu0
        %1892 = vmatprep.mubr.f32.mxu0 0.0
        %1893 = vmatmul.mubr.f32.gmra.mrb[0].mxu0 %v1513
        %v1894 = vpop.f32.mrb[0].mxu0
        %v1895 = vadd.f32 %v1541, %v1894
        %v1896 = vpop.f32.mrb[0].mxu0
        %1897 = vmatprep.mubr.f32.mxu0 0.0
        %1898 = vmatmul.mubr.f32.gmra.mrb[0].mxu0 %v1514
        %v1899 = vpop.f32.mrb[0].mxu0
        %v1900 = vadd.f32 %v1541, %v1899
        %v1901 = vpop.f32.mrb[0].mxu0
        %1902 = vmatprep.mubr.f32.mxu0 0.0
        %1903 = vmatmul.mubr.f32.gmra.mrb[0].mxu0 %v1515
        %v1904 = vpop.f32.mrb[0].mxu0
        %v1905 = vadd.f32 %v1541, %v1904
        %v1906 = vpop.f32.mrb[0].mxu0
        %1907 = vmatprep.mubr.f32.mxu0 0.0
        %1908 = vmatmul.mubr.f32.gmra.mrb[0].mxu0 %v1516
        %v1909 = vpop.f32.mrb[0].mxu0
        %v1910 = vadd.f32 %v1541, %v1909
        %v1911 = vpop.f32.mrb[0].mxu0
        %1912 = vmatprep.mubr.f32.mxu0 0.0
        %1913 = vmatmul.mubr.f32.gmra.mrb[0].mxu0 %v1517
        %v1914 = vpop.f32.mrb[0].mxu0
        %v1915 = vadd.f32 %v1541, %v1914
        %v1916 = vpop.f32.mrb[0].mxu0
        %1917 = vmatprep.mubr.f32.mxu0 0.0
        %1918 = vmatmul.mubr.f32.gmra.mrb[0].mxu0 %v1518
        %v1919 = vpop.f32.mrb[0].mxu0
        %v1920 = vadd.f32 %v1541, %v1919
        %v1921 = vpop.f32.mrb[0].mxu0
        %1922 = vmatprep.mubr.f32.mxu0 0.0
        %1923 = vmatmul.mubr.f32.gmra.mrb[0].mxu0 %v1519
        %v1924 = vpop.f32.mrb[0].mxu0
        %v1925 = vadd.f32 %v1541, %v1924
        %v1926 = vpop.f32.mrb[0].mxu0
        %1927 = vdwg.mxu0
        %v1928 = vmax.f32 %v1610, 0.0
        %v1929 = vmax.f32 %v1615, 0.0
        %v1930 = vmax.f32 %v1620, 0.0
        %v1931 = vmax.f32 %v1625, 0.0
        %v1932 = vmax.f32 %v1630, 0.0
        %v1933 = vmax.f32 %v1635, 0.0
        %v1934 = vmax.f32 %v1640, 0.0
        %v1935 = vmax.f32 %v1645, 0.0
        %v1936 = vmax.f32 %v1650, 0.0
        %v1937 = vmax.f32 %v1655, 0.0
        %v1938 = vmax.f32 %v1660, 0.0
        %v1939 = vmax.f32 %v1665, 0.0
        %v1940 = vmax.f32 %v1670, 0.0
        %v1941 = vmax.f32 %v1675, 0.0
        %v1942 = vmax.f32 %v1680, 0.0
        %v1943 = vmax.f32 %v1685, 0.0
        %v1944 = vmax.f32 %v1690, 0.0
        %v1945 = vmax.f32 %v1695, 0.0
        %v1946 = vmax.f32 %v1700, 0.0
        %v1947 = vmax.f32 %v1705, 0.0
        %v1948 = vmax.f32 %v1710, 0.0
        %v1949 = vmax.f32 %v1715, 0.0
        %v1950 = vmax.f32 %v1720, 0.0
        %v1951 = vmax.f32 %v1725, 0.0
        %v1952 = vmax.f32 %v1730, 0.0
        %v1953 = vmax.f32 %v1735, 0.0
        %v1954 = vmax.f32 %v1740, 0.0
        %v1955 = vmax.f32 %v1745, 0.0
        %v1956 = vmax.f32 %v1750, 0.0
        %v1957 = vmax.f32 %v1755, 0.0
        %v1958 = vmax.f32 %v1760, 0.0
        %v1959 = vmax.f32 %v1765, 0.0
        %v1960 = vmax.f32 %v1770, 0.0
        %v1961 = vmax.f32 %v1775, 0.0
        %v1962 = vmax.f32 %v1780, 0.0
        %v1963 = vmax.f32 %v1785, 0.0
        %v1964 = vmax.f32 %v1790, 0.0
        %v1965 = vmax.f32 %v1795, 0.0
        %v1966 = vmax.f32 %v1800, 0.0
        %v1967 = vmax.f32 %v1805, 0.0
        %v1968 = vmax.f32 %v1810, 0.0
        %v1969 = vmax.f32 %v1815, 0.0
        %v1970 = vmax.f32 %v1820, 0.0
        %v1971 = vmax.f32 %v1825, 0.0
        %v1972 = vmax.f32 %v1830, 0.0
        %v1973 = vmax.f32 %v1835, 0.0
        %v1974 = vmax.f32 %v1840, 0.0
        %v1975 = vmax.f32 %v1845, 0.0
        %v1976 = vmax.f32 %v1850, 0.0
        %v1977 = vmax.f32 %v1855, 0.0
        %v1978 = vmax.f32 %v1860, 0.0
        %v1979 = vmax.f32 %v1865, 0.0
        %v1980 = vmax.f32 %v1870, 0.0
        %v1981 = vmax.f32 %v1875, 0.0
        %v1982 = vmax.f32 %v1880, 0.0
        %v1983 = vmax.f32 %v1885, 0.0
        %v1984 = vmax.f32 %v1890, 0.0
        %v1985 = vmax.f32 %v1895, 0.0
        %v1986 = vmax.f32 %v1900, 0.0
        %v1987 = vmax.f32 %v1905, 0.0
        %v1988 = vmax.f32 %v1910, 0.0
        %v1989 = vmax.f32 %v1915, 0.0
        %v1990 = vmax.f32 %v1920, 0.0
        %v1991 = vmax.f32 %v1925, 0.0
        %s1992 = scalar_lea.vmem %s2, 256
        %v1993 = vld [vmem:[%s1992] sm:$0xff]
        %v1994 = vld [vmem:[%s1992 + $0x8] sm:$0xff]
        %v1995 = vld [vmem:[%s1992 + $0x10] sm:$0xff]
        %v1996 = vld [vmem:[%s1992 + $0x18] sm:$0xff]
        %v1997 = vld [vmem:[%s1992 + $0x20] sm:$0xff]
        %v1998 = vld [vmem:[%s1992 + $0x28] sm:$0xff]
        %v1999 = vld [vmem:[%s1992 + $0x30] sm:$0xff]
        %v2000 = vld [vmem:[%s1992 + $0x38] sm:$0xff]
        %v2001 = vld [vmem:[%s1992 + $0x40] sm:$0xff]
        %v2002 = vld [vmem:[%s1992 + $0x48] sm:$0xff]
        %v2003 = vld [vmem:[%s1992 + $0x50] sm:$0xff]
        %v2004 = vld [vmem:[%s1992 + $0x58] sm:$0xff]
        %v2005 = vld [vmem:[%s1992 + $0x60] sm:$0xff]
        %v2006 = vld [vmem:[%s1992 + $0x68] sm:$0xff]
        %v2007 = vld [vmem:[%s1992 + $0x70] sm:$0xff]
        %v2008 = vld [vmem:[%s1992 + $0x78] sm:$0xff]
        %v2010 = vlaneseq
        %v2011 = vshrl.u32 %v2010, 7
        %v2012 = vsub.s32 0, %v2011
        %v2013 = vrot.slane %v202, %v2012
        %2015 = vmatprep.subr.mxu0 0.0
        %2016 = vmatpush1.msra.mxu0 %v1993
        %2017 = vmatprep.subr.mxu0 0.0
        %2018 = vmatpush1.msra.mxu0 %v1994
        %2019 = vmatprep.subr.mxu0 0.0
        %2020 = vmatpush1.msra.mxu0 %v1995
        %2021 = vmatprep.subr.mxu0 0.0
        %2022 = vmatpush1.msra.mxu0 %v1996
        %2023 = vmatprep.subr.mxu0 0.0
        %2024 = vmatpush1.msra.mxu0 %v1997
        %2025 = vmatprep.subr.mxu0 0.0
        %2026 = vmatpush1.msra.mxu0 %v1998
        %2027 = vmatprep.subr.mxu0 0.0
        %2028 = vmatpush1.msra.mxu0 %v1999
        %2029 = vmatprep.subr.mxu0 0.0
        %2030 = vmatpush1.msra.mxu0 %v2000
        %2031 = vmatprep.subr.mxu0 0.0
        %2032 = vmatpush1.msra.mxu0 %v2001
        %2033 = vmatprep.subr.mxu0 0.0
        %2034 = vmatpush1.msra.mxu0 %v2002
        %2035 = vmatprep.subr.mxu0 0.0
        %2036 = vmatpush1.msra.mxu0 %v2003
        %2037 = vmatprep.subr.mxu0 0.0
        %2038 = vmatpush1.msra.mxu0 %v2004
        %2039 = vmatprep.subr.mxu0 0.0
        %2040 = vmatpush1.msra.mxu0 %v2005
        %2041 = vmatprep.subr.mxu0 0.0
        %2042 = vmatpush1.msra.mxu0 %v2006
        %2043 = vmatprep.subr.mxu0 0.0
        %2044 = vmatpush1.msra.mxu0 %v2007
        %2045 = vmatprep.subr.mxu0 0.0
        %2046 = vmatpush1.msra.mxu0 %v2008
        %2047 = vmatprep.subr.mxu0 0.0
        %2048 = vmatpush1.msra.mxu0 0.0
        %2049 = vmatprep.subr.mxu0 0.0
        %2050 = vmatpush1.msra.mxu0 0.0
        %2051 = vmatprep.subr.mxu0 0.0
        %2052 = vmatpush1.msra.mxu0 0.0
        %2053 = vmatprep.subr.mxu0 0.0
        %2054 = vmatpush1.msra.mxu0 0.0
        %2055 = vmatprep.subr.mxu0 0.0
        %2056 = vmatpush1.msra.mxu0 0.0
        %2057 = vmatprep.subr.mxu0 0.0
        %2058 = vmatpush1.msra.mxu0 0.0
        %2059 = vmatprep.subr.mxu0 0.0
        %2060 = vmatpush1.msra.mxu0 0.0
        %2061 = vmatprep.subr.mxu0 0.0
        %2062 = vmatpush1.msra.mxu0 0.0
        %2063 = vmatprep.subr.mxu0 0.0
        %2064 = vmatpush1.msra.mxu0 0.0
        %2065 = vmatprep.subr.mxu0 0.0
        %2066 = vmatpush1.msra.mxu0 0.0
        %2067 = vmatprep.subr.mxu0 0.0
        %2068 = vmatpush1.msra.mxu0 0.0
        %2069 = vmatprep.subr.mxu0 0.0
        %2070 = vmatpush1.msra.mxu0 0.0
        %2071 = vmatprep.subr.mxu0 0.0
        %2072 = vmatpush1.msra.mxu0 0.0
        %2073 = vmatprep.subr.mxu0 0.0
        %2074 = vmatpush1.msra.mxu0 0.0
        %2075 = vmatprep.subr.mxu0 0.0
        %2076 = vmatpush1.msra.mxu0 0.0
        %2077 = vmatprep.subr.mxu0 0.0
        %2078 = vmatpush1.msra.mxu0 0.0
        %2079 = vmatprep.mubr.f32.mxu0 0.0
        %2080 = vmatmul.mubr.f32.gmra.mrb[0].mxu0 %v1928
        %v2081 = vpop.f32.mrb[0].mxu0
        %v2082 = vadd.f32 %v2013, %v2081
        %v2083 = vpop.f32.mrb[0].mxu0
        %2084 = vmatprep.mubr.f32.mxu0 0.0
        %2085 = vmatmul.mubr.f32.gmra.mrb[0].mxu0 %v1929
        %v2086 = vpop.f32.mrb[0].mxu0
        %v2087 = vadd.f32 %v2013, %v2086
        %v2088 = vpop.f32.mrb[0].mxu0
        %2089 = vmatprep.mubr.f32.mxu0 0.0
        %2090 = vmatmul.mubr.f32.gmra.mrb[0].mxu0 %v1930
        %v2091 = vpop.f32.mrb[0].mxu0
        %v2092 = vadd.f32 %v2013, %v2091
        %v2093 = vpop.f32.mrb[0].mxu0
        %2094 = vmatprep.mubr.f32.mxu0 0.0
        %2095 = vmatmul.mubr.f32.gmra.mrb[0].mxu0 %v1931
        %v2096 = vpop.f32.mrb[0].mxu0
        %v2097 = vadd.f32 %v2013, %v2096
        %v2098 = vpop.f32.mrb[0].mxu0
        %2099 = vmatprep.mubr.f32.mxu0 0.0
        %2100 = vmatmul.mubr.f32.gmra.mrb[0].mxu0 %v1932
        %v2101 = vpop.f32.mrb[0].mxu0
        %v2102 = vadd.f32 %v2013, %v2101
        %v2103 = vpop.f32.mrb[0].mxu0
        %2104 = vmatprep.mubr.f32.mxu0 0.0
        %2105 = vmatmul.mubr.f32.gmra.mrb[0].mxu0 %v1933
        %v2106 = vpop.f32.mrb[0].mxu0
        %v2107 = vadd.f32 %v2013, %v2106
        %v2108 = vpop.f32.mrb[0].mxu0
        %2109 = vmatprep.mubr.f32.mxu0 0.0
        %2110 = vmatmul.mubr.f32.gmra.mrb[0].mxu0 %v1934
        %v2111 = vpop.f32.mrb[0].mxu0
        %v2112 = vadd.f32 %v2013, %v2111
        %v2113 = vpop.f32.mrb[0].mxu0
        %2114 = vmatprep.mubr.f32.mxu0 0.0
        %2115 = vmatmul.mubr.f32.gmra.mrb[0].mxu0 %v1935
        %v2116 = vpop.f32.mrb[0].mxu0
        %v2117 = vadd.f32 %v2013, %v2116
        %v2118 = vpop.f32.mrb[0].mxu0
        %2119 = vmatprep.mubr.f32.mxu0 0.0
        %2120 = vmatmul.mubr.f32.gmra.mrb[0].mxu0 %v1936
        %v2121 = vpop.f32.mrb[0].mxu0
        %v2122 = vadd.f32 %v2013, %v2121
        %v2123 = vpop.f32.mrb[0].mxu0
        %2124 = vmatprep.mubr.f32.mxu0 0.0
        %2125 = vmatmul.mubr.f32.gmra.mrb[0].mxu0 %v1937
        %v2126 = vpop.f32.mrb[0].mxu0
        %v2127 = vadd.f32 %v2013, %v2126
        %v2128 = vpop.f32.mrb[0].mxu0
        %2129 = vmatprep.mubr.f32.mxu0 0.0
        %2130 = vmatmul.mubr.f32.gmra.mrb[0].mxu0 %v1938
        %v2131 = vpop.f32.mrb[0].mxu0
        %v2132 = vadd.f32 %v2013, %v2131
        %v2133 = vpop.f32.mrb[0].mxu0
        %2134 = vmatprep.mubr.f32.mxu0 0.0
        %2135 = vmatmul.mubr.f32.gmra.mrb[0].mxu0 %v1939
        %v2136 = vpop.f32.mrb[0].mxu0
        %v2137 = vadd.f32 %v2013, %v2136
        %v2138 = vpop.f32.mrb[0].mxu0
        %2139 = vmatprep.mubr.f32.mxu0 0.0
        %2140 = vmatmul.mubr.f32.gmra.mrb[0].mxu0 %v1940
        %v2141 = vpop.f32.mrb[0].mxu0
        %v2142 = vadd.f32 %v2013, %v2141
        %v2143 = vpop.f32.mrb[0].mxu0
        %2144 = vmatprep.mubr.f32.mxu0 0.0
        %2145 = vmatmul.mubr.f32.gmra.mrb[0].mxu0 %v1941
        %v2146 = vpop.f32.mrb[0].mxu0
        %v2147 = vadd.f32 %v2013, %v2146
        %v2148 = vpop.f32.mrb[0].mxu0
        %2149 = vmatprep.mubr.f32.mxu0 0.0
        %2150 = vmatmul.mubr.f32.gmra.mrb[0].mxu0 %v1942
        %v2151 = vpop.f32.mrb[0].mxu0
        %v2152 = vadd.f32 %v2013, %v2151
        %v2153 = vpop.f32.mrb[0].mxu0
        %2154 = vmatprep.mubr.f32.mxu0 0.0
        %2155 = vmatmul.mubr.f32.gmra.mrb[0].mxu0 %v1943
        %v2156 = vpop.f32.mrb[0].mxu0
        %v2157 = vadd.f32 %v2013, %v2156
        %v2158 = vpop.f32.mrb[0].mxu0
        %2159 = vmatprep.mubr.f32.mxu0 0.0
        %2160 = vmatmul.mubr.f32.gmra.mrb[0].mxu0 %v1944
        %v2161 = vpop.f32.mrb[0].mxu0
        %v2162 = vadd.f32 %v2013, %v2161
        %v2163 = vpop.f32.mrb[0].mxu0
        %2164 = vmatprep.mubr.f32.mxu0 0.0
        %2165 = vmatmul.mubr.f32.gmra.mrb[0].mxu0 %v1945
        %v2166 = vpop.f32.mrb[0].mxu0
        %v2167 = vadd.f32 %v2013, %v2166
        %v2168 = vpop.f32.mrb[0].mxu0
        %2169 = vmatprep.mubr.f32.mxu0 0.0
        %2170 = vmatmul.mubr.f32.gmra.mrb[0].mxu0 %v1946
        %v2171 = vpop.f32.mrb[0].mxu0
        %v2172 = vadd.f32 %v2013, %v2171
        %v2173 = vpop.f32.mrb[0].mxu0
        %2174 = vmatprep.mubr.f32.mxu0 0.0
        %2175 = vmatmul.mubr.f32.gmra.mrb[0].mxu0 %v1947
        %v2176 = vpop.f32.mrb[0].mxu0
        %v2177 = vadd.f32 %v2013, %v2176
        %v2178 = vpop.f32.mrb[0].mxu0
        %2179 = vmatprep.mubr.f32.mxu0 0.0
        %2180 = vmatmul.mubr.f32.gmra.mrb[0].mxu0 %v1948
        %v2181 = vpop.f32.mrb[0].mxu0
        %v2182 = vadd.f32 %v2013, %v2181
        %v2183 = vpop.f32.mrb[0].mxu0
        %2184 = vmatprep.mubr.f32.mxu0 0.0
        %2185 = vmatmul.mubr.f32.gmra.mrb[0].mxu0 %v1949
        %v2186 = vpop.f32.mrb[0].mxu0
        %v2187 = vadd.f32 %v2013, %v2186
        %v2188 = vpop.f32.mrb[0].mxu0
        %2189 = vmatprep.mubr.f32.mxu0 0.0
        %2190 = vmatmul.mubr.f32.gmra.mrb[0].mxu0 %v1950
        %v2191 = vpop.f32.mrb[0].mxu0
        %v2192 = vadd.f32 %v2013, %v2191
        %v2193 = vpop.f32.mrb[0].mxu0
        %2194 = vmatprep.mubr.f32.mxu0 0.0
        %2195 = vmatmul.mubr.f32.gmra.mrb[0].mxu0 %v1951
        %v2196 = vpop.f32.mrb[0].mxu0
        %v2197 = vadd.f32 %v2013, %v2196
        %v2198 = vpop.f32.mrb[0].mxu0
        %2199 = vmatprep.mubr.f32.mxu0 0.0
        %2200 = vmatmul.mubr.f32.gmra.mrb[0].mxu0 %v1952
        %v2201 = vpop.f32.mrb[0].mxu0
        %v2202 = vadd.f32 %v2013, %v2201
        %v2203 = vpop.f32.mrb[0].mxu0
        %2204 = vmatprep.mubr.f32.mxu0 0.0
        %2205 = vmatmul.mubr.f32.gmra.mrb[0].mxu0 %v1953
        %v2206 = vpop.f32.mrb[0].mxu0
        %v2207 = vadd.f32 %v2013, %v2206
        %v2208 = vpop.f32.mrb[0].mxu0
        %2209 = vmatprep.mubr.f32.mxu0 0.0
        %2210 = vmatmul.mubr.f32.gmra.mrb[0].mxu0 %v1954
        %v2211 = vpop.f32.mrb[0].mxu0
        %v2212 = vadd.f32 %v2013, %v2211
        %v2213 = vpop.f32.mrb[0].mxu0
        %2214 = vmatprep.mubr.f32.mxu0 0.0
        %2215 = vmatmul.mubr.f32.gmra.mrb[0].mxu0 %v1955
        %v2216 = vpop.f32.mrb[0].mxu0
        %v2217 = vadd.f32 %v2013, %v2216
        %v2218 = vpop.f32.mrb[0].mxu0
        %2219 = vmatprep.mubr.f32.mxu0 0.0
        %2220 = vmatmul.mubr.f32.gmra.mrb[0].mxu0 %v1956
        %v2221 = vpop.f32.mrb[0].mxu0
        %v2222 = vadd.f32 %v2013, %v2221
        %v2223 = vpop.f32.mrb[0].mxu0
        %2224 = vmatprep.mubr.f32.mxu0 0.0
        %2225 = vmatmul.mubr.f32.gmra.mrb[0].mxu0 %v1957
        %v2226 = vpop.f32.mrb[0].mxu0
        %v2227 = vadd.f32 %v2013, %v2226
        %v2228 = vpop.f32.mrb[0].mxu0
        %2229 = vmatprep.mubr.f32.mxu0 0.0
        %2230 = vmatmul.mubr.f32.gmra.mrb[0].mxu0 %v1958
        %v2231 = vpop.f32.mrb[0].mxu0
        %v2232 = vadd.f32 %v2013, %v2231
        %v2233 = vpop.f32.mrb[0].mxu0
        %2234 = vmatprep.mubr.f32.mxu0 0.0
        %2235 = vmatmul.mubr.f32.gmra.mrb[0].mxu0 %v1959
        %v2236 = vpop.f32.mrb[0].mxu0
        %v2237 = vadd.f32 %v2013, %v2236
        %v2238 = vpop.f32.mrb[0].mxu0
        %2239 = vmatprep.mubr.f32.mxu0 0.0
        %2240 = vmatmul.mubr.f32.gmra.mrb[0].mxu0 %v1960
        %v2241 = vpop.f32.mrb[0].mxu0
        %v2242 = vadd.f32 %v2013, %v2241
        %v2243 = vpop.f32.mrb[0].mxu0
        %2244 = vmatprep.mubr.f32.mxu0 0.0
        %2245 = vmatmul.mubr.f32.gmra.mrb[0].mxu0 %v1961
        %v2246 = vpop.f32.mrb[0].mxu0
        %v2247 = vadd.f32 %v2013, %v2246
        %v2248 = vpop.f32.mrb[0].mxu0
        %2249 = vmatprep.mubr.f32.mxu0 0.0
        %2250 = vmatmul.mubr.f32.gmra.mrb[0].mxu0 %v1962
        %v2251 = vpop.f32.mrb[0].mxu0
        %v2252 = vadd.f32 %v2013, %v2251
        %v2253 = vpop.f32.mrb[0].mxu0
        %2254 = vmatprep.mubr.f32.mxu0 0.0
        %2255 = vmatmul.mubr.f32.gmra.mrb[0].mxu0 %v1963
        %v2256 = vpop.f32.mrb[0].mxu0
        %v2257 = vadd.f32 %v2013, %v2256
        %v2258 = vpop.f32.mrb[0].mxu0
        %2259 = vmatprep.mubr.f32.mxu0 0.0
        %2260 = vmatmul.mubr.f32.gmra.mrb[0].mxu0 %v1964
        %v2261 = vpop.f32.mrb[0].mxu0
        %v2262 = vadd.f32 %v2013, %v2261
        %v2263 = vpop.f32.mrb[0].mxu0
        %2264 = vmatprep.mubr.f32.mxu0 0.0
        %2265 = vmatmul.mubr.f32.gmra.mrb[0].mxu0 %v1965
        %v2266 = vpop.f32.mrb[0].mxu0
        %v2267 = vadd.f32 %v2013, %v2266
        %v2268 = vpop.f32.mrb[0].mxu0
        %2269 = vmatprep.mubr.f32.mxu0 0.0
        %2270 = vmatmul.mubr.f32.gmra.mrb[0].mxu0 %v1966
        %v2271 = vpop.f32.mrb[0].mxu0
        %v2272 = vadd.f32 %v2013, %v2271
        %v2273 = vpop.f32.mrb[0].mxu0
        %2274 = vmatprep.mubr.f32.mxu0 0.0
        %2275 = vmatmul.mubr.f32.gmra.mrb[0].mxu0 %v1967
        %v2276 = vpop.f32.mrb[0].mxu0
        %v2277 = vadd.f32 %v2013, %v2276
        %v2278 = vpop.f32.mrb[0].mxu0
        %2279 = vmatprep.mubr.f32.mxu0 0.0
        %2280 = vmatmul.mubr.f32.gmra.mrb[0].mxu0 %v1968
        %v2281 = vpop.f32.mrb[0].mxu0
        %v2282 = vadd.f32 %v2013, %v2281
        %v2283 = vpop.f32.mrb[0].mxu0
        %2284 = vmatprep.mubr.f32.mxu0 0.0
        %2285 = vmatmul.mubr.f32.gmra.mrb[0].mxu0 %v1969
        %v2286 = vpop.f32.mrb[0].mxu0
        %v2287 = vadd.f32 %v2013, %v2286
        %v2288 = vpop.f32.mrb[0].mxu0
        %2289 = vmatprep.mubr.f32.mxu0 0.0
        %2290 = vmatmul.mubr.f32.gmra.mrb[0].mxu0 %v1970
        %v2291 = vpop.f32.mrb[0].mxu0
        %v2292 = vadd.f32 %v2013, %v2291
        %v2293 = vpop.f32.mrb[0].mxu0
        %2294 = vmatprep.mubr.f32.mxu0 0.0
        %2295 = vmatmul.mubr.f32.gmra.mrb[0].mxu0 %v1971
        %v2296 = vpop.f32.mrb[0].mxu0
        %v2297 = vadd.f32 %v2013, %v2296
        %v2298 = vpop.f32.mrb[0].mxu0
        %2299 = vmatprep.mubr.f32.mxu0 0.0
        %2300 = vmatmul.mubr.f32.gmra.mrb[0].mxu0 %v1972
        %v2301 = vpop.f32.mrb[0].mxu0
        %v2302 = vadd.f32 %v2013, %v2301
        %v2303 = vpop.f32.mrb[0].mxu0
        %2304 = vmatprep.mubr.f32.mxu0 0.0
        %2305 = vmatmul.mubr.f32.gmra.mrb[0].mxu0 %v1973
        %v2306 = vpop.f32.mrb[0].mxu0
        %v2307 = vadd.f32 %v2013, %v2306
        %v2308 = vpop.f32.mrb[0].mxu0
        %2309 = vmatprep.mubr.f32.mxu0 0.0
        %2310 = vmatmul.mubr.f32.gmra.mrb[0].mxu0 %v1974
        %v2311 = vpop.f32.mrb[0].mxu0
        %v2312 = vadd.f32 %v2013, %v2311
        %v2313 = vpop.f32.mrb[0].mxu0
        %2314 = vmatprep.mubr.f32.mxu0 0.0
        %2315 = vmatmul.mubr.f32.gmra.mrb[0].mxu0 %v1975
        %v2316 = vpop.f32.mrb[0].mxu0
        %v2317 = vadd.f32 %v2013, %v2316
        %v2318 = vpop.f32.mrb[0].mxu0
        %2319 = vmatprep.mubr.f32.mxu0 0.0
        %2320 = vmatmul.mubr.f32.gmra.mrb[0].mxu0 %v1976
        %v2321 = vpop.f32.mrb[0].mxu0
        %v2322 = vadd.f32 %v2013, %v2321
        %v2323 = vpop.f32.mrb[0].mxu0
        %2324 = vmatprep.mubr.f32.mxu0 0.0
        %2325 = vmatmul.mubr.f32.gmra.mrb[0].mxu0 %v1977
        %v2326 = vpop.f32.mrb[0].mxu0
        %v2327 = vadd.f32 %v2013, %v2326
        %v2328 = vpop.f32.mrb[0].mxu0
        %2329 = vmatprep.mubr.f32.mxu0 0.0
        %2330 = vmatmul.mubr.f32.gmra.mrb[0].mxu0 %v1978
        %v2331 = vpop.f32.mrb[0].mxu0
        %v2332 = vadd.f32 %v2013, %v2331
        %v2333 = vpop.f32.mrb[0].mxu0
        %2334 = vmatprep.mubr.f32.mxu0 0.0
        %2335 = vmatmul.mubr.f32.gmra.mrb[0].mxu0 %v1979
        %v2336 = vpop.f32.mrb[0].mxu0
        %v2337 = vadd.f32 %v2013, %v2336
        %v2338 = vpop.f32.mrb[0].mxu0
        %2339 = vmatprep.mubr.f32.mxu0 0.0
        %2340 = vmatmul.mubr.f32.gmra.mrb[0].mxu0 %v1980
        %v2341 = vpop.f32.mrb[0].mxu0
        %v2342 = vadd.f32 %v2013, %v2341
        %v2343 = vpop.f32.mrb[0].mxu0
        %2344 = vmatprep.mubr.f32.mxu0 0.0
        %2345 = vmatmul.mubr.f32.gmra.mrb[0].mxu0 %v1981
        %v2346 = vpop.f32.mrb[0].mxu0
        %v2347 = vadd.f32 %v2013, %v2346
        %v2348 = vpop.f32.mrb[0].mxu0
        %2349 = vmatprep.mubr.f32.mxu0 0.0
        %2350 = vmatmul.mubr.f32.gmra.mrb[0].mxu0 %v1982
        %v2351 = vpop.f32.mrb[0].mxu0
        %v2352 = vadd.f32 %v2013, %v2351
        %v2353 = vpop.f32.mrb[0].mxu0
        %2354 = vmatprep.mubr.f32.mxu0 0.0
        %2355 = vmatmul.mubr.f32.gmra.mrb[0].mxu0 %v1983
        %v2356 = vpop.f32.mrb[0].mxu0
        %v2357 = vadd.f32 %v2013, %v2356
        %v2358 = vpop.f32.mrb[0].mxu0
        %2359 = vmatprep.mubr.f32.mxu0 0.0
        %2360 = vmatmul.mubr.f32.gmra.mrb[0].mxu0 %v1984
        %v2361 = vpop.f32.mrb[0].mxu0
        %v2362 = vadd.f32 %v2013, %v2361
        %v2363 = vpop.f32.mrb[0].mxu0
        %2364 = vmatprep.mubr.f32.mxu0 0.0
        %2365 = vmatmul.mubr.f32.gmra.mrb[0].mxu0 %v1985
        %v2366 = vpop.f32.mrb[0].mxu0
        %v2367 = vadd.f32 %v2013, %v2366
        %v2368 = vpop.f32.mrb[0].mxu0
        %2369 = vmatprep.mubr.f32.mxu0 0.0
        %2370 = vmatmul.mubr.f32.gmra.mrb[0].mxu0 %v1986
        %v2371 = vpop.f32.mrb[0].mxu0
        %v2372 = vadd.f32 %v2013, %v2371
        %v2373 = vpop.f32.mrb[0].mxu0
        %2374 = vmatprep.mubr.f32.mxu0 0.0
        %2375 = vmatmul.mubr.f32.gmra.mrb[0].mxu0 %v1987
        %v2376 = vpop.f32.mrb[0].mxu0
        %v2377 = vadd.f32 %v2013, %v2376
        %v2378 = vpop.f32.mrb[0].mxu0
        %2379 = vmatprep.mubr.f32.mxu0 0.0
        %2380 = vmatmul.mubr.f32.gmra.mrb[0].mxu0 %v1988
        %v2381 = vpop.f32.mrb[0].mxu0
        %v2382 = vadd.f32 %v2013, %v2381
        %v2383 = vpop.f32.mrb[0].mxu0
        %2384 = vmatprep.mubr.f32.mxu0 0.0
        %2385 = vmatmul.mubr.f32.gmra.mrb[0].mxu0 %v1989
        %v2386 = vpop.f32.mrb[0].mxu0
        %v2387 = vadd.f32 %v2013, %v2386
        %v2388 = vpop.f32.mrb[0].mxu0
        %2389 = vmatprep.mubr.f32.mxu0 0.0
        %2390 = vmatmul.mubr.f32.gmra.mrb[0].mxu0 %v1990
        %v2391 = vpop.f32.mrb[0].mxu0
        %v2392 = vadd.f32 %v2013, %v2391
        %v2393 = vpop.f32.mrb[0].mxu0
        %2394 = vmatprep.mubr.f32.mxu0 0.0
        %2395 = vmatmul.mubr.f32.gmra.mrb[0].mxu0 %v1991
        %v2396 = vpop.f32.mrb[0].mxu0
        %v2397 = vadd.f32 %v2013, %v2396
        %v2398 = vpop.f32.mrb[0].mxu0
        %2399 = vdwg.mxu0
        %v2400 = vadd.f32 %v1456, %v2082
        %v2401 = vadd.f32 %v1457, %v2087
        %v2402 = vadd.f32 %v1458, %v2092
        %v2403 = vadd.f32 %v1459, %v2097
        %v2404 = vadd.f32 %v1460, %v2102
        %v2405 = vadd.f32 %v1461, %v2107
        %v2406 = vadd.f32 %v1462, %v2112
        %v2407 = vadd.f32 %v1463, %v2117
        %v2408 = vadd.f32 %v1464, %v2122
        %v2409 = vadd.f32 %v1465, %v2127
        %v2410 = vadd.f32 %v1466, %v2132
        %v2411 = vadd.f32 %v1467, %v2137
        %v2412 = vadd.f32 %v1468, %v2142
        %v2413 = vadd.f32 %v1469, %v2147
        %v2414 = vadd.f32 %v1470, %v2152
        %v2415 = vadd.f32 %v1471, %v2157
        %v2416 = vadd.f32 %v1472, %v2162
        %v2417 = vadd.f32 %v1473, %v2167
        %v2418 = vadd.f32 %v1474, %v2172
        %v2419 = vadd.f32 %v1475, %v2177
        %v2420 = vadd.f32 %v1476, %v2182
        %v2421 = vadd.f32 %v1477, %v2187
        %v2422 = vadd.f32 %v1478, %v2192
        %v2423 = vadd.f32 %v1479, %v2197
        %v2424 = vadd.f32 %v1480, %v2202
        %v2425 = vadd.f32 %v1481, %v2207
        %v2426 = vadd.f32 %v1482, %v2212
        %v2427 = vadd.f32 %v1483, %v2217
        %v2428 = vadd.f32 %v1484, %v2222
        %v2429 = vadd.f32 %v1485, %v2227
        %v2430 = vadd.f32 %v1486, %v2232
        %v2431 = vadd.f32 %v1487, %v2237
        %v2432 = vadd.f32 %v1488, %v2242
        %v2433 = vadd.f32 %v1489, %v2247
        %v2434 = vadd.f32 %v1490, %v2252
        %v2435 = vadd.f32 %v1491, %v2257
        %v2436 = vadd.f32 %v1492, %v2262
        %v2437 = vadd.f32 %v1493, %v2267
        %v2438 = vadd.f32 %v1494, %v2272
        %v2439 = vadd.f32 %v1495, %v2277
        %v2440 = vadd.f32 %v1496, %v2282
        %v2441 = vadd.f32 %v1497, %v2287
        %v2442 = vadd.f32 %v1498, %v2292
        %v2443 = vadd.f32 %v1499, %v2297
        %v2444 = vadd.f32 %v1500, %v2302
        %v2445 = vadd.f32 %v1501, %v2307
        %v2446 = vadd.f32 %v1502, %v2312
        %v2447 = vadd.f32 %v1503, %v2317
        %v2448 = vadd.f32 %v1504, %v2322
        %v2449 = vadd.f32 %v1505, %v2327
        %v2450 = vadd.f32 %v1506, %v2332
        %v2451 = vadd.f32 %v1507, %v2337
        %v2452 = vadd.f32 %v1508, %v2342
        %v2453 = vadd.f32 %v1509, %v2347
        %v2454 = vadd.f32 %v1510, %v2352
        %v2455 = vadd.f32 %v1511, %v2357
        %v2456 = vadd.f32 %v1512, %v2362
        %v2457 = vadd.f32 %v1513, %v2367
        %v2458 = vadd.f32 %v1514, %v2372
        %v2459 = vadd.f32 %v1515, %v2377
        %v2460 = vadd.f32 %v1516, %v2382
        %v2461 = vadd.f32 %v1517, %v2387
        %v2462 = vadd.f32 %v1518, %v2392
        %v2463 = vadd.f32 %v1519, %v2397
        %s2464 = scalar_lea.vmem %s2, 384
        %v2465 = vld [vmem:[%s2464] sm:$0xff]
        %v2466 = vld [vmem:[%s2464 + $0x8] sm:$0xff]
        %v2467 = vld [vmem:[%s2464 + $0x10] sm:$0xff]
        %v2468 = vld [vmem:[%s2464 + $0x18] sm:$0xff]
        %v2469 = vld [vmem:[%s2464 + $0x20] sm:$0xff]
        %v2470 = vld [vmem:[%s2464 + $0x28] sm:$0xff]
        %v2471 = vld [vmem:[%s2464 + $0x30] sm:$0xff]
        %v2472 = vld [vmem:[%s2464 + $0x38] sm:$0xff]
        %v2473 = vld [vmem:[%s2464 + $0x40] sm:$0xff]
        %v2474 = vld [vmem:[%s2464 + $0x48] sm:$0xff]
        %v2475 = vld [vmem:[%s2464 + $0x50] sm:$0xff]
        %v2476 = vld [vmem:[%s2464 + $0x58] sm:$0xff]
        %v2477 = vld [vmem:[%s2464 + $0x60] sm:$0xff]
        %v2478 = vld [vmem:[%s2464 + $0x68] sm:$0xff]
        %v2479 = vld [vmem:[%s2464 + $0x70] sm:$0xff]
        %v2480 = vld [vmem:[%s2464 + $0x78] sm:$0xff]
        %v2482 = vlaneseq
        %v2483 = vshrl.u32 %v2482, 7
        %v2484 = vsub.s32 0, %v2483
        %v2485 = vrot.slane %v203, %v2484
        %2487 = vmatprep.subr.mxu0 0.0
        %2488 = vmatpush1.msra.mxu0 %v2465
        %2489 = vmatprep.subr.mxu0 0.0
        %2490 = vmatpush1.msra.mxu0 %v2466
        %2491 = vmatprep.subr.mxu0 0.0
        %2492 = vmatpush1.msra.mxu0 %v2467
        %2493 = vmatprep.subr.mxu0 0.0
        %2494 = vmatpush1.msra.mxu0 %v2468
        %2495 = vmatprep.subr.mxu0 0.0
        %2496 = vmatpush1.msra.mxu0 %v2469
        %2497 = vmatprep.subr.mxu0 0.0
        %2498 = vmatpush1.msra.mxu0 %v2470
        %2499 = vmatprep.subr.mxu0 0.0
        %2500 = vmatpush1.msra.mxu0 %v2471
        %2501 = vmatprep.subr.mxu0 0.0
        %2502 = vmatpush1.msra.mxu0 %v2472
        %2503 = vmatprep.subr.mxu0 0.0
        %2504 = vmatpush1.msra.mxu0 %v2473
        %2505 = vmatprep.subr.mxu0 0.0
        %2506 = vmatpush1.msra.mxu0 %v2474
        %2507 = vmatprep.subr.mxu0 0.0
        %2508 = vmatpush1.msra.mxu0 %v2475
        %2509 = vmatprep.subr.mxu0 0.0
        %2510 = vmatpush1.msra.mxu0 %v2476
        %2511 = vmatprep.subr.mxu0 0.0
        %2512 = vmatpush1.msra.mxu0 %v2477
        %2513 = vmatprep.subr.mxu0 0.0
        %2514 = vmatpush1.msra.mxu0 %v2478
        %2515 = vmatprep.subr.mxu0 0.0
        %2516 = vmatpush1.msra.mxu0 %v2479
        %2517 = vmatprep.subr.mxu0 0.0
        %2518 = vmatpush1.msra.mxu0 %v2480
        %2519 = vmatprep.subr.mxu0 0.0
        %2520 = vmatpush1.msra.mxu0 0.0
        %2521 = vmatprep.subr.mxu0 0.0
        %2522 = vmatpush1.msra.mxu0 0.0
        %2523 = vmatprep.subr.mxu0 0.0
        %2524 = vmatpush1.msra.mxu0 0.0
        %2525 = vmatprep.subr.mxu0 0.0
        %2526 = vmatpush1.msra.mxu0 0.0
        %2527 = vmatprep.subr.mxu0 0.0
        %2528 = vmatpush1.msra.mxu0 0.0
        %2529 = vmatprep.subr.mxu0 0.0
        %2530 = vmatpush1.msra.mxu0 0.0
        %2531 = vmatprep.subr.mxu0 0.0
        %2532 = vmatpush1.msra.mxu0 0.0
        %2533 = vmatprep.subr.mxu0 0.0
        %2534 = vmatpush1.msra.mxu0 0.0
        %2535 = vmatprep.subr.mxu0 0.0
        %2536 = vmatpush1.msra.mxu0 0.0
        %2537 = vmatprep.subr.mxu0 0.0
        %2538 = vmatpush1.msra.mxu0 0.0
        %2539 = vmatprep.subr.mxu0 0.0
        %2540 = vmatpush1.msra.mxu0 0.0
        %2541 = vmatprep.subr.mxu0 0.0
        %2542 = vmatpush1.msra.mxu0 0.0
        %2543 = vmatprep.subr.mxu0 0.0
        %2544 = vmatpush1.msra.mxu0 0.0
        %2545 = vmatprep.subr.mxu0 0.0
        %2546 = vmatpush1.msra.mxu0 0.0
        %2547 = vmatprep.subr.mxu0 0.0
        %2548 = vmatpush1.msra.mxu0 0.0
        %2549 = vmatprep.subr.mxu0 0.0
        %2550 = vmatpush1.msra.mxu0 0.0
        %2551 = vmatprep.mubr.f32.mxu0 0.0
        %2552 = vmatmul.mubr.f32.gmra.mrb[0].mxu0 %v2400
        %v2553 = vpop.f32.mrb[0].mxu0
        %v2554 = vadd.f32 %v2485, %v2553
        %v2555 = vpop.f32.mrb[0].mxu0
        %2556 = vmatprep.mubr.f32.mxu0 0.0
        %2557 = vmatmul.mubr.f32.gmra.mrb[0].mxu0 %v2401
        %v2558 = vpop.f32.mrb[0].mxu0
        %v2559 = vadd.f32 %v2485, %v2558
        %v2560 = vpop.f32.mrb[0].mxu0
        %2561 = vmatprep.mubr.f32.mxu0 0.0
        %2562 = vmatmul.mubr.f32.gmra.mrb[0].mxu0 %v2402
        %v2563 = vpop.f32.mrb[0].mxu0
        %v2564 = vadd.f32 %v2485, %v2563
        %v2565 = vpop.f32.mrb[0].mxu0
        %2566 = vmatprep.mubr.f32.mxu0 0.0
        %2567 = vmatmul.mubr.f32.gmra.mrb[0].mxu0 %v2403
        %v2568 = vpop.f32.mrb[0].mxu0
        %v2569 = vadd.f32 %v2485, %v2568
        %v2570 = vpop.f32.mrb[0].mxu0
        %2571 = vmatprep.mubr.f32.mxu0 0.0
        %2572 = vmatmul.mubr.f32.gmra.mrb[0].mxu0 %v2404
        %v2573 = vpop.f32.mrb[0].mxu0
        %v2574 = vadd.f32 %v2485, %v2573
        %v2575 = vpop.f32.mrb[0].mxu0
        %2576 = vmatprep.mubr.f32.mxu0 0.0
        %2577 = vmatmul.mubr.f32.gmra.mrb[0].mxu0 %v2405
        %v2578 = vpop.f32.mrb[0].mxu0
        %v2579 = vadd.f32 %v2485, %v2578
        %v2580 = vpop.f32.mrb[0].mxu0
        %2581 = vmatprep.mubr.f32.mxu0 0.0
        %2582 = vmatmul.mubr.f32.gmra.mrb[0].mxu0 %v2406
        %v2583 = vpop.f32.mrb[0].mxu0
        %v2584 = vadd.f32 %v2485, %v2583
        %v2585 = vpop.f32.mrb[0].mxu0
        %2586 = vmatprep.mubr.f32.mxu0 0.0
        %2587 = vmatmul.mubr.f32.gmra.mrb[0].mxu0 %v2407
        %v2588 = vpop.f32.mrb[0].mxu0
        %v2589 = vadd.f32 %v2485, %v2588
        %v2590 = vpop.f32.mrb[0].mxu0
        %2591 = vmatprep.mubr.f32.mxu0 0.0
        %2592 = vmatmul.mubr.f32.gmra.mrb[0].mxu0 %v2408
        %v2593 = vpop.f32.mrb[0].mxu0
        %v2594 = vadd.f32 %v2485, %v2593
        %v2595 = vpop.f32.mrb[0].mxu0
        %2596 = vmatprep.mubr.f32.mxu0 0.0
        %2597 = vmatmul.mubr.f32.gmra.mrb[0].mxu0 %v2409
        %v2598 = vpop.f32.mrb[0].mxu0
        %v2599 = vadd.f32 %v2485, %v2598
        %v2600 = vpop.f32.mrb[0].mxu0
        %2601 = vmatprep.mubr.f32.mxu0 0.0
        %2602 = vmatmul.mubr.f32.gmra.mrb[0].mxu0 %v2410
        %v2603 = vpop.f32.mrb[0].mxu0
        %v2604 = vadd.f32 %v2485, %v2603
        %v2605 = vpop.f32.mrb[0].mxu0
        %2606 = vmatprep.mubr.f32.mxu0 0.0
        %2607 = vmatmul.mubr.f32.gmra.mrb[0].mxu0 %v2411
        %v2608 = vpop.f32.mrb[0].mxu0
        %v2609 = vadd.f32 %v2485, %v2608
        %v2610 = vpop.f32.mrb[0].mxu0
        %2611 = vmatprep.mubr.f32.mxu0 0.0
        %2612 = vmatmul.mubr.f32.gmra.mrb[0].mxu0 %v2412
        %v2613 = vpop.f32.mrb[0].mxu0
        %v2614 = vadd.f32 %v2485, %v2613
        %v2615 = vpop.f32.mrb[0].mxu0
        %2616 = vmatprep.mubr.f32.mxu0 0.0
        %2617 = vmatmul.mubr.f32.gmra.mrb[0].mxu0 %v2413
        %v2618 = vpop.f32.mrb[0].mxu0
        %v2619 = vadd.f32 %v2485, %v2618
        %v2620 = vpop.f32.mrb[0].mxu0
        %2621 = vmatprep.mubr.f32.mxu0 0.0
        %2622 = vmatmul.mubr.f32.gmra.mrb[0].mxu0 %v2414
        %v2623 = vpop.f32.mrb[0].mxu0
        %v2624 = vadd.f32 %v2485, %v2623
        %v2625 = vpop.f32.mrb[0].mxu0
        %2626 = vmatprep.mubr.f32.mxu0 0.0
        %2627 = vmatmul.mubr.f32.gmra.mrb[0].mxu0 %v2415
        %v2628 = vpop.f32.mrb[0].mxu0
        %v2629 = vadd.f32 %v2485, %v2628
        %v2630 = vpop.f32.mrb[0].mxu0
        %2631 = vmatprep.mubr.f32.mxu0 0.0
        %2632 = vmatmul.mubr.f32.gmra.mrb[0].mxu0 %v2416
        %v2633 = vpop.f32.mrb[0].mxu0
        %v2634 = vadd.f32 %v2485, %v2633
        %v2635 = vpop.f32.mrb[0].mxu0
        %2636 = vmatprep.mubr.f32.mxu0 0.0
        %2637 = vmatmul.mubr.f32.gmra.mrb[0].mxu0 %v2417
        %v2638 = vpop.f32.mrb[0].mxu0
        %v2639 = vadd.f32 %v2485, %v2638
        %v2640 = vpop.f32.mrb[0].mxu0
        %2641 = vmatprep.mubr.f32.mxu0 0.0
        %2642 = vmatmul.mubr.f32.gmra.mrb[0].mxu0 %v2418
        %v2643 = vpop.f32.mrb[0].mxu0
        %v2644 = vadd.f32 %v2485, %v2643
        %v2645 = vpop.f32.mrb[0].mxu0
        %2646 = vmatprep.mubr.f32.mxu0 0.0
        %2647 = vmatmul.mubr.f32.gmra.mrb[0].mxu0 %v2419
        %v2648 = vpop.f32.mrb[0].mxu0
        %v2649 = vadd.f32 %v2485, %v2648
        %v2650 = vpop.f32.mrb[0].mxu0
        %2651 = vmatprep.mubr.f32.mxu0 0.0
        %2652 = vmatmul.mubr.f32.gmra.mrb[0].mxu0 %v2420
        %v2653 = vpop.f32.mrb[0].mxu0
        %v2654 = vadd.f32 %v2485, %v2653
        %v2655 = vpop.f32.mrb[0].mxu0
        %2656 = vmatprep.mubr.f32.mxu0 0.0
        %2657 = vmatmul.mubr.f32.gmra.mrb[0].mxu0 %v2421
        %v2658 = vpop.f32.mrb[0].mxu0
        %v2659 = vadd.f32 %v2485, %v2658
        %v2660 = vpop.f32.mrb[0].mxu0
        %2661 = vmatprep.mubr.f32.mxu0 0.0
        %2662 = vmatmul.mubr.f32.gmra.mrb[0].mxu0 %v2422
        %v2663 = vpop.f32.mrb[0].mxu0
        %v2664 = vadd.f32 %v2485, %v2663
        %v2665 = vpop.f32.mrb[0].mxu0
        %2666 = vmatprep.mubr.f32.mxu0 0.0
        %2667 = vmatmul.mubr.f32.gmra.mrb[0].mxu0 %v2423
        %v2668 = vpop.f32.mrb[0].mxu0
        %v2669 = vadd.f32 %v2485, %v2668
        %v2670 = vpop.f32.mrb[0].mxu0
        %2671 = vmatprep.mubr.f32.mxu0 0.0
        %2672 = vmatmul.mubr.f32.gmra.mrb[0].mxu0 %v2424
        %v2673 = vpop.f32.mrb[0].mxu0
        %v2674 = vadd.f32 %v2485, %v2673
        %v2675 = vpop.f32.mrb[0].mxu0
        %2676 = vmatprep.mubr.f32.mxu0 0.0
        %2677 = vmatmul.mubr.f32.gmra.mrb[0].mxu0 %v2425
        %v2678 = vpop.f32.mrb[0].mxu0
        %v2679 = vadd.f32 %v2485, %v2678
        %v2680 = vpop.f32.mrb[0].mxu0
        %2681 = vmatprep.mubr.f32.mxu0 0.0
        %2682 = vmatmul.mubr.f32.gmra.mrb[0].mxu0 %v2426
        %v2683 = vpop.f32.mrb[0].mxu0
        %v2684 = vadd.f32 %v2485, %v2683
        %v2685 = vpop.f32.mrb[0].mxu0
        %2686 = vmatprep.mubr.f32.mxu0 0.0
        %2687 = vmatmul.mubr.f32.gmra.mrb[0].mxu0 %v2427
        %v2688 = vpop.f32.mrb[0].mxu0
        %v2689 = vadd.f32 %v2485, %v2688
        %v2690 = vpop.f32.mrb[0].mxu0
        %2691 = vmatprep.mubr.f32.mxu0 0.0
        %2692 = vmatmul.mubr.f32.gmra.mrb[0].mxu0 %v2428
        %v2693 = vpop.f32.mrb[0].mxu0
        %v2694 = vadd.f32 %v2485, %v2693
        %v2695 = vpop.f32.mrb[0].mxu0
        %2696 = vmatprep.mubr.f32.mxu0 0.0
        %2697 = vmatmul.mubr.f32.gmra.mrb[0].mxu0 %v2429
        %v2698 = vpop.f32.mrb[0].mxu0
        %v2699 = vadd.f32 %v2485, %v2698
        %v2700 = vpop.f32.mrb[0].mxu0
        %2701 = vmatprep.mubr.f32.mxu0 0.0
        %2702 = vmatmul.mubr.f32.gmra.mrb[0].mxu0 %v2430
        %v2703 = vpop.f32.mrb[0].mxu0
        %v2704 = vadd.f32 %v2485, %v2703
        %v2705 = vpop.f32.mrb[0].mxu0
        %2706 = vmatprep.mubr.f32.mxu0 0.0
        %2707 = vmatmul.mubr.f32.gmra.mrb[0].mxu0 %v2431
        %v2708 = vpop.f32.mrb[0].mxu0
        %v2709 = vadd.f32 %v2485, %v2708
        %v2710 = vpop.f32.mrb[0].mxu0
        %2711 = vmatprep.mubr.f32.mxu0 0.0
        %2712 = vmatmul.mubr.f32.gmra.mrb[0].mxu0 %v2432
        %v2713 = vpop.f32.mrb[0].mxu0
        %v2714 = vadd.f32 %v2485, %v2713
        %v2715 = vpop.f32.mrb[0].mxu0
        %2716 = vmatprep.mubr.f32.mxu0 0.0
        %2717 = vmatmul.mubr.f32.gmra.mrb[0].mxu0 %v2433
        %v2718 = vpop.f32.mrb[0].mxu0
        %v2719 = vadd.f32 %v2485, %v2718
        %v2720 = vpop.f32.mrb[0].mxu0
        %2721 = vmatprep.mubr.f32.mxu0 0.0
        %2722 = vmatmul.mubr.f32.gmra.mrb[0].mxu0 %v2434
        %v2723 = vpop.f32.mrb[0].mxu0
        %v2724 = vadd.f32 %v2485, %v2723
        %v2725 = vpop.f32.mrb[0].mxu0
        %2726 = vmatprep.mubr.f32.mxu0 0.0
        %2727 = vmatmul.mubr.f32.gmra.mrb[0].mxu0 %v2435
        %v2728 = vpop.f32.mrb[0].mxu0
        %v2729 = vadd.f32 %v2485, %v2728
        %v2730 = vpop.f32.mrb[0].mxu0
        %2731 = vmatprep.mubr.f32.mxu0 0.0
        %2732 = vmatmul.mubr.f32.gmra.mrb[0].mxu0 %v2436
        %v2733 = vpop.f32.mrb[0].mxu0
        %v2734 = vadd.f32 %v2485, %v2733
        %v2735 = vpop.f32.mrb[0].mxu0
        %2736 = vmatprep.mubr.f32.mxu0 0.0
        %2737 = vmatmul.mubr.f32.gmra.mrb[0].mxu0 %v2437
        %v2738 = vpop.f32.mrb[0].mxu0
        %v2739 = vadd.f32 %v2485, %v2738
        %v2740 = vpop.f32.mrb[0].mxu0
        %2741 = vmatprep.mubr.f32.mxu0 0.0
        %2742 = vmatmul.mubr.f32.gmra.mrb[0].mxu0 %v2438
        %v2743 = vpop.f32.mrb[0].mxu0
        %v2744 = vadd.f32 %v2485, %v2743
        %v2745 = vpop.f32.mrb[0].mxu0
        %2746 = vmatprep.mubr.f32.mxu0 0.0
        %2747 = vmatmul.mubr.f32.gmra.mrb[0].mxu0 %v2439
        %v2748 = vpop.f32.mrb[0].mxu0
        %v2749 = vadd.f32 %v2485, %v2748
        %v2750 = vpop.f32.mrb[0].mxu0
        %2751 = vmatprep.mubr.f32.mxu0 0.0
        %2752 = vmatmul.mubr.f32.gmra.mrb[0].mxu0 %v2440
        %v2753 = vpop.f32.mrb[0].mxu0
        %v2754 = vadd.f32 %v2485, %v2753
        %v2755 = vpop.f32.mrb[0].mxu0
        %2756 = vmatprep.mubr.f32.mxu0 0.0
        %2757 = vmatmul.mubr.f32.gmra.mrb[0].mxu0 %v2441
        %v2758 = vpop.f32.mrb[0].mxu0
        %v2759 = vadd.f32 %v2485, %v2758
        %v2760 = vpop.f32.mrb[0].mxu0
        %2761 = vmatprep.mubr.f32.mxu0 0.0
        %2762 = vmatmul.mubr.f32.gmra.mrb[0].mxu0 %v2442
        %v2763 = vpop.f32.mrb[0].mxu0
        %v2764 = vadd.f32 %v2485, %v2763
        %v2765 = vpop.f32.mrb[0].mxu0
        %2766 = vmatprep.mubr.f32.mxu0 0.0
        %2767 = vmatmul.mubr.f32.gmra.mrb[0].mxu0 %v2443
        %v2768 = vpop.f32.mrb[0].mxu0
        %v2769 = vadd.f32 %v2485, %v2768
        %v2770 = vpop.f32.mrb[0].mxu0
        %2771 = vmatprep.mubr.f32.mxu0 0.0
        %2772 = vmatmul.mubr.f32.gmra.mrb[0].mxu0 %v2444
        %v2773 = vpop.f32.mrb[0].mxu0
        %v2774 = vadd.f32 %v2485, %v2773
        %v2775 = vpop.f32.mrb[0].mxu0
        %2776 = vmatprep.mubr.f32.mxu0 0.0
        %2777 = vmatmul.mubr.f32.gmra.mrb[0].mxu0 %v2445
        %v2778 = vpop.f32.mrb[0].mxu0
        %v2779 = vadd.f32 %v2485, %v2778
        %v2780 = vpop.f32.mrb[0].mxu0
        %2781 = vmatprep.mubr.f32.mxu0 0.0
        %2782 = vmatmul.mubr.f32.gmra.mrb[0].mxu0 %v2446
        %v2783 = vpop.f32.mrb[0].mxu0
        %v2784 = vadd.f32 %v2485, %v2783
        %v2785 = vpop.f32.mrb[0].mxu0
        %2786 = vmatprep.mubr.f32.mxu0 0.0
        %2787 = vmatmul.mubr.f32.gmra.mrb[0].mxu0 %v2447
        %v2788 = vpop.f32.mrb[0].mxu0
        %v2789 = vadd.f32 %v2485, %v2788
        %v2790 = vpop.f32.mrb[0].mxu0
        %2791 = vmatprep.mubr.f32.mxu0 0.0
        %2792 = vmatmul.mubr.f32.gmra.mrb[0].mxu0 %v2448
        %v2793 = vpop.f32.mrb[0].mxu0
        %v2794 = vadd.f32 %v2485, %v2793
        %v2795 = vpop.f32.mrb[0].mxu0
        %2796 = vmatprep.mubr.f32.mxu0 0.0
        %2797 = vmatmul.mubr.f32.gmra.mrb[0].mxu0 %v2449
        %v2798 = vpop.f32.mrb[0].mxu0
        %v2799 = vadd.f32 %v2485, %v2798
        %v2800 = vpop.f32.mrb[0].mxu0
        %2801 = vmatprep.mubr.f32.mxu0 0.0
        %2802 = vmatmul.mubr.f32.gmra.mrb[0].mxu0 %v2450
        %v2803 = vpop.f32.mrb[0].mxu0
        %v2804 = vadd.f32 %v2485, %v2803
        %v2805 = vpop.f32.mrb[0].mxu0
        %2806 = vmatprep.mubr.f32.mxu0 0.0
        %2807 = vmatmul.mubr.f32.gmra.mrb[0].mxu0 %v2451
        %v2808 = vpop.f32.mrb[0].mxu0
        %v2809 = vadd.f32 %v2485, %v2808
        %v2810 = vpop.f32.mrb[0].mxu0
        %2811 = vmatprep.mubr.f32.mxu0 0.0
        %2812 = vmatmul.mubr.f32.gmra.mrb[0].mxu0 %v2452
        %v2813 = vpop.f32.mrb[0].mxu0
        %v2814 = vadd.f32 %v2485, %v2813
        %v2815 = vpop.f32.mrb[0].mxu0
        %2816 = vmatprep.mubr.f32.mxu0 0.0
        %2817 = vmatmul.mubr.f32.gmra.mrb[0].mxu0 %v2453
        %v2818 = vpop.f32.mrb[0].mxu0
        %v2819 = vadd.f32 %v2485, %v2818
        %v2820 = vpop.f32.mrb[0].mxu0
        %2821 = vmatprep.mubr.f32.mxu0 0.0
        %2822 = vmatmul.mubr.f32.gmra.mrb[0].mxu0 %v2454
        %v2823 = vpop.f32.mrb[0].mxu0
        %v2824 = vadd.f32 %v2485, %v2823
        %v2825 = vpop.f32.mrb[0].mxu0
        %2826 = vmatprep.mubr.f32.mxu0 0.0
        %2827 = vmatmul.mubr.f32.gmra.mrb[0].mxu0 %v2455
        %v2828 = vpop.f32.mrb[0].mxu0
        %v2829 = vadd.f32 %v2485, %v2828
        %v2830 = vpop.f32.mrb[0].mxu0
        %2831 = vmatprep.mubr.f32.mxu0 0.0
        %2832 = vmatmul.mubr.f32.gmra.mrb[0].mxu0 %v2456
        %v2833 = vpop.f32.mrb[0].mxu0
        %v2834 = vadd.f32 %v2485, %v2833
        %v2835 = vpop.f32.mrb[0].mxu0
        %2836 = vmatprep.mubr.f32.mxu0 0.0
        %2837 = vmatmul.mubr.f32.gmra.mrb[0].mxu0 %v2457
        %v2838 = vpop.f32.mrb[0].mxu0
        %v2839 = vadd.f32 %v2485, %v2838
        %v2840 = vpop.f32.mrb[0].mxu0
        %2841 = vmatprep.mubr.f32.mxu0 0.0
        %2842 = vmatmul.mubr.f32.gmra.mrb[0].mxu0 %v2458
        %v2843 = vpop.f32.mrb[0].mxu0
        %v2844 = vadd.f32 %v2485, %v2843
        %v2845 = vpop.f32.mrb[0].mxu0
        %2846 = vmatprep.mubr.f32.mxu0 0.0
        %2847 = vmatmul.mubr.f32.gmra.mrb[0].mxu0 %v2459
        %v2848 = vpop.f32.mrb[0].mxu0
        %v2849 = vadd.f32 %v2485, %v2848
        %v2850 = vpop.f32.mrb[0].mxu0
        %2851 = vmatprep.mubr.f32.mxu0 0.0
        %2852 = vmatmul.mubr.f32.gmra.mrb[0].mxu0 %v2460
        %v2853 = vpop.f32.mrb[0].mxu0
        %v2854 = vadd.f32 %v2485, %v2853
        %v2855 = vpop.f32.mrb[0].mxu0
        %2856 = vmatprep.mubr.f32.mxu0 0.0
        %2857 = vmatmul.mubr.f32.gmra.mrb[0].mxu0 %v2461
        %v2858 = vpop.f32.mrb[0].mxu0
        %v2859 = vadd.f32 %v2485, %v2858
        %v2860 = vpop.f32.mrb[0].mxu0
        %2861 = vmatprep.mubr.f32.mxu0 0.0
        %2862 = vmatmul.mubr.f32.gmra.mrb[0].mxu0 %v2462
        %v2863 = vpop.f32.mrb[0].mxu0
        %v2864 = vadd.f32 %v2485, %v2863
        %v2865 = vpop.f32.mrb[0].mxu0
        %2866 = vmatprep.mubr.f32.mxu0 0.0
        %2867 = vmatmul.mubr.f32.gmra.mrb[0].mxu0 %v2463
        %v2868 = vpop.f32.mrb[0].mxu0
        %v2869 = vadd.f32 %v2485, %v2868
        %v2870 = vpop.f32.mrb[0].mxu0
        %2871 = vdwg.mxu0
        %v2872 = vmax.f32 %v2554, 0.0
        %v2873 = vmax.f32 %v2559, 0.0
        %v2874 = vmax.f32 %v2564, 0.0
        %v2875 = vmax.f32 %v2569, 0.0
        %v2876 = vmax.f32 %v2574, 0.0
        %v2877 = vmax.f32 %v2579, 0.0
        %v2878 = vmax.f32 %v2584, 0.0
        %v2879 = vmax.f32 %v2589, 0.0
        %v2880 = vmax.f32 %v2594, 0.0
        %v2881 = vmax.f32 %v2599, 0.0
        %v2882 = vmax.f32 %v2604, 0.0
        %v2883 = vmax.f32 %v2609, 0.0
        %v2884 = vmax.f32 %v2614, 0.0
        %v2885 = vmax.f32 %v2619, 0.0
        %v2886 = vmax.f32 %v2624, 0.0
        %v2887 = vmax.f32 %v2629, 0.0
        %v2888 = vmax.f32 %v2634, 0.0
        %v2889 = vmax.f32 %v2639, 0.0
        %v2890 = vmax.f32 %v2644, 0.0
        %v2891 = vmax.f32 %v2649, 0.0
        %v2892 = vmax.f32 %v2654, 0.0
        %v2893 = vmax.f32 %v2659, 0.0
        %v2894 = vmax.f32 %v2664, 0.0
        %v2895 = vmax.f32 %v2669, 0.0
        %v2896 = vmax.f32 %v2674, 0.0
        %v2897 = vmax.f32 %v2679, 0.0
        %v2898 = vmax.f32 %v2684, 0.0
        %v2899 = vmax.f32 %v2689, 0.0
        %v2900 = vmax.f32 %v2694, 0.0
        %v2901 = vmax.f32 %v2699, 0.0
        %v2902 = vmax.f32 %v2704, 0.0
        %v2903 = vmax.f32 %v2709, 0.0
        %v2904 = vmax.f32 %v2714, 0.0
        %v2905 = vmax.f32 %v2719, 0.0
        %v2906 = vmax.f32 %v2724, 0.0
        %v2907 = vmax.f32 %v2729, 0.0
        %v2908 = vmax.f32 %v2734, 0.0
        %v2909 = vmax.f32 %v2739, 0.0
        %v2910 = vmax.f32 %v2744, 0.0
        %v2911 = vmax.f32 %v2749, 0.0
        %v2912 = vmax.f32 %v2754, 0.0
        %v2913 = vmax.f32 %v2759, 0.0
        %v2914 = vmax.f32 %v2764, 0.0
        %v2915 = vmax.f32 %v2769, 0.0
        %v2916 = vmax.f32 %v2774, 0.0
        %v2917 = vmax.f32 %v2779, 0.0
        %v2918 = vmax.f32 %v2784, 0.0
        %v2919 = vmax.f32 %v2789, 0.0
        %v2920 = vmax.f32 %v2794, 0.0
        %v2921 = vmax.f32 %v2799, 0.0
        %v2922 = vmax.f32 %v2804, 0.0
        %v2923 = vmax.f32 %v2809, 0.0
        %v2924 = vmax.f32 %v2814, 0.0
        %v2925 = vmax.f32 %v2819, 0.0
        %v2926 = vmax.f32 %v2824, 0.0
        %v2927 = vmax.f32 %v2829, 0.0
        %v2928 = vmax.f32 %v2834, 0.0
        %v2929 = vmax.f32 %v2839, 0.0
        %v2930 = vmax.f32 %v2844, 0.0
        %v2931 = vmax.f32 %v2849, 0.0
        %v2932 = vmax.f32 %v2854, 0.0
        %v2933 = vmax.f32 %v2859, 0.0
        %v2934 = vmax.f32 %v2864, 0.0
        %v2935 = vmax.f32 %v2869, 0.0
        %s2936 = scalar_lea.vmem %s2, 512
        %v2937 = vld [vmem:[%s2936] sm:$0xff]
        %v2938 = vld [vmem:[%s2936 + $0x8] sm:$0xff]
        %v2939 = vld [vmem:[%s2936 + $0x10] sm:$0xff]
        %v2940 = vld [vmem:[%s2936 + $0x18] sm:$0xff]
        %v2941 = vld [vmem:[%s2936 + $0x20] sm:$0xff]
        %v2942 = vld [vmem:[%s2936 + $0x28] sm:$0xff]
        %v2943 = vld [vmem:[%s2936 + $0x30] sm:$0xff]
        %v2944 = vld [vmem:[%s2936 + $0x38] sm:$0xff]
        %v2945 = vld [vmem:[%s2936 + $0x40] sm:$0xff]
        %v2946 = vld [vmem:[%s2936 + $0x48] sm:$0xff]
        %v2947 = vld [vmem:[%s2936 + $0x50] sm:$0xff]
        %v2948 = vld [vmem:[%s2936 + $0x58] sm:$0xff]
        %v2949 = vld [vmem:[%s2936 + $0x60] sm:$0xff]
        %v2950 = vld [vmem:[%s2936 + $0x68] sm:$0xff]
        %v2951 = vld [vmem:[%s2936 + $0x70] sm:$0xff]
        %v2952 = vld [vmem:[%s2936 + $0x78] sm:$0xff]
        %v2954 = vlaneseq
        %v2955 = vshrl.u32 %v2954, 7
        %v2956 = vsub.s32 0, %v2955
        %v2957 = vrot.slane %v204, %v2956
        %2959 = vmatprep.subr.mxu0 0.0
        %2960 = vmatpush1.msra.mxu0 %v2937
        %2961 = vmatprep.subr.mxu0 0.0
        %2962 = vmatpush1.msra.mxu0 %v2938
        %2963 = vmatprep.subr.mxu0 0.0
        %2964 = vmatpush1.msra.mxu0 %v2939
        %2965 = vmatprep.subr.mxu0 0.0
        %2966 = vmatpush1.msra.mxu0 %v2940
        %2967 = vmatprep.subr.mxu0 0.0
        %2968 = vmatpush1.msra.mxu0 %v2941
        %2969 = vmatprep.subr.mxu0 0.0
        %2970 = vmatpush1.msra.mxu0 %v2942
        %2971 = vmatprep.subr.mxu0 0.0
        %2972 = vmatpush1.msra.mxu0 %v2943
        %2973 = vmatprep.subr.mxu0 0.0
        %2974 = vmatpush1.msra.mxu0 %v2944
        %2975 = vmatprep.subr.mxu0 0.0
        %2976 = vmatpush1.msra.mxu0 %v2945
        %2977 = vmatprep.subr.mxu0 0.0
        %2978 = vmatpush1.msra.mxu0 %v2946
        %2979 = vmatprep.subr.mxu0 0.0
        %2980 = vmatpush1.msra.mxu0 %v2947
        %2981 = vmatprep.subr.mxu0 0.0
        %2982 = vmatpush1.msra.mxu0 %v2948
        %2983 = vmatprep.subr.mxu0 0.0
        %2984 = vmatpush1.msra.mxu0 %v2949
        %2985 = vmatprep.subr.mxu0 0.0
        %2986 = vmatpush1.msra.mxu0 %v2950
        %2987 = vmatprep.subr.mxu0 0.0
        %2988 = vmatpush1.msra.mxu0 %v2951
        %2989 = vmatprep.subr.mxu0 0.0
        %2990 = vmatpush1.msra.mxu0 %v2952
        %2991 = vmatprep.subr.mxu0 0.0
        %2992 = vmatpush1.msra.mxu0 0.0
        %2993 = vmatprep.subr.mxu0 0.0
        %2994 = vmatpush1.msra.mxu0 0.0
        %2995 = vmatprep.subr.mxu0 0.0
        %2996 = vmatpush1.msra.mxu0 0.0
        %2997 = vmatprep.subr.mxu0 0.0
        %2998 = vmatpush1.msra.mxu0 0.0
        %2999 = vmatprep.subr.mxu0 0.0
        %3000 = vmatpush1.msra.mxu0 0.0
        %3001 = vmatprep.subr.mxu0 0.0
        %3002 = vmatpush1.msra.mxu0 0.0
        %3003 = vmatprep.subr.mxu0 0.0
        %3004 = vmatpush1.msra.mxu0 0.0
        %3005 = vmatprep.subr.mxu0 0.0
        %3006 = vmatpush1.msra.mxu0 0.0
        %3007 = vmatprep.subr.mxu0 0.0
        %3008 = vmatpush1.msra.mxu0 0.0
        %3009 = vmatprep.subr.mxu0 0.0
        %3010 = vmatpush1.msra.mxu0 0.0
        %3011 = vmatprep.subr.mxu0 0.0
        %3012 = vmatpush1.msra.mxu0 0.0
        %3013 = vmatprep.subr.mxu0 0.0
        %3014 = vmatpush1.msra.mxu0 0.0
        %3015 = vmatprep.subr.mxu0 0.0
        %3016 = vmatpush1.msra.mxu0 0.0
        %3017 = vmatprep.subr.mxu0 0.0
        %3018 = vmatpush1.msra.mxu0 0.0
        %3019 = vmatprep.subr.mxu0 0.0
        %3020 = vmatpush1.msra.mxu0 0.0
        %3021 = vmatprep.subr.mxu0 0.0
        %3022 = vmatpush1.msra.mxu0 0.0
        %3023 = vmatprep.mubr.f32.mxu0 0.0
        %3024 = vmatmul.mubr.f32.gmra.mrb[0].mxu0 %v2872
        %v3025 = vpop.f32.mrb[0].mxu0
        %v3026 = vadd.f32 %v2957, %v3025
        %v3027 = vpop.f32.mrb[0].mxu0
        %3028 = vmatprep.mubr.f32.mxu0 0.0
        %3029 = vmatmul.mubr.f32.gmra.mrb[0].mxu0 %v2873
        %v3030 = vpop.f32.mrb[0].mxu0
        %v3031 = vadd.f32 %v2957, %v3030
        %v3032 = vpop.f32.mrb[0].mxu0
        %3033 = vmatprep.mubr.f32.mxu0 0.0
        %3034 = vmatmul.mubr.f32.gmra.mrb[0].mxu0 %v2874
        %v3035 = vpop.f32.mrb[0].mxu0
        %v3036 = vadd.f32 %v2957, %v3035
        %v3037 = vpop.f32.mrb[0].mxu0
        %3038 = vmatprep.mubr.f32.mxu0 0.0
        %3039 = vmatmul.mubr.f32.gmra.mrb[0].mxu0 %v2875
        %v3040 = vpop.f32.mrb[0].mxu0
        %v3041 = vadd.f32 %v2957, %v3040
        %v3042 = vpop.f32.mrb[0].mxu0
        %3043 = vmatprep.mubr.f32.mxu0 0.0
        %3044 = vmatmul.mubr.f32.gmra.mrb[0].mxu0 %v2876
        %v3045 = vpop.f32.mrb[0].mxu0
        %v3046 = vadd.f32 %v2957, %v3045
        %v3047 = vpop.f32.mrb[0].mxu0
        %3048 = vmatprep.mubr.f32.mxu0 0.0
        %3049 = vmatmul.mubr.f32.gmra.mrb[0].mxu0 %v2877
        %v3050 = vpop.f32.mrb[0].mxu0
        %v3051 = vadd.f32 %v2957, %v3050
        %v3052 = vpop.f32.mrb[0].mxu0
        %3053 = vmatprep.mubr.f32.mxu0 0.0
        %3054 = vmatmul.mubr.f32.gmra.mrb[0].mxu0 %v2878
        %v3055 = vpop.f32.mrb[0].mxu0
        %v3056 = vadd.f32 %v2957, %v3055
        %v3057 = vpop.f32.mrb[0].mxu0
        %3058 = vmatprep.mubr.f32.mxu0 0.0
        %3059 = vmatmul.mubr.f32.gmra.mrb[0].mxu0 %v2879
        %v3060 = vpop.f32.mrb[0].mxu0
        %v3061 = vadd.f32 %v2957, %v3060
        %v3062 = vpop.f32.mrb[0].mxu0
        %3063 = vmatprep.mubr.f32.mxu0 0.0
        %3064 = vmatmul.mubr.f32.gmra.mrb[0].mxu0 %v2880
        %v3065 = vpop.f32.mrb[0].mxu0
        %v3066 = vadd.f32 %v2957, %v3065
        %v3067 = vpop.f32.mrb[0].mxu0
        %3068 = vmatprep.mubr.f32.mxu0 0.0
        %3069 = vmatmul.mubr.f32.gmra.mrb[0].mxu0 %v2881
        %v3070 = vpop.f32.mrb[0].mxu0
        %v3071 = vadd.f32 %v2957, %v3070
        %v3072 = vpop.f32.mrb[0].mxu0
        %3073 = vmatprep.mubr.f32.mxu0 0.0
        %3074 = vmatmul.mubr.f32.gmra.mrb[0].mxu0 %v2882
        %v3075 = vpop.f32.mrb[0].mxu0
        %v3076 = vadd.f32 %v2957, %v3075
        %v3077 = vpop.f32.mrb[0].mxu0
        %3078 = vmatprep.mubr.f32.mxu0 0.0
        %3079 = vmatmul.mubr.f32.gmra.mrb[0].mxu0 %v2883
        %v3080 = vpop.f32.mrb[0].mxu0
        %v3081 = vadd.f32 %v2957, %v3080
        %v3082 = vpop.f32.mrb[0].mxu0
        %3083 = vmatprep.mubr.f32.mxu0 0.0
        %3084 = vmatmul.mubr.f32.gmra.mrb[0].mxu0 %v2884
        %v3085 = vpop.f32.mrb[0].mxu0
        %v3086 = vadd.f32 %v2957, %v3085
        %v3087 = vpop.f32.mrb[0].mxu0
        %3088 = vmatprep.mubr.f32.mxu0 0.0
        %3089 = vmatmul.mubr.f32.gmra.mrb[0].mxu0 %v2885
        %v3090 = vpop.f32.mrb[0].mxu0
        %v3091 = vadd.f32 %v2957, %v3090
        %v3092 = vpop.f32.mrb[0].mxu0
        %3093 = vmatprep.mubr.f32.mxu0 0.0
        %3094 = vmatmul.mubr.f32.gmra.mrb[0].mxu0 %v2886
        %v3095 = vpop.f32.mrb[0].mxu0
        %v3096 = vadd.f32 %v2957, %v3095
        %v3097 = vpop.f32.mrb[0].mxu0
        %3098 = vmatprep.mubr.f32.mxu0 0.0
        %3099 = vmatmul.mubr.f32.gmra.mrb[0].mxu0 %v2887
        %v3100 = vpop.f32.mrb[0].mxu0
        %v3101 = vadd.f32 %v2957, %v3100
        %v3102 = vpop.f32.mrb[0].mxu0
        %3103 = vmatprep.mubr.f32.mxu0 0.0
        %3104 = vmatmul.mubr.f32.gmra.mrb[0].mxu0 %v2888
        %v3105 = vpop.f32.mrb[0].mxu0
        %v3106 = vadd.f32 %v2957, %v3105
        %v3107 = vpop.f32.mrb[0].mxu0
        %3108 = vmatprep.mubr.f32.mxu0 0.0
        %3109 = vmatmul.mubr.f32.gmra.mrb[0].mxu0 %v2889
        %v3110 = vpop.f32.mrb[0].mxu0
        %v3111 = vadd.f32 %v2957, %v3110
        %v3112 = vpop.f32.mrb[0].mxu0
        %3113 = vmatprep.mubr.f32.mxu0 0.0
        %3114 = vmatmul.mubr.f32.gmra.mrb[0].mxu0 %v2890
        %v3115 = vpop.f32.mrb[0].mxu0
        %v3116 = vadd.f32 %v2957, %v3115
        %v3117 = vpop.f32.mrb[0].mxu0
        %3118 = vmatprep.mubr.f32.mxu0 0.0
        %3119 = vmatmul.mubr.f32.gmra.mrb[0].mxu0 %v2891
        %v3120 = vpop.f32.mrb[0].mxu0
        %v3121 = vadd.f32 %v2957, %v3120
        %v3122 = vpop.f32.mrb[0].mxu0
        %3123 = vmatprep.mubr.f32.mxu0 0.0
        %3124 = vmatmul.mubr.f32.gmra.mrb[0].mxu0 %v2892
        %v3125 = vpop.f32.mrb[0].mxu0
        %v3126 = vadd.f32 %v2957, %v3125
        %v3127 = vpop.f32.mrb[0].mxu0
        %3128 = vmatprep.mubr.f32.mxu0 0.0
        %3129 = vmatmul.mubr.f32.gmra.mrb[0].mxu0 %v2893
        %v3130 = vpop.f32.mrb[0].mxu0
        %v3131 = vadd.f32 %v2957, %v3130
        %v3132 = vpop.f32.mrb[0].mxu0
        %3133 = vmatprep.mubr.f32.mxu0 0.0
        %3134 = vmatmul.mubr.f32.gmra.mrb[0].mxu0 %v2894
        %v3135 = vpop.f32.mrb[0].mxu0
        %v3136 = vadd.f32 %v2957, %v3135
        %v3137 = vpop.f32.mrb[0].mxu0
        %3138 = vmatprep.mubr.f32.mxu0 0.0
        %3139 = vmatmul.mubr.f32.gmra.mrb[0].mxu0 %v2895
        %v3140 = vpop.f32.mrb[0].mxu0
        %v3141 = vadd.f32 %v2957, %v3140
        %v3142 = vpop.f32.mrb[0].mxu0
        %3143 = vmatprep.mubr.f32.mxu0 0.0
        %3144 = vmatmul.mubr.f32.gmra.mrb[0].mxu0 %v2896
        %v3145 = vpop.f32.mrb[0].mxu0
        %v3146 = vadd.f32 %v2957, %v3145
        %v3147 = vpop.f32.mrb[0].mxu0
        %3148 = vmatprep.mubr.f32.mxu0 0.0
        %3149 = vmatmul.mubr.f32.gmra.mrb[0].mxu0 %v2897
        %v3150 = vpop.f32.mrb[0].mxu0
        %v3151 = vadd.f32 %v2957, %v3150
        %v3152 = vpop.f32.mrb[0].mxu0
        %3153 = vmatprep.mubr.f32.mxu0 0.0
        %3154 = vmatmul.mubr.f32.gmra.mrb[0].mxu0 %v2898
        %v3155 = vpop.f32.mrb[0].mxu0
        %v3156 = vadd.f32 %v2957, %v3155
        %v3157 = vpop.f32.mrb[0].mxu0
        %3158 = vmatprep.mubr.f32.mxu0 0.0
        %3159 = vmatmul.mubr.f32.gmra.mrb[0].mxu0 %v2899
        %v3160 = vpop.f32.mrb[0].mxu0
        %v3161 = vadd.f32 %v2957, %v3160
        %v3162 = vpop.f32.mrb[0].mxu0
        %3163 = vmatprep.mubr.f32.mxu0 0.0
        %3164 = vmatmul.mubr.f32.gmra.mrb[0].mxu0 %v2900
        %v3165 = vpop.f32.mrb[0].mxu0
        %v3166 = vadd.f32 %v2957, %v3165
        %v3167 = vpop.f32.mrb[0].mxu0
        %3168 = vmatprep.mubr.f32.mxu0 0.0
        %3169 = vmatmul.mubr.f32.gmra.mrb[0].mxu0 %v2901
        %v3170 = vpop.f32.mrb[0].mxu0
        %v3171 = vadd.f32 %v2957, %v3170
        %v3172 = vpop.f32.mrb[0].mxu0
        %3173 = vmatprep.mubr.f32.mxu0 0.0
        %3174 = vmatmul.mubr.f32.gmra.mrb[0].mxu0 %v2902
        %v3175 = vpop.f32.mrb[0].mxu0
        %v3176 = vadd.f32 %v2957, %v3175
        %v3177 = vpop.f32.mrb[0].mxu0
        %3178 = vmatprep.mubr.f32.mxu0 0.0
        %3179 = vmatmul.mubr.f32.gmra.mrb[0].mxu0 %v2903
        %v3180 = vpop.f32.mrb[0].mxu0
        %v3181 = vadd.f32 %v2957, %v3180
        %v3182 = vpop.f32.mrb[0].mxu0
        %3183 = vmatprep.mubr.f32.mxu0 0.0
        %3184 = vmatmul.mubr.f32.gmra.mrb[0].mxu0 %v2904
        %v3185 = vpop.f32.mrb[0].mxu0
        %v3186 = vadd.f32 %v2957, %v3185
        %v3187 = vpop.f32.mrb[0].mxu0
        %3188 = vmatprep.mubr.f32.mxu0 0.0
        %3189 = vmatmul.mubr.f32.gmra.mrb[0].mxu0 %v2905
        %v3190 = vpop.f32.mrb[0].mxu0
        %v3191 = vadd.f32 %v2957, %v3190
        %v3192 = vpop.f32.mrb[0].mxu0
        %3193 = vmatprep.mubr.f32.mxu0 0.0
        %3194 = vmatmul.mubr.f32.gmra.mrb[0].mxu0 %v2906
        %v3195 = vpop.f32.mrb[0].mxu0
        %v3196 = vadd.f32 %v2957, %v3195
        %v3197 = vpop.f32.mrb[0].mxu0
        %3198 = vmatprep.mubr.f32.mxu0 0.0
        %3199 = vmatmul.mubr.f32.gmra.mrb[0].mxu0 %v2907
        %v3200 = vpop.f32.mrb[0].mxu0
        %v3201 = vadd.f32 %v2957, %v3200
        %v3202 = vpop.f32.mrb[0].mxu0
        %3203 = vmatprep.mubr.f32.mxu0 0.0
        %3204 = vmatmul.mubr.f32.gmra.mrb[0].mxu0 %v2908
        %v3205 = vpop.f32.mrb[0].mxu0
        %v3206 = vadd.f32 %v2957, %v3205
        %v3207 = vpop.f32.mrb[0].mxu0
        %3208 = vmatprep.mubr.f32.mxu0 0.0
        %3209 = vmatmul.mubr.f32.gmra.mrb[0].mxu0 %v2909
        %v3210 = vpop.f32.mrb[0].mxu0
        %v3211 = vadd.f32 %v2957, %v3210
        %v3212 = vpop.f32.mrb[0].mxu0
        %3213 = vmatprep.mubr.f32.mxu0 0.0
        %3214 = vmatmul.mubr.f32.gmra.mrb[0].mxu0 %v2910
        %v3215 = vpop.f32.mrb[0].mxu0
        %v3216 = vadd.f32 %v2957, %v3215
        %v3217 = vpop.f32.mrb[0].mxu0
        %3218 = vmatprep.mubr.f32.mxu0 0.0
        %3219 = vmatmul.mubr.f32.gmra.mrb[0].mxu0 %v2911
        %v3220 = vpop.f32.mrb[0].mxu0
        %v3221 = vadd.f32 %v2957, %v3220
        %v3222 = vpop.f32.mrb[0].mxu0
        %3223 = vmatprep.mubr.f32.mxu0 0.0
        %3224 = vmatmul.mubr.f32.gmra.mrb[0].mxu0 %v2912
        %v3225 = vpop.f32.mrb[0].mxu0
        %v3226 = vadd.f32 %v2957, %v3225
        %v3227 = vpop.f32.mrb[0].mxu0
        %3228 = vmatprep.mubr.f32.mxu0 0.0
        %3229 = vmatmul.mubr.f32.gmra.mrb[0].mxu0 %v2913
        %v3230 = vpop.f32.mrb[0].mxu0
        %v3231 = vadd.f32 %v2957, %v3230
        %v3232 = vpop.f32.mrb[0].mxu0
        %3233 = vmatprep.mubr.f32.mxu0 0.0
        %3234 = vmatmul.mubr.f32.gmra.mrb[0].mxu0 %v2914
        %v3235 = vpop.f32.mrb[0].mxu0
        %v3236 = vadd.f32 %v2957, %v3235
        %v3237 = vpop.f32.mrb[0].mxu0
        %3238 = vmatprep.mubr.f32.mxu0 0.0
        %3239 = vmatmul.mubr.f32.gmra.mrb[0].mxu0 %v2915
        %v3240 = vpop.f32.mrb[0].mxu0
        %v3241 = vadd.f32 %v2957, %v3240
        %v3242 = vpop.f32.mrb[0].mxu0
        %3243 = vmatprep.mubr.f32.mxu0 0.0
        %3244 = vmatmul.mubr.f32.gmra.mrb[0].mxu0 %v2916
        %v3245 = vpop.f32.mrb[0].mxu0
        %v3246 = vadd.f32 %v2957, %v3245
        %v3247 = vpop.f32.mrb[0].mxu0
        %3248 = vmatprep.mubr.f32.mxu0 0.0
        %3249 = vmatmul.mubr.f32.gmra.mrb[0].mxu0 %v2917
        %v3250 = vpop.f32.mrb[0].mxu0
        %v3251 = vadd.f32 %v2957, %v3250
        %v3252 = vpop.f32.mrb[0].mxu0
        %3253 = vmatprep.mubr.f32.mxu0 0.0
        %3254 = vmatmul.mubr.f32.gmra.mrb[0].mxu0 %v2918
        %v3255 = vpop.f32.mrb[0].mxu0
        %v3256 = vadd.f32 %v2957, %v3255
        %v3257 = vpop.f32.mrb[0].mxu0
        %3258 = vmatprep.mubr.f32.mxu0 0.0
        %3259 = vmatmul.mubr.f32.gmra.mrb[0].mxu0 %v2919
        %v3260 = vpop.f32.mrb[0].mxu0
        %v3261 = vadd.f32 %v2957, %v3260
        %v3262 = vpop.f32.mrb[0].mxu0
        %3263 = vmatprep.mubr.f32.mxu0 0.0
        %3264 = vmatmul.mubr.f32.gmra.mrb[0].mxu0 %v2920
        %v3265 = vpop.f32.mrb[0].mxu0
        %v3266 = vadd.f32 %v2957, %v3265
        %v3267 = vpop.f32.mrb[0].mxu0
        %3268 = vmatprep.mubr.f32.mxu0 0.0
        %3269 = vmatmul.mubr.f32.gmra.mrb[0].mxu0 %v2921
        %v3270 = vpop.f32.mrb[0].mxu0
        %v3271 = vadd.f32 %v2957, %v3270
        %v3272 = vpop.f32.mrb[0].mxu0
        %3273 = vmatprep.mubr.f32.mxu0 0.0
        %3274 = vmatmul.mubr.f32.gmra.mrb[0].mxu0 %v2922
        %v3275 = vpop.f32.mrb[0].mxu0
        %v3276 = vadd.f32 %v2957, %v3275
        %v3277 = vpop.f32.mrb[0].mxu0
        %3278 = vmatprep.mubr.f32.mxu0 0.0
        %3279 = vmatmul.mubr.f32.gmra.mrb[0].mxu0 %v2923
        %v3280 = vpop.f32.mrb[0].mxu0
        %v3281 = vadd.f32 %v2957, %v3280
        %v3282 = vpop.f32.mrb[0].mxu0
        %3283 = vmatprep.mubr.f32.mxu0 0.0
        %3284 = vmatmul.mubr.f32.gmra.mrb[0].mxu0 %v2924
        %v3285 = vpop.f32.mrb[0].mxu0
        %v3286 = vadd.f32 %v2957, %v3285
        %v3287 = vpop.f32.mrb[0].mxu0
        %3288 = vmatprep.mubr.f32.mxu0 0.0
        %3289 = vmatmul.mubr.f32.gmra.mrb[0].mxu0 %v2925
        %v3290 = vpop.f32.mrb[0].mxu0
        %v3291 = vadd.f32 %v2957, %v3290
        %v3292 = vpop.f32.mrb[0].mxu0
        %3293 = vmatprep.mubr.f32.mxu0 0.0
        %3294 = vmatmul.mubr.f32.gmra.mrb[0].mxu0 %v2926
        %v3295 = vpop.f32.mrb[0].mxu0
        %v3296 = vadd.f32 %v2957, %v3295
        %v3297 = vpop.f32.mrb[0].mxu0
        %3298 = vmatprep.mubr.f32.mxu0 0.0
        %3299 = vmatmul.mubr.f32.gmra.mrb[0].mxu0 %v2927
        %v3300 = vpop.f32.mrb[0].mxu0
        %v3301 = vadd.f32 %v2957, %v3300
        %v3302 = vpop.f32.mrb[0].mxu0
        %3303 = vmatprep.mubr.f32.mxu0 0.0
        %3304 = vmatmul.mubr.f32.gmra.mrb[0].mxu0 %v2928
        %v3305 = vpop.f32.mrb[0].mxu0
        %v3306 = vadd.f32 %v2957, %v3305
        %v3307 = vpop.f32.mrb[0].mxu0
        %3308 = vmatprep.mubr.f32.mxu0 0.0
        %3309 = vmatmul.mubr.f32.gmra.mrb[0].mxu0 %v2929
        %v3310 = vpop.f32.mrb[0].mxu0
        %v3311 = vadd.f32 %v2957, %v3310
        %v3312 = vpop.f32.mrb[0].mxu0
        %3313 = vmatprep.mubr.f32.mxu0 0.0
        %3314 = vmatmul.mubr.f32.gmra.mrb[0].mxu0 %v2930
        %v3315 = vpop.f32.mrb[0].mxu0
        %v3316 = vadd.f32 %v2957, %v3315
        %v3317 = vpop.f32.mrb[0].mxu0
        %3318 = vmatprep.mubr.f32.mxu0 0.0
        %3319 = vmatmul.mubr.f32.gmra.mrb[0].mxu0 %v2931
        %v3320 = vpop.f32.mrb[0].mxu0
        %v3321 = vadd.f32 %v2957, %v3320
        %v3322 = vpop.f32.mrb[0].mxu0
        %3323 = vmatprep.mubr.f32.mxu0 0.0
        %3324 = vmatmul.mubr.f32.gmra.mrb[0].mxu0 %v2932
        %v3325 = vpop.f32.mrb[0].mxu0
        %v3326 = vadd.f32 %v2957, %v3325
        %v3327 = vpop.f32.mrb[0].mxu0
        %3328 = vmatprep.mubr.f32.mxu0 0.0
        %3329 = vmatmul.mubr.f32.gmra.mrb[0].mxu0 %v2933
        %v3330 = vpop.f32.mrb[0].mxu0
        %v3331 = vadd.f32 %v2957, %v3330
        %v3332 = vpop.f32.mrb[0].mxu0
        %3333 = vmatprep.mubr.f32.mxu0 0.0
        %3334 = vmatmul.mubr.f32.gmra.mrb[0].mxu0 %v2934
        %v3335 = vpop.f32.mrb[0].mxu0
        %v3336 = vadd.f32 %v2957, %v3335
        %v3337 = vpop.f32.mrb[0].mxu0
        %3338 = vmatprep.mubr.f32.mxu0 0.0
        %3339 = vmatmul.mubr.f32.gmra.mrb[0].mxu0 %v2935
        %v3340 = vpop.f32.mrb[0].mxu0
        %v3341 = vadd.f32 %v2957, %v3340
        %v3342 = vpop.f32.mrb[0].mxu0
        %3343 = vdwg.mxu0
        %v3344 = vadd.f32 %v2400, %v3026
        %v3345 = vadd.f32 %v2401, %v3031
        %v3346 = vadd.f32 %v2402, %v3036
        %v3347 = vadd.f32 %v2403, %v3041
        %v3348 = vadd.f32 %v2404, %v3046
        %v3349 = vadd.f32 %v2405, %v3051
        %v3350 = vadd.f32 %v2406, %v3056
        %v3351 = vadd.f32 %v2407, %v3061
        %v3352 = vadd.f32 %v2408, %v3066
        %v3353 = vadd.f32 %v2409, %v3071
        %v3354 = vadd.f32 %v2410, %v3076
        %v3355 = vadd.f32 %v2411, %v3081
        %v3356 = vadd.f32 %v2412, %v3086
        %v3357 = vadd.f32 %v2413, %v3091
        %v3358 = vadd.f32 %v2414, %v3096
        %v3359 = vadd.f32 %v2415, %v3101
        %v3360 = vadd.f32 %v2416, %v3106
        %v3361 = vadd.f32 %v2417, %v3111
        %v3362 = vadd.f32 %v2418, %v3116
        %v3363 = vadd.f32 %v2419, %v3121
        %v3364 = vadd.f32 %v2420, %v3126
        %v3365 = vadd.f32 %v2421, %v3131
        %v3366 = vadd.f32 %v2422, %v3136
        %v3367 = vadd.f32 %v2423, %v3141
        %v3368 = vadd.f32 %v2424, %v3146
        %v3369 = vadd.f32 %v2425, %v3151
        %v3370 = vadd.f32 %v2426, %v3156
        %v3371 = vadd.f32 %v2427, %v3161
        %v3372 = vadd.f32 %v2428, %v3166
        %v3373 = vadd.f32 %v2429, %v3171
        %v3374 = vadd.f32 %v2430, %v3176
        %v3375 = vadd.f32 %v2431, %v3181
        %v3376 = vadd.f32 %v2432, %v3186
        %v3377 = vadd.f32 %v2433, %v3191
        %v3378 = vadd.f32 %v2434, %v3196
        %v3379 = vadd.f32 %v2435, %v3201
        %v3380 = vadd.f32 %v2436, %v3206
        %v3381 = vadd.f32 %v2437, %v3211
        %v3382 = vadd.f32 %v2438, %v3216
        %v3383 = vadd.f32 %v2439, %v3221
        %v3384 = vadd.f32 %v2440, %v3226
        %v3385 = vadd.f32 %v2441, %v3231
        %v3386 = vadd.f32 %v2442, %v3236
        %v3387 = vadd.f32 %v2443, %v3241
        %v3388 = vadd.f32 %v2444, %v3246
        %v3389 = vadd.f32 %v2445, %v3251
        %v3390 = vadd.f32 %v2446, %v3256
        %v3391 = vadd.f32 %v2447, %v3261
        %v3392 = vadd.f32 %v2448, %v3266
        %v3393 = vadd.f32 %v2449, %v3271
        %v3394 = vadd.f32 %v2450, %v3276
        %v3395 = vadd.f32 %v2451, %v3281
        %v3396 = vadd.f32 %v2452, %v3286
        %v3397 = vadd.f32 %v2453, %v3291
        %v3398 = vadd.f32 %v2454, %v3296
        %v3399 = vadd.f32 %v2455, %v3301
        %v3400 = vadd.f32 %v2456, %v3306
        %v3401 = vadd.f32 %v2457, %v3311
        %v3402 = vadd.f32 %v2458, %v3316
        %v3403 = vadd.f32 %v2459, %v3321
        %v3404 = vadd.f32 %v2460, %v3326
        %v3405 = vadd.f32 %v2461, %v3331
        %v3406 = vadd.f32 %v2462, %v3336
        %v3407 = vadd.f32 %v2463, %v3341
        %s3408 = scalar_lea.vmem %s2, 640
        %v3409 = vld [vmem:[%s3408] sm:$0xff]
        %v3410 = vld [vmem:[%s3408 + $0x8] sm:$0xff]
        %v3411 = vld [vmem:[%s3408 + $0x10] sm:$0xff]
        %v3412 = vld [vmem:[%s3408 + $0x18] sm:$0xff]
        %v3413 = vld [vmem:[%s3408 + $0x20] sm:$0xff]
        %v3414 = vld [vmem:[%s3408 + $0x28] sm:$0xff]
        %v3415 = vld [vmem:[%s3408 + $0x30] sm:$0xff]
        %v3416 = vld [vmem:[%s3408 + $0x38] sm:$0xff]
        %v3417 = vld [vmem:[%s3408 + $0x40] sm:$0xff]
        %v3418 = vld [vmem:[%s3408 + $0x48] sm:$0xff]
        %v3419 = vld [vmem:[%s3408 + $0x50] sm:$0xff]
        %v3420 = vld [vmem:[%s3408 + $0x58] sm:$0xff]
        %v3421 = vld [vmem:[%s3408 + $0x60] sm:$0xff]
        %v3422 = vld [vmem:[%s3408 + $0x68] sm:$0xff]
        %v3423 = vld [vmem:[%s3408 + $0x70] sm:$0xff]
        %v3424 = vld [vmem:[%s3408 + $0x78] sm:$0xff]
        %v3426 = vlaneseq
        %v3427 = vshrl.u32 %v3426, 7
        %v3428 = vsub.s32 0, %v3427
        %v3429 = vrot.slane %v205, %v3428
        %3431 = vmatprep.subr.mxu0 0.0
        %3432 = vmatpush1.msra.mxu0 %v3409
        %3433 = vmatprep.subr.mxu0 0.0
        %3434 = vmatpush1.msra.mxu0 %v3410
        %3435 = vmatprep.subr.mxu0 0.0
        %3436 = vmatpush1.msra.mxu0 %v3411
        %3437 = vmatprep.subr.mxu0 0.0
        %3438 = vmatpush1.msra.mxu0 %v3412
        %3439 = vmatprep.subr.mxu0 0.0
        %3440 = vmatpush1.msra.mxu0 %v3413
        %3441 = vmatprep.subr.mxu0 0.0
        %3442 = vmatpush1.msra.mxu0 %v3414
        %3443 = vmatprep.subr.mxu0 0.0
        %3444 = vmatpush1.msra.mxu0 %v3415
        %3445 = vmatprep.subr.mxu0 0.0
        %3446 = vmatpush1.msra.mxu0 %v3416
        %3447 = vmatprep.subr.mxu0 0.0
        %3448 = vmatpush1.msra.mxu0 %v3417
        %3449 = vmatprep.subr.mxu0 0.0
        %3450 = vmatpush1.msra.mxu0 %v3418
        %3451 = vmatprep.subr.mxu0 0.0
        %3452 = vmatpush1.msra.mxu0 %v3419
        %3453 = vmatprep.subr.mxu0 0.0
        %3454 = vmatpush1.msra.mxu0 %v3420
        %3455 = vmatprep.subr.mxu0 0.0
        %3456 = vmatpush1.msra.mxu0 %v3421
        %3457 = vmatprep.subr.mxu0 0.0
        %3458 = vmatpush1.msra.mxu0 %v3422
        %3459 = vmatprep.subr.mxu0 0.0
        %3460 = vmatpush1.msra.mxu0 %v3423
        %3461 = vmatprep.subr.mxu0 0.0
        %3462 = vmatpush1.msra.mxu0 %v3424
        %3463 = vmatprep.subr.mxu0 0.0
        %3464 = vmatpush1.msra.mxu0 0.0
        %3465 = vmatprep.subr.mxu0 0.0
        %3466 = vmatpush1.msra.mxu0 0.0
        %3467 = vmatprep.subr.mxu0 0.0
        %3468 = vmatpush1.msra.mxu0 0.0
        %3469 = vmatprep.subr.mxu0 0.0
        %3470 = vmatpush1.msra.mxu0 0.0
        %3471 = vmatprep.subr.mxu0 0.0
        %3472 = vmatpush1.msra.mxu0 0.0
        %3473 = vmatprep.subr.mxu0 0.0
        %3474 = vmatpush1.msra.mxu0 0.0
        %3475 = vmatprep.subr.mxu0 0.0
        %3476 = vmatpush1.msra.mxu0 0.0
        %3477 = vmatprep.subr.mxu0 0.0
        %3478 = vmatpush1.msra.mxu0 0.0
        %3479 = vmatprep.subr.mxu0 0.0
        %3480 = vmatpush1.msra.mxu0 0.0
        %3481 = vmatprep.subr.mxu0 0.0
        %3482 = vmatpush1.msra.mxu0 0.0
        %3483 = vmatprep.subr.mxu0 0.0
        %3484 = vmatpush1.msra.mxu0 0.0
        %3485 = vmatprep.subr.mxu0 0.0
        %3486 = vmatpush1.msra.mxu0 0.0
        %3487 = vmatprep.subr.mxu0 0.0
        %3488 = vmatpush1.msra.mxu0 0.0
        %3489 = vmatprep.subr.mxu0 0.0
        %3490 = vmatpush1.msra.mxu0 0.0
        %3491 = vmatprep.subr.mxu0 0.0
        %3492 = vmatpush1.msra.mxu0 0.0
        %3493 = vmatprep.subr.mxu0 0.0
        %3494 = vmatpush1.msra.mxu0 0.0
        %3495 = vmatprep.mubr.f32.mxu0 0.0
        %3496 = vmatmul.mubr.f32.gmra.mrb[0].mxu0 %v3344
        %v3497 = vpop.f32.mrb[0].mxu0
        %v3498 = vadd.f32 %v3429, %v3497
        %v3499 = vpop.f32.mrb[0].mxu0
        %3500 = vmatprep.mubr.f32.mxu0 0.0
        %3501 = vmatmul.mubr.f32.gmra.mrb[0].mxu0 %v3345
        %v3502 = vpop.f32.mrb[0].mxu0
        %v3503 = vadd.f32 %v3429, %v3502
        %v3504 = vpop.f32.mrb[0].mxu0
        %3505 = vmatprep.mubr.f32.mxu0 0.0
        %3506 = vmatmul.mubr.f32.gmra.mrb[0].mxu0 %v3346
        %v3507 = vpop.f32.mrb[0].mxu0
        %v3508 = vadd.f32 %v3429, %v3507
        %v3509 = vpop.f32.mrb[0].mxu0
        %3510 = vmatprep.mubr.f32.mxu0 0.0
        %3511 = vmatmul.mubr.f32.gmra.mrb[0].mxu0 %v3347
        %v3512 = vpop.f32.mrb[0].mxu0
        %v3513 = vadd.f32 %v3429, %v3512
        %v3514 = vpop.f32.mrb[0].mxu0
        %3515 = vmatprep.mubr.f32.mxu0 0.0
        %3516 = vmatmul.mubr.f32.gmra.mrb[0].mxu0 %v3348
        %v3517 = vpop.f32.mrb[0].mxu0
        %v3518 = vadd.f32 %v3429, %v3517
        %v3519 = vpop.f32.mrb[0].mxu0
        %3520 = vmatprep.mubr.f32.mxu0 0.0
        %3521 = vmatmul.mubr.f32.gmra.mrb[0].mxu0 %v3349
        %v3522 = vpop.f32.mrb[0].mxu0
        %v3523 = vadd.f32 %v3429, %v3522
        %v3524 = vpop.f32.mrb[0].mxu0
        %3525 = vmatprep.mubr.f32.mxu0 0.0
        %3526 = vmatmul.mubr.f32.gmra.mrb[0].mxu0 %v3350
        %v3527 = vpop.f32.mrb[0].mxu0
        %v3528 = vadd.f32 %v3429, %v3527
        %v3529 = vpop.f32.mrb[0].mxu0
        %3530 = vmatprep.mubr.f32.mxu0 0.0
        %3531 = vmatmul.mubr.f32.gmra.mrb[0].mxu0 %v3351
        %v3532 = vpop.f32.mrb[0].mxu0
        %v3533 = vadd.f32 %v3429, %v3532
        %v3534 = vpop.f32.mrb[0].mxu0
        %3535 = vmatprep.mubr.f32.mxu0 0.0
        %3536 = vmatmul.mubr.f32.gmra.mrb[0].mxu0 %v3352
        %v3537 = vpop.f32.mrb[0].mxu0
        %v3538 = vadd.f32 %v3429, %v3537
        %v3539 = vpop.f32.mrb[0].mxu0
        %3540 = vmatprep.mubr.f32.mxu0 0.0
        %3541 = vmatmul.mubr.f32.gmra.mrb[0].mxu0 %v3353
        %v3542 = vpop.f32.mrb[0].mxu0
        %v3543 = vadd.f32 %v3429, %v3542
        %v3544 = vpop.f32.mrb[0].mxu0
        %3545 = vmatprep.mubr.f32.mxu0 0.0
        %3546 = vmatmul.mubr.f32.gmra.mrb[0].mxu0 %v3354
        %v3547 = vpop.f32.mrb[0].mxu0
        %v3548 = vadd.f32 %v3429, %v3547
        %v3549 = vpop.f32.mrb[0].mxu0
        %3550 = vmatprep.mubr.f32.mxu0 0.0
        %3551 = vmatmul.mubr.f32.gmra.mrb[0].mxu0 %v3355
        %v3552 = vpop.f32.mrb[0].mxu0
        %v3553 = vadd.f32 %v3429, %v3552
        %v3554 = vpop.f32.mrb[0].mxu0
        %3555 = vmatprep.mubr.f32.mxu0 0.0
        %3556 = vmatmul.mubr.f32.gmra.mrb[0].mxu0 %v3356
        %v3557 = vpop.f32.mrb[0].mxu0
        %v3558 = vadd.f32 %v3429, %v3557
        %v3559 = vpop.f32.mrb[0].mxu0
        %3560 = vmatprep.mubr.f32.mxu0 0.0
        %3561 = vmatmul.mubr.f32.gmra.mrb[0].mxu0 %v3357
        %v3562 = vpop.f32.mrb[0].mxu0
        %v3563 = vadd.f32 %v3429, %v3562
        %v3564 = vpop.f32.mrb[0].mxu0
        %3565 = vmatprep.mubr.f32.mxu0 0.0
        %3566 = vmatmul.mubr.f32.gmra.mrb[0].mxu0 %v3358
        %v3567 = vpop.f32.mrb[0].mxu0
        %v3568 = vadd.f32 %v3429, %v3567
        %v3569 = vpop.f32.mrb[0].mxu0
        %3570 = vmatprep.mubr.f32.mxu0 0.0
        %3571 = vmatmul.mubr.f32.gmra.mrb[0].mxu0 %v3359
        %v3572 = vpop.f32.mrb[0].mxu0
        %v3573 = vadd.f32 %v3429, %v3572
        %v3574 = vpop.f32.mrb[0].mxu0
        %3575 = vmatprep.mubr.f32.mxu0 0.0
        %3576 = vmatmul.mubr.f32.gmra.mrb[0].mxu0 %v3360
        %v3577 = vpop.f32.mrb[0].mxu0
        %v3578 = vadd.f32 %v3429, %v3577
        %v3579 = vpop.f32.mrb[0].mxu0
        %3580 = vmatprep.mubr.f32.mxu0 0.0
        %3581 = vmatmul.mubr.f32.gmra.mrb[0].mxu0 %v3361
        %v3582 = vpop.f32.mrb[0].mxu0
        %v3583 = vadd.f32 %v3429, %v3582
        %v3584 = vpop.f32.mrb[0].mxu0
        %3585 = vmatprep.mubr.f32.mxu0 0.0
        %3586 = vmatmul.mubr.f32.gmra.mrb[0].mxu0 %v3362
        %v3587 = vpop.f32.mrb[0].mxu0
        %v3588 = vadd.f32 %v3429, %v3587
        %v3589 = vpop.f32.mrb[0].mxu0
        %3590 = vmatprep.mubr.f32.mxu0 0.0
        %3591 = vmatmul.mubr.f32.gmra.mrb[0].mxu0 %v3363
        %v3592 = vpop.f32.mrb[0].mxu0
        %v3593 = vadd.f32 %v3429, %v3592
        %v3594 = vpop.f32.mrb[0].mxu0
        %3595 = vmatprep.mubr.f32.mxu0 0.0
        %3596 = vmatmul.mubr.f32.gmra.mrb[0].mxu0 %v3364
        %v3597 = vpop.f32.mrb[0].mxu0
        %v3598 = vadd.f32 %v3429, %v3597
        %v3599 = vpop.f32.mrb[0].mxu0
        %3600 = vmatprep.mubr.f32.mxu0 0.0
        %3601 = vmatmul.mubr.f32.gmra.mrb[0].mxu0 %v3365
        %v3602 = vpop.f32.mrb[0].mxu0
        %v3603 = vadd.f32 %v3429, %v3602
        %v3604 = vpop.f32.mrb[0].mxu0
        %3605 = vmatprep.mubr.f32.mxu0 0.0
        %3606 = vmatmul.mubr.f32.gmra.mrb[0].mxu0 %v3366
        %v3607 = vpop.f32.mrb[0].mxu0
        %v3608 = vadd.f32 %v3429, %v3607
        %v3609 = vpop.f32.mrb[0].mxu0
        %3610 = vmatprep.mubr.f32.mxu0 0.0
        %3611 = vmatmul.mubr.f32.gmra.mrb[0].mxu0 %v3367
        %v3612 = vpop.f32.mrb[0].mxu0
        %v3613 = vadd.f32 %v3429, %v3612
        %v3614 = vpop.f32.mrb[0].mxu0
        %3615 = vmatprep.mubr.f32.mxu0 0.0
        %3616 = vmatmul.mubr.f32.gmra.mrb[0].mxu0 %v3368
        %v3617 = vpop.f32.mrb[0].mxu0
        %v3618 = vadd.f32 %v3429, %v3617
        %v3619 = vpop.f32.mrb[0].mxu0
        %3620 = vmatprep.mubr.f32.mxu0 0.0
        %3621 = vmatmul.mubr.f32.gmra.mrb[0].mxu0 %v3369
        %v3622 = vpop.f32.mrb[0].mxu0
        %v3623 = vadd.f32 %v3429, %v3622
        %v3624 = vpop.f32.mrb[0].mxu0
        %3625 = vmatprep.mubr.f32.mxu0 0.0
        %3626 = vmatmul.mubr.f32.gmra.mrb[0].mxu0 %v3370
        %v3627 = vpop.f32.mrb[0].mxu0
        %v3628 = vadd.f32 %v3429, %v3627
        %v3629 = vpop.f32.mrb[0].mxu0
        %3630 = vmatprep.mubr.f32.mxu0 0.0
        %3631 = vmatmul.mubr.f32.gmra.mrb[0].mxu0 %v3371
        %v3632 = vpop.f32.mrb[0].mxu0
        %v3633 = vadd.f32 %v3429, %v3632
        %v3634 = vpop.f32.mrb[0].mxu0
        %3635 = vmatprep.mubr.f32.mxu0 0.0
        %3636 = vmatmul.mubr.f32.gmra.mrb[0].mxu0 %v3372
        %v3637 = vpop.f32.mrb[0].mxu0
        %v3638 = vadd.f32 %v3429, %v3637
        %v3639 = vpop.f32.mrb[0].mxu0
        %3640 = vmatprep.mubr.f32.mxu0 0.0
        %3641 = vmatmul.mubr.f32.gmra.mrb[0].mxu0 %v3373
        %v3642 = vpop.f32.mrb[0].mxu0
        %v3643 = vadd.f32 %v3429, %v3642
        %v3644 = vpop.f32.mrb[0].mxu0
        %3645 = vmatprep.mubr.f32.mxu0 0.0
        %3646 = vmatmul.mubr.f32.gmra.mrb[0].mxu0 %v3374
        %v3647 = vpop.f32.mrb[0].mxu0
        %v3648 = vadd.f32 %v3429, %v3647
        %v3649 = vpop.f32.mrb[0].mxu0
        %3650 = vmatprep.mubr.f32.mxu0 0.0
        %3651 = vmatmul.mubr.f32.gmra.mrb[0].mxu0 %v3375
        %v3652 = vpop.f32.mrb[0].mxu0
        %v3653 = vadd.f32 %v3429, %v3652
        %v3654 = vpop.f32.mrb[0].mxu0
        %3655 = vmatprep.mubr.f32.mxu0 0.0
        %3656 = vmatmul.mubr.f32.gmra.mrb[0].mxu0 %v3376
        %v3657 = vpop.f32.mrb[0].mxu0
        %v3658 = vadd.f32 %v3429, %v3657
        %v3659 = vpop.f32.mrb[0].mxu0
        %3660 = vmatprep.mubr.f32.mxu0 0.0
        %3661 = vmatmul.mubr.f32.gmra.mrb[0].mxu0 %v3377
        %v3662 = vpop.f32.mrb[0].mxu0
        %v3663 = vadd.f32 %v3429, %v3662
        %v3664 = vpop.f32.mrb[0].mxu0
        %3665 = vmatprep.mubr.f32.mxu0 0.0
        %3666 = vmatmul.mubr.f32.gmra.mrb[0].mxu0 %v3378
        %v3667 = vpop.f32.mrb[0].mxu0
        %v3668 = vadd.f32 %v3429, %v3667
        %v3669 = vpop.f32.mrb[0].mxu0
        %3670 = vmatprep.mubr.f32.mxu0 0.0
        %3671 = vmatmul.mubr.f32.gmra.mrb[0].mxu0 %v3379
        %v3672 = vpop.f32.mrb[0].mxu0
        %v3673 = vadd.f32 %v3429, %v3672
        %v3674 = vpop.f32.mrb[0].mxu0
        %3675 = vmatprep.mubr.f32.mxu0 0.0
        %3676 = vmatmul.mubr.f32.gmra.mrb[0].mxu0 %v3380
        %v3677 = vpop.f32.mrb[0].mxu0
        %v3678 = vadd.f32 %v3429, %v3677
        %v3679 = vpop.f32.mrb[0].mxu0
        %3680 = vmatprep.mubr.f32.mxu0 0.0
        %3681 = vmatmul.mubr.f32.gmra.mrb[0].mxu0 %v3381
        %v3682 = vpop.f32.mrb[0].mxu0
        %v3683 = vadd.f32 %v3429, %v3682
        %v3684 = vpop.f32.mrb[0].mxu0
        %3685 = vmatprep.mubr.f32.mxu0 0.0
        %3686 = vmatmul.mubr.f32.gmra.mrb[0].mxu0 %v3382
        %v3687 = vpop.f32.mrb[0].mxu0
        %v3688 = vadd.f32 %v3429, %v3687
        %v3689 = vpop.f32.mrb[0].mxu0
        %3690 = vmatprep.mubr.f32.mxu0 0.0
        %3691 = vmatmul.mubr.f32.gmra.mrb[0].mxu0 %v3383
        %v3692 = vpop.f32.mrb[0].mxu0
        %v3693 = vadd.f32 %v3429, %v3692
        %v3694 = vpop.f32.mrb[0].mxu0
        %3695 = vmatprep.mubr.f32.mxu0 0.0
        %3696 = vmatmul.mubr.f32.gmra.mrb[0].mxu0 %v3384
        %v3697 = vpop.f32.mrb[0].mxu0
        %v3698 = vadd.f32 %v3429, %v3697
        %v3699 = vpop.f32.mrb[0].mxu0
        %3700 = vmatprep.mubr.f32.mxu0 0.0
        %3701 = vmatmul.mubr.f32.gmra.mrb[0].mxu0 %v3385
        %v3702 = vpop.f32.mrb[0].mxu0
        %v3703 = vadd.f32 %v3429, %v3702
        %v3704 = vpop.f32.mrb[0].mxu0
        %3705 = vmatprep.mubr.f32.mxu0 0.0
        %3706 = vmatmul.mubr.f32.gmra.mrb[0].mxu0 %v3386
        %v3707 = vpop.f32.mrb[0].mxu0
        %v3708 = vadd.f32 %v3429, %v3707
        %v3709 = vpop.f32.mrb[0].mxu0
        %3710 = vmatprep.mubr.f32.mxu0 0.0
        %3711 = vmatmul.mubr.f32.gmra.mrb[0].mxu0 %v3387
        %v3712 = vpop.f32.mrb[0].mxu0
        %v3713 = vadd.f32 %v3429, %v3712
        %v3714 = vpop.f32.mrb[0].mxu0
        %3715 = vmatprep.mubr.f32.mxu0 0.0
        %3716 = vmatmul.mubr.f32.gmra.mrb[0].mxu0 %v3388
        %v3717 = vpop.f32.mrb[0].mxu0
        %v3718 = vadd.f32 %v3429, %v3717
        %v3719 = vpop.f32.mrb[0].mxu0
        %3720 = vmatprep.mubr.f32.mxu0 0.0
        %3721 = vmatmul.mubr.f32.gmra.mrb[0].mxu0 %v3389
        %v3722 = vpop.f32.mrb[0].mxu0
        %v3723 = vadd.f32 %v3429, %v3722
        %v3724 = vpop.f32.mrb[0].mxu0
        %3725 = vmatprep.mubr.f32.mxu0 0.0
        %3726 = vmatmul.mubr.f32.gmra.mrb[0].mxu0 %v3390
        %v3727 = vpop.f32.mrb[0].mxu0
        %v3728 = vadd.f32 %v3429, %v3727
        %v3729 = vpop.f32.mrb[0].mxu0
        %3730 = vmatprep.mubr.f32.mxu0 0.0
        %3731 = vmatmul.mubr.f32.gmra.mrb[0].mxu0 %v3391
        %v3732 = vpop.f32.mrb[0].mxu0
        %v3733 = vadd.f32 %v3429, %v3732
        %v3734 = vpop.f32.mrb[0].mxu0
        %3735 = vmatprep.mubr.f32.mxu0 0.0
        %3736 = vmatmul.mubr.f32.gmra.mrb[0].mxu0 %v3392
        %v3737 = vpop.f32.mrb[0].mxu0
        %v3738 = vadd.f32 %v3429, %v3737
        %v3739 = vpop.f32.mrb[0].mxu0
        %3740 = vmatprep.mubr.f32.mxu0 0.0
        %3741 = vmatmul.mubr.f32.gmra.mrb[0].mxu0 %v3393
        %v3742 = vpop.f32.mrb[0].mxu0
        %v3743 = vadd.f32 %v3429, %v3742
        %v3744 = vpop.f32.mrb[0].mxu0
        %3745 = vmatprep.mubr.f32.mxu0 0.0
        %3746 = vmatmul.mubr.f32.gmra.mrb[0].mxu0 %v3394
        %v3747 = vpop.f32.mrb[0].mxu0
        %v3748 = vadd.f32 %v3429, %v3747
        %v3749 = vpop.f32.mrb[0].mxu0
        %3750 = vmatprep.mubr.f32.mxu0 0.0
        %3751 = vmatmul.mubr.f32.gmra.mrb[0].mxu0 %v3395
        %v3752 = vpop.f32.mrb[0].mxu0
        %v3753 = vadd.f32 %v3429, %v3752
        %v3754 = vpop.f32.mrb[0].mxu0
        %3755 = vmatprep.mubr.f32.mxu0 0.0
        %3756 = vmatmul.mubr.f32.gmra.mrb[0].mxu0 %v3396
        %v3757 = vpop.f32.mrb[0].mxu0
        %v3758 = vadd.f32 %v3429, %v3757
        %v3759 = vpop.f32.mrb[0].mxu0
        %3760 = vmatprep.mubr.f32.mxu0 0.0
        %3761 = vmatmul.mubr.f32.gmra.mrb[0].mxu0 %v3397
        %v3762 = vpop.f32.mrb[0].mxu0
        %v3763 = vadd.f32 %v3429, %v3762
        %v3764 = vpop.f32.mrb[0].mxu0
        %3765 = vmatprep.mubr.f32.mxu0 0.0
        %3766 = vmatmul.mubr.f32.gmra.mrb[0].mxu0 %v3398
        %v3767 = vpop.f32.mrb[0].mxu0
        %v3768 = vadd.f32 %v3429, %v3767
        %v3769 = vpop.f32.mrb[0].mxu0
        %3770 = vmatprep.mubr.f32.mxu0 0.0
        %3771 = vmatmul.mubr.f32.gmra.mrb[0].mxu0 %v3399
        %v3772 = vpop.f32.mrb[0].mxu0
        %v3773 = vadd.f32 %v3429, %v3772
        %v3774 = vpop.f32.mrb[0].mxu0
        %3775 = vmatprep.mubr.f32.mxu0 0.0
        %3776 = vmatmul.mubr.f32.gmra.mrb[0].mxu0 %v3400
        %v3777 = vpop.f32.mrb[0].mxu0
        %v3778 = vadd.f32 %v3429, %v3777
        %v3779 = vpop.f32.mrb[0].mxu0
        %3780 = vmatprep.mubr.f32.mxu0 0.0
        %3781 = vmatmul.mubr.f32.gmra.mrb[0].mxu0 %v3401
        %v3782 = vpop.f32.mrb[0].mxu0
        %v3783 = vadd.f32 %v3429, %v3782
        %v3784 = vpop.f32.mrb[0].mxu0
        %3785 = vmatprep.mubr.f32.mxu0 0.0
        %3786 = vmatmul.mubr.f32.gmra.mrb[0].mxu0 %v3402
        %v3787 = vpop.f32.mrb[0].mxu0
        %v3788 = vadd.f32 %v3429, %v3787
        %v3789 = vpop.f32.mrb[0].mxu0
        %3790 = vmatprep.mubr.f32.mxu0 0.0
        %3791 = vmatmul.mubr.f32.gmra.mrb[0].mxu0 %v3403
        %v3792 = vpop.f32.mrb[0].mxu0
        %v3793 = vadd.f32 %v3429, %v3792
        %v3794 = vpop.f32.mrb[0].mxu0
        %3795 = vmatprep.mubr.f32.mxu0 0.0
        %3796 = vmatmul.mubr.f32.gmra.mrb[0].mxu0 %v3404
        %v3797 = vpop.f32.mrb[0].mxu0
        %v3798 = vadd.f32 %v3429, %v3797
        %v3799 = vpop.f32.mrb[0].mxu0
        %3800 = vmatprep.mubr.f32.mxu0 0.0
        %3801 = vmatmul.mubr.f32.gmra.mrb[0].mxu0 %v3405
        %v3802 = vpop.f32.mrb[0].mxu0
        %v3803 = vadd.f32 %v3429, %v3802
        %v3804 = vpop.f32.mrb[0].mxu0
        %3805 = vmatprep.mubr.f32.mxu0 0.0
        %3806 = vmatmul.mubr.f32.gmra.mrb[0].mxu0 %v3406
        %v3807 = vpop.f32.mrb[0].mxu0
        %v3808 = vadd.f32 %v3429, %v3807
        %v3809 = vpop.f32.mrb[0].mxu0
        %3810 = vmatprep.mubr.f32.mxu0 0.0
        %3811 = vmatmul.mubr.f32.gmra.mrb[0].mxu0 %v3407
        %v3812 = vpop.f32.mrb[0].mxu0
        %v3813 = vadd.f32 %v3429, %v3812
        %v3814 = vpop.f32.mrb[0].mxu0
        %3815 = vdwg.mxu0
        %v3816 = vmax.f32 %v3498, 0.0
        %v3817 = vmax.f32 %v3503, 0.0
        %v3818 = vmax.f32 %v3508, 0.0
        %v3819 = vmax.f32 %v3513, 0.0
        %v3820 = vmax.f32 %v3518, 0.0
        %v3821 = vmax.f32 %v3523, 0.0
        %v3822 = vmax.f32 %v3528, 0.0
        %v3823 = vmax.f32 %v3533, 0.0
        %v3824 = vmax.f32 %v3538, 0.0
        %v3825 = vmax.f32 %v3543, 0.0
        %v3826 = vmax.f32 %v3548, 0.0
        %v3827 = vmax.f32 %v3553, 0.0
        %v3828 = vmax.f32 %v3558, 0.0
        %v3829 = vmax.f32 %v3563, 0.0
        %v3830 = vmax.f32 %v3568, 0.0
        %v3831 = vmax.f32 %v3573, 0.0
        %v3832 = vmax.f32 %v3578, 0.0
        %v3833 = vmax.f32 %v3583, 0.0
        %v3834 = vmax.f32 %v3588, 0.0
        %v3835 = vmax.f32 %v3593, 0.0
        %v3836 = vmax.f32 %v3598, 0.0
        %v3837 = vmax.f32 %v3603, 0.0
        %v3838 = vmax.f32 %v3608, 0.0
        %v3839 = vmax.f32 %v3613, 0.0
        %v3840 = vmax.f32 %v3618, 0.0
        %v3841 = vmax.f32 %v3623, 0.0
        %v3842 = vmax.f32 %v3628, 0.0
        %v3843 = vmax.f32 %v3633, 0.0
        %v3844 = vmax.f32 %v3638, 0.0
        %v3845 = vmax.f32 %v3643, 0.0
        %v3846 = vmax.f32 %v3648, 0.0
        %v3847 = vmax.f32 %v3653, 0.0
        %v3848 = vmax.f32 %v3658, 0.0
        %v3849 = vmax.f32 %v3663, 0.0
        %v3850 = vmax.f32 %v3668, 0.0
        %v3851 = vmax.f32 %v3673, 0.0
        %v3852 = vmax.f32 %v3678, 0.0
        %v3853 = vmax.f32 %v3683, 0.0
        %v3854 = vmax.f32 %v3688, 0.0
        %v3855 = vmax.f32 %v3693, 0.0
        %v3856 = vmax.f32 %v3698, 0.0
        %v3857 = vmax.f32 %v3703, 0.0
        %v3858 = vmax.f32 %v3708, 0.0
        %v3859 = vmax.f32 %v3713, 0.0
        %v3860 = vmax.f32 %v3718, 0.0
        %v3861 = vmax.f32 %v3723, 0.0
        %v3862 = vmax.f32 %v3728, 0.0
        %v3863 = vmax.f32 %v3733, 0.0
        %v3864 = vmax.f32 %v3738, 0.0
        %v3865 = vmax.f32 %v3743, 0.0
        %v3866 = vmax.f32 %v3748, 0.0
        %v3867 = vmax.f32 %v3753, 0.0
        %v3868 = vmax.f32 %v3758, 0.0
        %v3869 = vmax.f32 %v3763, 0.0
        %v3870 = vmax.f32 %v3768, 0.0
        %v3871 = vmax.f32 %v3773, 0.0
        %v3872 = vmax.f32 %v3778, 0.0
        %v3873 = vmax.f32 %v3783, 0.0
        %v3874 = vmax.f32 %v3788, 0.0
        %v3875 = vmax.f32 %v3793, 0.0
        %v3876 = vmax.f32 %v3798, 0.0
        %v3877 = vmax.f32 %v3803, 0.0
        %v3878 = vmax.f32 %v3808, 0.0
        %v3879 = vmax.f32 %v3813, 0.0
        %s3880 = scalar_lea.vmem %s2, 768
        %v3881 = vld [vmem:[%s3880] sm:$0xff]
        %v3882 = vld [vmem:[%s3880 + $0x8] sm:$0xff]
        %v3883 = vld [vmem:[%s3880 + $0x10] sm:$0xff]
        %v3884 = vld [vmem:[%s3880 + $0x18] sm:$0xff]
        %v3885 = vld [vmem:[%s3880 + $0x20] sm:$0xff]
        %v3886 = vld [vmem:[%s3880 + $0x28] sm:$0xff]
        %v3887 = vld [vmem:[%s3880 + $0x30] sm:$0xff]
        %v3888 = vld [vmem:[%s3880 + $0x38] sm:$0xff]
        %v3889 = vld [vmem:[%s3880 + $0x40] sm:$0xff]
        %v3890 = vld [vmem:[%s3880 + $0x48] sm:$0xff]
        %v3891 = vld [vmem:[%s3880 + $0x50] sm:$0xff]
        %v3892 = vld [vmem:[%s3880 + $0x58] sm:$0xff]
        %v3893 = vld [vmem:[%s3880 + $0x60] sm:$0xff]
        %v3894 = vld [vmem:[%s3880 + $0x68] sm:$0xff]
        %v3895 = vld [vmem:[%s3880 + $0x70] sm:$0xff]
        %v3896 = vld [vmem:[%s3880 + $0x78] sm:$0xff]
        %v3898 = vlaneseq
        %v3899 = vshrl.u32 %v3898, 7
        %v3900 = vsub.s32 0, %v3899
        %v3901 = vrot.slane %v206, %v3900
        %3903 = vmatprep.subr.mxu0 0.0
        %3904 = vmatpush1.msra.mxu0 %v3881
        %3905 = vmatprep.subr.mxu0 0.0
        %3906 = vmatpush1.msra.mxu0 %v3882
        %3907 = vmatprep.subr.mxu0 0.0
        %3908 = vmatpush1.msra.mxu0 %v3883
        %3909 = vmatprep.subr.mxu0 0.0
        %3910 = vmatpush1.msra.mxu0 %v3884
        %3911 = vmatprep.subr.mxu0 0.0
        %3912 = vmatpush1.msra.mxu0 %v3885
        %3913 = vmatprep.subr.mxu0 0.0
        %3914 = vmatpush1.msra.mxu0 %v3886
        %3915 = vmatprep.subr.mxu0 0.0
        %3916 = vmatpush1.msra.mxu0 %v3887
        %3917 = vmatprep.subr.mxu0 0.0
        %3918 = vmatpush1.msra.mxu0 %v3888
        %3919 = vmatprep.subr.mxu0 0.0
        %3920 = vmatpush1.msra.mxu0 %v3889
        %3921 = vmatprep.subr.mxu0 0.0
        %3922 = vmatpush1.msra.mxu0 %v3890
        %3923 = vmatprep.subr.mxu0 0.0
        %3924 = vmatpush1.msra.mxu0 %v3891
        %3925 = vmatprep.subr.mxu0 0.0
        %3926 = vmatpush1.msra.mxu0 %v3892
        %3927 = vmatprep.subr.mxu0 0.0
        %3928 = vmatpush1.msra.mxu0 %v3893
        %3929 = vmatprep.subr.mxu0 0.0
        %3930 = vmatpush1.msra.mxu0 %v3894
        %3931 = vmatprep.subr.mxu0 0.0
        %3932 = vmatpush1.msra.mxu0 %v3895
        %3933 = vmatprep.subr.mxu0 0.0
        %3934 = vmatpush1.msra.mxu0 %v3896
        %3935 = vmatprep.subr.mxu0 0.0
        %3936 = vmatpush1.msra.mxu0 0.0
        %3937 = vmatprep.subr.mxu0 0.0
        %3938 = vmatpush1.msra.mxu0 0.0
        %3939 = vmatprep.subr.mxu0 0.0
        %3940 = vmatpush1.msra.mxu0 0.0
        %3941 = vmatprep.subr.mxu0 0.0
        %3942 = vmatpush1.msra.mxu0 0.0
        %3943 = vmatprep.subr.mxu0 0.0
        %3944 = vmatpush1.msra.mxu0 0.0
        %3945 = vmatprep.subr.mxu0 0.0
        %3946 = vmatpush1.msra.mxu0 0.0
        %3947 = vmatprep.subr.mxu0 0.0
        %3948 = vmatpush1.msra.mxu0 0.0
        %3949 = vmatprep.subr.mxu0 0.0
        %3950 = vmatpush1.msra.mxu0 0.0
        %3951 = vmatprep.subr.mxu0 0.0
        %3952 = vmatpush1.msra.mxu0 0.0
        %3953 = vmatprep.subr.mxu0 0.0
        %3954 = vmatpush1.msra.mxu0 0.0
        %3955 = vmatprep.subr.mxu0 0.0
        %3956 = vmatpush1.msra.mxu0 0.0
        %3957 = vmatprep.subr.mxu0 0.0
        %3958 = vmatpush1.msra.mxu0 0.0
        %3959 = vmatprep.subr.mxu0 0.0
        %3960 = vmatpush1.msra.mxu0 0.0
        %3961 = vmatprep.subr.mxu0 0.0
        %3962 = vmatpush1.msra.mxu0 0.0
        %3963 = vmatprep.subr.mxu0 0.0
        %3964 = vmatpush1.msra.mxu0 0.0
        %3965 = vmatprep.subr.mxu0 0.0
        %3966 = vmatpush1.msra.mxu0 0.0
        %3967 = vmatprep.mubr.f32.mxu0 0.0
        %3968 = vmatmul.mubr.f32.gmra.mrb[0].mxu0 %v3816
        %v3969 = vpop.f32.mrb[0].mxu0
        %v3970 = vadd.f32 %v3901, %v3969
        %v3971 = vpop.f32.mrb[0].mxu0
        %3972 = vmatprep.mubr.f32.mxu0 0.0
        %3973 = vmatmul.mubr.f32.gmra.mrb[0].mxu0 %v3817
        %v3974 = vpop.f32.mrb[0].mxu0
        %v3975 = vadd.f32 %v3901, %v3974
        %v3976 = vpop.f32.mrb[0].mxu0
        %3977 = vmatprep.mubr.f32.mxu0 0.0
        %3978 = vmatmul.mubr.f32.gmra.mrb[0].mxu0 %v3818
        %v3979 = vpop.f32.mrb[0].mxu0
        %v3980 = vadd.f32 %v3901, %v3979
        %v3981 = vpop.f32.mrb[0].mxu0
        %3982 = vmatprep.mubr.f32.mxu0 0.0
        %3983 = vmatmul.mubr.f32.gmra.mrb[0].mxu0 %v3819
        %v3984 = vpop.f32.mrb[0].mxu0
        %v3985 = vadd.f32 %v3901, %v3984
        %v3986 = vpop.f32.mrb[0].mxu0
        %3987 = vmatprep.mubr.f32.mxu0 0.0
        %3988 = vmatmul.mubr.f32.gmra.mrb[0].mxu0 %v3820
        %v3989 = vpop.f32.mrb[0].mxu0
        %v3990 = vadd.f32 %v3901, %v3989
        %v3991 = vpop.f32.mrb[0].mxu0
        %3992 = vmatprep.mubr.f32.mxu0 0.0
        %3993 = vmatmul.mubr.f32.gmra.mrb[0].mxu0 %v3821
        %v3994 = vpop.f32.mrb[0].mxu0
        %v3995 = vadd.f32 %v3901, %v3994
        %v3996 = vpop.f32.mrb[0].mxu0
        %3997 = vmatprep.mubr.f32.mxu0 0.0
        %3998 = vmatmul.mubr.f32.gmra.mrb[0].mxu0 %v3822
        %v3999 = vpop.f32.mrb[0].mxu0
        %v4000 = vadd.f32 %v3901, %v3999
        %v4001 = vpop.f32.mrb[0].mxu0
        %4002 = vmatprep.mubr.f32.mxu0 0.0
        %4003 = vmatmul.mubr.f32.gmra.mrb[0].mxu0 %v3823
        %v4004 = vpop.f32.mrb[0].mxu0
        %v4005 = vadd.f32 %v3901, %v4004
        %v4006 = vpop.f32.mrb[0].mxu0
        %4007 = vmatprep.mubr.f32.mxu0 0.0
        %4008 = vmatmul.mubr.f32.gmra.mrb[0].mxu0 %v3824
        %v4009 = vpop.f32.mrb[0].mxu0
        %v4010 = vadd.f32 %v3901, %v4009
        %v4011 = vpop.f32.mrb[0].mxu0
        %4012 = vmatprep.mubr.f32.mxu0 0.0
        %4013 = vmatmul.mubr.f32.gmra.mrb[0].mxu0 %v3825
        %v4014 = vpop.f32.mrb[0].mxu0
        %v4015 = vadd.f32 %v3901, %v4014
        %v4016 = vpop.f32.mrb[0].mxu0
        %4017 = vmatprep.mubr.f32.mxu0 0.0
        %4018 = vmatmul.mubr.f32.gmra.mrb[0].mxu0 %v3826
        %v4019 = vpop.f32.mrb[0].mxu0
        %v4020 = vadd.f32 %v3901, %v4019
        %v4021 = vpop.f32.mrb[0].mxu0
        %4022 = vmatprep.mubr.f32.mxu0 0.0
        %4023 = vmatmul.mubr.f32.gmra.mrb[0].mxu0 %v3827
        %v4024 = vpop.f32.mrb[0].mxu0
        %v4025 = vadd.f32 %v3901, %v4024
        %v4026 = vpop.f32.mrb[0].mxu0
        %4027 = vmatprep.mubr.f32.mxu0 0.0
        %4028 = vmatmul.mubr.f32.gmra.mrb[0].mxu0 %v3828
        %v4029 = vpop.f32.mrb[0].mxu0
        %v4030 = vadd.f32 %v3901, %v4029
        %v4031 = vpop.f32.mrb[0].mxu0
        %4032 = vmatprep.mubr.f32.mxu0 0.0
        %4033 = vmatmul.mubr.f32.gmra.mrb[0].mxu0 %v3829
        %v4034 = vpop.f32.mrb[0].mxu0
        %v4035 = vadd.f32 %v3901, %v4034
        %v4036 = vpop.f32.mrb[0].mxu0
        %4037 = vmatprep.mubr.f32.mxu0 0.0
        %4038 = vmatmul.mubr.f32.gmra.mrb[0].mxu0 %v3830
        %v4039 = vpop.f32.mrb[0].mxu0
        %v4040 = vadd.f32 %v3901, %v4039
        %v4041 = vpop.f32.mrb[0].mxu0
        %4042 = vmatprep.mubr.f32.mxu0 0.0
        %4043 = vmatmul.mubr.f32.gmra.mrb[0].mxu0 %v3831
        %v4044 = vpop.f32.mrb[0].mxu0
        %v4045 = vadd.f32 %v3901, %v4044
        %v4046 = vpop.f32.mrb[0].mxu0
        %4047 = vmatprep.mubr.f32.mxu0 0.0
        %4048 = vmatmul.mubr.f32.gmra.mrb[0].mxu0 %v3832
        %v4049 = vpop.f32.mrb[0].mxu0
        %v4050 = vadd.f32 %v3901, %v4049
        %v4051 = vpop.f32.mrb[0].mxu0
        %4052 = vmatprep.mubr.f32.mxu0 0.0
        %4053 = vmatmul.mubr.f32.gmra.mrb[0].mxu0 %v3833
        %v4054 = vpop.f32.mrb[0].mxu0
        %v4055 = vadd.f32 %v3901, %v4054
        %v4056 = vpop.f32.mrb[0].mxu0
        %4057 = vmatprep.mubr.f32.mxu0 0.0
        %4058 = vmatmul.mubr.f32.gmra.mrb[0].mxu0 %v3834
        %v4059 = vpop.f32.mrb[0].mxu0
        %v4060 = vadd.f32 %v3901, %v4059
        %v4061 = vpop.f32.mrb[0].mxu0
        %4062 = vmatprep.mubr.f32.mxu0 0.0
        %4063 = vmatmul.mubr.f32.gmra.mrb[0].mxu0 %v3835
        %v4064 = vpop.f32.mrb[0].mxu0
        %v4065 = vadd.f32 %v3901, %v4064
        %v4066 = vpop.f32.mrb[0].mxu0
        %4067 = vmatprep.mubr.f32.mxu0 0.0
        %4068 = vmatmul.mubr.f32.gmra.mrb[0].mxu0 %v3836
        %v4069 = vpop.f32.mrb[0].mxu0
        %v4070 = vadd.f32 %v3901, %v4069
        %v4071 = vpop.f32.mrb[0].mxu0
        %4072 = vmatprep.mubr.f32.mxu0 0.0
        %4073 = vmatmul.mubr.f32.gmra.mrb[0].mxu0 %v3837
        %v4074 = vpop.f32.mrb[0].mxu0
        %v4075 = vadd.f32 %v3901, %v4074
        %v4076 = vpop.f32.mrb[0].mxu0
        %4077 = vmatprep.mubr.f32.mxu0 0.0
        %4078 = vmatmul.mubr.f32.gmra.mrb[0].mxu0 %v3838
        %v4079 = vpop.f32.mrb[0].mxu0
        %v4080 = vadd.f32 %v3901, %v4079
        %v4081 = vpop.f32.mrb[0].mxu0
        %4082 = vmatprep.mubr.f32.mxu0 0.0
        %4083 = vmatmul.mubr.f32.gmra.mrb[0].mxu0 %v3839
        %v4084 = vpop.f32.mrb[0].mxu0
        %v4085 = vadd.f32 %v3901, %v4084
        %v4086 = vpop.f32.mrb[0].mxu0
        %4087 = vmatprep.mubr.f32.mxu0 0.0
        %4088 = vmatmul.mubr.f32.gmra.mrb[0].mxu0 %v3840
        %v4089 = vpop.f32.mrb[0].mxu0
        %v4090 = vadd.f32 %v3901, %v4089
        %v4091 = vpop.f32.mrb[0].mxu0
        %4092 = vmatprep.mubr.f32.mxu0 0.0
        %4093 = vmatmul.mubr.f32.gmra.mrb[0].mxu0 %v3841
        %v4094 = vpop.f32.mrb[0].mxu0
        %v4095 = vadd.f32 %v3901, %v4094
        %v4096 = vpop.f32.mrb[0].mxu0
        %4097 = vmatprep.mubr.f32.mxu0 0.0
        %4098 = vmatmul.mubr.f32.gmra.mrb[0].mxu0 %v3842
        %v4099 = vpop.f32.mrb[0].mxu0
        %v4100 = vadd.f32 %v3901, %v4099
        %v4101 = vpop.f32.mrb[0].mxu0
        %4102 = vmatprep.mubr.f32.mxu0 0.0
        %4103 = vmatmul.mubr.f32.gmra.mrb[0].mxu0 %v3843
        %v4104 = vpop.f32.mrb[0].mxu0
        %v4105 = vadd.f32 %v3901, %v4104
        %v4106 = vpop.f32.mrb[0].mxu0
        %4107 = vmatprep.mubr.f32.mxu0 0.0
        %4108 = vmatmul.mubr.f32.gmra.mrb[0].mxu0 %v3844
        %v4109 = vpop.f32.mrb[0].mxu0
        %v4110 = vadd.f32 %v3901, %v4109
        %v4111 = vpop.f32.mrb[0].mxu0
        %4112 = vmatprep.mubr.f32.mxu0 0.0
        %4113 = vmatmul.mubr.f32.gmra.mrb[0].mxu0 %v3845
        %v4114 = vpop.f32.mrb[0].mxu0
        %v4115 = vadd.f32 %v3901, %v4114
        %v4116 = vpop.f32.mrb[0].mxu0
        %4117 = vmatprep.mubr.f32.mxu0 0.0
        %4118 = vmatmul.mubr.f32.gmra.mrb[0].mxu0 %v3846
        %v4119 = vpop.f32.mrb[0].mxu0
        %v4120 = vadd.f32 %v3901, %v4119
        %v4121 = vpop.f32.mrb[0].mxu0
        %4122 = vmatprep.mubr.f32.mxu0 0.0
        %4123 = vmatmul.mubr.f32.gmra.mrb[0].mxu0 %v3847
        %v4124 = vpop.f32.mrb[0].mxu0
        %v4125 = vadd.f32 %v3901, %v4124
        %v4126 = vpop.f32.mrb[0].mxu0
        %4127 = vmatprep.mubr.f32.mxu0 0.0
        %4128 = vmatmul.mubr.f32.gmra.mrb[0].mxu0 %v3848
        %v4129 = vpop.f32.mrb[0].mxu0
        %v4130 = vadd.f32 %v3901, %v4129
        %v4131 = vpop.f32.mrb[0].mxu0
        %4132 = vmatprep.mubr.f32.mxu0 0.0
        %4133 = vmatmul.mubr.f32.gmra.mrb[0].mxu0 %v3849
        %v4134 = vpop.f32.mrb[0].mxu0
        %v4135 = vadd.f32 %v3901, %v4134
        %v4136 = vpop.f32.mrb[0].mxu0
        %4137 = vmatprep.mubr.f32.mxu0 0.0
        %4138 = vmatmul.mubr.f32.gmra.mrb[0].mxu0 %v3850
        %v4139 = vpop.f32.mrb[0].mxu0
        %v4140 = vadd.f32 %v3901, %v4139
        %v4141 = vpop.f32.mrb[0].mxu0
        %4142 = vmatprep.mubr.f32.mxu0 0.0
        %4143 = vmatmul.mubr.f32.gmra.mrb[0].mxu0 %v3851
        %v4144 = vpop.f32.mrb[0].mxu0
        %v4145 = vadd.f32 %v3901, %v4144
        %v4146 = vpop.f32.mrb[0].mxu0
        %4147 = vmatprep.mubr.f32.mxu0 0.0
        %4148 = vmatmul.mubr.f32.gmra.mrb[0].mxu0 %v3852
        %v4149 = vpop.f32.mrb[0].mxu0
        %v4150 = vadd.f32 %v3901, %v4149
        %v4151 = vpop.f32.mrb[0].mxu0
        %4152 = vmatprep.mubr.f32.mxu0 0.0
        %4153 = vmatmul.mubr.f32.gmra.mrb[0].mxu0 %v3853
        %v4154 = vpop.f32.mrb[0].mxu0
        %v4155 = vadd.f32 %v3901, %v4154
        %v4156 = vpop.f32.mrb[0].mxu0
        %4157 = vmatprep.mubr.f32.mxu0 0.0
        %4158 = vmatmul.mubr.f32.gmra.mrb[0].mxu0 %v3854
        %v4159 = vpop.f32.mrb[0].mxu0
        %v4160 = vadd.f32 %v3901, %v4159
        %v4161 = vpop.f32.mrb[0].mxu0
        %4162 = vmatprep.mubr.f32.mxu0 0.0
        %4163 = vmatmul.mubr.f32.gmra.mrb[0].mxu0 %v3855
        %v4164 = vpop.f32.mrb[0].mxu0
        %v4165 = vadd.f32 %v3901, %v4164
        %v4166 = vpop.f32.mrb[0].mxu0
        %4167 = vmatprep.mubr.f32.mxu0 0.0
        %4168 = vmatmul.mubr.f32.gmra.mrb[0].mxu0 %v3856
        %v4169 = vpop.f32.mrb[0].mxu0
        %v4170 = vadd.f32 %v3901, %v4169
        %v4171 = vpop.f32.mrb[0].mxu0
        %4172 = vmatprep.mubr.f32.mxu0 0.0
        %4173 = vmatmul.mubr.f32.gmra.mrb[0].mxu0 %v3857
        %v4174 = vpop.f32.mrb[0].mxu0
        %v4175 = vadd.f32 %v3901, %v4174
        %v4176 = vpop.f32.mrb[0].mxu0
        %4177 = vmatprep.mubr.f32.mxu0 0.0
        %4178 = vmatmul.mubr.f32.gmra.mrb[0].mxu0 %v3858
        %v4179 = vpop.f32.mrb[0].mxu0
        %v4180 = vadd.f32 %v3901, %v4179
        %v4181 = vpop.f32.mrb[0].mxu0
        %4182 = vmatprep.mubr.f32.mxu0 0.0
        %4183 = vmatmul.mubr.f32.gmra.mrb[0].mxu0 %v3859
        %v4184 = vpop.f32.mrb[0].mxu0
        %v4185 = vadd.f32 %v3901, %v4184
        %v4186 = vpop.f32.mrb[0].mxu0
        %4187 = vmatprep.mubr.f32.mxu0 0.0
        %4188 = vmatmul.mubr.f32.gmra.mrb[0].mxu0 %v3860
        %v4189 = vpop.f32.mrb[0].mxu0
        %v4190 = vadd.f32 %v3901, %v4189
        %v4191 = vpop.f32.mrb[0].mxu0
        %4192 = vmatprep.mubr.f32.mxu0 0.0
        %4193 = vmatmul.mubr.f32.gmra.mrb[0].mxu0 %v3861
        %v4194 = vpop.f32.mrb[0].mxu0
        %v4195 = vadd.f32 %v3901, %v4194
        %v4196 = vpop.f32.mrb[0].mxu0
        %4197 = vmatprep.mubr.f32.mxu0 0.0
        %4198 = vmatmul.mubr.f32.gmra.mrb[0].mxu0 %v3862
        %v4199 = vpop.f32.mrb[0].mxu0
        %v4200 = vadd.f32 %v3901, %v4199
        %v4201 = vpop.f32.mrb[0].mxu0
        %4202 = vmatprep.mubr.f32.mxu0 0.0
        %4203 = vmatmul.mubr.f32.gmra.mrb[0].mxu0 %v3863
        %v4204 = vpop.f32.mrb[0].mxu0
        %v4205 = vadd.f32 %v3901, %v4204
        %v4206 = vpop.f32.mrb[0].mxu0
        %4207 = vmatprep.mubr.f32.mxu0 0.0
        %4208 = vmatmul.mubr.f32.gmra.mrb[0].mxu0 %v3864
        %v4209 = vpop.f32.mrb[0].mxu0
        %v4210 = vadd.f32 %v3901, %v4209
        %v4211 = vpop.f32.mrb[0].mxu0
        %4212 = vmatprep.mubr.f32.mxu0 0.0
        %4213 = vmatmul.mubr.f32.gmra.mrb[0].mxu0 %v3865
        %v4214 = vpop.f32.mrb[0].mxu0
        %v4215 = vadd.f32 %v3901, %v4214
        %v4216 = vpop.f32.mrb[0].mxu0
        %4217 = vmatprep.mubr.f32.mxu0 0.0
        %4218 = vmatmul.mubr.f32.gmra.mrb[0].mxu0 %v3866
        %v4219 = vpop.f32.mrb[0].mxu0
        %v4220 = vadd.f32 %v3901, %v4219
        %v4221 = vpop.f32.mrb[0].mxu0
        %4222 = vmatprep.mubr.f32.mxu0 0.0
        %4223 = vmatmul.mubr.f32.gmra.mrb[0].mxu0 %v3867
        %v4224 = vpop.f32.mrb[0].mxu0
        %v4225 = vadd.f32 %v3901, %v4224
        %v4226 = vpop.f32.mrb[0].mxu0
        %4227 = vmatprep.mubr.f32.mxu0 0.0
        %4228 = vmatmul.mubr.f32.gmra.mrb[0].mxu0 %v3868
        %v4229 = vpop.f32.mrb[0].mxu0
        %v4230 = vadd.f32 %v3901, %v4229
        %v4231 = vpop.f32.mrb[0].mxu0
        %4232 = vmatprep.mubr.f32.mxu0 0.0
        %4233 = vmatmul.mubr.f32.gmra.mrb[0].mxu0 %v3869
        %v4234 = vpop.f32.mrb[0].mxu0
        %v4235 = vadd.f32 %v3901, %v4234
        %v4236 = vpop.f32.mrb[0].mxu0
        %4237 = vmatprep.mubr.f32.mxu0 0.0
        %4238 = vmatmul.mubr.f32.gmra.mrb[0].mxu0 %v3870
        %v4239 = vpop.f32.mrb[0].mxu0
        %v4240 = vadd.f32 %v3901, %v4239
        %v4241 = vpop.f32.mrb[0].mxu0
        %4242 = vmatprep.mubr.f32.mxu0 0.0
        %4243 = vmatmul.mubr.f32.gmra.mrb[0].mxu0 %v3871
        %v4244 = vpop.f32.mrb[0].mxu0
        %v4245 = vadd.f32 %v3901, %v4244
        %v4246 = vpop.f32.mrb[0].mxu0
        %4247 = vmatprep.mubr.f32.mxu0 0.0
        %4248 = vmatmul.mubr.f32.gmra.mrb[0].mxu0 %v3872
        %v4249 = vpop.f32.mrb[0].mxu0
        %v4250 = vadd.f32 %v3901, %v4249
        %v4251 = vpop.f32.mrb[0].mxu0
        %4252 = vmatprep.mubr.f32.mxu0 0.0
        %4253 = vmatmul.mubr.f32.gmra.mrb[0].mxu0 %v3873
        %v4254 = vpop.f32.mrb[0].mxu0
        %v4255 = vadd.f32 %v3901, %v4254
        %v4256 = vpop.f32.mrb[0].mxu0
        %4257 = vmatprep.mubr.f32.mxu0 0.0
        %4258 = vmatmul.mubr.f32.gmra.mrb[0].mxu0 %v3874
        %v4259 = vpop.f32.mrb[0].mxu0
        %v4260 = vadd.f32 %v3901, %v4259
        %v4261 = vpop.f32.mrb[0].mxu0
        %4262 = vmatprep.mubr.f32.mxu0 0.0
        %4263 = vmatmul.mubr.f32.gmra.mrb[0].mxu0 %v3875
        %v4264 = vpop.f32.mrb[0].mxu0
        %v4265 = vadd.f32 %v3901, %v4264
        %v4266 = vpop.f32.mrb[0].mxu0
        %4267 = vmatprep.mubr.f32.mxu0 0.0
        %4268 = vmatmul.mubr.f32.gmra.mrb[0].mxu0 %v3876
        %v4269 = vpop.f32.mrb[0].mxu0
        %v4270 = vadd.f32 %v3901, %v4269
        %v4271 = vpop.f32.mrb[0].mxu0
        %4272 = vmatprep.mubr.f32.mxu0 0.0
        %4273 = vmatmul.mubr.f32.gmra.mrb[0].mxu0 %v3877
        %v4274 = vpop.f32.mrb[0].mxu0
        %v4275 = vadd.f32 %v3901, %v4274
        %v4276 = vpop.f32.mrb[0].mxu0
        %4277 = vmatprep.mubr.f32.mxu0 0.0
        %4278 = vmatmul.mubr.f32.gmra.mrb[0].mxu0 %v3878
        %v4279 = vpop.f32.mrb[0].mxu0
        %v4280 = vadd.f32 %v3901, %v4279
        %v4281 = vpop.f32.mrb[0].mxu0
        %4282 = vmatprep.mubr.f32.mxu0 0.0
        %4283 = vmatmul.mubr.f32.gmra.mrb[0].mxu0 %v3879
        %v4284 = vpop.f32.mrb[0].mxu0
        %v4285 = vadd.f32 %v3901, %v4284
        %v4286 = vpop.f32.mrb[0].mxu0
        %4287 = vdwg.mxu0
        %v4288 = vadd.f32 %v3344, %v3970
        %v4289 = vadd.f32 %v3345, %v3975
        %v4290 = vadd.f32 %v3346, %v3980
        %v4291 = vadd.f32 %v3347, %v3985
        %v4292 = vadd.f32 %v3348, %v3990
        %v4293 = vadd.f32 %v3349, %v3995
        %v4294 = vadd.f32 %v3350, %v4000
        %v4295 = vadd.f32 %v3351, %v4005
        %v4296 = vadd.f32 %v3352, %v4010
        %v4297 = vadd.f32 %v3353, %v4015
        %v4298 = vadd.f32 %v3354, %v4020
        %v4299 = vadd.f32 %v3355, %v4025
        %v4300 = vadd.f32 %v3356, %v4030
        %v4301 = vadd.f32 %v3357, %v4035
        %v4302 = vadd.f32 %v3358, %v4040
        %v4303 = vadd.f32 %v3359, %v4045
        %v4304 = vadd.f32 %v3360, %v4050
        %v4305 = vadd.f32 %v3361, %v4055
        %v4306 = vadd.f32 %v3362, %v4060
        %v4307 = vadd.f32 %v3363, %v4065
        %v4308 = vadd.f32 %v3364, %v4070
        %v4309 = vadd.f32 %v3365, %v4075
        %v4310 = vadd.f32 %v3366, %v4080
        %v4311 = vadd.f32 %v3367, %v4085
        %v4312 = vadd.f32 %v3368, %v4090
        %v4313 = vadd.f32 %v3369, %v4095
        %v4314 = vadd.f32 %v3370, %v4100
        %v4315 = vadd.f32 %v3371, %v4105
        %v4316 = vadd.f32 %v3372, %v4110
        %v4317 = vadd.f32 %v3373, %v4115
        %v4318 = vadd.f32 %v3374, %v4120
        %v4319 = vadd.f32 %v3375, %v4125
        %v4320 = vadd.f32 %v3376, %v4130
        %v4321 = vadd.f32 %v3377, %v4135
        %v4322 = vadd.f32 %v3378, %v4140
        %v4323 = vadd.f32 %v3379, %v4145
        %v4324 = vadd.f32 %v3380, %v4150
        %v4325 = vadd.f32 %v3381, %v4155
        %v4326 = vadd.f32 %v3382, %v4160
        %v4327 = vadd.f32 %v3383, %v4165
        %v4328 = vadd.f32 %v3384, %v4170
        %v4329 = vadd.f32 %v3385, %v4175
        %v4330 = vadd.f32 %v3386, %v4180
        %v4331 = vadd.f32 %v3387, %v4185
        %v4332 = vadd.f32 %v3388, %v4190
        %v4333 = vadd.f32 %v3389, %v4195
        %v4334 = vadd.f32 %v3390, %v4200
        %v4335 = vadd.f32 %v3391, %v4205
        %v4336 = vadd.f32 %v3392, %v4210
        %v4337 = vadd.f32 %v3393, %v4215
        %v4338 = vadd.f32 %v3394, %v4220
        %v4339 = vadd.f32 %v3395, %v4225
        %v4340 = vadd.f32 %v3396, %v4230
        %v4341 = vadd.f32 %v3397, %v4235
        %v4342 = vadd.f32 %v3398, %v4240
        %v4343 = vadd.f32 %v3399, %v4245
        %v4344 = vadd.f32 %v3400, %v4250
        %v4345 = vadd.f32 %v3401, %v4255
        %v4346 = vadd.f32 %v3402, %v4260
        %v4347 = vadd.f32 %v3403, %v4265
        %v4348 = vadd.f32 %v3404, %v4270
        %v4349 = vadd.f32 %v3405, %v4275
        %v4350 = vadd.f32 %v3406, %v4280
        %v4351 = vadd.f32 %v3407, %v4285
        %4352 = vst [vmem:[%s191] sm:$0xff] %v4288
        %4353 = vst [vmem:[%s191 + $0x8] sm:$0xff] %v4289
        %4354 = vst [vmem:[%s191 + $0x10] sm:$0xff] %v4290
        %4355 = vst [vmem:[%s191 + $0x18] sm:$0xff] %v4291
        %4356 = vst [vmem:[%s191 + $0x20] sm:$0xff] %v4292
        %4357 = vst [vmem:[%s191 + $0x28] sm:$0xff] %v4293
        %4358 = vst [vmem:[%s191 + $0x30] sm:$0xff] %v4294
        %4359 = vst [vmem:[%s191 + $0x38] sm:$0xff] %v4295
        %4360 = vst [vmem:[%s191 + $0x40] sm:$0xff] %v4296
        %4361 = vst [vmem:[%s191 + $0x48] sm:$0xff] %v4297
        %4362 = vst [vmem:[%s191 + $0x50] sm:$0xff] %v4298
        %4363 = vst [vmem:[%s191 + $0x58] sm:$0xff] %v4299
        %4364 = vst [vmem:[%s191 + $0x60] sm:$0xff] %v4300
        %4365 = vst [vmem:[%s191 + $0x68] sm:$0xff] %v4301
        %4366 = vst [vmem:[%s191 + $0x70] sm:$0xff] %v4302
        %4367 = vst [vmem:[%s191 + $0x78] sm:$0xff] %v4303
        %4368 = vst [vmem:[%s191 + $0x80] sm:$0xff] %v4304
        %4369 = vst [vmem:[%s191 + $0x88] sm:$0xff] %v4305
        %4370 = vst [vmem:[%s191 + $0x90] sm:$0xff] %v4306
        %4371 = vst [vmem:[%s191 + $0x98] sm:$0xff] %v4307
        %4372 = vst [vmem:[%s191 + $0xa0] sm:$0xff] %v4308
        %4373 = vst [vmem:[%s191 + $0xa8] sm:$0xff] %v4309
        %4374 = vst [vmem:[%s191 + $0xb0] sm:$0xff] %v4310
        %4375 = vst [vmem:[%s191 + $0xb8] sm:$0xff] %v4311
        %4376 = vst [vmem:[%s191 + $0xc0] sm:$0xff] %v4312
        %4377 = vst [vmem:[%s191 + $0xc8] sm:$0xff] %v4313
        %4378 = vst [vmem:[%s191 + $0xd0] sm:$0xff] %v4314
        %4379 = vst [vmem:[%s191 + $0xd8] sm:$0xff] %v4315
        %4380 = vst [vmem:[%s191 + $0xe0] sm:$0xff] %v4316
        %4381 = vst [vmem:[%s191 + $0xe8] sm:$0xff] %v4317
        %4382 = vst [vmem:[%s191 + $0xf0] sm:$0xff] %v4318
        %4383 = vst [vmem:[%s191 + $0xf8] sm:$0xff] %v4319
        %4384 = vst [vmem:[%s191 + $0x100] sm:$0xff] %v4320
        %4385 = vst [vmem:[%s191 + $0x108] sm:$0xff] %v4321
        %4386 = vst [vmem:[%s191 + $0x110] sm:$0xff] %v4322
        %4387 = vst [vmem:[%s191 + $0x118] sm:$0xff] %v4323
        %4388 = vst [vmem:[%s191 + $0x120] sm:$0xff] %v4324
        %4389 = vst [vmem:[%s191 + $0x128] sm:$0xff] %v4325
        %4390 = vst [vmem:[%s191 + $0x130] sm:$0xff] %v4326
        %4391 = vst [vmem:[%s191 + $0x138] sm:$0xff] %v4327
        %4392 = vst [vmem:[%s191 + $0x140] sm:$0xff] %v4328
        %4393 = vst [vmem:[%s191 + $0x148] sm:$0xff] %v4329
        %4394 = vst [vmem:[%s191 + $0x150] sm:$0xff] %v4330
        %4395 = vst [vmem:[%s191 + $0x158] sm:$0xff] %v4331
        %4396 = vst [vmem:[%s191 + $0x160] sm:$0xff] %v4332
        %4397 = vst [vmem:[%s191 + $0x168] sm:$0xff] %v4333
        %4398 = vst [vmem:[%s191 + $0x170] sm:$0xff] %v4334
        %4399 = vst [vmem:[%s191 + $0x178] sm:$0xff] %v4335
        %4400 = vst [vmem:[%s191 + $0x180] sm:$0xff] %v4336
        %4401 = vst [vmem:[%s191 + $0x188] sm:$0xff] %v4337
        %4402 = vst [vmem:[%s191 + $0x190] sm:$0xff] %v4338
        %4403 = vst [vmem:[%s191 + $0x198] sm:$0xff] %v4339
        %4404 = vst [vmem:[%s191 + $0x1a0] sm:$0xff] %v4340
        %4405 = vst [vmem:[%s191 + $0x1a8] sm:$0xff] %v4341
        %4406 = vst [vmem:[%s191 + $0x1b0] sm:$0xff] %v4342
        %4407 = vst [vmem:[%s191 + $0x1b8] sm:$0xff] %v4343
        %4408 = vst [vmem:[%s191 + $0x1c0] sm:$0xff] %v4344
        %4409 = vst [vmem:[%s191 + $0x1c8] sm:$0xff] %v4345
        %4410 = vst [vmem:[%s191 + $0x1d0] sm:$0xff] %v4346
        %4411 = vst [vmem:[%s191 + $0x1d8] sm:$0xff] %v4347
        %4412 = vst [vmem:[%s191 + $0x1e0] sm:$0xff] %v4348
        %4413 = vst [vmem:[%s191 + $0x1e8] sm:$0xff] %v4349
        %4414 = vst [vmem:[%s191 + $0x1f0] sm:$0xff] %v4350
        %4415 = vst [vmem:[%s191 + $0x1f8] sm:$0xff] %v4351
        %s4416 = sand.u32 %s115, 1
        %s4417 = scalar_lea.sflag [#allocation3], %s4416
        %s4418 = sand.u32 %s115, 1
        %s4419 = smul.addr %s4418, 512
        %s4420 = scalar_lea.vmem [#allocation2], %s4419
        // Predicated region
        $region37: #{tpu_custom_call.1} parent=35 // pred_check
          %p4421 = pneg %p125
        $region38: #{tpu_custom_call.1} parent=35 // pred_check_branch
          %4423 = sbr.rel (%p4421) target = $region40
        $region39: #{tpu_custom_call.1} parent=35 // pred_region
          %s4424 = smul.u32 64, %s18
          %s4426 = ssub.s32 8192, 8192
          %4427 = vsyncadd %s4417, %s4426
          %s4428 = smul.addr %s4424, 128
          %s4429 = scalar_lea.hbm %s4, %s4428
          %s4430 = sshll.u32 %s4420, 4
          %s4431 = int_to_ptr.vmem [resolvable:$true] %s4430
          %4436 = dma.vmem_to_hbm [thread:$0]  %s4431, 8192, %s4429, %s4417, 128, 128, 8
        $region40: #{tpu_custom_call.1} parent=35 // pred_fallthru
          _
      $region36: #{tpu_custom_call.1} parent=5 // pred_fallthru
        _
      %p4437 = scmp.le.s32.totalorder 2, %s13
      // Predicated region
      $region41: #{tpu_custom_call.1} parent=5 // pred_check
        %p4438 = pneg %p4437
      $region42: #{tpu_custom_call.1} parent=5 // pred_check_branch
        %4440 = sbr.rel (%p4438) target = $region44
      $region43: #{tpu_custom_call.1} parent=5 // pred_region
        %s4441 = ssub.s32 %s13, 2
        // Predicated region
        $region45: #{tpu_custom_call.1} parent=43 // pred_check
          %p4442 = pneg %p131
        $region46: #{tpu_custom_call.1} parent=43 // pred_check_branch
          %4444 = sbr.rel (%p4442) target = $region48
        $region47: #{tpu_custom_call.1} parent=43 // pred_region
          %s4445 = sand.u32 %s116, 1
          %s4446 = scalar_lea.sflag [#allocation3], %s4445
          %s4447 = sand.u32 %s116, 1
          %s4448 = smul.addr %s4447, 512
          %s4449 = scalar_lea.vmem [#allocation2], %s4448
          %4450 = dma.done %s4446, 8192
        $region48: #{tpu_custom_call.1} parent=43 // pred_fallthru
          _
      $region44: #{tpu_custom_call.1} parent=5 // pred_fallthru
        _
    $region6: #{tpu_custom_call.1} parent=1 // loop_footer
      %s17 = sadd.s32 1, %s13
    $region7: #{tpu_custom_call.1} parent=1 // loop_footer_branch
      %12 = sbr.rel target = $region3
    $region8: #{tpu_custom_call.1} parent=1 // loop_exit
      _
    %4451 = vsyncpa [#allocation3], 1
    %s4452 = scalar_lea.sflag [#allocation3], 1
    %4453 = vsyncpa %s4452, 1

// kernel: tpu_custom_call.1
$region0: #{tpu_custom_call.1}
  #allocation0 [shape = 'u32[]', space=smem, size = 0x4, offset = 0x4, fixed_abs, tag = 'smem constant byte address 0x4 - core index']
  #allocation1 [shape = 'u32[144,128]{1,0:T(1,128)}', space=vmem, size = 0x12000, scoped, tag = 'internal scratch']
  %s0 = inlined_call_operand.vmem [shape: f32[1024,16], index: 0, kind: input, shape index: {}]
  %s1 = inlined_call_operand.vmem [shape: f32[16,128], index: 1, kind: input, shape index: {}]
  %s2 = inlined_call_operand.vmem [shape: f32[7,128,128], index: 2, kind: input, shape index: {}]
  %s3 = inlined_call_operand.vmem [shape: f32[8,1,128], index: 3, kind: input, shape index: {}]
  %s4 = inlined_call_operand.hbm [shape: f32[1024,128], index: 4, kind: output, shape index: {}]
  %s5 = sld [smem:[#allocation0]]
  $region49: #{tpu_custom_call.1} parent=0
    _
  %s7 = ssub.s32 1, %s5
  %s8 = scalar_select 0, %s7, %s5
  $region1: #{tpu_custom_call.1} parent=0
    #allocation2 [shape = 'u8[524288]{0}', space=vmem, size = 0x80000, scoped, tag = 'output window, operand 0']
    #allocation3 [shape = 's32[2]{0}', space=sflag, size = 0x8, scoped, tag = 'scoped memory for tpu_custom_call.1']
    %9 = vsyncpa [#allocation3], 0
    %s10 = scalar_lea.sflag [#allocation3], 1
    %11 = vsyncpa %s10, 0
    loop: start=0, step=1, limit=4
    $region2: #{tpu_custom_call.1} parent=1 // loop_pre_header
      _
    $region3: #{tpu_custom_call.1} parent=1 // loop_header
      %s13 = sphi 0, %s17
      %p14 = scmp.ge.s32.totalorder %s13, 4
      %s23 = sphi 0, %s25
      %s26 = sphi 0, %s23
      %s27 = sphi 0, %s26
      %s43 = sphi 0, %s27
      %s47 = sphi 0, %s47
      %s49 = sphi 0, %s47
      %s50 = sphi 0, %s49
      %s64 = sphi 0, %s50
      %s68 = sphi 0, %s68
      %s70 = sphi 0, %s68
      %s71 = sphi 0, %s70
      %s85 = sphi 0, %s71
      %s89 = sphi 0, %s89
      %s91 = sphi 0, %s89
      %s92 = sphi 0, %s91
      %s106 = sphi 0, %s92
      %s112 = sphi 0, %s114
      %s115 = sphi 0, %s112
      %s116 = sphi 0, %s115
      %s132 = sphi 0, %s116
    $region4: #{tpu_custom_call.1} parent=1 // loop_header_branch
      %16 = sbr.rel (%p14) target = $region8
    $region5: #{tpu_custom_call.1} parent=1 // loop_body
      %s18 = ssub.s32 %s13, 1
      %s19 = ssub.s32 %s13, 2
      %s20 = sadd.s32 %s13, 1
      %s21 = ssub.s32 %s13, %s20
      %p22 = scmp.eq.s32.totalorder %s21, 0
      %s24 = sadd.s32 %s23, 1
      %s25 = scalar_select %p22, %s23, %s24
      %p28 = pneg %p22
      %p29 = scmp.eq.s32.totalorder %s13, 1
      %p30 = por %p28, %p29
      %p31 = scmp.ne.s32.totalorder %s23, %s26
      %p32 = scmp.eq.s32.totalorder %s13, 0
      %p33 = por %p31, %p32
      %p34 = scmp.ne.s32.totalorder %s23, %s26
      %p35 = scmp.eq.s32.totalorder %s18, 1
      %p36 = por %p34, %p35
      %p37 = scmp.ne.s32.totalorder %s26, %s27
      %p38 = scmp.eq.s32.totalorder %s18, 0
      %p39 = por %p37, %p38
      %p40 = scmp.ne.s32.totalorder %s26, %s27
      %p41 = scmp.eq.s32.totalorder %s19, 1
      %p42 = por %p40, %p41
      %p44 = scmp.ne.s32.totalorder %s27, %s43
      %p45 = scmp.eq.s32.totalorder %s19, 0
      %p46 = por %p44, %p45
      %s48 = sadd.s32 %s47, 1
      %p51 = scmp.eq.s32.totalorder %s13, 1
      %p52 = scmp.ne.s32.totalorder %s47, %s49
      %p53 = scmp.eq.s32.totalorder %s13, 0
      %p54 = por %p52, %p53
      %p55 = scmp.ne.s32.totalorder %s47, %s49
      %p56 = scmp.eq.s32.totalorder %s18, 1
      %p57 = por %p55, %p56
      %p58 = scmp.ne.s32.totalorder %s49, %s50
      %p59 = scmp.eq.s32.totalorder %s18, 0
      %p60 = por %p58, %p59
      %p61 = scmp.ne.s32.totalorder %s49, %s50
      %p62 = scmp.eq.s32.totalorder %s19, 1
      %p63 = por %p61, %p62
      %p65 = scmp.ne.s32.totalorder %s50, %s64
      %p66 = scmp.eq.s32.totalorder %s19, 0
      %p67 = por %p65, %p66
      %s69 = sadd.s32 %s68, 1
      %p72 = scmp.eq.s32.totalorder %s13, 1
      %p73 = scmp.ne.s32.totalorder %s68, %s70
      %p74 = scmp.eq.s32.totalorder %s13, 0
      %p75 = por %p73, %p74
      %p76 = scmp.ne.s32.totalorder %s68, %s70
      %p77 = scmp.eq.s32.totalorder %s18, 1
      %p78 = por %p76, %p77
      %p79 = scmp.ne.s32.totalorder %s70, %s71
      %p80 = scmp.eq.s32.totalorder %s18, 0
      %p81 = por %p79, %p80
      %p82 = scmp.ne.s32.totalorder %s70, %s71
      %p83 = scmp.eq.s32.totalorder %s19, 1
      %p84 = por %p82, %p83
      %p86 = scmp.ne.s32.totalorder %s71, %s85
      %p87 = scmp.eq.s32.totalorder %s19, 0
      %p88 = por %p86, %p87
      %s90 = sadd.s32 %s89, 1
      %p93 = scmp.eq.s32.totalorder %s13, 1
      %p94 = scmp.ne.s32.totalorder %s89, %s91
      %p95 = scmp.eq.s32.totalorder %s13, 0
      %p96 = por %p94, %p95
      %p97 = scmp.ne.s32.totalorder %s89, %s91
      %p98 = scmp.eq.s32.totalorder %s18, 1
      %p99 = por %p97, %p98
      %p100 = scmp.ne.s32.totalorder %s91, %s92
      %p101 = scmp.eq.s32.totalorder %s18, 0
      %p102 = por %p100, %p101
      %p103 = scmp.ne.s32.totalorder %s91, %s92
      %p104 = scmp.eq.s32.totalorder %s19, 1
      %p105 = por %p103, %p104
      %p107 = scmp.ne.s32.totalorder %s92, %s106
      %p108 = scmp.eq.s32.totalorder %s19, 0
      %p109 = por %p107, %p108
      %s110 = ssub.s32 %s13, %s20
      %p111 = scmp.eq.s32.totalorder %s110, 0
      %s113 = sadd.s32 %s112, 1
      %s114 = scalar_select %p111, %s112, %s113
      %p117 = pneg %p111
      %p118 = scmp.eq.s32.totalorder %s13, 1
      %p119 = por %p117, %p118
      %p120 = scmp.ne.s32.totalorder %s112, %s115
      %p121 = scmp.eq.s32.totalorder %s13, 0
      %p122 = por %p120, %p121
      %p123 = scmp.ne.s32.totalorder %s112, %s115
      %p124 = scmp.eq.s32.totalorder %s18, 1
      %p125 = por %p123, %p124
      %p126 = scmp.ne.s32.totalorder %s115, %s116
      %p127 = scmp.eq.s32.totalorder %s18, 0
      %p128 = por %p126, %p127
      %p129 = scmp.ne.s32.totalorder %s115, %s116
      %p130 = scmp.eq.s32.totalorder %s19, 1
      %p131 = por %p129, %p130
      %p133 = scmp.ne.s32.totalorder %s116, %s132
      %p134 = scmp.eq.s32.totalorder %s19, 0
      %p135 = por %p133, %p134
      %p136 = scmp.le.s32.totalorder 1, %s13
      %p137 = scmp.lt.s32.totalorder %s13, 3
      %p138 = pnand %p136, %p137
      %p139 = pneg %p138
      // Predicated region
      $region9: #{tpu_custom_call.1} parent=5 // pred_check
        _
      $region10: #{tpu_custom_call.1} parent=5 // pred_check_branch
        %141 = sbr.rel (%p138) target = $region12
      $region11: #{tpu_custom_call.1} parent=5 // pred_region
        %s142 = ssub.s32 %s13, 1
        // Predicated region
        $region13: #{tpu_custom_call.1} parent=11 // pred_check
          %p143 = pneg %p60
        $region14: #{tpu_custom_call.1} parent=11 // pred_check_branch
          %145 = sbr.rel (%p143) target = $region16
        $region15: #{tpu_custom_call.1} parent=11 // pred_region
          _
        $region16: #{tpu_custom_call.1} parent=11 // pred_fallthru
          _
        // Predicated region
        $region17: #{tpu_custom_call.1} parent=11 // pred_check
          %p146 = pneg %p81
        $region18: #{tpu_custom_call.1} parent=11 // pred_check_branch
          %148 = sbr.rel (%p146) target = $region20
        $region19: #{tpu_custom_call.1} parent=11 // pred_region
          _
        $region20: #{tpu_custom_call.1} parent=11 // pred_fallthru
          _
        // Predicated region
        $region21: #{tpu_custom_call.1} parent=11 // pred_check
          %p149 = pneg %p102
        $region22: #{tpu_custom_call.1} parent=11 // pred_check_branch
          %151 = sbr.rel (%p149) target = $region24
        $region23: #{tpu_custom_call.1} parent=11 // pred_region
          _
        $region24: #{tpu_custom_call.1} parent=11 // pred_fallthru
          _
      $region12: #{tpu_custom_call.1} parent=5 // pred_fallthru
        _
      %p152 = scmp.lt.s32.totalorder %s13, 2
      // Predicated region
      $region25: #{tpu_custom_call.1} parent=5 // pred_check
        %p153 = pneg %p152
      $region26: #{tpu_custom_call.1} parent=5 // pred_check_branch
        %155 = sbr.rel (%p153) target = $region28
      $region27: #{tpu_custom_call.1} parent=5 // pred_region
        // Predicated region
        $region29: #{tpu_custom_call.1} parent=27 // pred_check
          %p156 = pneg %p33
        $region30: #{tpu_custom_call.1} parent=27 // pred_check_branch
          %158 = sbr.rel (%p156) target = $region32
        $region31: #{tpu_custom_call.1} parent=27 // pred_region
          %s159 = smul.u32 64, %s13
          %p160 = scmp.lt.s32.totalorder %s159, 127
          %s161 = scalar_select %p160, %s159, 127
          %s162 = smul.addr %s161, 8
          %s163 = scalar_lea.vmem %s0, %s162
          %s164 = smul.u32 64, %s13
        $region32: #{tpu_custom_call.1} parent=27 // pred_fallthru
          _
      $region28: #{tpu_custom_call.1} parent=5 // pred_fallthru
        _
      %p165 = scmp.le.s32.totalorder 1, %s13
      %p166 = scmp.lt.s32.totalorder %s13, 3
      %p167 = pnand %p165, %p166
      %p168 = pneg %p167
      // Predicated region
      $region33: #{tpu_custom_call.1} parent=5 // pred_check
        _
      $region34: #{tpu_custom_call.1} parent=5 // pred_check_branch
        %170 = sbr.rel (%p167) target = $region36
      $region35: #{tpu_custom_call.1} parent=5 // pred_region
        %s171 = ssub.s32 %s13, 1
        %s172 = smul.u32 64, %s18
        %p173 = scmp.lt.s32.totalorder %s172, 127
        %s174 = scalar_select %p173, %s172, 127
        %s175 = smul.addr %s174, 8
        %s176 = scalar_lea.vmem %s0, %s175
        %p177 = pneg %p39
        %p178 = pneg %p36
        %p179 = pneg %p60
        %p180 = pneg %p57
        %p181 = pneg %p81
        %p182 = pneg %p78
        %p183 = pneg %p102
        %p184 = pneg %p99
        %p185 = pneg %p128
        %p186 = pneg %p125
        %s187 = sand.u32 %s115, 1
        %s188 = scalar_lea.sflag [#allocation3], %s187
        %s189 = sand.u32 %s115, 1
        %s190 = smul.addr %s189, 512
        %s191 = scalar_lea.vmem [#allocation2], %s190
        %s192 = smul.u32 64, %s18
        %p193 = scmp.lt.s32.totalorder %s192, 127
        %s194 = scalar_select %p193, %s192, 127
        %s195 = smul.addr %s194, 8
        %s196 = scalar_lea.vmem %s0, %s195
        %s197 = smul.u32 64, %s18
        %s198 = smul.u32 64, %s18
        %v199 = vld [vmem:[%s3] sm:$0x1]
        %v200 = vld [vmem:[%s3 + $0x1] sm:$0x1]
        %v201 = vld [vmem:[%s3 + $0x2] sm:$0x1]
        %v202 = vld [vmem:[%s3 + $0x3] sm:$0x1]
        %v203 = vld [vmem:[%s3 + $0x4] sm:$0x1]
        %v204 = vld [vmem:[%s3 + $0x5] sm:$0x1]
        %v205 = vld [vmem:[%s3 + $0x6] sm:$0x1]
        %v206 = vld [vmem:[%s3 + $0x7] sm:$0x1]
        %v207 = vld [vmem:[%s196] sm:$0xff]
        %v208 = vld [vmem:[%s196 + $0x8] sm:$0xff]
        %v209 = vld [vmem:[%s196 + $0x10] sm:$0xff]
        %v210 = vld [vmem:[%s196 + $0x18] sm:$0xff]
        %v211 = vld [vmem:[%s196 + $0x20] sm:$0xff]
        %v212 = vld [vmem:[%s196 + $0x28] sm:$0xff]
        %v213 = vld [vmem:[%s196 + $0x30] sm:$0xff]
        %v214 = vld [vmem:[%s196 + $0x38] sm:$0xff]
        %v215 = vld [vmem:[%s196 + $0x40] sm:$0xff]
        %v216 = vld [vmem:[%s196 + $0x48] sm:$0xff]
        %v217 = vld [vmem:[%s196 + $0x50] sm:$0xff]
        %v218 = vld [vmem:[%s196 + $0x58] sm:$0xff]
        %v219 = vld [vmem:[%s196 + $0x60] sm:$0xff]
        %v220 = vld [vmem:[%s196 + $0x68] sm:$0xff]
        %v221 = vld [vmem:[%s196 + $0x70] sm:$0xff]
        %v222 = vld [vmem:[%s196 + $0x78] sm:$0xff]
        %v223 = vld [vmem:[%s196 + $0x80] sm:$0xff]
        %v224 = vld [vmem:[%s196 + $0x88] sm:$0xff]
        %v225 = vld [vmem:[%s196 + $0x90] sm:$0xff]
        %v226 = vld [vmem:[%s196 + $0x98] sm:$0xff]
        %v227 = vld [vmem:[%s196 + $0xa0] sm:$0xff]
        %v228 = vld [vmem:[%s196 + $0xa8] sm:$0xff]
        %v229 = vld [vmem:[%s196 + $0xb0] sm:$0xff]
        %v230 = vld [vmem:[%s196 + $0xb8] sm:$0xff]
        %v231 = vld [vmem:[%s196 + $0xc0] sm:$0xff]
        %v232 = vld [vmem:[%s196 + $0xc8] sm:$0xff]
        %v233 = vld [vmem:[%s196 + $0xd0] sm:$0xff]
        %v234 = vld [vmem:[%s196 + $0xd8] sm:$0xff]
        %v235 = vld [vmem:[%s196 + $0xe0] sm:$0xff]
        %v236 = vld [vmem:[%s196 + $0xe8] sm:$0xff]
        %v237 = vld [vmem:[%s196 + $0xf0] sm:$0xff]
        %v238 = vld [vmem:[%s196 + $0xf8] sm:$0xff]
        %v239 = vld [vmem:[%s196 + $0x100] sm:$0xff]
        %v240 = vld [vmem:[%s196 + $0x108] sm:$0xff]
        %v241 = vld [vmem:[%s196 + $0x110] sm:$0xff]
        %v242 = vld [vmem:[%s196 + $0x118] sm:$0xff]
        %v243 = vld [vmem:[%s196 + $0x120] sm:$0xff]
        %v244 = vld [vmem:[%s196 + $0x128] sm:$0xff]
        %v245 = vld [vmem:[%s196 + $0x130] sm:$0xff]
        %v246 = vld [vmem:[%s196 + $0x138] sm:$0xff]
        %v247 = vld [vmem:[%s196 + $0x140] sm:$0xff]
        %v248 = vld [vmem:[%s196 + $0x148] sm:$0xff]
        %v249 = vld [vmem:[%s196 + $0x150] sm:$0xff]
        %v250 = vld [vmem:[%s196 + $0x158] sm:$0xff]
        %v251 = vld [vmem:[%s196 + $0x160] sm:$0xff]
        %v252 = vld [vmem:[%s196 + $0x168] sm:$0xff]
        %v253 = vld [vmem:[%s196 + $0x170] sm:$0xff]
        %v254 = vld [vmem:[%s196 + $0x178] sm:$0xff]
        %v255 = vld [vmem:[%s196 + $0x180] sm:$0xff]
        %v256 = vld [vmem:[%s196 + $0x188] sm:$0xff]
        %v257 = vld [vmem:[%s196 + $0x190] sm:$0xff]
        %v258 = vld [vmem:[%s196 + $0x198] sm:$0xff]
        %v259 = vld [vmem:[%s196 + $0x1a0] sm:$0xff]
        %v260 = vld [vmem:[%s196 + $0x1a8] sm:$0xff]
        %v261 = vld [vmem:[%s196 + $0x1b0] sm:$0xff]
        %v262 = vld [vmem:[%s196 + $0x1b8] sm:$0xff]
        %v263 = vld [vmem:[%s196 + $0x1c0] sm:$0xff]
        %v264 = vld [vmem:[%s196 + $0x1c8] sm:$0xff]
        %v265 = vld [vmem:[%s196 + $0x1d0] sm:$0xff]
        %v266 = vld [vmem:[%s196 + $0x1d8] sm:$0xff]
        %v267 = vld [vmem:[%s196 + $0x1e0] sm:$0xff]
        %v268 = vld [vmem:[%s196 + $0x1e8] sm:$0xff]
        %v269 = vld [vmem:[%s196 + $0x1f0] sm:$0xff]
        %v270 = vld [vmem:[%s196 + $0x1f8] sm:$0xff]
        %v271 = vld [vmem:[%s1] sm:$0xff]
        %v272 = vld [vmem:[%s1 + $0x8] sm:$0xff]
        %v274 = vlaneseq
        %v275 = vshrl.u32 %v274, 7
        %v276 = vsub.s32 0, %v275
        %v277 = vrot.slane %v199, %v276
        %vm279 = vcmask 130048
        %v281 = vsel %vm279, %v207, 0
        %v284 = vsel %vm279, %v208, 0
        %v287 = vsel %vm279, %v209, 0
        %v290 = vsel %vm279, %v210, 0
        %v293 = vsel %vm279, %v211, 0
        %v296 = vsel %vm279, %v212, 0
        %v299 = vsel %vm279, %v213, 0
        %v302 = vsel %vm279, %v214, 0
        %v305 = vsel %vm279, %v215, 0
        %v308 = vsel %vm279, %v216, 0
        %v311 = vsel %vm279, %v217, 0
        %v314 = vsel %vm279, %v218, 0
        %v317 = vsel %vm279, %v219, 0
        %v320 = vsel %vm279, %v220, 0
        %v323 = vsel %vm279, %v221, 0
        %v326 = vsel %vm279, %v222, 0
        %v329 = vsel %vm279, %v223, 0
        %v332 = vsel %vm279, %v224, 0
        %v335 = vsel %vm279, %v225, 0
        %v338 = vsel %vm279, %v226, 0
        %v341 = vsel %vm279, %v227, 0
        %v344 = vsel %vm279, %v228, 0
        %v347 = vsel %vm279, %v229, 0
        %v350 = vsel %vm279, %v230, 0
        %v353 = vsel %vm279, %v231, 0
        %v356 = vsel %vm279, %v232, 0
        %v359 = vsel %vm279, %v233, 0
        %v362 = vsel %vm279, %v234, 0
        %v365 = vsel %vm279, %v235, 0
        %v368 = vsel %vm279, %v236, 0
        %v371 = vsel %vm279, %v237, 0
        %v374 = vsel %vm279, %v238, 0
        %v377 = vsel %vm279, %v239, 0
        %v380 = vsel %vm279, %v240, 0
        %v383 = vsel %vm279, %v241, 0
        %v386 = vsel %vm279, %v242, 0
        %v389 = vsel %vm279, %v243, 0
        %v392 = vsel %vm279, %v244, 0
        %v395 = vsel %vm279, %v245, 0
        %v398 = vsel %vm279, %v246, 0
        %v401 = vsel %vm279, %v247, 0
        %v404 = vsel %vm279, %v248, 0
        %v407 = vsel %vm279, %v249, 0
        %v410 = vsel %vm279, %v250, 0
        %v413 = vsel %vm279, %v251, 0
        %v416 = vsel %vm279, %v252, 0
        %v419 = vsel %vm279, %v253, 0
        %v422 = vsel %vm279, %v254, 0
        %v425 = vsel %vm279, %v255, 0
        %v428 = vsel %vm279, %v256, 0
        %v431 = vsel %vm279, %v257, 0
        %v434 = vsel %vm279, %v258, 0
        %v437 = vsel %vm279, %v259, 0
        %v440 = vsel %vm279, %v260, 0
        %v443 = vsel %vm279, %v261, 0
        %v446 = vsel %vm279, %v262, 0
        %v449 = vsel %vm279, %v263, 0
        %v452 = vsel %vm279, %v264, 0
        %v455 = vsel %vm279, %v265, 0
        %v458 = vsel %vm279, %v266, 0
        %v461 = vsel %vm279, %v267, 0
        %v464 = vsel %vm279, %v268, 0
        %v467 = vsel %vm279, %v269, 0
        %v470 = vsel %vm279, %v270, 0
        %472 = vmatprep.subr.mxu0 0.0
        %473 = vmatpush1.msra.mxu0 %v271
        %474 = vmatprep.subr.mxu0 0.0
        %475 = vmatpush1.msra.mxu0 %v272
        %476 = vmatprep.subr.mxu0 0.0
        %477 = vmatpush1.msra.mxu0 0.0
        %478 = vmatprep.subr.mxu0 0.0
        %479 = vmatpush1.msra.mxu0 0.0
        %480 = vmatprep.subr.mxu0 0.0
        %481 = vmatpush1.msra.mxu0 0.0
        %482 = vmatprep.subr.mxu0 0.0
        %483 = vmatpush1.msra.mxu0 0.0
        %484 = vmatprep.subr.mxu0 0.0
        %485 = vmatpush1.msra.mxu0 0.0
        %486 = vmatprep.subr.mxu0 0.0
        %487 = vmatpush1.msra.mxu0 0.0
        %488 = vmatprep.subr.mxu0 0.0
        %489 = vmatpush1.msra.mxu0 0.0
        %490 = vmatprep.subr.mxu0 0.0
        %491 = vmatpush1.msra.mxu0 0.0
        %492 = vmatprep.subr.mxu0 0.0
        %493 = vmatpush1.msra.mxu0 0.0
        %494 = vmatprep.subr.mxu0 0.0
        %495 = vmatpush1.msra.mxu0 0.0
        %496 = vmatprep.subr.mxu0 0.0
        %497 = vmatpush1.msra.mxu0 0.0
        %498 = vmatprep.subr.mxu0 0.0
        %499 = vmatpush1.msra.mxu0 0.0
        %500 = vmatprep.subr.mxu0 0.0
        %501 = vmatpush1.msra.mxu0 0.0
        %502 = vmatprep.subr.mxu0 0.0
        %503 = vmatpush1.msra.mxu0 0.0
        %504 = vmatprep.subr.mxu0 0.0
        %505 = vmatpush1.msra.mxu0 0.0
        %506 = vmatprep.subr.mxu0 0.0
        %507 = vmatpush1.msra.mxu0 0.0
        %508 = vmatprep.subr.mxu0 0.0
        %509 = vmatpush1.msra.mxu0 0.0
        %510 = vmatprep.subr.mxu0 0.0
        %511 = vmatpush1.msra.mxu0 0.0
        %512 = vmatprep.subr.mxu0 0.0
        %513 = vmatpush1.msra.mxu0 0.0
        %514 = vmatprep.subr.mxu0 0.0
        %515 = vmatpush1.msra.mxu0 0.0
        %516 = vmatprep.subr.mxu0 0.0
        %517 = vmatpush1.msra.mxu0 0.0
        %518 = vmatprep.subr.mxu0 0.0
        %519 = vmatpush1.msra.mxu0 0.0
        %520 = vmatprep.subr.mxu0 0.0
        %521 = vmatpush1.msra.mxu0 0.0
        %522 = vmatprep.subr.mxu0 0.0
        %523 = vmatpush1.msra.mxu0 0.0
        %524 = vmatprep.subr.mxu0 0.0
        %525 = vmatpush1.msra.mxu0 0.0
        %526 = vmatprep.subr.mxu0 0.0
        %527 = vmatpush1.msra.mxu0 0.0
        %528 = vmatprep.subr.mxu0 0.0
        %529 = vmatpush1.msra.mxu0 0.0
        %530 = vmatprep.subr.mxu0 0.0
        %531 = vmatpush1.msra.mxu0 0.0
        %532 = vmatprep.subr.mxu0 0.0
        %533 = vmatpush1.msra.mxu0 0.0
        %534 = vmatprep.subr.mxu0 0.0
        %535 = vmatpush1.msra.mxu0 0.0
        %536 = vmatprep.mubr.f32.mxu0 0.0
        %537 = vmatmul.mubr.f32.gmra.mrb[0].mxu0 %v281
        %v538 = vpop.f32.mrb[0].mxu0
        %v539 = vadd.f32 %v277, %v538
        %v540 = vpop.f32.mrb[0].mxu0
        %541 = vmatprep.mubr.f32.mxu0 0.0
        %542 = vmatmul.mubr.f32.gmra.mrb[0].mxu0 %v284
        %v543 = vpop.f32.mrb[0].mxu0
        %v544 = vadd.f32 %v277, %v543
        %v545 = vpop.f32.mrb[0].mxu0
        %546 = vmatprep.mubr.f32.mxu0 0.0
        %547 = vmatmul.mubr.f32.gmra.mrb[0].mxu0 %v287
        %v548 = vpop.f32.mrb[0].mxu0
        %v549 = vadd.f32 %v277, %v548
        %v550 = vpop.f32.mrb[0].mxu0
        %551 = vmatprep.mubr.f32.mxu0 0.0
        %552 = vmatmul.mubr.f32.gmra.mrb[0].mxu0 %v290
        %v553 = vpop.f32.mrb[0].mxu0
        %v554 = vadd.f32 %v277, %v553
        %v555 = vpop.f32.mrb[0].mxu0
        %556 = vmatprep.mubr.f32.mxu0 0.0
        %557 = vmatmul.mubr.f32.gmra.mrb[0].mxu0 %v293
        %v558 = vpop.f32.mrb[0].mxu0
        %v559 = vadd.f32 %v277, %v558
        %v560 = vpop.f32.mrb[0].mxu0
        %561 = vmatprep.mubr.f32.mxu0 0.0
        %562 = vmatmul.mubr.f32.gmra.mrb[0].mxu0 %v296
        %v563 = vpop.f32.mrb[0].mxu0
        %v564 = vadd.f32 %v277, %v563
        %v565 = vpop.f32.mrb[0].mxu0
        %566 = vmatprep.mubr.f32.mxu0 0.0
        %567 = vmatmul.mubr.f32.gmra.mrb[0].mxu0 %v299
        %v568 = vpop.f32.mrb[0].mxu0
        %v569 = vadd.f32 %v277, %v568
        %v570 = vpop.f32.mrb[0].mxu0
        %571 = vmatprep.mubr.f32.mxu0 0.0
        %572 = vmatmul.mubr.f32.gmra.mrb[0].mxu0 %v302
        %v573 = vpop.f32.mrb[0].mxu0
        %v574 = vadd.f32 %v277, %v573
        %v575 = vpop.f32.mrb[0].mxu0
        %576 = vmatprep.mubr.f32.mxu0 0.0
        %577 = vmatmul.mubr.f32.gmra.mrb[0].mxu0 %v305
        %v578 = vpop.f32.mrb[0].mxu0
        %v579 = vadd.f32 %v277, %v578
        %v580 = vpop.f32.mrb[0].mxu0
        %581 = vmatprep.mubr.f32.mxu0 0.0
        %582 = vmatmul.mubr.f32.gmra.mrb[0].mxu0 %v308
        %v583 = vpop.f32.mrb[0].mxu0
        %v584 = vadd.f32 %v277, %v583
        %v585 = vpop.f32.mrb[0].mxu0
        %586 = vmatprep.mubr.f32.mxu0 0.0
        %587 = vmatmul.mubr.f32.gmra.mrb[0].mxu0 %v311
        %v588 = vpop.f32.mrb[0].mxu0
        %v589 = vadd.f32 %v277, %v588
        %v590 = vpop.f32.mrb[0].mxu0
        %591 = vmatprep.mubr.f32.mxu0 0.0
        %592 = vmatmul.mubr.f32.gmra.mrb[0].mxu0 %v314
        %v593 = vpop.f32.mrb[0].mxu0
        %v594 = vadd.f32 %v277, %v593
        %v595 = vpop.f32.mrb[0].mxu0
        %596 = vmatprep.mubr.f32.mxu0 0.0
        %597 = vmatmul.mubr.f32.gmra.mrb[0].mxu0 %v317
        %v598 = vpop.f32.mrb[0].mxu0
        %v599 = vadd.f32 %v277, %v598
        %v600 = vpop.f32.mrb[0].mxu0
        %601 = vmatprep.mubr.f32.mxu0 0.0
        %602 = vmatmul.mubr.f32.gmra.mrb[0].mxu0 %v320
        %v603 = vpop.f32.mrb[0].mxu0
        %v604 = vadd.f32 %v277, %v603
        %v605 = vpop.f32.mrb[0].mxu0
        %606 = vmatprep.mubr.f32.mxu0 0.0
        %607 = vmatmul.mubr.f32.gmra.mrb[0].mxu0 %v323
        %v608 = vpop.f32.mrb[0].mxu0
        %v609 = vadd.f32 %v277, %v608
        %v610 = vpop.f32.mrb[0].mxu0
        %611 = vmatprep.mubr.f32.mxu0 0.0
        %612 = vmatmul.mubr.f32.gmra.mrb[0].mxu0 %v326
        %v613 = vpop.f32.mrb[0].mxu0
        %v614 = vadd.f32 %v277, %v613
        %v615 = vpop.f32.mrb[0].mxu0
        %616 = vmatprep.mubr.f32.mxu0 0.0
        %617 = vmatmul.mubr.f32.gmra.mrb[0].mxu0 %v329
        %v618 = vpop.f32.mrb[0].mxu0
        %v619 = vadd.f32 %v277, %v618
        %v620 = vpop.f32.mrb[0].mxu0
        %621 = vmatprep.mubr.f32.mxu0 0.0
        %622 = vmatmul.mubr.f32.gmra.mrb[0].mxu0 %v332
        %v623 = vpop.f32.mrb[0].mxu0
        %v624 = vadd.f32 %v277, %v623
        %v625 = vpop.f32.mrb[0].mxu0
        %626 = vmatprep.mubr.f32.mxu0 0.0
        %627 = vmatmul.mubr.f32.gmra.mrb[0].mxu0 %v335
        %v628 = vpop.f32.mrb[0].mxu0
        %v629 = vadd.f32 %v277, %v628
        %v630 = vpop.f32.mrb[0].mxu0
        %631 = vmatprep.mubr.f32.mxu0 0.0
        %632 = vmatmul.mubr.f32.gmra.mrb[0].mxu0 %v338
        %v633 = vpop.f32.mrb[0].mxu0
        %v634 = vadd.f32 %v277, %v633
        %v635 = vpop.f32.mrb[0].mxu0
        %636 = vmatprep.mubr.f32.mxu0 0.0
        %637 = vmatmul.mubr.f32.gmra.mrb[0].mxu0 %v341
        %v638 = vpop.f32.mrb[0].mxu0
        %v639 = vadd.f32 %v277, %v638
        %v640 = vpop.f32.mrb[0].mxu0
        %641 = vmatprep.mubr.f32.mxu0 0.0
        %642 = vmatmul.mubr.f32.gmra.mrb[0].mxu0 %v344
        %v643 = vpop.f32.mrb[0].mxu0
        %v644 = vadd.f32 %v277, %v643
        %v645 = vpop.f32.mrb[0].mxu0
        %646 = vmatprep.mubr.f32.mxu0 0.0
        %647 = vmatmul.mubr.f32.gmra.mrb[0].mxu0 %v347
        %v648 = vpop.f32.mrb[0].mxu0
        %v649 = vadd.f32 %v277, %v648
        %v650 = vpop.f32.mrb[0].mxu0
        %651 = vmatprep.mubr.f32.mxu0 0.0
        %652 = vmatmul.mubr.f32.gmra.mrb[0].mxu0 %v350
        %v653 = vpop.f32.mrb[0].mxu0
        %v654 = vadd.f32 %v277, %v653
        %v655 = vpop.f32.mrb[0].mxu0
        %656 = vmatprep.mubr.f32.mxu0 0.0
        %657 = vmatmul.mubr.f32.gmra.mrb[0].mxu0 %v353
        %v658 = vpop.f32.mrb[0].mxu0
        %v659 = vadd.f32 %v277, %v658
        %v660 = vpop.f32.mrb[0].mxu0
        %661 = vmatprep.mubr.f32.mxu0 0.0
        %662 = vmatmul.mubr.f32.gmra.mrb[0].mxu0 %v356
        %v663 = vpop.f32.mrb[0].mxu0
        %v664 = vadd.f32 %v277, %v663
        %v665 = vpop.f32.mrb[0].mxu0
        %666 = vmatprep.mubr.f32.mxu0 0.0
        %667 = vmatmul.mubr.f32.gmra.mrb[0].mxu0 %v359
        %v668 = vpop.f32.mrb[0].mxu0
        %v669 = vadd.f32 %v277, %v668
        %v670 = vpop.f32.mrb[0].mxu0
        %671 = vmatprep.mubr.f32.mxu0 0.0
        %672 = vmatmul.mubr.f32.gmra.mrb[0].mxu0 %v362
        %v673 = vpop.f32.mrb[0].mxu0
        %v674 = vadd.f32 %v277, %v673
        %v675 = vpop.f32.mrb[0].mxu0
        %676 = vmatprep.mubr.f32.mxu0 0.0
        %677 = vmatmul.mubr.f32.gmra.mrb[0].mxu0 %v365
        %v678 = vpop.f32.mrb[0].mxu0
        %v679 = vadd.f32 %v277, %v678
        %v680 = vpop.f32.mrb[0].mxu0
        %681 = vmatprep.mubr.f32.mxu0 0.0
        %682 = vmatmul.mubr.f32.gmra.mrb[0].mxu0 %v368
        %v683 = vpop.f32.mrb[0].mxu0
        %v684 = vadd.f32 %v277, %v683
        %v685 = vpop.f32.mrb[0].mxu0
        %686 = vmatprep.mubr.f32.mxu0 0.0
        %687 = vmatmul.mubr.f32.gmra.mrb[0].mxu0 %v371
        %v688 = vpop.f32.mrb[0].mxu0
        %v689 = vadd.f32 %v277, %v688
        %v690 = vpop.f32.mrb[0].mxu0
        %691 = vmatprep.mubr.f32.mxu0 0.0
        %692 = vmatmul.mubr.f32.gmra.mrb[0].mxu0 %v374
        %v693 = vpop.f32.mrb[0].mxu0
        %v694 = vadd.f32 %v277, %v693
        %v695 = vpop.f32.mrb[0].mxu0
        %696 = vmatprep.mubr.f32.mxu0 0.0
        %697 = vmatmul.mubr.f32.gmra.mrb[0].mxu0 %v377
        %v698 = vpop.f32.mrb[0].mxu0
        %v699 = vadd.f32 %v277, %v698
        %v700 = vpop.f32.mrb[0].mxu0
        %701 = vmatprep.mubr.f32.mxu0 0.0
        %702 = vmatmul.mubr.f32.gmra.mrb[0].mxu0 %v380
        %v703 = vpop.f32.mrb[0].mxu0
        %v704 = vadd.f32 %v277, %v703
        %v705 = vpop.f32.mrb[0].mxu0
        %706 = vmatprep.mubr.f32.mxu0 0.0
        %707 = vmatmul.mubr.f32.gmra.mrb[0].mxu0 %v383
        %v708 = vpop.f32.mrb[0].mxu0
        %v709 = vadd.f32 %v277, %v708
        %v710 = vpop.f32.mrb[0].mxu0
        %711 = vmatprep.mubr.f32.mxu0 0.0
        %712 = vmatmul.mubr.f32.gmra.mrb[0].mxu0 %v386
        %v713 = vpop.f32.mrb[0].mxu0
        %v714 = vadd.f32 %v277, %v713
        %v715 = vpop.f32.mrb[0].mxu0
        %716 = vmatprep.mubr.f32.mxu0 0.0
        %717 = vmatmul.mubr.f32.gmra.mrb[0].mxu0 %v389
        %v718 = vpop.f32.mrb[0].mxu0
        %v719 = vadd.f32 %v277, %v718
        %v720 = vpop.f32.mrb[0].mxu0
        %721 = vmatprep.mubr.f32.mxu0 0.0
        %722 = vmatmul.mubr.f32.gmra.mrb[0].mxu0 %v392
        %v723 = vpop.f32.mrb[0].mxu0
        %v724 = vadd.f32 %v277, %v723
        %v725 = vpop.f32.mrb[0].mxu0
        %726 = vmatprep.mubr.f32.mxu0 0.0
        %727 = vmatmul.mubr.f32.gmra.mrb[0].mxu0 %v395
        %v728 = vpop.f32.mrb[0].mxu0
        %v729 = vadd.f32 %v277, %v728
        %v730 = vpop.f32.mrb[0].mxu0
        %731 = vmatprep.mubr.f32.mxu0 0.0
        %732 = vmatmul.mubr.f32.gmra.mrb[0].mxu0 %v398
        %v733 = vpop.f32.mrb[0].mxu0
        %v734 = vadd.f32 %v277, %v733
        %v735 = vpop.f32.mrb[0].mxu0
        %736 = vmatprep.mubr.f32.mxu0 0.0
        %737 = vmatmul.mubr.f32.gmra.mrb[0].mxu0 %v401
        %v738 = vpop.f32.mrb[0].mxu0
        %v739 = vadd.f32 %v277, %v738
        %v740 = vpop.f32.mrb[0].mxu0
        %741 = vmatprep.mubr.f32.mxu0 0.0
        %742 = vmatmul.mubr.f32.gmra.mrb[0].mxu0 %v404
        %v743 = vpop.f32.mrb[0].mxu0
        %v744 = vadd.f32 %v277, %v743
        %v745 = vpop.f32.mrb[0].mxu0
        %746 = vmatprep.mubr.f32.mxu0 0.0
        %747 = vmatmul.mubr.f32.gmra.mrb[0].mxu0 %v407
        %v748 = vpop.f32.mrb[0].mxu0
        %v749 = vadd.f32 %v277, %v748
        %v750 = vpop.f32.mrb[0].mxu0
        %751 = vmatprep.mubr.f32.mxu0 0.0
        %752 = vmatmul.mubr.f32.gmra.mrb[0].mxu0 %v410
        %v753 = vpop.f32.mrb[0].mxu0
        %v754 = vadd.f32 %v277, %v753
        %v755 = vpop.f32.mrb[0].mxu0
        %756 = vmatprep.mubr.f32.mxu0 0.0
        %757 = vmatmul.mubr.f32.gmra.mrb[0].mxu0 %v413
        %v758 = vpop.f32.mrb[0].mxu0
        %v759 = vadd.f32 %v277, %v758
        %v760 = vpop.f32.mrb[0].mxu0
        %761 = vmatprep.mubr.f32.mxu0 0.0
        %762 = vmatmul.mubr.f32.gmra.mrb[0].mxu0 %v416
        %v763 = vpop.f32.mrb[0].mxu0
        %v764 = vadd.f32 %v277, %v763
        %v765 = vpop.f32.mrb[0].mxu0
        %766 = vmatprep.mubr.f32.mxu0 0.0
        %767 = vmatmul.mubr.f32.gmra.mrb[0].mxu0 %v419
        %v768 = vpop.f32.mrb[0].mxu0
        %v769 = vadd.f32 %v277, %v768
        %v770 = vpop.f32.mrb[0].mxu0
        %771 = vmatprep.mubr.f32.mxu0 0.0
        %772 = vmatmul.mubr.f32.gmra.mrb[0].mxu0 %v422
        %v773 = vpop.f32.mrb[0].mxu0
        %v774 = vadd.f32 %v277, %v773
        %v775 = vpop.f32.mrb[0].mxu0
        %776 = vmatprep.mubr.f32.mxu0 0.0
        %777 = vmatmul.mubr.f32.gmra.mrb[0].mxu0 %v425
        %v778 = vpop.f32.mrb[0].mxu0
        %v779 = vadd.f32 %v277, %v778
        %v780 = vpop.f32.mrb[0].mxu0
        %781 = vmatprep.mubr.f32.mxu0 0.0
        %782 = vmatmul.mubr.f32.gmra.mrb[0].mxu0 %v428
        %v783 = vpop.f32.mrb[0].mxu0
        %v784 = vadd.f32 %v277, %v783
        %v785 = vpop.f32.mrb[0].mxu0
        %786 = vmatprep.mubr.f32.mxu0 0.0
        %787 = vmatmul.mubr.f32.gmra.mrb[0].mxu0 %v431
        %v788 = vpop.f32.mrb[0].mxu0
        %v789 = vadd.f32 %v277, %v788
        %v790 = vpop.f32.mrb[0].mxu0
        %791 = vmatprep.mubr.f32.mxu0 0.0
        %792 = vmatmul.mubr.f32.gmra.mrb[0].mxu0 %v434
        %v793 = vpop.f32.mrb[0].mxu0
        %v794 = vadd.f32 %v277, %v793
        %v795 = vpop.f32.mrb[0].mxu0
        %796 = vmatprep.mubr.f32.mxu0 0.0
        %797 = vmatmul.mubr.f32.gmra.mrb[0].mxu0 %v437
        %v798 = vpop.f32.mrb[0].mxu0
        %v799 = vadd.f32 %v277, %v798
        %v800 = vpop.f32.mrb[0].mxu0
        %801 = vmatprep.mubr.f32.mxu0 0.0
        %802 = vmatmul.mubr.f32.gmra.mrb[0].mxu0 %v440
        %v803 = vpop.f32.mrb[0].mxu0
        %v804 = vadd.f32 %v277, %v803
        %v805 = vpop.f32.mrb[0].mxu0
        %806 = vmatprep.mubr.f32.mxu0 0.0
        %807 = vmatmul.mubr.f32.gmra.mrb[0].mxu0 %v443
        %v808 = vpop.f32.mrb[0].mxu0
        %v809 = vadd.f32 %v277, %v808
        %v810 = vpop.f32.mrb[0].mxu0
        %811 = vmatprep.mubr.f32.mxu0 0.0
        %812 = vmatmul.mubr.f32.gmra.mrb[0].mxu0 %v446
        %v813 = vpop.f32.mrb[0].mxu0
        %v814 = vadd.f32 %v277, %v813
        %v815 = vpop.f32.mrb[0].mxu0
        %816 = vmatprep.mubr.f32.mxu0 0.0
        %817 = vmatmul.mubr.f32.gmra.mrb[0].mxu0 %v449
        %v818 = vpop.f32.mrb[0].mxu0
        %v819 = vadd.f32 %v277, %v818
        %v820 = vpop.f32.mrb[0].mxu0
        %821 = vmatprep.mubr.f32.mxu0 0.0
        %822 = vmatmul.mubr.f32.gmra.mrb[0].mxu0 %v452
        %v823 = vpop.f32.mrb[0].mxu0
        %v824 = vadd.f32 %v277, %v823
        %v825 = vpop.f32.mrb[0].mxu0
        %826 = vmatprep.mubr.f32.mxu0 0.0
        %827 = vmatmul.mubr.f32.gmra.mrb[0].mxu0 %v455
        %v828 = vpop.f32.mrb[0].mxu0
        %v829 = vadd.f32 %v277, %v828
        %v830 = vpop.f32.mrb[0].mxu0
        %831 = vmatprep.mubr.f32.mxu0 0.0
        %832 = vmatmul.mubr.f32.gmra.mrb[0].mxu0 %v458
        %v833 = vpop.f32.mrb[0].mxu0
        %v834 = vadd.f32 %v277, %v833
        %v835 = vpop.f32.mrb[0].mxu0
        %836 = vmatprep.mubr.f32.mxu0 0.0
        %837 = vmatmul.mubr.f32.gmra.mrb[0].mxu0 %v461
        %v838 = vpop.f32.mrb[0].mxu0
        %v839 = vadd.f32 %v277, %v838
        %v840 = vpop.f32.mrb[0].mxu0
        %841 = vmatprep.mubr.f32.mxu0 0.0
        %842 = vmatmul.mubr.f32.gmra.mrb[0].mxu0 %v464
        %v843 = vpop.f32.mrb[0].mxu0
        %v844 = vadd.f32 %v277, %v843
        %v845 = vpop.f32.mrb[0].mxu0
        %846 = vmatprep.mubr.f32.mxu0 0.0
        %847 = vmatmul.mubr.f32.gmra.mrb[0].mxu0 %v467
        %v848 = vpop.f32.mrb[0].mxu0
        %v849 = vadd.f32 %v277, %v848
        %v850 = vpop.f32.mrb[0].mxu0
        %851 = vmatprep.mubr.f32.mxu0 0.0
        %852 = vmatmul.mubr.f32.gmra.mrb[0].mxu0 %v470
        %v853 = vpop.f32.mrb[0].mxu0
        %v854 = vadd.f32 %v277, %v853
        %v855 = vpop.f32.mrb[0].mxu0
        %856 = vdwg.mxu0
        %v857 = vmul.f32 %v539, 0.01
        %v858 = vmul.f32 %v544, 0.01
        %v859 = vmul.f32 %v549, 0.01
        %v860 = vmul.f32 %v554, 0.01
        %v861 = vmul.f32 %v559, 0.01
        %v862 = vmul.f32 %v564, 0.01
        %v863 = vmul.f32 %v569, 0.01
        %v864 = vmul.f32 %v574, 0.01
        %v865 = vmul.f32 %v579, 0.01
        %v866 = vmul.f32 %v584, 0.01
        %v867 = vmul.f32 %v589, 0.01
        %v868 = vmul.f32 %v594, 0.01
        %v869 = vmul.f32 %v599, 0.01
        %v870 = vmul.f32 %v604, 0.01
        %v871 = vmul.f32 %v609, 0.01
        %v872 = vmul.f32 %v614, 0.01
        %v873 = vmul.f32 %v619, 0.01
        %v874 = vmul.f32 %v624, 0.01
        %v875 = vmul.f32 %v629, 0.01
        %v876 = vmul.f32 %v634, 0.01
        %v877 = vmul.f32 %v639, 0.01
        %v878 = vmul.f32 %v644, 0.01
        %v879 = vmul.f32 %v649, 0.01
        %v880 = vmul.f32 %v654, 0.01
        %v881 = vmul.f32 %v659, 0.01
        %v882 = vmul.f32 %v664, 0.01
        %v883 = vmul.f32 %v669, 0.01
        %v884 = vmul.f32 %v674, 0.01
        %v885 = vmul.f32 %v679, 0.01
        %v886 = vmul.f32 %v684, 0.01
        %v887 = vmul.f32 %v689, 0.01
        %v888 = vmul.f32 %v694, 0.01
        %v889 = vmul.f32 %v699, 0.01
        %v890 = vmul.f32 %v704, 0.01
        %v891 = vmul.f32 %v709, 0.01
        %v892 = vmul.f32 %v714, 0.01
        %v893 = vmul.f32 %v719, 0.01
        %v894 = vmul.f32 %v724, 0.01
        %v895 = vmul.f32 %v729, 0.01
        %v896 = vmul.f32 %v734, 0.01
        %v897 = vmul.f32 %v739, 0.01
        %v898 = vmul.f32 %v744, 0.01
        %v899 = vmul.f32 %v749, 0.01
        %v900 = vmul.f32 %v754, 0.01
        %v901 = vmul.f32 %v759, 0.01
        %v902 = vmul.f32 %v764, 0.01
        %v903 = vmul.f32 %v769, 0.01
        %v904 = vmul.f32 %v774, 0.01
        %v905 = vmul.f32 %v779, 0.01
        %v906 = vmul.f32 %v784, 0.01
        %v907 = vmul.f32 %v789, 0.01
        %v908 = vmul.f32 %v794, 0.01
        %v909 = vmul.f32 %v799, 0.01
        %v910 = vmul.f32 %v804, 0.01
        %v911 = vmul.f32 %v809, 0.01
        %v912 = vmul.f32 %v814, 0.01
        %v913 = vmul.f32 %v819, 0.01
        %v914 = vmul.f32 %v824, 0.01
        %v915 = vmul.f32 %v829, 0.01
        %v916 = vmul.f32 %v834, 0.01
        %v917 = vmul.f32 %v839, 0.01
        %v918 = vmul.f32 %v844, 0.01
        %v919 = vmul.f32 %v849, 0.01
        %v920 = vmul.f32 %v854, 0.01
        %v921 = vmax.f32 %v539, %v857
        %v922 = vmax.f32 %v544, %v858
        %v923 = vmax.f32 %v549, %v859
        %v924 = vmax.f32 %v554, %v860
        %v925 = vmax.f32 %v559, %v861
        %v926 = vmax.f32 %v564, %v862
        %v927 = vmax.f32 %v569, %v863
        %v928 = vmax.f32 %v574, %v864
        %v929 = vmax.f32 %v579, %v865
        %v930 = vmax.f32 %v584, %v866
        %v931 = vmax.f32 %v589, %v867
        %v932 = vmax.f32 %v594, %v868
        %v933 = vmax.f32 %v599, %v869
        %v934 = vmax.f32 %v604, %v870
        %v935 = vmax.f32 %v609, %v871
        %v936 = vmax.f32 %v614, %v872
        %v937 = vmax.f32 %v619, %v873
        %v938 = vmax.f32 %v624, %v874
        %v939 = vmax.f32 %v629, %v875
        %v940 = vmax.f32 %v634, %v876
        %v941 = vmax.f32 %v639, %v877
        %v942 = vmax.f32 %v644, %v878
        %v943 = vmax.f32 %v649, %v879
        %v944 = vmax.f32 %v654, %v880
        %v945 = vmax.f32 %v659, %v881
        %v946 = vmax.f32 %v664, %v882
        %v947 = vmax.f32 %v669, %v883
        %v948 = vmax.f32 %v674, %v884
        %v949 = vmax.f32 %v679, %v885
        %v950 = vmax.f32 %v684, %v886
        %v951 = vmax.f32 %v689, %v887
        %v952 = vmax.f32 %v694, %v888
        %v953 = vmax.f32 %v699, %v889
        %v954 = vmax.f32 %v704, %v890
        %v955 = vmax.f32 %v709, %v891
        %v956 = vmax.f32 %v714, %v892
        %v957 = vmax.f32 %v719, %v893
        %v958 = vmax.f32 %v724, %v894
        %v959 = vmax.f32 %v729, %v895
        %v960 = vmax.f32 %v734, %v896
        %v961 = vmax.f32 %v739, %v897
        %v962 = vmax.f32 %v744, %v898
        %v963 = vmax.f32 %v749, %v899
        %v964 = vmax.f32 %v754, %v900
        %v965 = vmax.f32 %v759, %v901
        %v966 = vmax.f32 %v764, %v902
        %v967 = vmax.f32 %v769, %v903
        %v968 = vmax.f32 %v774, %v904
        %v969 = vmax.f32 %v779, %v905
        %v970 = vmax.f32 %v784, %v906
        %v971 = vmax.f32 %v789, %v907
        %v972 = vmax.f32 %v794, %v908
        %v973 = vmax.f32 %v799, %v909
        %v974 = vmax.f32 %v804, %v910
        %v975 = vmax.f32 %v809, %v911
        %v976 = vmax.f32 %v814, %v912
        %v977 = vmax.f32 %v819, %v913
        %v978 = vmax.f32 %v824, %v914
        %v979 = vmax.f32 %v829, %v915
        %v980 = vmax.f32 %v834, %v916
        %v981 = vmax.f32 %v839, %v917
        %v982 = vmax.f32 %v844, %v918
        %v983 = vmax.f32 %v849, %v919
        %v984 = vmax.f32 %v854, %v920
        %v985 = vld [vmem:[%s2] sm:$0xff]
        %v986 = vld [vmem:[%s2 + $0x8] sm:$0xff]
        %v987 = vld [vmem:[%s2 + $0x10] sm:$0xff]
        %v988 = vld [vmem:[%s2 + $0x18] sm:$0xff]
        %v989 = vld [vmem:[%s2 + $0x20] sm:$0xff]
        %v990 = vld [vmem:[%s2 + $0x28] sm:$0xff]
        %v991 = vld [vmem:[%s2 + $0x30] sm:$0xff]
        %v992 = vld [vmem:[%s2 + $0x38] sm:$0xff]
        %v993 = vld [vmem:[%s2 + $0x40] sm:$0xff]
        %v994 = vld [vmem:[%s2 + $0x48] sm:$0xff]
        %v995 = vld [vmem:[%s2 + $0x50] sm:$0xff]
        %v996 = vld [vmem:[%s2 + $0x58] sm:$0xff]
        %v997 = vld [vmem:[%s2 + $0x60] sm:$0xff]
        %v998 = vld [vmem:[%s2 + $0x68] sm:$0xff]
        %v999 = vld [vmem:[%s2 + $0x70] sm:$0xff]
        %v1000 = vld [vmem:[%s2 + $0x78] sm:$0xff]
        %v1002 = vlaneseq
        %v1003 = vshrl.u32 %v1002, 7
        %v1004 = vsub.s32 0, %v1003
        %v1005 = vrot.slane %v200, %v1004
        %1007 = vmatprep.subr.mxu0 0.0
        %1008 = vmatpush1.msra.mxu0 %v985
        %1009 = vmatprep.subr.mxu0 0.0
        %1010 = vmatpush1.msra.mxu0 %v986
        %1011 = vmatprep.subr.mxu0 0.0
        %1012 = vmatpush1.msra.mxu0 %v987
        %1013 = vmatprep.subr.mxu0 0.0
        %1014 = vmatpush1.msra.mxu0 %v988
        %1015 = vmatprep.subr.mxu0 0.0
        %1016 = vmatpush1.msra.mxu0 %v989
        %1017 = vmatprep.subr.mxu0 0.0
        %1018 = vmatpush1.msra.mxu0 %v990
        %1019 = vmatprep.subr.mxu0 0.0
        %1020 = vmatpush1.msra.mxu0 %v991
        %1021 = vmatprep.subr.mxu0 0.0
        %1022 = vmatpush1.msra.mxu0 %v992
        %1023 = vmatprep.subr.mxu0 0.0
        %1024 = vmatpush1.msra.mxu0 %v993
        %1025 = vmatprep.subr.mxu0 0.0
        %1026 = vmatpush1.msra.mxu0 %v994
        %1027 = vmatprep.subr.mxu0 0.0
        %1028 = vmatpush1.msra.mxu0 %v995
        %1029 = vmatprep.subr.mxu0 0.0
        %1030 = vmatpush1.msra.mxu0 %v996
        %1031 = vmatprep.subr.mxu0 0.0
        %1032 = vmatpush1.msra.mxu0 %v997
        %1033 = vmatprep.subr.mxu0 0.0
        %1034 = vmatpush1.msra.mxu0 %v998
        %1035 = vmatprep.subr.mxu0 0.0
        %1036 = vmatpush1.msra.mxu0 %v999
        %1037 = vmatprep.subr.mxu0 0.0
        %1038 = vmatpush1.msra.mxu0 %v1000
        %1039 = vmatprep.subr.mxu0 0.0
        %1040 = vmatpush1.msra.mxu0 0.0
        %1041 = vmatprep.subr.mxu0 0.0
        %1042 = vmatpush1.msra.mxu0 0.0
        %1043 = vmatprep.subr.mxu0 0.0
        %1044 = vmatpush1.msra.mxu0 0.0
        %1045 = vmatprep.subr.mxu0 0.0
        %1046 = vmatpush1.msra.mxu0 0.0
        %1047 = vmatprep.subr.mxu0 0.0
        %1048 = vmatpush1.msra.mxu0 0.0
        %1049 = vmatprep.subr.mxu0 0.0
        %1050 = vmatpush1.msra.mxu0 0.0
        %1051 = vmatprep.subr.mxu0 0.0
        %1052 = vmatpush1.msra.mxu0 0.0
        %1053 = vmatprep.subr.mxu0 0.0
        %1054 = vmatpush1.msra.mxu0 0.0
        %1055 = vmatprep.subr.mxu0 0.0
        %1056 = vmatpush1.msra.mxu0 0.0
        %1057 = vmatprep.subr.mxu0 0.0
        %1058 = vmatpush1.msra.mxu0 0.0
        %1059 = vmatprep.subr.mxu0 0.0
        %1060 = vmatpush1.msra.mxu0 0.0
        %1061 = vmatprep.subr.mxu0 0.0
        %1062 = vmatpush1.msra.mxu0 0.0
        %1063 = vmatprep.subr.mxu0 0.0
        %1064 = vmatpush1.msra.mxu0 0.0
        %1065 = vmatprep.subr.mxu0 0.0
        %1066 = vmatpush1.msra.mxu0 0.0
        %1067 = vmatprep.subr.mxu0 0.0
        %1068 = vmatpush1.msra.mxu0 0.0
        %1069 = vmatprep.subr.mxu0 0.0
        %1070 = vmatpush1.msra.mxu0 0.0
        %1071 = vmatprep.mubr.f32.mxu0 0.0
        %1072 = vmatmul.mubr.f32.gmra.mrb[0].mxu0 %v921
        %v1073 = vpop.f32.mrb[0].mxu0
        %v1074 = vadd.f32 %v1005, %v1073
        %v1075 = vpop.f32.mrb[0].mxu0
        %1076 = vmatprep.mubr.f32.mxu0 0.0
        %1077 = vmatmul.mubr.f32.gmra.mrb[0].mxu0 %v922
        %v1078 = vpop.f32.mrb[0].mxu0
        %v1079 = vadd.f32 %v1005, %v1078
        %v1080 = vpop.f32.mrb[0].mxu0
        %1081 = vmatprep.mubr.f32.mxu0 0.0
        %1082 = vmatmul.mubr.f32.gmra.mrb[0].mxu0 %v923
        %v1083 = vpop.f32.mrb[0].mxu0
        %v1084 = vadd.f32 %v1005, %v1083
        %v1085 = vpop.f32.mrb[0].mxu0
        %1086 = vmatprep.mubr.f32.mxu0 0.0
        %1087 = vmatmul.mubr.f32.gmra.mrb[0].mxu0 %v924
        %v1088 = vpop.f32.mrb[0].mxu0
        %v1089 = vadd.f32 %v1005, %v1088
        %v1090 = vpop.f32.mrb[0].mxu0
        %1091 = vmatprep.mubr.f32.mxu0 0.0
        %1092 = vmatmul.mubr.f32.gmra.mrb[0].mxu0 %v925
        %v1093 = vpop.f32.mrb[0].mxu0
        %v1094 = vadd.f32 %v1005, %v1093
        %v1095 = vpop.f32.mrb[0].mxu0
        %1096 = vmatprep.mubr.f32.mxu0 0.0
        %1097 = vmatmul.mubr.f32.gmra.mrb[0].mxu0 %v926
        %v1098 = vpop.f32.mrb[0].mxu0
        %v1099 = vadd.f32 %v1005, %v1098
        %v1100 = vpop.f32.mrb[0].mxu0
        %1101 = vmatprep.mubr.f32.mxu0 0.0
        %1102 = vmatmul.mubr.f32.gmra.mrb[0].mxu0 %v927
        %v1103 = vpop.f32.mrb[0].mxu0
        %v1104 = vadd.f32 %v1005, %v1103
        %v1105 = vpop.f32.mrb[0].mxu0
        %1106 = vmatprep.mubr.f32.mxu0 0.0
        %1107 = vmatmul.mubr.f32.gmra.mrb[0].mxu0 %v928
        %v1108 = vpop.f32.mrb[0].mxu0
        %v1109 = vadd.f32 %v1005, %v1108
        %v1110 = vpop.f32.mrb[0].mxu0
        %1111 = vmatprep.mubr.f32.mxu0 0.0
        %1112 = vmatmul.mubr.f32.gmra.mrb[0].mxu0 %v929
        %v1113 = vpop.f32.mrb[0].mxu0
        %v1114 = vadd.f32 %v1005, %v1113
        %v1115 = vpop.f32.mrb[0].mxu0
        %1116 = vmatprep.mubr.f32.mxu0 0.0
        %1117 = vmatmul.mubr.f32.gmra.mrb[0].mxu0 %v930
        %v1118 = vpop.f32.mrb[0].mxu0
        %v1119 = vadd.f32 %v1005, %v1118
        %v1120 = vpop.f32.mrb[0].mxu0
        %1121 = vmatprep.mubr.f32.mxu0 0.0
        %1122 = vmatmul.mubr.f32.gmra.mrb[0].mxu0 %v931
        %v1123 = vpop.f32.mrb[0].mxu0
        %v1124 = vadd.f32 %v1005, %v1123
        %v1125 = vpop.f32.mrb[0].mxu0
        %1126 = vmatprep.mubr.f32.mxu0 0.0
        %1127 = vmatmul.mubr.f32.gmra.mrb[0].mxu0 %v932
        %v1128 = vpop.f32.mrb[0].mxu0
        %v1129 = vadd.f32 %v1005, %v1128
        %v1130 = vpop.f32.mrb[0].mxu0
        %1131 = vmatprep.mubr.f32.mxu0 0.0
        %1132 = vmatmul.mubr.f32.gmra.mrb[0].mxu0 %v933
        %v1133 = vpop.f32.mrb[0].mxu0
        %v1134 = vadd.f32 %v1005, %v1133
        %v1135 = vpop.f32.mrb[0].mxu0
        %1136 = vmatprep.mubr.f32.mxu0 0.0
        %1137 = vmatmul.mubr.f32.gmra.mrb[0].mxu0 %v934
        %v1138 = vpop.f32.mrb[0].mxu0
        %v1139 = vadd.f32 %v1005, %v1138
        %v1140 = vpop.f32.mrb[0].mxu0
        %1141 = vmatprep.mubr.f32.mxu0 0.0
        %1142 = vmatmul.mubr.f32.gmra.mrb[0].mxu0 %v935
        %v1143 = vpop.f32.mrb[0].mxu0
        %v1144 = vadd.f32 %v1005, %v1143
        %v1145 = vpop.f32.mrb[0].mxu0
        %1146 = vmatprep.mubr.f32.mxu0 0.0
        %1147 = vmatmul.mubr.f32.gmra.mrb[0].mxu0 %v936
        %v1148 = vpop.f32.mrb[0].mxu0
        %v1149 = vadd.f32 %v1005, %v1148
        %v1150 = vpop.f32.mrb[0].mxu0
        %1151 = vmatprep.mubr.f32.mxu0 0.0
        %1152 = vmatmul.mubr.f32.gmra.mrb[0].mxu0 %v937
        %v1153 = vpop.f32.mrb[0].mxu0
        %v1154 = vadd.f32 %v1005, %v1153
        %v1155 = vpop.f32.mrb[0].mxu0
        %1156 = vmatprep.mubr.f32.mxu0 0.0
        %1157 = vmatmul.mubr.f32.gmra.mrb[0].mxu0 %v938
        %v1158 = vpop.f32.mrb[0].mxu0
        %v1159 = vadd.f32 %v1005, %v1158
        %v1160 = vpop.f32.mrb[0].mxu0
        %1161 = vmatprep.mubr.f32.mxu0 0.0
        %1162 = vmatmul.mubr.f32.gmra.mrb[0].mxu0 %v939
        %v1163 = vpop.f32.mrb[0].mxu0
        %v1164 = vadd.f32 %v1005, %v1163
        %v1165 = vpop.f32.mrb[0].mxu0
        %1166 = vmatprep.mubr.f32.mxu0 0.0
        %1167 = vmatmul.mubr.f32.gmra.mrb[0].mxu0 %v940
        %v1168 = vpop.f32.mrb[0].mxu0
        %v1169 = vadd.f32 %v1005, %v1168
        %v1170 = vpop.f32.mrb[0].mxu0
        %1171 = vmatprep.mubr.f32.mxu0 0.0
        %1172 = vmatmul.mubr.f32.gmra.mrb[0].mxu0 %v941
        %v1173 = vpop.f32.mrb[0].mxu0
        %v1174 = vadd.f32 %v1005, %v1173
        %v1175 = vpop.f32.mrb[0].mxu0
        %1176 = vmatprep.mubr.f32.mxu0 0.0
        %1177 = vmatmul.mubr.f32.gmra.mrb[0].mxu0 %v942
        %v1178 = vpop.f32.mrb[0].mxu0
        %v1179 = vadd.f32 %v1005, %v1178
        %v1180 = vpop.f32.mrb[0].mxu0
        %1181 = vmatprep.mubr.f32.mxu0 0.0
        %1182 = vmatmul.mubr.f32.gmra.mrb[0].mxu0 %v943
        %v1183 = vpop.f32.mrb[0].mxu0
        %v1184 = vadd.f32 %v1005, %v1183
        %v1185 = vpop.f32.mrb[0].mxu0
        %1186 = vmatprep.mubr.f32.mxu0 0.0
        %1187 = vmatmul.mubr.f32.gmra.mrb[0].mxu0 %v944
        %v1188 = vpop.f32.mrb[0].mxu0
        %v1189 = vadd.f32 %v1005, %v1188
        %v1190 = vpop.f32.mrb[0].mxu0
        %1191 = vmatprep.mubr.f32.mxu0 0.0
        %1192 = vmatmul.mubr.f32.gmra.mrb[0].mxu0 %v945
        %v1193 = vpop.f32.mrb[0].mxu0
        %v1194 = vadd.f32 %v1005, %v1193
        %v1195 = vpop.f32.mrb[0].mxu0
        %1196 = vmatprep.mubr.f32.mxu0 0.0
        %1197 = vmatmul.mubr.f32.gmra.mrb[0].mxu0 %v946
        %v1198 = vpop.f32.mrb[0].mxu0
        %v1199 = vadd.f32 %v1005, %v1198
        %v1200 = vpop.f32.mrb[0].mxu0
        %1201 = vmatprep.mubr.f32.mxu0 0.0
        %1202 = vmatmul.mubr.f32.gmra.mrb[0].mxu0 %v947
        %v1203 = vpop.f32.mrb[0].mxu0
        %v1204 = vadd.f32 %v1005, %v1203
        %v1205 = vpop.f32.mrb[0].mxu0
        %1206 = vmatprep.mubr.f32.mxu0 0.0
        %1207 = vmatmul.mubr.f32.gmra.mrb[0].mxu0 %v948
        %v1208 = vpop.f32.mrb[0].mxu0
        %v1209 = vadd.f32 %v1005, %v1208
        %v1210 = vpop.f32.mrb[0].mxu0
        %1211 = vmatprep.mubr.f32.mxu0 0.0
        %1212 = vmatmul.mubr.f32.gmra.mrb[0].mxu0 %v949
        %v1213 = vpop.f32.mrb[0].mxu0
        %v1214 = vadd.f32 %v1005, %v1213
        %v1215 = vpop.f32.mrb[0].mxu0
        %1216 = vmatprep.mubr.f32.mxu0 0.0
        %1217 = vmatmul.mubr.f32.gmra.mrb[0].mxu0 %v950
        %v1218 = vpop.f32.mrb[0].mxu0
        %v1219 = vadd.f32 %v1005, %v1218
        %v1220 = vpop.f32.mrb[0].mxu0
        %1221 = vmatprep.mubr.f32.mxu0 0.0
        %1222 = vmatmul.mubr.f32.gmra.mrb[0].mxu0 %v951
        %v1223 = vpop.f32.mrb[0].mxu0
        %v1224 = vadd.f32 %v1005, %v1223
        %v1225 = vpop.f32.mrb[0].mxu0
        %1226 = vmatprep.mubr.f32.mxu0 0.0
        %1227 = vmatmul.mubr.f32.gmra.mrb[0].mxu0 %v952
        %v1228 = vpop.f32.mrb[0].mxu0
        %v1229 = vadd.f32 %v1005, %v1228
        %v1230 = vpop.f32.mrb[0].mxu0
        %1231 = vmatprep.mubr.f32.mxu0 0.0
        %1232 = vmatmul.mubr.f32.gmra.mrb[0].mxu0 %v953
        %v1233 = vpop.f32.mrb[0].mxu0
        %v1234 = vadd.f32 %v1005, %v1233
        %v1235 = vpop.f32.mrb[0].mxu0
        %1236 = vmatprep.mubr.f32.mxu0 0.0
        %1237 = vmatmul.mubr.f32.gmra.mrb[0].mxu0 %v954
        %v1238 = vpop.f32.mrb[0].mxu0
        %v1239 = vadd.f32 %v1005, %v1238
        %v1240 = vpop.f32.mrb[0].mxu0
        %1241 = vmatprep.mubr.f32.mxu0 0.0
        %1242 = vmatmul.mubr.f32.gmra.mrb[0].mxu0 %v955
        %v1243 = vpop.f32.mrb[0].mxu0
        %v1244 = vadd.f32 %v1005, %v1243
        %v1245 = vpop.f32.mrb[0].mxu0
        %1246 = vmatprep.mubr.f32.mxu0 0.0
        %1247 = vmatmul.mubr.f32.gmra.mrb[0].mxu0 %v956
        %v1248 = vpop.f32.mrb[0].mxu0
        %v1249 = vadd.f32 %v1005, %v1248
        %v1250 = vpop.f32.mrb[0].mxu0
        %1251 = vmatprep.mubr.f32.mxu0 0.0
        %1252 = vmatmul.mubr.f32.gmra.mrb[0].mxu0 %v957
        %v1253 = vpop.f32.mrb[0].mxu0
        %v1254 = vadd.f32 %v1005, %v1253
        %v1255 = vpop.f32.mrb[0].mxu0
        %1256 = vmatprep.mubr.f32.mxu0 0.0
        %1257 = vmatmul.mubr.f32.gmra.mrb[0].mxu0 %v958
        %v1258 = vpop.f32.mrb[0].mxu0
        %v1259 = vadd.f32 %v1005, %v1258
        %v1260 = vpop.f32.mrb[0].mxu0
        %1261 = vmatprep.mubr.f32.mxu0 0.0
        %1262 = vmatmul.mubr.f32.gmra.mrb[0].mxu0 %v959
        %v1263 = vpop.f32.mrb[0].mxu0
        %v1264 = vadd.f32 %v1005, %v1263
        %v1265 = vpop.f32.mrb[0].mxu0
        %1266 = vmatprep.mubr.f32.mxu0 0.0
        %1267 = vmatmul.mubr.f32.gmra.mrb[0].mxu0 %v960
        %v1268 = vpop.f32.mrb[0].mxu0
        %v1269 = vadd.f32 %v1005, %v1268
        %v1270 = vpop.f32.mrb[0].mxu0
        %1271 = vmatprep.mubr.f32.mxu0 0.0
        %1272 = vmatmul.mubr.f32.gmra.mrb[0].mxu0 %v961
        %v1273 = vpop.f32.mrb[0].mxu0
        %v1274 = vadd.f32 %v1005, %v1273
        %v1275 = vpop.f32.mrb[0].mxu0
        %1276 = vmatprep.mubr.f32.mxu0 0.0
        %1277 = vmatmul.mubr.f32.gmra.mrb[0].mxu0 %v962
        %v1278 = vpop.f32.mrb[0].mxu0
        %v1279 = vadd.f32 %v1005, %v1278
        %v1280 = vpop.f32.mrb[0].mxu0
        %1281 = vmatprep.mubr.f32.mxu0 0.0
        %1282 = vmatmul.mubr.f32.gmra.mrb[0].mxu0 %v963
        %v1283 = vpop.f32.mrb[0].mxu0
        %v1284 = vadd.f32 %v1005, %v1283
        %v1285 = vpop.f32.mrb[0].mxu0
        %1286 = vmatprep.mubr.f32.mxu0 0.0
        %1287 = vmatmul.mubr.f32.gmra.mrb[0].mxu0 %v964
        %v1288 = vpop.f32.mrb[0].mxu0
        %v1289 = vadd.f32 %v1005, %v1288
        %v1290 = vpop.f32.mrb[0].mxu0
        %1291 = vmatprep.mubr.f32.mxu0 0.0
        %1292 = vmatmul.mubr.f32.gmra.mrb[0].mxu0 %v965
        %v1293 = vpop.f32.mrb[0].mxu0
        %v1294 = vadd.f32 %v1005, %v1293
        %v1295 = vpop.f32.mrb[0].mxu0
        %1296 = vmatprep.mubr.f32.mxu0 0.0
        %1297 = vmatmul.mubr.f32.gmra.mrb[0].mxu0 %v966
        %v1298 = vpop.f32.mrb[0].mxu0
        %v1299 = vadd.f32 %v1005, %v1298
        %v1300 = vpop.f32.mrb[0].mxu0
        %1301 = vmatprep.mubr.f32.mxu0 0.0
        %1302 = vmatmul.mubr.f32.gmra.mrb[0].mxu0 %v967
        %v1303 = vpop.f32.mrb[0].mxu0
        %v1304 = vadd.f32 %v1005, %v1303
        %v1305 = vpop.f32.mrb[0].mxu0
        %1306 = vmatprep.mubr.f32.mxu0 0.0
        %1307 = vmatmul.mubr.f32.gmra.mrb[0].mxu0 %v968
        %v1308 = vpop.f32.mrb[0].mxu0
        %v1309 = vadd.f32 %v1005, %v1308
        %v1310 = vpop.f32.mrb[0].mxu0
        %1311 = vmatprep.mubr.f32.mxu0 0.0
        %1312 = vmatmul.mubr.f32.gmra.mrb[0].mxu0 %v969
        %v1313 = vpop.f32.mrb[0].mxu0
        %v1314 = vadd.f32 %v1005, %v1313
        %v1315 = vpop.f32.mrb[0].mxu0
        %1316 = vmatprep.mubr.f32.mxu0 0.0
        %1317 = vmatmul.mubr.f32.gmra.mrb[0].mxu0 %v970
        %v1318 = vpop.f32.mrb[0].mxu0
        %v1319 = vadd.f32 %v1005, %v1318
        %v1320 = vpop.f32.mrb[0].mxu0
        %1321 = vmatprep.mubr.f32.mxu0 0.0
        %1322 = vmatmul.mubr.f32.gmra.mrb[0].mxu0 %v971
        %v1323 = vpop.f32.mrb[0].mxu0
        %v1324 = vadd.f32 %v1005, %v1323
        %v1325 = vpop.f32.mrb[0].mxu0
        %1326 = vmatprep.mubr.f32.mxu0 0.0
        %1327 = vmatmul.mubr.f32.gmra.mrb[0].mxu0 %v972
        %v1328 = vpop.f32.mrb[0].mxu0
        %v1329 = vadd.f32 %v1005, %v1328
        %v1330 = vpop.f32.mrb[0].mxu0
        %1331 = vmatprep.mubr.f32.mxu0 0.0
        %1332 = vmatmul.mubr.f32.gmra.mrb[0].mxu0 %v973
        %v1333 = vpop.f32.mrb[0].mxu0
        %v1334 = vadd.f32 %v1005, %v1333
        %v1335 = vpop.f32.mrb[0].mxu0
        %1336 = vmatprep.mubr.f32.mxu0 0.0
        %1337 = vmatmul.mubr.f32.gmra.mrb[0].mxu0 %v974
        %v1338 = vpop.f32.mrb[0].mxu0
        %v1339 = vadd.f32 %v1005, %v1338
        %v1340 = vpop.f32.mrb[0].mxu0
        %1341 = vmatprep.mubr.f32.mxu0 0.0
        %1342 = vmatmul.mubr.f32.gmra.mrb[0].mxu0 %v975
        %v1343 = vpop.f32.mrb[0].mxu0
        %v1344 = vadd.f32 %v1005, %v1343
        %v1345 = vpop.f32.mrb[0].mxu0
        %1346 = vmatprep.mubr.f32.mxu0 0.0
        %1347 = vmatmul.mubr.f32.gmra.mrb[0].mxu0 %v976
        %v1348 = vpop.f32.mrb[0].mxu0
        %v1349 = vadd.f32 %v1005, %v1348
        %v1350 = vpop.f32.mrb[0].mxu0
        %1351 = vmatprep.mubr.f32.mxu0 0.0
        %1352 = vmatmul.mubr.f32.gmra.mrb[0].mxu0 %v977
        %v1353 = vpop.f32.mrb[0].mxu0
        %v1354 = vadd.f32 %v1005, %v1353
        %v1355 = vpop.f32.mrb[0].mxu0
        %1356 = vmatprep.mubr.f32.mxu0 0.0
        %1357 = vmatmul.mubr.f32.gmra.mrb[0].mxu0 %v978
        %v1358 = vpop.f32.mrb[0].mxu0
        %v1359 = vadd.f32 %v1005, %v1358
        %v1360 = vpop.f32.mrb[0].mxu0
        %1361 = vmatprep.mubr.f32.mxu0 0.0
        %1362 = vmatmul.mubr.f32.gmra.mrb[0].mxu0 %v979
        %v1363 = vpop.f32.mrb[0].mxu0
        %v1364 = vadd.f32 %v1005, %v1363
        %v1365 = vpop.f32.mrb[0].mxu0
        %1366 = vmatprep.mubr.f32.mxu0 0.0
        %1367 = vmatmul.mubr.f32.gmra.mrb[0].mxu0 %v980
        %v1368 = vpop.f32.mrb[0].mxu0
        %v1369 = vadd.f32 %v1005, %v1368
        %v1370 = vpop.f32.mrb[0].mxu0
        %1371 = vmatprep.mubr.f32.mxu0 0.0
        %1372 = vmatmul.mubr.f32.gmra.mrb[0].mxu0 %v981
        %v1373 = vpop.f32.mrb[0].mxu0
        %v1374 = vadd.f32 %v1005, %v1373
        %v1375 = vpop.f32.mrb[0].mxu0
        %1376 = vmatprep.mubr.f32.mxu0 0.0
        %1377 = vmatmul.mubr.f32.gmra.mrb[0].mxu0 %v982
        %v1378 = vpop.f32.mrb[0].mxu0
        %v1379 = vadd.f32 %v1005, %v1378
        %v1380 = vpop.f32.mrb[0].mxu0
        %1381 = vmatprep.mubr.f32.mxu0 0.0
        %1382 = vmatmul.mubr.f32.gmra.mrb[0].mxu0 %v983
        %v1383 = vpop.f32.mrb[0].mxu0
        %v1384 = vadd.f32 %v1005, %v1383
        %v1385 = vpop.f32.mrb[0].mxu0
        %1386 = vmatprep.mubr.f32.mxu0 0.0
        %1387 = vmatmul.mubr.f32.gmra.mrb[0].mxu0 %v984
        %v1388 = vpop.f32.mrb[0].mxu0
        %v1389 = vadd.f32 %v1005, %v1388
        %v1390 = vpop.f32.mrb[0].mxu0
        %1391 = vdwg.mxu0
        %v1392 = vmul.f32 %v1074, 0.01
        %v1393 = vmul.f32 %v1079, 0.01
        %v1394 = vmul.f32 %v1084, 0.01
        %v1395 = vmul.f32 %v1089, 0.01
        %v1396 = vmul.f32 %v1094, 0.01
        %v1397 = vmul.f32 %v1099, 0.01
        %v1398 = vmul.f32 %v1104, 0.01
        %v1399 = vmul.f32 %v1109, 0.01
        %v1400 = vmul.f32 %v1114, 0.01
        %v1401 = vmul.f32 %v1119, 0.01
        %v1402 = vmul.f32 %v1124, 0.01
        %v1403 = vmul.f32 %v1129, 0.01
        %v1404 = vmul.f32 %v1134, 0.01
        %v1405 = vmul.f32 %v1139, 0.01
        %v1406 = vmul.f32 %v1144, 0.01
        %v1407 = vmul.f32 %v1149, 0.01
        %v1408 = vmul.f32 %v1154, 0.01
        %v1409 = vmul.f32 %v1159, 0.01
        %v1410 = vmul.f32 %v1164, 0.01
        %v1411 = vmul.f32 %v1169, 0.01
        %v1412 = vmul.f32 %v1174, 0.01
        %v1413 = vmul.f32 %v1179, 0.01
        %v1414 = vmul.f32 %v1184, 0.01
        %v1415 = vmul.f32 %v1189, 0.01
        %v1416 = vmul.f32 %v1194, 0.01
        %v1417 = vmul.f32 %v1199, 0.01
        %v1418 = vmul.f32 %v1204, 0.01
        %v1419 = vmul.f32 %v1209, 0.01
        %v1420 = vmul.f32 %v1214, 0.01
        %v1421 = vmul.f32 %v1219, 0.01
        %v1422 = vmul.f32 %v1224, 0.01
        %v1423 = vmul.f32 %v1229, 0.01
        %v1424 = vmul.f32 %v1234, 0.01
        %v1425 = vmul.f32 %v1239, 0.01
        %v1426 = vmul.f32 %v1244, 0.01
        %v1427 = vmul.f32 %v1249, 0.01
        %v1428 = vmul.f32 %v1254, 0.01
        %v1429 = vmul.f32 %v1259, 0.01
        %v1430 = vmul.f32 %v1264, 0.01
        %v1431 = vmul.f32 %v1269, 0.01
        %v1432 = vmul.f32 %v1274, 0.01
        %v1433 = vmul.f32 %v1279, 0.01
        %v1434 = vmul.f32 %v1284, 0.01
        %v1435 = vmul.f32 %v1289, 0.01
        %v1436 = vmul.f32 %v1294, 0.01
        %v1437 = vmul.f32 %v1299, 0.01
        %v1438 = vmul.f32 %v1304, 0.01
        %v1439 = vmul.f32 %v1309, 0.01
        %v1440 = vmul.f32 %v1314, 0.01
        %v1441 = vmul.f32 %v1319, 0.01
        %v1442 = vmul.f32 %v1324, 0.01
        %v1443 = vmul.f32 %v1329, 0.01
        %v1444 = vmul.f32 %v1334, 0.01
        %v1445 = vmul.f32 %v1339, 0.01
        %v1446 = vmul.f32 %v1344, 0.01
        %v1447 = vmul.f32 %v1349, 0.01
        %v1448 = vmul.f32 %v1354, 0.01
        %v1449 = vmul.f32 %v1359, 0.01
        %v1450 = vmul.f32 %v1364, 0.01
        %v1451 = vmul.f32 %v1369, 0.01
        %v1452 = vmul.f32 %v1374, 0.01
        %v1453 = vmul.f32 %v1379, 0.01
        %v1454 = vmul.f32 %v1384, 0.01
        %v1455 = vmul.f32 %v1389, 0.01
        %v1456 = vmax.f32 %v1074, %v1392
        %v1457 = vmax.f32 %v1079, %v1393
        %v1458 = vmax.f32 %v1084, %v1394
        %v1459 = vmax.f32 %v1089, %v1395
        %v1460 = vmax.f32 %v1094, %v1396
        %v1461 = vmax.f32 %v1099, %v1397
        %v1462 = vmax.f32 %v1104, %v1398
        %v1463 = vmax.f32 %v1109, %v1399
        %v1464 = vmax.f32 %v1114, %v1400
        %v1465 = vmax.f32 %v1119, %v1401
        %v1466 = vmax.f32 %v1124, %v1402
        %v1467 = vmax.f32 %v1129, %v1403
        %v1468 = vmax.f32 %v1134, %v1404
        %v1469 = vmax.f32 %v1139, %v1405
        %v1470 = vmax.f32 %v1144, %v1406
        %v1471 = vmax.f32 %v1149, %v1407
        %v1472 = vmax.f32 %v1154, %v1408
        %v1473 = vmax.f32 %v1159, %v1409
        %v1474 = vmax.f32 %v1164, %v1410
        %v1475 = vmax.f32 %v1169, %v1411
        %v1476 = vmax.f32 %v1174, %v1412
        %v1477 = vmax.f32 %v1179, %v1413
        %v1478 = vmax.f32 %v1184, %v1414
        %v1479 = vmax.f32 %v1189, %v1415
        %v1480 = vmax.f32 %v1194, %v1416
        %v1481 = vmax.f32 %v1199, %v1417
        %v1482 = vmax.f32 %v1204, %v1418
        %v1483 = vmax.f32 %v1209, %v1419
        %v1484 = vmax.f32 %v1214, %v1420
        %v1485 = vmax.f32 %v1219, %v1421
        %v1486 = vmax.f32 %v1224, %v1422
        %v1487 = vmax.f32 %v1229, %v1423
        %v1488 = vmax.f32 %v1234, %v1424
        %v1489 = vmax.f32 %v1239, %v1425
        %v1490 = vmax.f32 %v1244, %v1426
        %v1491 = vmax.f32 %v1249, %v1427
        %v1492 = vmax.f32 %v1254, %v1428
        %v1493 = vmax.f32 %v1259, %v1429
        %v1494 = vmax.f32 %v1264, %v1430
        %v1495 = vmax.f32 %v1269, %v1431
        %v1496 = vmax.f32 %v1274, %v1432
        %v1497 = vmax.f32 %v1279, %v1433
        %v1498 = vmax.f32 %v1284, %v1434
        %v1499 = vmax.f32 %v1289, %v1435
        %v1500 = vmax.f32 %v1294, %v1436
        %v1501 = vmax.f32 %v1299, %v1437
        %v1502 = vmax.f32 %v1304, %v1438
        %v1503 = vmax.f32 %v1309, %v1439
        %v1504 = vmax.f32 %v1314, %v1440
        %v1505 = vmax.f32 %v1319, %v1441
        %v1506 = vmax.f32 %v1324, %v1442
        %v1507 = vmax.f32 %v1329, %v1443
        %v1508 = vmax.f32 %v1334, %v1444
        %v1509 = vmax.f32 %v1339, %v1445
        %v1510 = vmax.f32 %v1344, %v1446
        %v1511 = vmax.f32 %v1349, %v1447
        %v1512 = vmax.f32 %v1354, %v1448
        %v1513 = vmax.f32 %v1359, %v1449
        %v1514 = vmax.f32 %v1364, %v1450
        %v1515 = vmax.f32 %v1369, %v1451
        %v1516 = vmax.f32 %v1374, %v1452
        %v1517 = vmax.f32 %v1379, %v1453
        %v1518 = vmax.f32 %v1384, %v1454
        %v1519 = vmax.f32 %v1389, %v1455
        %s1520 = scalar_lea.vmem %s2, 128
        %v1521 = vld [vmem:[%s1520] sm:$0xff]
        %v1522 = vld [vmem:[%s1520 + $0x8] sm:$0xff]
        %v1523 = vld [vmem:[%s1520 + $0x10] sm:$0xff]
        %v1524 = vld [vmem:[%s1520 + $0x18] sm:$0xff]
        %v1525 = vld [vmem:[%s1520 + $0x20] sm:$0xff]
        %v1526 = vld [vmem:[%s1520 + $0x28] sm:$0xff]
        %v1527 = vld [vmem:[%s1520 + $0x30] sm:$0xff]
        %v1528 = vld [vmem:[%s1520 + $0x38] sm:$0xff]
        %v1529 = vld [vmem:[%s1520 + $0x40] sm:$0xff]
        %v1530 = vld [vmem:[%s1520 + $0x48] sm:$0xff]
        %v1531 = vld [vmem:[%s1520 + $0x50] sm:$0xff]
        %v1532 = vld [vmem:[%s1520 + $0x58] sm:$0xff]
        %v1533 = vld [vmem:[%s1520 + $0x60] sm:$0xff]
        %v1534 = vld [vmem:[%s1520 + $0x68] sm:$0xff]
        %v1535 = vld [vmem:[%s1520 + $0x70] sm:$0xff]
        %v1536 = vld [vmem:[%s1520 + $0x78] sm:$0xff]
        %v1538 = vlaneseq
        %v1539 = vshrl.u32 %v1538, 7
        %v1540 = vsub.s32 0, %v1539
        %v1541 = vrot.slane %v201, %v1540
        %1543 = vmatprep.subr.mxu0 0.0
        %1544 = vmatpush1.msra.mxu0 %v1521
        %1545 = vmatprep.subr.mxu0 0.0
        %1546 = vmatpush1.msra.mxu0 %v1522
        %1547 = vmatprep.subr.mxu0 0.0
        %1548 = vmatpush1.msra.mxu0 %v1523
        %1549 = vmatprep.subr.mxu0 0.0
        %1550 = vmatpush1.msra.mxu0 %v1524
        %1551 = vmatprep.subr.mxu0 0.0
        %1552 = vmatpush1.msra.mxu0 %v1525
        %1553 = vmatprep.subr.mxu0 0.0
        %1554 = vmatpush1.msra.mxu0 %v1526
        %1555 = vmatprep.subr.mxu0 0.0
        %1556 = vmatpush1.msra.mxu0 %v1527
        %1557 = vmatprep.subr.mxu0 0.0
        %1558 = vmatpush1.msra.mxu0 %v1528
        %1559 = vmatprep.subr.mxu0 0.0
        %1560 = vmatpush1.msra.mxu0 %v1529
        %1561 = vmatprep.subr.mxu0 0.0
        %1562 = vmatpush1.msra.mxu0 %v1530
        %1563 = vmatprep.subr.mxu0 0.0
        %1564 = vmatpush1.msra.mxu0 %v1531
        %1565 = vmatprep.subr.mxu0 0.0
        %1566 = vmatpush1.msra.mxu0 %v1532
        %1567 = vmatprep.subr.mxu0 0.0
        %1568 = vmatpush1.msra.mxu0 %v1533
        %1569 = vmatprep.subr.mxu0 0.0
        %1570 = vmatpush1.msra.mxu0 %v1534
        %1571 = vmatprep.subr.mxu0 0.0
        %1572 = vmatpush1.msra.mxu0 %v1535
        %1573 = vmatprep.subr.mxu0 0.0
        %1574 = vmatpush1.msra.mxu0 %v1536
        %1575 = vmatprep.subr.mxu0 0.0
        %1576 = vmatpush1.msra.mxu0 0.0
        %1577 = vmatprep.subr.mxu0 0.0
        %1578 = vmatpush1.msra.mxu0 0.0
        %1579 = vmatprep.subr.mxu0 0.0
        %1580 = vmatpush1.msra.mxu0 0.0
        %1581 = vmatprep.subr.mxu0 0.0
        %1582 = vmatpush1.msra.mxu0 0.0
        %1583 = vmatprep.subr.mxu0 0.0
        %1584 = vmatpush1.msra.mxu0 0.0
        %1585 = vmatprep.subr.mxu0 0.0
        %1586 = vmatpush1.msra.mxu0 0.0
        %1587 = vmatprep.subr.mxu0 0.0
        %1588 = vmatpush1.msra.mxu0 0.0
        %1589 = vmatprep.subr.mxu0 0.0
        %1590 = vmatpush1.msra.mxu0 0.0
        %1591 = vmatprep.subr.mxu0 0.0
        %1592 = vmatpush1.msra.mxu0 0.0
        %1593 = vmatprep.subr.mxu0 0.0
        %1594 = vmatpush1.msra.mxu0 0.0
        %1595 = vmatprep.subr.mxu0 0.0
        %1596 = vmatpush1.msra.mxu0 0.0
        %1597 = vmatprep.subr.mxu0 0.0
        %1598 = vmatpush1.msra.mxu0 0.0
        %1599 = vmatprep.subr.mxu0 0.0
        %1600 = vmatpush1.msra.mxu0 0.0
        %1601 = vmatprep.subr.mxu0 0.0
        %1602 = vmatpush1.msra.mxu0 0.0
        %1603 = vmatprep.subr.mxu0 0.0
        %1604 = vmatpush1.msra.mxu0 0.0
        %1605 = vmatprep.subr.mxu0 0.0
        %1606 = vmatpush1.msra.mxu0 0.0
        %1607 = vmatprep.mubr.f32.mxu0 0.0
        %1608 = vmatmul.mubr.f32.gmra.mrb[0].mxu0 %v1456
        %v1609 = vpop.f32.mrb[0].mxu0
        %v1610 = vadd.f32 %v1541, %v1609
        %v1611 = vpop.f32.mrb[0].mxu0
        %1612 = vmatprep.mubr.f32.mxu0 0.0
        %1613 = vmatmul.mubr.f32.gmra.mrb[0].mxu0 %v1457
        %v1614 = vpop.f32.mrb[0].mxu0
        %v1615 = vadd.f32 %v1541, %v1614
        %v1616 = vpop.f32.mrb[0].mxu0
        %1617 = vmatprep.mubr.f32.mxu0 0.0
        %1618 = vmatmul.mubr.f32.gmra.mrb[0].mxu0 %v1458
        %v1619 = vpop.f32.mrb[0].mxu0
        %v1620 = vadd.f32 %v1541, %v1619
        %v1621 = vpop.f32.mrb[0].mxu0
        %1622 = vmatprep.mubr.f32.mxu0 0.0
        %1623 = vmatmul.mubr.f32.gmra.mrb[0].mxu0 %v1459
        %v1624 = vpop.f32.mrb[0].mxu0
        %v1625 = vadd.f32 %v1541, %v1624
        %v1626 = vpop.f32.mrb[0].mxu0
        %1627 = vmatprep.mubr.f32.mxu0 0.0
        %1628 = vmatmul.mubr.f32.gmra.mrb[0].mxu0 %v1460
        %v1629 = vpop.f32.mrb[0].mxu0
        %v1630 = vadd.f32 %v1541, %v1629
        %v1631 = vpop.f32.mrb[0].mxu0
        %1632 = vmatprep.mubr.f32.mxu0 0.0
        %1633 = vmatmul.mubr.f32.gmra.mrb[0].mxu0 %v1461
        %v1634 = vpop.f32.mrb[0].mxu0
        %v1635 = vadd.f32 %v1541, %v1634
        %v1636 = vpop.f32.mrb[0].mxu0
        %1637 = vmatprep.mubr.f32.mxu0 0.0
        %1638 = vmatmul.mubr.f32.gmra.mrb[0].mxu0 %v1462
        %v1639 = vpop.f32.mrb[0].mxu0
        %v1640 = vadd.f32 %v1541, %v1639
        %v1641 = vpop.f32.mrb[0].mxu0
        %1642 = vmatprep.mubr.f32.mxu0 0.0
        %1643 = vmatmul.mubr.f32.gmra.mrb[0].mxu0 %v1463
        %v1644 = vpop.f32.mrb[0].mxu0
        %v1645 = vadd.f32 %v1541, %v1644
        %v1646 = vpop.f32.mrb[0].mxu0
        %1647 = vmatprep.mubr.f32.mxu0 0.0
        %1648 = vmatmul.mubr.f32.gmra.mrb[0].mxu0 %v1464
        %v1649 = vpop.f32.mrb[0].mxu0
        %v1650 = vadd.f32 %v1541, %v1649
        %v1651 = vpop.f32.mrb[0].mxu0
        %1652 = vmatprep.mubr.f32.mxu0 0.0
        %1653 = vmatmul.mubr.f32.gmra.mrb[0].mxu0 %v1465
        %v1654 = vpop.f32.mrb[0].mxu0
        %v1655 = vadd.f32 %v1541, %v1654
        %v1656 = vpop.f32.mrb[0].mxu0
        %1657 = vmatprep.mubr.f32.mxu0 0.0
        %1658 = vmatmul.mubr.f32.gmra.mrb[0].mxu0 %v1466
        %v1659 = vpop.f32.mrb[0].mxu0
        %v1660 = vadd.f32 %v1541, %v1659
        %v1661 = vpop.f32.mrb[0].mxu0
        %1662 = vmatprep.mubr.f32.mxu0 0.0
        %1663 = vmatmul.mubr.f32.gmra.mrb[0].mxu0 %v1467
        %v1664 = vpop.f32.mrb[0].mxu0
        %v1665 = vadd.f32 %v1541, %v1664
        %v1666 = vpop.f32.mrb[0].mxu0
        %1667 = vmatprep.mubr.f32.mxu0 0.0
        %1668 = vmatmul.mubr.f32.gmra.mrb[0].mxu0 %v1468
        %v1669 = vpop.f32.mrb[0].mxu0
        %v1670 = vadd.f32 %v1541, %v1669
        %v1671 = vpop.f32.mrb[0].mxu0
        %1672 = vmatprep.mubr.f32.mxu0 0.0
        %1673 = vmatmul.mubr.f32.gmra.mrb[0].mxu0 %v1469
        %v1674 = vpop.f32.mrb[0].mxu0
        %v1675 = vadd.f32 %v1541, %v1674
        %v1676 = vpop.f32.mrb[0].mxu0
        %1677 = vmatprep.mubr.f32.mxu0 0.0
        %1678 = vmatmul.mubr.f32.gmra.mrb[0].mxu0 %v1470
        %v1679 = vpop.f32.mrb[0].mxu0
        %v1680 = vadd.f32 %v1541, %v1679
        %v1681 = vpop.f32.mrb[0].mxu0
        %1682 = vmatprep.mubr.f32.mxu0 0.0
        %1683 = vmatmul.mubr.f32.gmra.mrb[0].mxu0 %v1471
        %v1684 = vpop.f32.mrb[0].mxu0
        %v1685 = vadd.f32 %v1541, %v1684
        %v1686 = vpop.f32.mrb[0].mxu0
        %1687 = vmatprep.mubr.f32.mxu0 0.0
        %1688 = vmatmul.mubr.f32.gmra.mrb[0].mxu0 %v1472
        %v1689 = vpop.f32.mrb[0].mxu0
        %v1690 = vadd.f32 %v1541, %v1689
        %v1691 = vpop.f32.mrb[0].mxu0
        %1692 = vmatprep.mubr.f32.mxu0 0.0
        %1693 = vmatmul.mubr.f32.gmra.mrb[0].mxu0 %v1473
        %v1694 = vpop.f32.mrb[0].mxu0
        %v1695 = vadd.f32 %v1541, %v1694
        %v1696 = vpop.f32.mrb[0].mxu0
        %1697 = vmatprep.mubr.f32.mxu0 0.0
        %1698 = vmatmul.mubr.f32.gmra.mrb[0].mxu0 %v1474
        %v1699 = vpop.f32.mrb[0].mxu0
        %v1700 = vadd.f32 %v1541, %v1699
        %v1701 = vpop.f32.mrb[0].mxu0
        %1702 = vmatprep.mubr.f32.mxu0 0.0
        %1703 = vmatmul.mubr.f32.gmra.mrb[0].mxu0 %v1475
        %v1704 = vpop.f32.mrb[0].mxu0
        %v1705 = vadd.f32 %v1541, %v1704
        %v1706 = vpop.f32.mrb[0].mxu0
        %1707 = vmatprep.mubr.f32.mxu0 0.0
        %1708 = vmatmul.mubr.f32.gmra.mrb[0].mxu0 %v1476
        %v1709 = vpop.f32.mrb[0].mxu0
        %v1710 = vadd.f32 %v1541, %v1709
        %v1711 = vpop.f32.mrb[0].mxu0
        %1712 = vmatprep.mubr.f32.mxu0 0.0
        %1713 = vmatmul.mubr.f32.gmra.mrb[0].mxu0 %v1477
        %v1714 = vpop.f32.mrb[0].mxu0
        %v1715 = vadd.f32 %v1541, %v1714
        %v1716 = vpop.f32.mrb[0].mxu0
        %1717 = vmatprep.mubr.f32.mxu0 0.0
        %1718 = vmatmul.mubr.f32.gmra.mrb[0].mxu0 %v1478
        %v1719 = vpop.f32.mrb[0].mxu0
        %v1720 = vadd.f32 %v1541, %v1719
        %v1721 = vpop.f32.mrb[0].mxu0
        %1722 = vmatprep.mubr.f32.mxu0 0.0
        %1723 = vmatmul.mubr.f32.gmra.mrb[0].mxu0 %v1479
        %v1724 = vpop.f32.mrb[0].mxu0
        %v1725 = vadd.f32 %v1541, %v1724
        %v1726 = vpop.f32.mrb[0].mxu0
        %1727 = vmatprep.mubr.f32.mxu0 0.0
        %1728 = vmatmul.mubr.f32.gmra.mrb[0].mxu0 %v1480
        %v1729 = vpop.f32.mrb[0].mxu0
        %v1730 = vadd.f32 %v1541, %v1729
        %v1731 = vpop.f32.mrb[0].mxu0
        %1732 = vmatprep.mubr.f32.mxu0 0.0
        %1733 = vmatmul.mubr.f32.gmra.mrb[0].mxu0 %v1481
        %v1734 = vpop.f32.mrb[0].mxu0
        %v1735 = vadd.f32 %v1541, %v1734
        %v1736 = vpop.f32.mrb[0].mxu0
        %1737 = vmatprep.mubr.f32.mxu0 0.0
        %1738 = vmatmul.mubr.f32.gmra.mrb[0].mxu0 %v1482
        %v1739 = vpop.f32.mrb[0].mxu0
        %v1740 = vadd.f32 %v1541, %v1739
        %v1741 = vpop.f32.mrb[0].mxu0
        %1742 = vmatprep.mubr.f32.mxu0 0.0
        %1743 = vmatmul.mubr.f32.gmra.mrb[0].mxu0 %v1483
        %v1744 = vpop.f32.mrb[0].mxu0
        %v1745 = vadd.f32 %v1541, %v1744
        %v1746 = vpop.f32.mrb[0].mxu0
        %1747 = vmatprep.mubr.f32.mxu0 0.0
        %1748 = vmatmul.mubr.f32.gmra.mrb[0].mxu0 %v1484
        %v1749 = vpop.f32.mrb[0].mxu0
        %v1750 = vadd.f32 %v1541, %v1749
        %v1751 = vpop.f32.mrb[0].mxu0
        %1752 = vmatprep.mubr.f32.mxu0 0.0
        %1753 = vmatmul.mubr.f32.gmra.mrb[0].mxu0 %v1485
        %v1754 = vpop.f32.mrb[0].mxu0
        %v1755 = vadd.f32 %v1541, %v1754
        %v1756 = vpop.f32.mrb[0].mxu0
        %1757 = vmatprep.mubr.f32.mxu0 0.0
        %1758 = vmatmul.mubr.f32.gmra.mrb[0].mxu0 %v1486
        %v1759 = vpop.f32.mrb[0].mxu0
        %v1760 = vadd.f32 %v1541, %v1759
        %v1761 = vpop.f32.mrb[0].mxu0
        %1762 = vmatprep.mubr.f32.mxu0 0.0
        %1763 = vmatmul.mubr.f32.gmra.mrb[0].mxu0 %v1487
        %v1764 = vpop.f32.mrb[0].mxu0
        %v1765 = vadd.f32 %v1541, %v1764
        %v1766 = vpop.f32.mrb[0].mxu0
        %1767 = vmatprep.mubr.f32.mxu0 0.0
        %1768 = vmatmul.mubr.f32.gmra.mrb[0].mxu0 %v1488
        %v1769 = vpop.f32.mrb[0].mxu0
        %v1770 = vadd.f32 %v1541, %v1769
        %v1771 = vpop.f32.mrb[0].mxu0
        %1772 = vmatprep.mubr.f32.mxu0 0.0
        %1773 = vmatmul.mubr.f32.gmra.mrb[0].mxu0 %v1489
        %v1774 = vpop.f32.mrb[0].mxu0
        %v1775 = vadd.f32 %v1541, %v1774
        %v1776 = vpop.f32.mrb[0].mxu0
        %1777 = vmatprep.mubr.f32.mxu0 0.0
        %1778 = vmatmul.mubr.f32.gmra.mrb[0].mxu0 %v1490
        %v1779 = vpop.f32.mrb[0].mxu0
        %v1780 = vadd.f32 %v1541, %v1779
        %v1781 = vpop.f32.mrb[0].mxu0
        %1782 = vmatprep.mubr.f32.mxu0 0.0
        %1783 = vmatmul.mubr.f32.gmra.mrb[0].mxu0 %v1491
        %v1784 = vpop.f32.mrb[0].mxu0
        %v1785 = vadd.f32 %v1541, %v1784
        %v1786 = vpop.f32.mrb[0].mxu0
        %1787 = vmatprep.mubr.f32.mxu0 0.0
        %1788 = vmatmul.mubr.f32.gmra.mrb[0].mxu0 %v1492
        %v1789 = vpop.f32.mrb[0].mxu0
        %v1790 = vadd.f32 %v1541, %v1789
        %v1791 = vpop.f32.mrb[0].mxu0
        %1792 = vmatprep.mubr.f32.mxu0 0.0
        %1793 = vmatmul.mubr.f32.gmra.mrb[0].mxu0 %v1493
        %v1794 = vpop.f32.mrb[0].mxu0
        %v1795 = vadd.f32 %v1541, %v1794
        %v1796 = vpop.f32.mrb[0].mxu0
        %1797 = vmatprep.mubr.f32.mxu0 0.0
        %1798 = vmatmul.mubr.f32.gmra.mrb[0].mxu0 %v1494
        %v1799 = vpop.f32.mrb[0].mxu0
        %v1800 = vadd.f32 %v1541, %v1799
        %v1801 = vpop.f32.mrb[0].mxu0
        %1802 = vmatprep.mubr.f32.mxu0 0.0
        %1803 = vmatmul.mubr.f32.gmra.mrb[0].mxu0 %v1495
        %v1804 = vpop.f32.mrb[0].mxu0
        %v1805 = vadd.f32 %v1541, %v1804
        %v1806 = vpop.f32.mrb[0].mxu0
        %1807 = vmatprep.mubr.f32.mxu0 0.0
        %1808 = vmatmul.mubr.f32.gmra.mrb[0].mxu0 %v1496
        %v1809 = vpop.f32.mrb[0].mxu0
        %v1810 = vadd.f32 %v1541, %v1809
        %v1811 = vpop.f32.mrb[0].mxu0
        %1812 = vmatprep.mubr.f32.mxu0 0.0
        %1813 = vmatmul.mubr.f32.gmra.mrb[0].mxu0 %v1497
        %v1814 = vpop.f32.mrb[0].mxu0
        %v1815 = vadd.f32 %v1541, %v1814
        %v1816 = vpop.f32.mrb[0].mxu0
        %1817 = vmatprep.mubr.f32.mxu0 0.0
        %1818 = vmatmul.mubr.f32.gmra.mrb[0].mxu0 %v1498
        %v1819 = vpop.f32.mrb[0].mxu0
        %v1820 = vadd.f32 %v1541, %v1819
        %v1821 = vpop.f32.mrb[0].mxu0
        %1822 = vmatprep.mubr.f32.mxu0 0.0
        %1823 = vmatmul.mubr.f32.gmra.mrb[0].mxu0 %v1499
        %v1824 = vpop.f32.mrb[0].mxu0
        %v1825 = vadd.f32 %v1541, %v1824
        %v1826 = vpop.f32.mrb[0].mxu0
        %1827 = vmatprep.mubr.f32.mxu0 0.0
        %1828 = vmatmul.mubr.f32.gmra.mrb[0].mxu0 %v1500
        %v1829 = vpop.f32.mrb[0].mxu0
        %v1830 = vadd.f32 %v1541, %v1829
        %v1831 = vpop.f32.mrb[0].mxu0
        %1832 = vmatprep.mubr.f32.mxu0 0.0
        %1833 = vmatmul.mubr.f32.gmra.mrb[0].mxu0 %v1501
        %v1834 = vpop.f32.mrb[0].mxu0
        %v1835 = vadd.f32 %v1541, %v1834
        %v1836 = vpop.f32.mrb[0].mxu0
        %1837 = vmatprep.mubr.f32.mxu0 0.0
        %1838 = vmatmul.mubr.f32.gmra.mrb[0].mxu0 %v1502
        %v1839 = vpop.f32.mrb[0].mxu0
        %v1840 = vadd.f32 %v1541, %v1839
        %v1841 = vpop.f32.mrb[0].mxu0
        %1842 = vmatprep.mubr.f32.mxu0 0.0
        %1843 = vmatmul.mubr.f32.gmra.mrb[0].mxu0 %v1503
        %v1844 = vpop.f32.mrb[0].mxu0
        %v1845 = vadd.f32 %v1541, %v1844
        %v1846 = vpop.f32.mrb[0].mxu0
        %1847 = vmatprep.mubr.f32.mxu0 0.0
        %1848 = vmatmul.mubr.f32.gmra.mrb[0].mxu0 %v1504
        %v1849 = vpop.f32.mrb[0].mxu0
        %v1850 = vadd.f32 %v1541, %v1849
        %v1851 = vpop.f32.mrb[0].mxu0
        %1852 = vmatprep.mubr.f32.mxu0 0.0
        %1853 = vmatmul.mubr.f32.gmra.mrb[0].mxu0 %v1505
        %v1854 = vpop.f32.mrb[0].mxu0
        %v1855 = vadd.f32 %v1541, %v1854
        %v1856 = vpop.f32.mrb[0].mxu0
        %1857 = vmatprep.mubr.f32.mxu0 0.0
        %1858 = vmatmul.mubr.f32.gmra.mrb[0].mxu0 %v1506
        %v1859 = vpop.f32.mrb[0].mxu0
        %v1860 = vadd.f32 %v1541, %v1859
        %v1861 = vpop.f32.mrb[0].mxu0
        %1862 = vmatprep.mubr.f32.mxu0 0.0
        %1863 = vmatmul.mubr.f32.gmra.mrb[0].mxu0 %v1507
        %v1864 = vpop.f32.mrb[0].mxu0
        %v1865 = vadd.f32 %v1541, %v1864
        %v1866 = vpop.f32.mrb[0].mxu0
        %1867 = vmatprep.mubr.f32.mxu0 0.0
        %1868 = vmatmul.mubr.f32.gmra.mrb[0].mxu0 %v1508
        %v1869 = vpop.f32.mrb[0].mxu0
        %v1870 = vadd.f32 %v1541, %v1869
        %v1871 = vpop.f32.mrb[0].mxu0
        %1872 = vmatprep.mubr.f32.mxu0 0.0
        %1873 = vmatmul.mubr.f32.gmra.mrb[0].mxu0 %v1509
        %v1874 = vpop.f32.mrb[0].mxu0
        %v1875 = vadd.f32 %v1541, %v1874
        %v1876 = vpop.f32.mrb[0].mxu0
        %1877 = vmatprep.mubr.f32.mxu0 0.0
        %1878 = vmatmul.mubr.f32.gmra.mrb[0].mxu0 %v1510
        %v1879 = vpop.f32.mrb[0].mxu0
        %v1880 = vadd.f32 %v1541, %v1879
        %v1881 = vpop.f32.mrb[0].mxu0
        %1882 = vmatprep.mubr.f32.mxu0 0.0
        %1883 = vmatmul.mubr.f32.gmra.mrb[0].mxu0 %v1511
        %v1884 = vpop.f32.mrb[0].mxu0
        %v1885 = vadd.f32 %v1541, %v1884
        %v1886 = vpop.f32.mrb[0].mxu0
        %1887 = vmatprep.mubr.f32.mxu0 0.0
        %1888 = vmatmul.mubr.f32.gmra.mrb[0].mxu0 %v1512
        %v1889 = vpop.f32.mrb[0].mxu0
        %v1890 = vadd.f32 %v1541, %v1889
        %v1891 = vpop.f32.mrb[0].mxu0
        %1892 = vmatprep.mubr.f32.mxu0 0.0
        %1893 = vmatmul.mubr.f32.gmra.mrb[0].mxu0 %v1513
        %v1894 = vpop.f32.mrb[0].mxu0
        %v1895 = vadd.f32 %v1541, %v1894
        %v1896 = vpop.f32.mrb[0].mxu0
        %1897 = vmatprep.mubr.f32.mxu0 0.0
        %1898 = vmatmul.mubr.f32.gmra.mrb[0].mxu0 %v1514
        %v1899 = vpop.f32.mrb[0].mxu0
        %v1900 = vadd.f32 %v1541, %v1899
        %v1901 = vpop.f32.mrb[0].mxu0
        %1902 = vmatprep.mubr.f32.mxu0 0.0
        %1903 = vmatmul.mubr.f32.gmra.mrb[0].mxu0 %v1515
        %v1904 = vpop.f32.mrb[0].mxu0
        %v1905 = vadd.f32 %v1541, %v1904
        %v1906 = vpop.f32.mrb[0].mxu0
        %1907 = vmatprep.mubr.f32.mxu0 0.0
        %1908 = vmatmul.mubr.f32.gmra.mrb[0].mxu0 %v1516
        %v1909 = vpop.f32.mrb[0].mxu0
        %v1910 = vadd.f32 %v1541, %v1909
        %v1911 = vpop.f32.mrb[0].mxu0
        %1912 = vmatprep.mubr.f32.mxu0 0.0
        %1913 = vmatmul.mubr.f32.gmra.mrb[0].mxu0 %v1517
        %v1914 = vpop.f32.mrb[0].mxu0
        %v1915 = vadd.f32 %v1541, %v1914
        %v1916 = vpop.f32.mrb[0].mxu0
        %1917 = vmatprep.mubr.f32.mxu0 0.0
        %1918 = vmatmul.mubr.f32.gmra.mrb[0].mxu0 %v1518
        %v1919 = vpop.f32.mrb[0].mxu0
        %v1920 = vadd.f32 %v1541, %v1919
        %v1921 = vpop.f32.mrb[0].mxu0
        %1922 = vmatprep.mubr.f32.mxu0 0.0
        %1923 = vmatmul.mubr.f32.gmra.mrb[0].mxu0 %v1519
        %v1924 = vpop.f32.mrb[0].mxu0
        %v1925 = vadd.f32 %v1541, %v1924
        %v1926 = vpop.f32.mrb[0].mxu0
        %1927 = vdwg.mxu0
        %v1928 = vmax.f32 %v1610, 0.0
        %v1929 = vmax.f32 %v1615, 0.0
        %v1930 = vmax.f32 %v1620, 0.0
        %v1931 = vmax.f32 %v1625, 0.0
        %v1932 = vmax.f32 %v1630, 0.0
        %v1933 = vmax.f32 %v1635, 0.0
        %v1934 = vmax.f32 %v1640, 0.0
        %v1935 = vmax.f32 %v1645, 0.0
        %v1936 = vmax.f32 %v1650, 0.0
        %v1937 = vmax.f32 %v1655, 0.0
        %v1938 = vmax.f32 %v1660, 0.0
        %v1939 = vmax.f32 %v1665, 0.0
        %v1940 = vmax.f32 %v1670, 0.0
        %v1941 = vmax.f32 %v1675, 0.0
        %v1942 = vmax.f32 %v1680, 0.0
        %v1943 = vmax.f32 %v1685, 0.0
        %v1944 = vmax.f32 %v1690, 0.0
        %v1945 = vmax.f32 %v1695, 0.0
        %v1946 = vmax.f32 %v1700, 0.0
        %v1947 = vmax.f32 %v1705, 0.0
        %v1948 = vmax.f32 %v1710, 0.0
        %v1949 = vmax.f32 %v1715, 0.0
        %v1950 = vmax.f32 %v1720, 0.0
        %v1951 = vmax.f32 %v1725, 0.0
        %v1952 = vmax.f32 %v1730, 0.0
        %v1953 = vmax.f32 %v1735, 0.0
        %v1954 = vmax.f32 %v1740, 0.0
        %v1955 = vmax.f32 %v1745, 0.0
        %v1956 = vmax.f32 %v1750, 0.0
        %v1957 = vmax.f32 %v1755, 0.0
        %v1958 = vmax.f32 %v1760, 0.0
        %v1959 = vmax.f32 %v1765, 0.0
        %v1960 = vmax.f32 %v1770, 0.0
        %v1961 = vmax.f32 %v1775, 0.0
        %v1962 = vmax.f32 %v1780, 0.0
        %v1963 = vmax.f32 %v1785, 0.0
        %v1964 = vmax.f32 %v1790, 0.0
        %v1965 = vmax.f32 %v1795, 0.0
        %v1966 = vmax.f32 %v1800, 0.0
        %v1967 = vmax.f32 %v1805, 0.0
        %v1968 = vmax.f32 %v1810, 0.0
        %v1969 = vmax.f32 %v1815, 0.0
        %v1970 = vmax.f32 %v1820, 0.0
        %v1971 = vmax.f32 %v1825, 0.0
        %v1972 = vmax.f32 %v1830, 0.0
        %v1973 = vmax.f32 %v1835, 0.0
        %v1974 = vmax.f32 %v1840, 0.0
        %v1975 = vmax.f32 %v1845, 0.0
        %v1976 = vmax.f32 %v1850, 0.0
        %v1977 = vmax.f32 %v1855, 0.0
        %v1978 = vmax.f32 %v1860, 0.0
        %v1979 = vmax.f32 %v1865, 0.0
        %v1980 = vmax.f32 %v1870, 0.0
        %v1981 = vmax.f32 %v1875, 0.0
        %v1982 = vmax.f32 %v1880, 0.0
        %v1983 = vmax.f32 %v1885, 0.0
        %v1984 = vmax.f32 %v1890, 0.0
        %v1985 = vmax.f32 %v1895, 0.0
        %v1986 = vmax.f32 %v1900, 0.0
        %v1987 = vmax.f32 %v1905, 0.0
        %v1988 = vmax.f32 %v1910, 0.0
        %v1989 = vmax.f32 %v1915, 0.0
        %v1990 = vmax.f32 %v1920, 0.0
        %v1991 = vmax.f32 %v1925, 0.0
        %s1992 = scalar_lea.vmem %s2, 256
        %v1993 = vld [vmem:[%s1992] sm:$0xff]
        %v1994 = vld [vmem:[%s1992 + $0x8] sm:$0xff]
        %v1995 = vld [vmem:[%s1992 + $0x10] sm:$0xff]
        %v1996 = vld [vmem:[%s1992 + $0x18] sm:$0xff]
        %v1997 = vld [vmem:[%s1992 + $0x20] sm:$0xff]
        %v1998 = vld [vmem:[%s1992 + $0x28] sm:$0xff]
        %v1999 = vld [vmem:[%s1992 + $0x30] sm:$0xff]
        %v2000 = vld [vmem:[%s1992 + $0x38] sm:$0xff]
        %v2001 = vld [vmem:[%s1992 + $0x40] sm:$0xff]
        %v2002 = vld [vmem:[%s1992 + $0x48] sm:$0xff]
        %v2003 = vld [vmem:[%s1992 + $0x50] sm:$0xff]
        %v2004 = vld [vmem:[%s1992 + $0x58] sm:$0xff]
        %v2005 = vld [vmem:[%s1992 + $0x60] sm:$0xff]
        %v2006 = vld [vmem:[%s1992 + $0x68] sm:$0xff]
        %v2007 = vld [vmem:[%s1992 + $0x70] sm:$0xff]
        %v2008 = vld [vmem:[%s1992 + $0x78] sm:$0xff]
        %v2010 = vlaneseq
        %v2011 = vshrl.u32 %v2010, 7
        %v2012 = vsub.s32 0, %v2011
        %v2013 = vrot.slane %v202, %v2012
        %2015 = vmatprep.subr.mxu0 0.0
        %2016 = vmatpush1.msra.mxu0 %v1993
        %2017 = vmatprep.subr.mxu0 0.0
        %2018 = vmatpush1.msra.mxu0 %v1994
        %2019 = vmatprep.subr.mxu0 0.0
        %2020 = vmatpush1.msra.mxu0 %v1995
        %2021 = vmatprep.subr.mxu0 0.0
        %2022 = vmatpush1.msra.mxu0 %v1996
        %2023 = vmatprep.subr.mxu0 0.0
        %2024 = vmatpush1.msra.mxu0 %v1997
        %2025 = vmatprep.subr.mxu0 0.0
        %2026 = vmatpush1.msra.mxu0 %v1998
        %2027 = vmatprep.subr.mxu0 0.0
        %2028 = vmatpush1.msra.mxu0 %v1999
        %2029 = vmatprep.subr.mxu0 0.0
        %2030 = vmatpush1.msra.mxu0 %v2000
        %2031 = vmatprep.subr.mxu0 0.0
        %2032 = vmatpush1.msra.mxu0 %v2001
        %2033 = vmatprep.subr.mxu0 0.0
        %2034 = vmatpush1.msra.mxu0 %v2002
        %2035 = vmatprep.subr.mxu0 0.0
        %2036 = vmatpush1.msra.mxu0 %v2003
        %2037 = vmatprep.subr.mxu0 0.0
        %2038 = vmatpush1.msra.mxu0 %v2004
        %2039 = vmatprep.subr.mxu0 0.0
        %2040 = vmatpush1.msra.mxu0 %v2005
        %2041 = vmatprep.subr.mxu0 0.0
        %2042 = vmatpush1.msra.mxu0 %v2006
        %2043 = vmatprep.subr.mxu0 0.0
        %2044 = vmatpush1.msra.mxu0 %v2007
        %2045 = vmatprep.subr.mxu0 0.0
        %2046 = vmatpush1.msra.mxu0 %v2008
        %2047 = vmatprep.subr.mxu0 0.0
        %2048 = vmatpush1.msra.mxu0 0.0
        %2049 = vmatprep.subr.mxu0 0.0
        %2050 = vmatpush1.msra.mxu0 0.0
        %2051 = vmatprep.subr.mxu0 0.0
        %2052 = vmatpush1.msra.mxu0 0.0
        %2053 = vmatprep.subr.mxu0 0.0
        %2054 = vmatpush1.msra.mxu0 0.0
        %2055 = vmatprep.subr.mxu0 0.0
        %2056 = vmatpush1.msra.mxu0 0.0
        %2057 = vmatprep.subr.mxu0 0.0
        %2058 = vmatpush1.msra.mxu0 0.0
        %2059 = vmatprep.subr.mxu0 0.0
        %2060 = vmatpush1.msra.mxu0 0.0
        %2061 = vmatprep.subr.mxu0 0.0
        %2062 = vmatpush1.msra.mxu0 0.0
        %2063 = vmatprep.subr.mxu0 0.0
        %2064 = vmatpush1.msra.mxu0 0.0
        %2065 = vmatprep.subr.mxu0 0.0
        %2066 = vmatpush1.msra.mxu0 0.0
        %2067 = vmatprep.subr.mxu0 0.0
        %2068 = vmatpush1.msra.mxu0 0.0
        %2069 = vmatprep.subr.mxu0 0.0
        %2070 = vmatpush1.msra.mxu0 0.0
        %2071 = vmatprep.subr.mxu0 0.0
        %2072 = vmatpush1.msra.mxu0 0.0
        %2073 = vmatprep.subr.mxu0 0.0
        %2074 = vmatpush1.msra.mxu0 0.0
        %2075 = vmatprep.subr.mxu0 0.0
        %2076 = vmatpush1.msra.mxu0 0.0
        %2077 = vmatprep.subr.mxu0 0.0
        %2078 = vmatpush1.msra.mxu0 0.0
        %2079 = vmatprep.mubr.f32.mxu0 0.0
        %2080 = vmatmul.mubr.f32.gmra.mrb[0].mxu0 %v1928
        %v2081 = vpop.f32.mrb[0].mxu0
        %v2082 = vadd.f32 %v2013, %v2081
        %v2083 = vpop.f32.mrb[0].mxu0
        %2084 = vmatprep.mubr.f32.mxu0 0.0
        %2085 = vmatmul.mubr.f32.gmra.mrb[0].mxu0 %v1929
        %v2086 = vpop.f32.mrb[0].mxu0
        %v2087 = vadd.f32 %v2013, %v2086
        %v2088 = vpop.f32.mrb[0].mxu0
        %2089 = vmatprep.mubr.f32.mxu0 0.0
        %2090 = vmatmul.mubr.f32.gmra.mrb[0].mxu0 %v1930
        %v2091 = vpop.f32.mrb[0].mxu0
        %v2092 = vadd.f32 %v2013, %v2091
        %v2093 = vpop.f32.mrb[0].mxu0
        %2094 = vmatprep.mubr.f32.mxu0 0.0
        %2095 = vmatmul.mubr.f32.gmra.mrb[0].mxu0 %v1931
        %v2096 = vpop.f32.mrb[0].mxu0
        %v2097 = vadd.f32 %v2013, %v2096
        %v2098 = vpop.f32.mrb[0].mxu0
        %2099 = vmatprep.mubr.f32.mxu0 0.0
        %2100 = vmatmul.mubr.f32.gmra.mrb[0].mxu0 %v1932
        %v2101 = vpop.f32.mrb[0].mxu0
        %v2102 = vadd.f32 %v2013, %v2101
        %v2103 = vpop.f32.mrb[0].mxu0
        %2104 = vmatprep.mubr.f32.mxu0 0.0
        %2105 = vmatmul.mubr.f32.gmra.mrb[0].mxu0 %v1933
        %v2106 = vpop.f32.mrb[0].mxu0
        %v2107 = vadd.f32 %v2013, %v2106
        %v2108 = vpop.f32.mrb[0].mxu0
        %2109 = vmatprep.mubr.f32.mxu0 0.0
        %2110 = vmatmul.mubr.f32.gmra.mrb[0].mxu0 %v1934
        %v2111 = vpop.f32.mrb[0].mxu0
        %v2112 = vadd.f32 %v2013, %v2111
        %v2113 = vpop.f32.mrb[0].mxu0
        %2114 = vmatprep.mubr.f32.mxu0 0.0
        %2115 = vmatmul.mubr.f32.gmra.mrb[0].mxu0 %v1935
        %v2116 = vpop.f32.mrb[0].mxu0
        %v2117 = vadd.f32 %v2013, %v2116
        %v2118 = vpop.f32.mrb[0].mxu0
        %2119 = vmatprep.mubr.f32.mxu0 0.0
        %2120 = vmatmul.mubr.f32.gmra.mrb[0].mxu0 %v1936
        %v2121 = vpop.f32.mrb[0].mxu0
        %v2122 = vadd.f32 %v2013, %v2121
        %v2123 = vpop.f32.mrb[0].mxu0
        %2124 = vmatprep.mubr.f32.mxu0 0.0
        %2125 = vmatmul.mubr.f32.gmra.mrb[0].mxu0 %v1937
        %v2126 = vpop.f32.mrb[0].mxu0
        %v2127 = vadd.f32 %v2013, %v2126
        %v2128 = vpop.f32.mrb[0].mxu0
        %2129 = vmatprep.mubr.f32.mxu0 0.0
        %2130 = vmatmul.mubr.f32.gmra.mrb[0].mxu0 %v1938
        %v2131 = vpop.f32.mrb[0].mxu0
        %v2132 = vadd.f32 %v2013, %v2131
        %v2133 = vpop.f32.mrb[0].mxu0
        %2134 = vmatprep.mubr.f32.mxu0 0.0
        %2135 = vmatmul.mubr.f32.gmra.mrb[0].mxu0 %v1939
        %v2136 = vpop.f32.mrb[0].mxu0
        %v2137 = vadd.f32 %v2013, %v2136
        %v2138 = vpop.f32.mrb[0].mxu0
        %2139 = vmatprep.mubr.f32.mxu0 0.0
        %2140 = vmatmul.mubr.f32.gmra.mrb[0].mxu0 %v1940
        %v2141 = vpop.f32.mrb[0].mxu0
        %v2142 = vadd.f32 %v2013, %v2141
        %v2143 = vpop.f32.mrb[0].mxu0
        %2144 = vmatprep.mubr.f32.mxu0 0.0
        %2145 = vmatmul.mubr.f32.gmra.mrb[0].mxu0 %v1941
        %v2146 = vpop.f32.mrb[0].mxu0
        %v2147 = vadd.f32 %v2013, %v2146
        %v2148 = vpop.f32.mrb[0].mxu0
        %2149 = vmatprep.mubr.f32.mxu0 0.0
        %2150 = vmatmul.mubr.f32.gmra.mrb[0].mxu0 %v1942
        %v2151 = vpop.f32.mrb[0].mxu0
        %v2152 = vadd.f32 %v2013, %v2151
        %v2153 = vpop.f32.mrb[0].mxu0
        %2154 = vmatprep.mubr.f32.mxu0 0.0
        %2155 = vmatmul.mubr.f32.gmra.mrb[0].mxu0 %v1943
        %v2156 = vpop.f32.mrb[0].mxu0
        %v2157 = vadd.f32 %v2013, %v2156
        %v2158 = vpop.f32.mrb[0].mxu0
        %2159 = vmatprep.mubr.f32.mxu0 0.0
        %2160 = vmatmul.mubr.f32.gmra.mrb[0].mxu0 %v1944
        %v2161 = vpop.f32.mrb[0].mxu0
        %v2162 = vadd.f32 %v2013, %v2161
        %v2163 = vpop.f32.mrb[0].mxu0
        %2164 = vmatprep.mubr.f32.mxu0 0.0
        %2165 = vmatmul.mubr.f32.gmra.mrb[0].mxu0 %v1945
        %v2166 = vpop.f32.mrb[0].mxu0
        %v2167 = vadd.f32 %v2013, %v2166
        %v2168 = vpop.f32.mrb[0].mxu0
        %2169 = vmatprep.mubr.f32.mxu0 0.0
        %2170 = vmatmul.mubr.f32.gmra.mrb[0].mxu0 %v1946
        %v2171 = vpop.f32.mrb[0].mxu0
        %v2172 = vadd.f32 %v2013, %v2171
        %v2173 = vpop.f32.mrb[0].mxu0
        %2174 = vmatprep.mubr.f32.mxu0 0.0
        %2175 = vmatmul.mubr.f32.gmra.mrb[0].mxu0 %v1947
        %v2176 = vpop.f32.mrb[0].mxu0
        %v2177 = vadd.f32 %v2013, %v2176
        %v2178 = vpop.f32.mrb[0].mxu0
        %2179 = vmatprep.mubr.f32.mxu0 0.0
        %2180 = vmatmul.mubr.f32.gmra.mrb[0].mxu0 %v1948
        %v2181 = vpop.f32.mrb[0].mxu0
        %v2182 = vadd.f32 %v2013, %v2181
        %v2183 = vpop.f32.mrb[0].mxu0
        %2184 = vmatprep.mubr.f32.mxu0 0.0
        %2185 = vmatmul.mubr.f32.gmra.mrb[0].mxu0 %v1949
        %v2186 = vpop.f32.mrb[0].mxu0
        %v2187 = vadd.f32 %v2013, %v2186
        %v2188 = vpop.f32.mrb[0].mxu0
        %2189 = vmatprep.mubr.f32.mxu0 0.0
        %2190 = vmatmul.mubr.f32.gmra.mrb[0].mxu0 %v1950
        %v2191 = vpop.f32.mrb[0].mxu0
        %v2192 = vadd.f32 %v2013, %v2191
        %v2193 = vpop.f32.mrb[0].mxu0
        %2194 = vmatprep.mubr.f32.mxu0 0.0
        %2195 = vmatmul.mubr.f32.gmra.mrb[0].mxu0 %v1951
        %v2196 = vpop.f32.mrb[0].mxu0
        %v2197 = vadd.f32 %v2013, %v2196
        %v2198 = vpop.f32.mrb[0].mxu0
        %2199 = vmatprep.mubr.f32.mxu0 0.0
        %2200 = vmatmul.mubr.f32.gmra.mrb[0].mxu0 %v1952
        %v2201 = vpop.f32.mrb[0].mxu0
        %v2202 = vadd.f32 %v2013, %v2201
        %v2203 = vpop.f32.mrb[0].mxu0
        %2204 = vmatprep.mubr.f32.mxu0 0.0
        %2205 = vmatmul.mubr.f32.gmra.mrb[0].mxu0 %v1953
        %v2206 = vpop.f32.mrb[0].mxu0
        %v2207 = vadd.f32 %v2013, %v2206
        %v2208 = vpop.f32.mrb[0].mxu0
        %2209 = vmatprep.mubr.f32.mxu0 0.0
        %2210 = vmatmul.mubr.f32.gmra.mrb[0].mxu0 %v1954
        %v2211 = vpop.f32.mrb[0].mxu0
        %v2212 = vadd.f32 %v2013, %v2211
        %v2213 = vpop.f32.mrb[0].mxu0
        %2214 = vmatprep.mubr.f32.mxu0 0.0
        %2215 = vmatmul.mubr.f32.gmra.mrb[0].mxu0 %v1955
        %v2216 = vpop.f32.mrb[0].mxu0
        %v2217 = vadd.f32 %v2013, %v2216
        %v2218 = vpop.f32.mrb[0].mxu0
        %2219 = vmatprep.mubr.f32.mxu0 0.0
        %2220 = vmatmul.mubr.f32.gmra.mrb[0].mxu0 %v1956
        %v2221 = vpop.f32.mrb[0].mxu0
        %v2222 = vadd.f32 %v2013, %v2221
        %v2223 = vpop.f32.mrb[0].mxu0
        %2224 = vmatprep.mubr.f32.mxu0 0.0
        %2225 = vmatmul.mubr.f32.gmra.mrb[0].mxu0 %v1957
        %v2226 = vpop.f32.mrb[0].mxu0
        %v2227 = vadd.f32 %v2013, %v2226
        %v2228 = vpop.f32.mrb[0].mxu0
        %2229 = vmatprep.mubr.f32.mxu0 0.0
        %2230 = vmatmul.mubr.f32.gmra.mrb[0].mxu0 %v1958
        %v2231 = vpop.f32.mrb[0].mxu0
        %v2232 = vadd.f32 %v2013, %v2231
        %v2233 = vpop.f32.mrb[0].mxu0
        %2234 = vmatprep.mubr.f32.mxu0 0.0
        %2235 = vmatmul.mubr.f32.gmra.mrb[0].mxu0 %v1959
        %v2236 = vpop.f32.mrb[0].mxu0
        %v2237 = vadd.f32 %v2013, %v2236
        %v2238 = vpop.f32.mrb[0].mxu0
        %2239 = vmatprep.mubr.f32.mxu0 0.0
        %2240 = vmatmul.mubr.f32.gmra.mrb[0].mxu0 %v1960
        %v2241 = vpop.f32.mrb[0].mxu0
        %v2242 = vadd.f32 %v2013, %v2241
        %v2243 = vpop.f32.mrb[0].mxu0
        %2244 = vmatprep.mubr.f32.mxu0 0.0
        %2245 = vmatmul.mubr.f32.gmra.mrb[0].mxu0 %v1961
        %v2246 = vpop.f32.mrb[0].mxu0
        %v2247 = vadd.f32 %v2013, %v2246
        %v2248 = vpop.f32.mrb[0].mxu0
        %2249 = vmatprep.mubr.f32.mxu0 0.0
        %2250 = vmatmul.mubr.f32.gmra.mrb[0].mxu0 %v1962
        %v2251 = vpop.f32.mrb[0].mxu0
        %v2252 = vadd.f32 %v2013, %v2251
        %v2253 = vpop.f32.mrb[0].mxu0
        %2254 = vmatprep.mubr.f32.mxu0 0.0
        %2255 = vmatmul.mubr.f32.gmra.mrb[0].mxu0 %v1963
        %v2256 = vpop.f32.mrb[0].mxu0
        %v2257 = vadd.f32 %v2013, %v2256
        %v2258 = vpop.f32.mrb[0].mxu0
        %2259 = vmatprep.mubr.f32.mxu0 0.0
        %2260 = vmatmul.mubr.f32.gmra.mrb[0].mxu0 %v1964
        %v2261 = vpop.f32.mrb[0].mxu0
        %v2262 = vadd.f32 %v2013, %v2261
        %v2263 = vpop.f32.mrb[0].mxu0
        %2264 = vmatprep.mubr.f32.mxu0 0.0
        %2265 = vmatmul.mubr.f32.gmra.mrb[0].mxu0 %v1965
        %v2266 = vpop.f32.mrb[0].mxu0
        %v2267 = vadd.f32 %v2013, %v2266
        %v2268 = vpop.f32.mrb[0].mxu0
        %2269 = vmatprep.mubr.f32.mxu0 0.0
        %2270 = vmatmul.mubr.f32.gmra.mrb[0].mxu0 %v1966
        %v2271 = vpop.f32.mrb[0].mxu0
        %v2272 = vadd.f32 %v2013, %v2271
        %v2273 = vpop.f32.mrb[0].mxu0
        %2274 = vmatprep.mubr.f32.mxu0 0.0
        %2275 = vmatmul.mubr.f32.gmra.mrb[0].mxu0 %v1967
        %v2276 = vpop.f32.mrb[0].mxu0
        %v2277 = vadd.f32 %v2013, %v2276
        %v2278 = vpop.f32.mrb[0].mxu0
        %2279 = vmatprep.mubr.f32.mxu0 0.0
        %2280 = vmatmul.mubr.f32.gmra.mrb[0].mxu0 %v1968
        %v2281 = vpop.f32.mrb[0].mxu0
        %v2282 = vadd.f32 %v2013, %v2281
        %v2283 = vpop.f32.mrb[0].mxu0
        %2284 = vmatprep.mubr.f32.mxu0 0.0
        %2285 = vmatmul.mubr.f32.gmra.mrb[0].mxu0 %v1969
        %v2286 = vpop.f32.mrb[0].mxu0
        %v2287 = vadd.f32 %v2013, %v2286
        %v2288 = vpop.f32.mrb[0].mxu0
        %2289 = vmatprep.mubr.f32.mxu0 0.0
        %2290 = vmatmul.mubr.f32.gmra.mrb[0].mxu0 %v1970
        %v2291 = vpop.f32.mrb[0].mxu0
        %v2292 = vadd.f32 %v2013, %v2291
        %v2293 = vpop.f32.mrb[0].mxu0
        %2294 = vmatprep.mubr.f32.mxu0 0.0
        %2295 = vmatmul.mubr.f32.gmra.mrb[0].mxu0 %v1971
        %v2296 = vpop.f32.mrb[0].mxu0
        %v2297 = vadd.f32 %v2013, %v2296
        %v2298 = vpop.f32.mrb[0].mxu0
        %2299 = vmatprep.mubr.f32.mxu0 0.0
        %2300 = vmatmul.mubr.f32.gmra.mrb[0].mxu0 %v1972
        %v2301 = vpop.f32.mrb[0].mxu0
        %v2302 = vadd.f32 %v2013, %v2301
        %v2303 = vpop.f32.mrb[0].mxu0
        %2304 = vmatprep.mubr.f32.mxu0 0.0
        %2305 = vmatmul.mubr.f32.gmra.mrb[0].mxu0 %v1973
        %v2306 = vpop.f32.mrb[0].mxu0
        %v2307 = vadd.f32 %v2013, %v2306
        %v2308 = vpop.f32.mrb[0].mxu0
        %2309 = vmatprep.mubr.f32.mxu0 0.0
        %2310 = vmatmul.mubr.f32.gmra.mrb[0].mxu0 %v1974
        %v2311 = vpop.f32.mrb[0].mxu0
        %v2312 = vadd.f32 %v2013, %v2311
        %v2313 = vpop.f32.mrb[0].mxu0
        %2314 = vmatprep.mubr.f32.mxu0 0.0
        %2315 = vmatmul.mubr.f32.gmra.mrb[0].mxu0 %v1975
        %v2316 = vpop.f32.mrb[0].mxu0
        %v2317 = vadd.f32 %v2013, %v2316
        %v2318 = vpop.f32.mrb[0].mxu0
        %2319 = vmatprep.mubr.f32.mxu0 0.0
        %2320 = vmatmul.mubr.f32.gmra.mrb[0].mxu0 %v1976
        %v2321 = vpop.f32.mrb[0].mxu0
        %v2322 = vadd.f32 %v2013, %v2321
        %v2323 = vpop.f32.mrb[0].mxu0
        %2324 = vmatprep.mubr.f32.mxu0 0.0
        %2325 = vmatmul.mubr.f32.gmra.mrb[0].mxu0 %v1977
        %v2326 = vpop.f32.mrb[0].mxu0
        %v2327 = vadd.f32 %v2013, %v2326
        %v2328 = vpop.f32.mrb[0].mxu0
        %2329 = vmatprep.mubr.f32.mxu0 0.0
        %2330 = vmatmul.mubr.f32.gmra.mrb[0].mxu0 %v1978
        %v2331 = vpop.f32.mrb[0].mxu0
        %v2332 = vadd.f32 %v2013, %v2331
        %v2333 = vpop.f32.mrb[0].mxu0
        %2334 = vmatprep.mubr.f32.mxu0 0.0
        %2335 = vmatmul.mubr.f32.gmra.mrb[0].mxu0 %v1979
        %v2336 = vpop.f32.mrb[0].mxu0
        %v2337 = vadd.f32 %v2013, %v2336
        %v2338 = vpop.f32.mrb[0].mxu0
        %2339 = vmatprep.mubr.f32.mxu0 0.0
        %2340 = vmatmul.mubr.f32.gmra.mrb[0].mxu0 %v1980
        %v2341 = vpop.f32.mrb[0].mxu0
        %v2342 = vadd.f32 %v2013, %v2341
        %v2343 = vpop.f32.mrb[0].mxu0
        %2344 = vmatprep.mubr.f32.mxu0 0.0
        %2345 = vmatmul.mubr.f32.gmra.mrb[0].mxu0 %v1981
        %v2346 = vpop.f32.mrb[0].mxu0
        %v2347 = vadd.f32 %v2013, %v2346
        %v2348 = vpop.f32.mrb[0].mxu0
        %2349 = vmatprep.mubr.f32.mxu0 0.0
        %2350 = vmatmul.mubr.f32.gmra.mrb[0].mxu0 %v1982
        %v2351 = vpop.f32.mrb[0].mxu0
        %v2352 = vadd.f32 %v2013, %v2351
        %v2353 = vpop.f32.mrb[0].mxu0
        %2354 = vmatprep.mubr.f32.mxu0 0.0
        %2355 = vmatmul.mubr.f32.gmra.mrb[0].mxu0 %v1983
        %v2356 = vpop.f32.mrb[0].mxu0
        %v2357 = vadd.f32 %v2013, %v2356
        %v2358 = vpop.f32.mrb[0].mxu0
        %2359 = vmatprep.mubr.f32.mxu0 0.0
        %2360 = vmatmul.mubr.f32.gmra.mrb[0].mxu0 %v1984
        %v2361 = vpop.f32.mrb[0].mxu0
        %v2362 = vadd.f32 %v2013, %v2361
        %v2363 = vpop.f32.mrb[0].mxu0
        %2364 = vmatprep.mubr.f32.mxu0 0.0
        %2365 = vmatmul.mubr.f32.gmra.mrb[0].mxu0 %v1985
        %v2366 = vpop.f32.mrb[0].mxu0
        %v2367 = vadd.f32 %v2013, %v2366
        %v2368 = vpop.f32.mrb[0].mxu0
        %2369 = vmatprep.mubr.f32.mxu0 0.0
        %2370 = vmatmul.mubr.f32.gmra.mrb[0].mxu0 %v1986
        %v2371 = vpop.f32.mrb[0].mxu0
        %v2372 = vadd.f32 %v2013, %v2371
        %v2373 = vpop.f32.mrb[0].mxu0
        %2374 = vmatprep.mubr.f32.mxu0 0.0
        %2375 = vmatmul.mubr.f32.gmra.mrb[0].mxu0 %v1987
        %v2376 = vpop.f32.mrb[0].mxu0
        %v2377 = vadd.f32 %v2013, %v2376
        %v2378 = vpop.f32.mrb[0].mxu0
        %2379 = vmatprep.mubr.f32.mxu0 0.0
        %2380 = vmatmul.mubr.f32.gmra.mrb[0].mxu0 %v1988
        %v2381 = vpop.f32.mrb[0].mxu0
        %v2382 = vadd.f32 %v2013, %v2381
        %v2383 = vpop.f32.mrb[0].mxu0
        %2384 = vmatprep.mubr.f32.mxu0 0.0
        %2385 = vmatmul.mubr.f32.gmra.mrb[0].mxu0 %v1989
        %v2386 = vpop.f32.mrb[0].mxu0
        %v2387 = vadd.f32 %v2013, %v2386
        %v2388 = vpop.f32.mrb[0].mxu0
        %2389 = vmatprep.mubr.f32.mxu0 0.0
        %2390 = vmatmul.mubr.f32.gmra.mrb[0].mxu0 %v1990
        %v2391 = vpop.f32.mrb[0].mxu0
        %v2392 = vadd.f32 %v2013, %v2391
        %v2393 = vpop.f32.mrb[0].mxu0
        %2394 = vmatprep.mubr.f32.mxu0 0.0
        %2395 = vmatmul.mubr.f32.gmra.mrb[0].mxu0 %v1991
        %v2396 = vpop.f32.mrb[0].mxu0
        %v2397 = vadd.f32 %v2013, %v2396
        %v2398 = vpop.f32.mrb[0].mxu0
        %2399 = vdwg.mxu0
        %v2400 = vadd.f32 %v1456, %v2082
        %v2401 = vadd.f32 %v1457, %v2087
        %v2402 = vadd.f32 %v1458, %v2092
        %v2403 = vadd.f32 %v1459, %v2097
        %v2404 = vadd.f32 %v1460, %v2102
        %v2405 = vadd.f32 %v1461, %v2107
        %v2406 = vadd.f32 %v1462, %v2112
        %v2407 = vadd.f32 %v1463, %v2117
        %v2408 = vadd.f32 %v1464, %v2122
        %v2409 = vadd.f32 %v1465, %v2127
        %v2410 = vadd.f32 %v1466, %v2132
        %v2411 = vadd.f32 %v1467, %v2137
        %v2412 = vadd.f32 %v1468, %v2142
        %v2413 = vadd.f32 %v1469, %v2147
        %v2414 = vadd.f32 %v1470, %v2152
        %v2415 = vadd.f32 %v1471, %v2157
        %v2416 = vadd.f32 %v1472, %v2162
        %v2417 = vadd.f32 %v1473, %v2167
        %v2418 = vadd.f32 %v1474, %v2172
        %v2419 = vadd.f32 %v1475, %v2177
        %v2420 = vadd.f32 %v1476, %v2182
        %v2421 = vadd.f32 %v1477, %v2187
        %v2422 = vadd.f32 %v1478, %v2192
        %v2423 = vadd.f32 %v1479, %v2197
        %v2424 = vadd.f32 %v1480, %v2202
        %v2425 = vadd.f32 %v1481, %v2207
        %v2426 = vadd.f32 %v1482, %v2212
        %v2427 = vadd.f32 %v1483, %v2217
        %v2428 = vadd.f32 %v1484, %v2222
        %v2429 = vadd.f32 %v1485, %v2227
        %v2430 = vadd.f32 %v1486, %v2232
        %v2431 = vadd.f32 %v1487, %v2237
        %v2432 = vadd.f32 %v1488, %v2242
        %v2433 = vadd.f32 %v1489, %v2247
        %v2434 = vadd.f32 %v1490, %v2252
        %v2435 = vadd.f32 %v1491, %v2257
        %v2436 = vadd.f32 %v1492, %v2262
        %v2437 = vadd.f32 %v1493, %v2267
        %v2438 = vadd.f32 %v1494, %v2272
        %v2439 = vadd.f32 %v1495, %v2277
        %v2440 = vadd.f32 %v1496, %v2282
        %v2441 = vadd.f32 %v1497, %v2287
        %v2442 = vadd.f32 %v1498, %v2292
        %v2443 = vadd.f32 %v1499, %v2297
        %v2444 = vadd.f32 %v1500, %v2302
        %v2445 = vadd.f32 %v1501, %v2307
        %v2446 = vadd.f32 %v1502, %v2312
        %v2447 = vadd.f32 %v1503, %v2317
        %v2448 = vadd.f32 %v1504, %v2322
        %v2449 = vadd.f32 %v1505, %v2327
        %v2450 = vadd.f32 %v1506, %v2332
        %v2451 = vadd.f32 %v1507, %v2337
        %v2452 = vadd.f32 %v1508, %v2342
        %v2453 = vadd.f32 %v1509, %v2347
        %v2454 = vadd.f32 %v1510, %v2352
        %v2455 = vadd.f32 %v1511, %v2357
        %v2456 = vadd.f32 %v1512, %v2362
        %v2457 = vadd.f32 %v1513, %v2367
        %v2458 = vadd.f32 %v1514, %v2372
        %v2459 = vadd.f32 %v1515, %v2377
        %v2460 = vadd.f32 %v1516, %v2382
        %v2461 = vadd.f32 %v1517, %v2387
        %v2462 = vadd.f32 %v1518, %v2392
        %v2463 = vadd.f32 %v1519, %v2397
        %s2464 = scalar_lea.vmem %s2, 384
        %v2465 = vld [vmem:[%s2464] sm:$0xff]
        %v2466 = vld [vmem:[%s2464 + $0x8] sm:$0xff]
        %v2467 = vld [vmem:[%s2464 + $0x10] sm:$0xff]
        %v2468 = vld [vmem:[%s2464 + $0x18] sm:$0xff]
        %v2469 = vld [vmem:[%s2464 + $0x20] sm:$0xff]
        %v2470 = vld [vmem:[%s2464 + $0x28] sm:$0xff]
        %v2471 = vld [vmem:[%s2464 + $0x30] sm:$0xff]
        %v2472 = vld [vmem:[%s2464 + $0x38] sm:$0xff]
        %v2473 = vld [vmem:[%s2464 + $0x40] sm:$0xff]
        %v2474 = vld [vmem:[%s2464 + $0x48] sm:$0xff]
        %v2475 = vld [vmem:[%s2464 + $0x50] sm:$0xff]
        %v2476 = vld [vmem:[%s2464 + $0x58] sm:$0xff]
        %v2477 = vld [vmem:[%s2464 + $0x60] sm:$0xff]
        %v2478 = vld [vmem:[%s2464 + $0x68] sm:$0xff]
        %v2479 = vld [vmem:[%s2464 + $0x70] sm:$0xff]
        %v2480 = vld [vmem:[%s2464 + $0x78] sm:$0xff]
        %v2482 = vlaneseq
        %v2483 = vshrl.u32 %v2482, 7
        %v2484 = vsub.s32 0, %v2483
        %v2485 = vrot.slane %v203, %v2484
        %2487 = vmatprep.subr.mxu0 0.0
        %2488 = vmatpush1.msra.mxu0 %v2465
        %2489 = vmatprep.subr.mxu0 0.0
        %2490 = vmatpush1.msra.mxu0 %v2466
        %2491 = vmatprep.subr.mxu0 0.0
        %2492 = vmatpush1.msra.mxu0 %v2467
        %2493 = vmatprep.subr.mxu0 0.0
        %2494 = vmatpush1.msra.mxu0 %v2468
        %2495 = vmatprep.subr.mxu0 0.0
        %2496 = vmatpush1.msra.mxu0 %v2469
        %2497 = vmatprep.subr.mxu0 0.0
        %2498 = vmatpush1.msra.mxu0 %v2470
        %2499 = vmatprep.subr.mxu0 0.0
        %2500 = vmatpush1.msra.mxu0 %v2471
        %2501 = vmatprep.subr.mxu0 0.0
        %2502 = vmatpush1.msra.mxu0 %v2472
        %2503 = vmatprep.subr.mxu0 0.0
        %2504 = vmatpush1.msra.mxu0 %v2473
        %2505 = vmatprep.subr.mxu0 0.0
        %2506 = vmatpush1.msra.mxu0 %v2474
        %2507 = vmatprep.subr.mxu0 0.0
        %2508 = vmatpush1.msra.mxu0 %v2475
        %2509 = vmatprep.subr.mxu0 0.0
        %2510 = vmatpush1.msra.mxu0 %v2476
        %2511 = vmatprep.subr.mxu0 0.0
        %2512 = vmatpush1.msra.mxu0 %v2477
        %2513 = vmatprep.subr.mxu0 0.0
        %2514 = vmatpush1.msra.mxu0 %v2478
        %2515 = vmatprep.subr.mxu0 0.0
        %2516 = vmatpush1.msra.mxu0 %v2479
        %2517 = vmatprep.subr.mxu0 0.0
        %2518 = vmatpush1.msra.mxu0 %v2480
        %2519 = vmatprep.subr.mxu0 0.0
        %2520 = vmatpush1.msra.mxu0 0.0
        %2521 = vmatprep.subr.mxu0 0.0
        %2522 = vmatpush1.msra.mxu0 0.0
        %2523 = vmatprep.subr.mxu0 0.0
        %2524 = vmatpush1.msra.mxu0 0.0
        %2525 = vmatprep.subr.mxu0 0.0
        %2526 = vmatpush1.msra.mxu0 0.0
        %2527 = vmatprep.subr.mxu0 0.0
        %2528 = vmatpush1.msra.mxu0 0.0
        %2529 = vmatprep.subr.mxu0 0.0
        %2530 = vmatpush1.msra.mxu0 0.0
        %2531 = vmatprep.subr.mxu0 0.0
        %2532 = vmatpush1.msra.mxu0 0.0
        %2533 = vmatprep.subr.mxu0 0.0
        %2534 = vmatpush1.msra.mxu0 0.0
        %2535 = vmatprep.subr.mxu0 0.0
        %2536 = vmatpush1.msra.mxu0 0.0
        %2537 = vmatprep.subr.mxu0 0.0
        %2538 = vmatpush1.msra.mxu0 0.0
        %2539 = vmatprep.subr.mxu0 0.0
        %2540 = vmatpush1.msra.mxu0 0.0
        %2541 = vmatprep.subr.mxu0 0.0
        %2542 = vmatpush1.msra.mxu0 0.0
        %2543 = vmatprep.subr.mxu0 0.0
        %2544 = vmatpush1.msra.mxu0 0.0
        %2545 = vmatprep.subr.mxu0 0.0
        %2546 = vmatpush1.msra.mxu0 0.0
        %2547 = vmatprep.subr.mxu0 0.0
        %2548 = vmatpush1.msra.mxu0 0.0
        %2549 = vmatprep.subr.mxu0 0.0
        %2550 = vmatpush1.msra.mxu0 0.0
        %2551 = vmatprep.mubr.f32.mxu0 0.0
        %2552 = vmatmul.mubr.f32.gmra.mrb[0].mxu0 %v2400
        %v2553 = vpop.f32.mrb[0].mxu0
        %v2554 = vadd.f32 %v2485, %v2553
        %v2555 = vpop.f32.mrb[0].mxu0
        %2556 = vmatprep.mubr.f32.mxu0 0.0
        %2557 = vmatmul.mubr.f32.gmra.mrb[0].mxu0 %v2401
        %v2558 = vpop.f32.mrb[0].mxu0
        %v2559 = vadd.f32 %v2485, %v2558
        %v2560 = vpop.f32.mrb[0].mxu0
        %2561 = vmatprep.mubr.f32.mxu0 0.0
        %2562 = vmatmul.mubr.f32.gmra.mrb[0].mxu0 %v2402
        %v2563 = vpop.f32.mrb[0].mxu0
        %v2564 = vadd.f32 %v2485, %v2563
        %v2565 = vpop.f32.mrb[0].mxu0
        %2566 = vmatprep.mubr.f32.mxu0 0.0
        %2567 = vmatmul.mubr.f32.gmra.mrb[0].mxu0 %v2403
        %v2568 = vpop.f32.mrb[0].mxu0
        %v2569 = vadd.f32 %v2485, %v2568
        %v2570 = vpop.f32.mrb[0].mxu0
        %2571 = vmatprep.mubr.f32.mxu0 0.0
        %2572 = vmatmul.mubr.f32.gmra.mrb[0].mxu0 %v2404
        %v2573 = vpop.f32.mrb[0].mxu0
        %v2574 = vadd.f32 %v2485, %v2573
        %v2575 = vpop.f32.mrb[0].mxu0
        %2576 = vmatprep.mubr.f32.mxu0 0.0
        %2577 = vmatmul.mubr.f32.gmra.mrb[0].mxu0 %v2405
        %v2578 = vpop.f32.mrb[0].mxu0
        %v2579 = vadd.f32 %v2485, %v2578
        %v2580 = vpop.f32.mrb[0].mxu0
        %2581 = vmatprep.mubr.f32.mxu0 0.0
        %2582 = vmatmul.mubr.f32.gmra.mrb[0].mxu0 %v2406
        %v2583 = vpop.f32.mrb[0].mxu0
        %v2584 = vadd.f32 %v2485, %v2583
        %v2585 = vpop.f32.mrb[0].mxu0
        %2586 = vmatprep.mubr.f32.mxu0 0.0
        %2587 = vmatmul.mubr.f32.gmra.mrb[0].mxu0 %v2407
        %v2588 = vpop.f32.mrb[0].mxu0
        %v2589 = vadd.f32 %v2485, %v2588
        %v2590 = vpop.f32.mrb[0].mxu0
        %2591 = vmatprep.mubr.f32.mxu0 0.0
        %2592 = vmatmul.mubr.f32.gmra.mrb[0].mxu0 %v2408
        %v2593 = vpop.f32.mrb[0].mxu0
        %v2594 = vadd.f32 %v2485, %v2593
        %v2595 = vpop.f32.mrb[0].mxu0
        %2596 = vmatprep.mubr.f32.mxu0 0.0
        %2597 = vmatmul.mubr.f32.gmra.mrb[0].mxu0 %v2409
        %v2598 = vpop.f32.mrb[0].mxu0
        %v2599 = vadd.f32 %v2485, %v2598
        %v2600 = vpop.f32.mrb[0].mxu0
        %2601 = vmatprep.mubr.f32.mxu0 0.0
        %2602 = vmatmul.mubr.f32.gmra.mrb[0].mxu0 %v2410
        %v2603 = vpop.f32.mrb[0].mxu0
        %v2604 = vadd.f32 %v2485, %v2603
        %v2605 = vpop.f32.mrb[0].mxu0
        %2606 = vmatprep.mubr.f32.mxu0 0.0
        %2607 = vmatmul.mubr.f32.gmra.mrb[0].mxu0 %v2411
        %v2608 = vpop.f32.mrb[0].mxu0
        %v2609 = vadd.f32 %v2485, %v2608
        %v2610 = vpop.f32.mrb[0].mxu0
        %2611 = vmatprep.mubr.f32.mxu0 0.0
        %2612 = vmatmul.mubr.f32.gmra.mrb[0].mxu0 %v2412
        %v2613 = vpop.f32.mrb[0].mxu0
        %v2614 = vadd.f32 %v2485, %v2613
        %v2615 = vpop.f32.mrb[0].mxu0
        %2616 = vmatprep.mubr.f32.mxu0 0.0
        %2617 = vmatmul.mubr.f32.gmra.mrb[0].mxu0 %v2413
        %v2618 = vpop.f32.mrb[0].mxu0
        %v2619 = vadd.f32 %v2485, %v2618
        %v2620 = vpop.f32.mrb[0].mxu0
        %2621 = vmatprep.mubr.f32.mxu0 0.0
        %2622 = vmatmul.mubr.f32.gmra.mrb[0].mxu0 %v2414
        %v2623 = vpop.f32.mrb[0].mxu0
        %v2624 = vadd.f32 %v2485, %v2623
        %v2625 = vpop.f32.mrb[0].mxu0
        %2626 = vmatprep.mubr.f32.mxu0 0.0
        %2627 = vmatmul.mubr.f32.gmra.mrb[0].mxu0 %v2415
        %v2628 = vpop.f32.mrb[0].mxu0
        %v2629 = vadd.f32 %v2485, %v2628
        %v2630 = vpop.f32.mrb[0].mxu0
        %2631 = vmatprep.mubr.f32.mxu0 0.0
        %2632 = vmatmul.mubr.f32.gmra.mrb[0].mxu0 %v2416
        %v2633 = vpop.f32.mrb[0].mxu0
        %v2634 = vadd.f32 %v2485, %v2633
        %v2635 = vpop.f32.mrb[0].mxu0
        %2636 = vmatprep.mubr.f32.mxu0 0.0
        %2637 = vmatmul.mubr.f32.gmra.mrb[0].mxu0 %v2417
        %v2638 = vpop.f32.mrb[0].mxu0
        %v2639 = vadd.f32 %v2485, %v2638
        %v2640 = vpop.f32.mrb[0].mxu0
        %2641 = vmatprep.mubr.f32.mxu0 0.0
        %2642 = vmatmul.mubr.f32.gmra.mrb[0].mxu0 %v2418
        %v2643 = vpop.f32.mrb[0].mxu0
        %v2644 = vadd.f32 %v2485, %v2643
        %v2645 = vpop.f32.mrb[0].mxu0
        %2646 = vmatprep.mubr.f32.mxu0 0.0
        %2647 = vmatmul.mubr.f32.gmra.mrb[0].mxu0 %v2419
        %v2648 = vpop.f32.mrb[0].mxu0
        %v2649 = vadd.f32 %v2485, %v2648
        %v2650 = vpop.f32.mrb[0].mxu0
        %2651 = vmatprep.mubr.f32.mxu0 0.0
        %2652 = vmatmul.mubr.f32.gmra.mrb[0].mxu0 %v2420
        %v2653 = vpop.f32.mrb[0].mxu0
        %v2654 = vadd.f32 %v2485, %v2653
        %v2655 = vpop.f32.mrb[0].mxu0
        %2656 = vmatprep.mubr.f32.mxu0 0.0
        %2657 = vmatmul.mubr.f32.gmra.mrb[0].mxu0 %v2421
        %v2658 = vpop.f32.mrb[0].mxu0
        %v2659 = vadd.f32 %v2485, %v2658
        %v2660 = vpop.f32.mrb[0].mxu0
        %2661 = vmatprep.mubr.f32.mxu0 0.0
        %2662 = vmatmul.mubr.f32.gmra.mrb[0].mxu0 %v2422
        %v2663 = vpop.f32.mrb[0].mxu0
        %v2664 = vadd.f32 %v2485, %v2663
        %v2665 = vpop.f32.mrb[0].mxu0
        %2666 = vmatprep.mubr.f32.mxu0 0.0
        %2667 = vmatmul.mubr.f32.gmra.mrb[0].mxu0 %v2423
        %v2668 = vpop.f32.mrb[0].mxu0
        %v2669 = vadd.f32 %v2485, %v2668
        %v2670 = vpop.f32.mrb[0].mxu0
        %2671 = vmatprep.mubr.f32.mxu0 0.0
        %2672 = vmatmul.mubr.f32.gmra.mrb[0].mxu0 %v2424
        %v2673 = vpop.f32.mrb[0].mxu0
        %v2674 = vadd.f32 %v2485, %v2673
        %v2675 = vpop.f32.mrb[0].mxu0
        %2676 = vmatprep.mubr.f32.mxu0 0.0
        %2677 = vmatmul.mubr.f32.gmra.mrb[0].mxu0 %v2425
        %v2678 = vpop.f32.mrb[0].mxu0
        %v2679 = vadd.f32 %v2485, %v2678
        %v2680 = vpop.f32.mrb[0].mxu0
        %2681 = vmatprep.mubr.f32.mxu0 0.0
        %2682 = vmatmul.mubr.f32.gmra.mrb[0].mxu0 %v2426
        %v2683 = vpop.f32.mrb[0].mxu0
        %v2684 = vadd.f32 %v2485, %v2683
        %v2685 = vpop.f32.mrb[0].mxu0
        %2686 = vmatprep.mubr.f32.mxu0 0.0
        %2687 = vmatmul.mubr.f32.gmra.mrb[0].mxu0 %v2427
        %v2688 = vpop.f32.mrb[0].mxu0
        %v2689 = vadd.f32 %v2485, %v2688
        %v2690 = vpop.f32.mrb[0].mxu0
        %2691 = vmatprep.mubr.f32.mxu0 0.0
        %2692 = vmatmul.mubr.f32.gmra.mrb[0].mxu0 %v2428
        %v2693 = vpop.f32.mrb[0].mxu0
        %v2694 = vadd.f32 %v2485, %v2693
        %v2695 = vpop.f32.mrb[0].mxu0
        %2696 = vmatprep.mubr.f32.mxu0 0.0
        %2697 = vmatmul.mubr.f32.gmra.mrb[0].mxu0 %v2429
        %v2698 = vpop.f32.mrb[0].mxu0
        %v2699 = vadd.f32 %v2485, %v2698
        %v2700 = vpop.f32.mrb[0].mxu0
        %2701 = vmatprep.mubr.f32.mxu0 0.0
        %2702 = vmatmul.mubr.f32.gmra.mrb[0].mxu0 %v2430
        %v2703 = vpop.f32.mrb[0].mxu0
        %v2704 = vadd.f32 %v2485, %v2703
        %v2705 = vpop.f32.mrb[0].mxu0
        %2706 = vmatprep.mubr.f32.mxu0 0.0
        %2707 = vmatmul.mubr.f32.gmra.mrb[0].mxu0 %v2431
        %v2708 = vpop.f32.mrb[0].mxu0
        %v2709 = vadd.f32 %v2485, %v2708
        %v2710 = vpop.f32.mrb[0].mxu0
        %2711 = vmatprep.mubr.f32.mxu0 0.0
        %2712 = vmatmul.mubr.f32.gmra.mrb[0].mxu0 %v2432
        %v2713 = vpop.f32.mrb[0].mxu0
        %v2714 = vadd.f32 %v2485, %v2713
        %v2715 = vpop.f32.mrb[0].mxu0
        %2716 = vmatprep.mubr.f32.mxu0 0.0
        %2717 = vmatmul.mubr.f32.gmra.mrb[0].mxu0 %v2433
        %v2718 = vpop.f32.mrb[0].mxu0
        %v2719 = vadd.f32 %v2485, %v2718
        %v2720 = vpop.f32.mrb[0].mxu0
        %2721 = vmatprep.mubr.f32.mxu0 0.0
        %2722 = vmatmul.mubr.f32.gmra.mrb[0].mxu0 %v2434
        %v2723 = vpop.f32.mrb[0].mxu0
        %v2724 = vadd.f32 %v2485, %v2723
        %v2725 = vpop.f32.mrb[0].mxu0
        %2726 = vmatprep.mubr.f32.mxu0 0.0
        %2727 = vmatmul.mubr.f32.gmra.mrb[0].mxu0 %v2435
        %v2728 = vpop.f32.mrb[0].mxu0
        %v2729 = vadd.f32 %v2485, %v2728
        %v2730 = vpop.f32.mrb[0].mxu0
        %2731 = vmatprep.mubr.f32.mxu0 0.0
        %2732 = vmatmul.mubr.f32.gmra.mrb[0].mxu0 %v2436
        %v2733 = vpop.f32.mrb[0].mxu0
        %v2734 = vadd.f32 %v2485, %v2733
        %v2735 = vpop.f32.mrb[0].mxu0
        %2736 = vmatprep.mubr.f32.mxu0 0.0
        %2737 = vmatmul.mubr.f32.gmra.mrb[0].mxu0 %v2437
        %v2738 = vpop.f32.mrb[0].mxu0
        %v2739 = vadd.f32 %v2485, %v2738
        %v2740 = vpop.f32.mrb[0].mxu0
        %2741 = vmatprep.mubr.f32.mxu0 0.0
        %2742 = vmatmul.mubr.f32.gmra.mrb[0].mxu0 %v2438
        %v2743 = vpop.f32.mrb[0].mxu0
        %v2744 = vadd.f32 %v2485, %v2743
        %v2745 = vpop.f32.mrb[0].mxu0
        %2746 = vmatprep.mubr.f32.mxu0 0.0
        %2747 = vmatmul.mubr.f32.gmra.mrb[0].mxu0 %v2439
        %v2748 = vpop.f32.mrb[0].mxu0
        %v2749 = vadd.f32 %v2485, %v2748
        %v2750 = vpop.f32.mrb[0].mxu0
        %2751 = vmatprep.mubr.f32.mxu0 0.0
        %2752 = vmatmul.mubr.f32.gmra.mrb[0].mxu0 %v2440
        %v2753 = vpop.f32.mrb[0].mxu0
        %v2754 = vadd.f32 %v2485, %v2753
        %v2755 = vpop.f32.mrb[0].mxu0
        %2756 = vmatprep.mubr.f32.mxu0 0.0
        %2757 = vmatmul.mubr.f32.gmra.mrb[0].mxu0 %v2441
        %v2758 = vpop.f32.mrb[0].mxu0
        %v2759 = vadd.f32 %v2485, %v2758
        %v2760 = vpop.f32.mrb[0].mxu0
        %2761 = vmatprep.mubr.f32.mxu0 0.0
        %2762 = vmatmul.mubr.f32.gmra.mrb[0].mxu0 %v2442
        %v2763 = vpop.f32.mrb[0].mxu0
        %v2764 = vadd.f32 %v2485, %v2763
        %v2765 = vpop.f32.mrb[0].mxu0
        %2766 = vmatprep.mubr.f32.mxu0 0.0
        %2767 = vmatmul.mubr.f32.gmra.mrb[0].mxu0 %v2443
        %v2768 = vpop.f32.mrb[0].mxu0
        %v2769 = vadd.f32 %v2485, %v2768
        %v2770 = vpop.f32.mrb[0].mxu0
        %2771 = vmatprep.mubr.f32.mxu0 0.0
        %2772 = vmatmul.mubr.f32.gmra.mrb[0].mxu0 %v2444
        %v2773 = vpop.f32.mrb[0].mxu0
        %v2774 = vadd.f32 %v2485, %v2773
        %v2775 = vpop.f32.mrb[0].mxu0
        %2776 = vmatprep.mubr.f32.mxu0 0.0
        %2777 = vmatmul.mubr.f32.gmra.mrb[0].mxu0 %v2445
        %v2778 = vpop.f32.mrb[0].mxu0
        %v2779 = vadd.f32 %v2485, %v2778
        %v2780 = vpop.f32.mrb[0].mxu0
        %2781 = vmatprep.mubr.f32.mxu0 0.0
        %2782 = vmatmul.mubr.f32.gmra.mrb[0].mxu0 %v2446
        %v2783 = vpop.f32.mrb[0].mxu0
        %v2784 = vadd.f32 %v2485, %v2783
        %v2785 = vpop.f32.mrb[0].mxu0
        %2786 = vmatprep.mubr.f32.mxu0 0.0
        %2787 = vmatmul.mubr.f32.gmra.mrb[0].mxu0 %v2447
        %v2788 = vpop.f32.mrb[0].mxu0
        %v2789 = vadd.f32 %v2485, %v2788
        %v2790 = vpop.f32.mrb[0].mxu0
        %2791 = vmatprep.mubr.f32.mxu0 0.0
        %2792 = vmatmul.mubr.f32.gmra.mrb[0].mxu0 %v2448
        %v2793 = vpop.f32.mrb[0].mxu0
        %v2794 = vadd.f32 %v2485, %v2793
        %v2795 = vpop.f32.mrb[0].mxu0
        %2796 = vmatprep.mubr.f32.mxu0 0.0
        %2797 = vmatmul.mubr.f32.gmra.mrb[0].mxu0 %v2449
        %v2798 = vpop.f32.mrb[0].mxu0
        %v2799 = vadd.f32 %v2485, %v2798
        %v2800 = vpop.f32.mrb[0].mxu0
        %2801 = vmatprep.mubr.f32.mxu0 0.0
        %2802 = vmatmul.mubr.f32.gmra.mrb[0].mxu0 %v2450
        %v2803 = vpop.f32.mrb[0].mxu0
        %v2804 = vadd.f32 %v2485, %v2803
        %v2805 = vpop.f32.mrb[0].mxu0
        %2806 = vmatprep.mubr.f32.mxu0 0.0
        %2807 = vmatmul.mubr.f32.gmra.mrb[0].mxu0 %v2451
        %v2808 = vpop.f32.mrb[0].mxu0
        %v2809 = vadd.f32 %v2485, %v2808
        %v2810 = vpop.f32.mrb[0].mxu0
        %2811 = vmatprep.mubr.f32.mxu0 0.0
        %2812 = vmatmul.mubr.f32.gmra.mrb[0].mxu0 %v2452
        %v2813 = vpop.f32.mrb[0].mxu0
        %v2814 = vadd.f32 %v2485, %v2813
        %v2815 = vpop.f32.mrb[0].mxu0
        %2816 = vmatprep.mubr.f32.mxu0 0.0
        %2817 = vmatmul.mubr.f32.gmra.mrb[0].mxu0 %v2453
        %v2818 = vpop.f32.mrb[0].mxu0
        %v2819 = vadd.f32 %v2485, %v2818
        %v2820 = vpop.f32.mrb[0].mxu0
        %2821 = vmatprep.mubr.f32.mxu0 0.0
        %2822 = vmatmul.mubr.f32.gmra.mrb[0].mxu0 %v2454
        %v2823 = vpop.f32.mrb[0].mxu0
        %v2824 = vadd.f32 %v2485, %v2823
        %v2825 = vpop.f32.mrb[0].mxu0
        %2826 = vmatprep.mubr.f32.mxu0 0.0
        %2827 = vmatmul.mubr.f32.gmra.mrb[0].mxu0 %v2455
        %v2828 = vpop.f32.mrb[0].mxu0
        %v2829 = vadd.f32 %v2485, %v2828
        %v2830 = vpop.f32.mrb[0].mxu0
        %2831 = vmatprep.mubr.f32.mxu0 0.0
        %2832 = vmatmul.mubr.f32.gmra.mrb[0].mxu0 %v2456
        %v2833 = vpop.f32.mrb[0].mxu0
        %v2834 = vadd.f32 %v2485, %v2833
        %v2835 = vpop.f32.mrb[0].mxu0
        %2836 = vmatprep.mubr.f32.mxu0 0.0
        %2837 = vmatmul.mubr.f32.gmra.mrb[0].mxu0 %v2457
        %v2838 = vpop.f32.mrb[0].mxu0
        %v2839 = vadd.f32 %v2485, %v2838
        %v2840 = vpop.f32.mrb[0].mxu0
        %2841 = vmatprep.mubr.f32.mxu0 0.0
        %2842 = vmatmul.mubr.f32.gmra.mrb[0].mxu0 %v2458
        %v2843 = vpop.f32.mrb[0].mxu0
        %v2844 = vadd.f32 %v2485, %v2843
        %v2845 = vpop.f32.mrb[0].mxu0
        %2846 = vmatprep.mubr.f32.mxu0 0.0
        %2847 = vmatmul.mubr.f32.gmra.mrb[0].mxu0 %v2459
        %v2848 = vpop.f32.mrb[0].mxu0
        %v2849 = vadd.f32 %v2485, %v2848
        %v2850 = vpop.f32.mrb[0].mxu0
        %2851 = vmatprep.mubr.f32.mxu0 0.0
        %2852 = vmatmul.mubr.f32.gmra.mrb[0].mxu0 %v2460
        %v2853 = vpop.f32.mrb[0].mxu0
        %v2854 = vadd.f32 %v2485, %v2853
        %v2855 = vpop.f32.mrb[0].mxu0
        %2856 = vmatprep.mubr.f32.mxu0 0.0
        %2857 = vmatmul.mubr.f32.gmra.mrb[0].mxu0 %v2461
        %v2858 = vpop.f32.mrb[0].mxu0
        %v2859 = vadd.f32 %v2485, %v2858
        %v2860 = vpop.f32.mrb[0].mxu0
        %2861 = vmatprep.mubr.f32.mxu0 0.0
        %2862 = vmatmul.mubr.f32.gmra.mrb[0].mxu0 %v2462
        %v2863 = vpop.f32.mrb[0].mxu0
        %v2864 = vadd.f32 %v2485, %v2863
        %v2865 = vpop.f32.mrb[0].mxu0
        %2866 = vmatprep.mubr.f32.mxu0 0.0
        %2867 = vmatmul.mubr.f32.gmra.mrb[0].mxu0 %v2463
        %v2868 = vpop.f32.mrb[0].mxu0
        %v2869 = vadd.f32 %v2485, %v2868
        %v2870 = vpop.f32.mrb[0].mxu0
        %2871 = vdwg.mxu0
        %v2872 = vmax.f32 %v2554, 0.0
        %v2873 = vmax.f32 %v2559, 0.0
        %v2874 = vmax.f32 %v2564, 0.0
        %v2875 = vmax.f32 %v2569, 0.0
        %v2876 = vmax.f32 %v2574, 0.0
        %v2877 = vmax.f32 %v2579, 0.0
        %v2878 = vmax.f32 %v2584, 0.0
        %v2879 = vmax.f32 %v2589, 0.0
        %v2880 = vmax.f32 %v2594, 0.0
        %v2881 = vmax.f32 %v2599, 0.0
        %v2882 = vmax.f32 %v2604, 0.0
        %v2883 = vmax.f32 %v2609, 0.0
        %v2884 = vmax.f32 %v2614, 0.0
        %v2885 = vmax.f32 %v2619, 0.0
        %v2886 = vmax.f32 %v2624, 0.0
        %v2887 = vmax.f32 %v2629, 0.0
        %v2888 = vmax.f32 %v2634, 0.0
        %v2889 = vmax.f32 %v2639, 0.0
        %v2890 = vmax.f32 %v2644, 0.0
        %v2891 = vmax.f32 %v2649, 0.0
        %v2892 = vmax.f32 %v2654, 0.0
        %v2893 = vmax.f32 %v2659, 0.0
        %v2894 = vmax.f32 %v2664, 0.0
        %v2895 = vmax.f32 %v2669, 0.0
        %v2896 = vmax.f32 %v2674, 0.0
        %v2897 = vmax.f32 %v2679, 0.0
        %v2898 = vmax.f32 %v2684, 0.0
        %v2899 = vmax.f32 %v2689, 0.0
        %v2900 = vmax.f32 %v2694, 0.0
        %v2901 = vmax.f32 %v2699, 0.0
        %v2902 = vmax.f32 %v2704, 0.0
        %v2903 = vmax.f32 %v2709, 0.0
        %v2904 = vmax.f32 %v2714, 0.0
        %v2905 = vmax.f32 %v2719, 0.0
        %v2906 = vmax.f32 %v2724, 0.0
        %v2907 = vmax.f32 %v2729, 0.0
        %v2908 = vmax.f32 %v2734, 0.0
        %v2909 = vmax.f32 %v2739, 0.0
        %v2910 = vmax.f32 %v2744, 0.0
        %v2911 = vmax.f32 %v2749, 0.0
        %v2912 = vmax.f32 %v2754, 0.0
        %v2913 = vmax.f32 %v2759, 0.0
        %v2914 = vmax.f32 %v2764, 0.0
        %v2915 = vmax.f32 %v2769, 0.0
        %v2916 = vmax.f32 %v2774, 0.0
        %v2917 = vmax.f32 %v2779, 0.0
        %v2918 = vmax.f32 %v2784, 0.0
        %v2919 = vmax.f32 %v2789, 0.0
        %v2920 = vmax.f32 %v2794, 0.0
        %v2921 = vmax.f32 %v2799, 0.0
        %v2922 = vmax.f32 %v2804, 0.0
        %v2923 = vmax.f32 %v2809, 0.0
        %v2924 = vmax.f32 %v2814, 0.0
        %v2925 = vmax.f32 %v2819, 0.0
        %v2926 = vmax.f32 %v2824, 0.0
        %v2927 = vmax.f32 %v2829, 0.0
        %v2928 = vmax.f32 %v2834, 0.0
        %v2929 = vmax.f32 %v2839, 0.0
        %v2930 = vmax.f32 %v2844, 0.0
        %v2931 = vmax.f32 %v2849, 0.0
        %v2932 = vmax.f32 %v2854, 0.0
        %v2933 = vmax.f32 %v2859, 0.0
        %v2934 = vmax.f32 %v2864, 0.0
        %v2935 = vmax.f32 %v2869, 0.0
        %s2936 = scalar_lea.vmem %s2, 512
        %v2937 = vld [vmem:[%s2936] sm:$0xff]
        %v2938 = vld [vmem:[%s2936 + $0x8] sm:$0xff]
        %v2939 = vld [vmem:[%s2936 + $0x10] sm:$0xff]
        %v2940 = vld [vmem:[%s2936 + $0x18] sm:$0xff]
        %v2941 = vld [vmem:[%s2936 + $0x20] sm:$0xff]
        %v2942 = vld [vmem:[%s2936 + $0x28] sm:$0xff]
        %v2943 = vld [vmem:[%s2936 + $0x30] sm:$0xff]
        %v2944 = vld [vmem:[%s2936 + $0x38] sm:$0xff]
        %v2945 = vld [vmem:[%s2936 + $0x40] sm:$0xff]
        %v2946 = vld [vmem:[%s2936 + $0x48] sm:$0xff]
        %v2947 = vld [vmem:[%s2936 + $0x50] sm:$0xff]
        %v2948 = vld [vmem:[%s2936 + $0x58] sm:$0xff]
        %v2949 = vld [vmem:[%s2936 + $0x60] sm:$0xff]
        %v2950 = vld [vmem:[%s2936 + $0x68] sm:$0xff]
        %v2951 = vld [vmem:[%s2936 + $0x70] sm:$0xff]
        %v2952 = vld [vmem:[%s2936 + $0x78] sm:$0xff]
        %v2954 = vlaneseq
        %v2955 = vshrl.u32 %v2954, 7
        %v2956 = vsub.s32 0, %v2955
        %v2957 = vrot.slane %v204, %v2956
        %2959 = vmatprep.subr.mxu0 0.0
        %2960 = vmatpush1.msra.mxu0 %v2937
        %2961 = vmatprep.subr.mxu0 0.0
        %2962 = vmatpush1.msra.mxu0 %v2938
        %2963 = vmatprep.subr.mxu0 0.0
        %2964 = vmatpush1.msra.mxu0 %v2939
        %2965 = vmatprep.subr.mxu0 0.0
        %2966 = vmatpush1.msra.mxu0 %v2940
        %2967 = vmatprep.subr.mxu0 0.0
        %2968 = vmatpush1.msra.mxu0 %v2941
        %2969 = vmatprep.subr.mxu0 0.0
        %2970 = vmatpush1.msra.mxu0 %v2942
        %2971 = vmatprep.subr.mxu0 0.0
        %2972 = vmatpush1.msra.mxu0 %v2943
        %2973 = vmatprep.subr.mxu0 0.0
        %2974 = vmatpush1.msra.mxu0 %v2944
        %2975 = vmatprep.subr.mxu0 0.0
        %2976 = vmatpush1.msra.mxu0 %v2945
        %2977 = vmatprep.subr.mxu0 0.0
        %2978 = vmatpush1.msra.mxu0 %v2946
        %2979 = vmatprep.subr.mxu0 0.0
        %2980 = vmatpush1.msra.mxu0 %v2947
        %2981 = vmatprep.subr.mxu0 0.0
        %2982 = vmatpush1.msra.mxu0 %v2948
        %2983 = vmatprep.subr.mxu0 0.0
        %2984 = vmatpush1.msra.mxu0 %v2949
        %2985 = vmatprep.subr.mxu0 0.0
        %2986 = vmatpush1.msra.mxu0 %v2950
        %2987 = vmatprep.subr.mxu0 0.0
        %2988 = vmatpush1.msra.mxu0 %v2951
        %2989 = vmatprep.subr.mxu0 0.0
        %2990 = vmatpush1.msra.mxu0 %v2952
        %2991 = vmatprep.subr.mxu0 0.0
        %2992 = vmatpush1.msra.mxu0 0.0
        %2993 = vmatprep.subr.mxu0 0.0
        %2994 = vmatpush1.msra.mxu0 0.0
        %2995 = vmatprep.subr.mxu0 0.0
        %2996 = vmatpush1.msra.mxu0 0.0
        %2997 = vmatprep.subr.mxu0 0.0
        %2998 = vmatpush1.msra.mxu0 0.0
        %2999 = vmatprep.subr.mxu0 0.0
        %3000 = vmatpush1.msra.mxu0 0.0
        %3001 = vmatprep.subr.mxu0 0.0
        %3002 = vmatpush1.msra.mxu0 0.0
        %3003 = vmatprep.subr.mxu0 0.0
        %3004 = vmatpush1.msra.mxu0 0.0
        %3005 = vmatprep.subr.mxu0 0.0
        %3006 = vmatpush1.msra.mxu0 0.0
        %3007 = vmatprep.subr.mxu0 0.0
        %3008 = vmatpush1.msra.mxu0 0.0
        %3009 = vmatprep.subr.mxu0 0.0
        %3010 = vmatpush1.msra.mxu0 0.0
        %3011 = vmatprep.subr.mxu0 0.0
        %3012 = vmatpush1.msra.mxu0 0.0
        %3013 = vmatprep.subr.mxu0 0.0
        %3014 = vmatpush1.msra.mxu0 0.0
        %3015 = vmatprep.subr.mxu0 0.0
        %3016 = vmatpush1.msra.mxu0 0.0
        %3017 = vmatprep.subr.mxu0 0.0
        %3018 = vmatpush1.msra.mxu0 0.0
        %3019 = vmatprep.subr.mxu0 0.0
        %3020 = vmatpush1.msra.mxu0 0.0
        %3021 = vmatprep.subr.mxu0 0.0
        %3022 = vmatpush1.msra.mxu0 0.0
        %3023 = vmatprep.mubr.f32.mxu0 0.0
        %3024 = vmatmul.mubr.f32.gmra.mrb[0].mxu0 %v2872
        %v3025 = vpop.f32.mrb[0].mxu0
        %v3026 = vadd.f32 %v2957, %v3025
        %v3027 = vpop.f32.mrb[0].mxu0
        %3028 = vmatprep.mubr.f32.mxu0 0.0
        %3029 = vmatmul.mubr.f32.gmra.mrb[0].mxu0 %v2873
        %v3030 = vpop.f32.mrb[0].mxu0
        %v3031 = vadd.f32 %v2957, %v3030
        %v3032 = vpop.f32.mrb[0].mxu0
        %3033 = vmatprep.mubr.f32.mxu0 0.0
        %3034 = vmatmul.mubr.f32.gmra.mrb[0].mxu0 %v2874
        %v3035 = vpop.f32.mrb[0].mxu0
        %v3036 = vadd.f32 %v2957, %v3035
        %v3037 = vpop.f32.mrb[0].mxu0
        %3038 = vmatprep.mubr.f32.mxu0 0.0
        %3039 = vmatmul.mubr.f32.gmra.mrb[0].mxu0 %v2875
        %v3040 = vpop.f32.mrb[0].mxu0
        %v3041 = vadd.f32 %v2957, %v3040
        %v3042 = vpop.f32.mrb[0].mxu0
        %3043 = vmatprep.mubr.f32.mxu0 0.0
        %3044 = vmatmul.mubr.f32.gmra.mrb[0].mxu0 %v2876
        %v3045 = vpop.f32.mrb[0].mxu0
        %v3046 = vadd.f32 %v2957, %v3045
        %v3047 = vpop.f32.mrb[0].mxu0
        %3048 = vmatprep.mubr.f32.mxu0 0.0
        %3049 = vmatmul.mubr.f32.gmra.mrb[0].mxu0 %v2877
        %v3050 = vpop.f32.mrb[0].mxu0
        %v3051 = vadd.f32 %v2957, %v3050
        %v3052 = vpop.f32.mrb[0].mxu0
        %3053 = vmatprep.mubr.f32.mxu0 0.0
        %3054 = vmatmul.mubr.f32.gmra.mrb[0].mxu0 %v2878
        %v3055 = vpop.f32.mrb[0].mxu0
        %v3056 = vadd.f32 %v2957, %v3055
        %v3057 = vpop.f32.mrb[0].mxu0
        %3058 = vmatprep.mubr.f32.mxu0 0.0
        %3059 = vmatmul.mubr.f32.gmra.mrb[0].mxu0 %v2879
        %v3060 = vpop.f32.mrb[0].mxu0
        %v3061 = vadd.f32 %v2957, %v3060
        %v3062 = vpop.f32.mrb[0].mxu0
        %3063 = vmatprep.mubr.f32.mxu0 0.0
        %3064 = vmatmul.mubr.f32.gmra.mrb[0].mxu0 %v2880
        %v3065 = vpop.f32.mrb[0].mxu0
        %v3066 = vadd.f32 %v2957, %v3065
        %v3067 = vpop.f32.mrb[0].mxu0
        %3068 = vmatprep.mubr.f32.mxu0 0.0
        %3069 = vmatmul.mubr.f32.gmra.mrb[0].mxu0 %v2881
        %v3070 = vpop.f32.mrb[0].mxu0
        %v3071 = vadd.f32 %v2957, %v3070
        %v3072 = vpop.f32.mrb[0].mxu0
        %3073 = vmatprep.mubr.f32.mxu0 0.0
        %3074 = vmatmul.mubr.f32.gmra.mrb[0].mxu0 %v2882
        %v3075 = vpop.f32.mrb[0].mxu0
        %v3076 = vadd.f32 %v2957, %v3075
        %v3077 = vpop.f32.mrb[0].mxu0
        %3078 = vmatprep.mubr.f32.mxu0 0.0
        %3079 = vmatmul.mubr.f32.gmra.mrb[0].mxu0 %v2883
        %v3080 = vpop.f32.mrb[0].mxu0
        %v3081 = vadd.f32 %v2957, %v3080
        %v3082 = vpop.f32.mrb[0].mxu0
        %3083 = vmatprep.mubr.f32.mxu0 0.0
        %3084 = vmatmul.mubr.f32.gmra.mrb[0].mxu0 %v2884
        %v3085 = vpop.f32.mrb[0].mxu0
        %v3086 = vadd.f32 %v2957, %v3085
        %v3087 = vpop.f32.mrb[0].mxu0
        %3088 = vmatprep.mubr.f32.mxu0 0.0
        %3089 = vmatmul.mubr.f32.gmra.mrb[0].mxu0 %v2885
        %v3090 = vpop.f32.mrb[0].mxu0
        %v3091 = vadd.f32 %v2957, %v3090
        %v3092 = vpop.f32.mrb[0].mxu0
        %3093 = vmatprep.mubr.f32.mxu0 0.0
        %3094 = vmatmul.mubr.f32.gmra.mrb[0].mxu0 %v2886
        %v3095 = vpop.f32.mrb[0].mxu0
        %v3096 = vadd.f32 %v2957, %v3095
        %v3097 = vpop.f32.mrb[0].mxu0
        %3098 = vmatprep.mubr.f32.mxu0 0.0
        %3099 = vmatmul.mubr.f32.gmra.mrb[0].mxu0 %v2887
        %v3100 = vpop.f32.mrb[0].mxu0
        %v3101 = vadd.f32 %v2957, %v3100
        %v3102 = vpop.f32.mrb[0].mxu0
        %3103 = vmatprep.mubr.f32.mxu0 0.0
        %3104 = vmatmul.mubr.f32.gmra.mrb[0].mxu0 %v2888
        %v3105 = vpop.f32.mrb[0].mxu0
        %v3106 = vadd.f32 %v2957, %v3105
        %v3107 = vpop.f32.mrb[0].mxu0
        %3108 = vmatprep.mubr.f32.mxu0 0.0
        %3109 = vmatmul.mubr.f32.gmra.mrb[0].mxu0 %v2889
        %v3110 = vpop.f32.mrb[0].mxu0
        %v3111 = vadd.f32 %v2957, %v3110
        %v3112 = vpop.f32.mrb[0].mxu0
        %3113 = vmatprep.mubr.f32.mxu0 0.0
        %3114 = vmatmul.mubr.f32.gmra.mrb[0].mxu0 %v2890
        %v3115 = vpop.f32.mrb[0].mxu0
        %v3116 = vadd.f32 %v2957, %v3115
        %v3117 = vpop.f32.mrb[0].mxu0
        %3118 = vmatprep.mubr.f32.mxu0 0.0
        %3119 = vmatmul.mubr.f32.gmra.mrb[0].mxu0 %v2891
        %v3120 = vpop.f32.mrb[0].mxu0
        %v3121 = vadd.f32 %v2957, %v3120
        %v3122 = vpop.f32.mrb[0].mxu0
        %3123 = vmatprep.mubr.f32.mxu0 0.0
        %3124 = vmatmul.mubr.f32.gmra.mrb[0].mxu0 %v2892
        %v3125 = vpop.f32.mrb[0].mxu0
        %v3126 = vadd.f32 %v2957, %v3125
        %v3127 = vpop.f32.mrb[0].mxu0
        %3128 = vmatprep.mubr.f32.mxu0 0.0
        %3129 = vmatmul.mubr.f32.gmra.mrb[0].mxu0 %v2893
        %v3130 = vpop.f32.mrb[0].mxu0
        %v3131 = vadd.f32 %v2957, %v3130
        %v3132 = vpop.f32.mrb[0].mxu0
        %3133 = vmatprep.mubr.f32.mxu0 0.0
        %3134 = vmatmul.mubr.f32.gmra.mrb[0].mxu0 %v2894
        %v3135 = vpop.f32.mrb[0].mxu0
        %v3136 = vadd.f32 %v2957, %v3135
        %v3137 = vpop.f32.mrb[0].mxu0
        %3138 = vmatprep.mubr.f32.mxu0 0.0
        %3139 = vmatmul.mubr.f32.gmra.mrb[0].mxu0 %v2895
        %v3140 = vpop.f32.mrb[0].mxu0
        %v3141 = vadd.f32 %v2957, %v3140
        %v3142 = vpop.f32.mrb[0].mxu0
        %3143 = vmatprep.mubr.f32.mxu0 0.0
        %3144 = vmatmul.mubr.f32.gmra.mrb[0].mxu0 %v2896
        %v3145 = vpop.f32.mrb[0].mxu0
        %v3146 = vadd.f32 %v2957, %v3145
        %v3147 = vpop.f32.mrb[0].mxu0
        %3148 = vmatprep.mubr.f32.mxu0 0.0
        %3149 = vmatmul.mubr.f32.gmra.mrb[0].mxu0 %v2897
        %v3150 = vpop.f32.mrb[0].mxu0
        %v3151 = vadd.f32 %v2957, %v3150
        %v3152 = vpop.f32.mrb[0].mxu0
        %3153 = vmatprep.mubr.f32.mxu0 0.0
        %3154 = vmatmul.mubr.f32.gmra.mrb[0].mxu0 %v2898
        %v3155 = vpop.f32.mrb[0].mxu0
        %v3156 = vadd.f32 %v2957, %v3155
        %v3157 = vpop.f32.mrb[0].mxu0
        %3158 = vmatprep.mubr.f32.mxu0 0.0
        %3159 = vmatmul.mubr.f32.gmra.mrb[0].mxu0 %v2899
        %v3160 = vpop.f32.mrb[0].mxu0
        %v3161 = vadd.f32 %v2957, %v3160
        %v3162 = vpop.f32.mrb[0].mxu0
        %3163 = vmatprep.mubr.f32.mxu0 0.0
        %3164 = vmatmul.mubr.f32.gmra.mrb[0].mxu0 %v2900
        %v3165 = vpop.f32.mrb[0].mxu0
        %v3166 = vadd.f32 %v2957, %v3165
        %v3167 = vpop.f32.mrb[0].mxu0
        %3168 = vmatprep.mubr.f32.mxu0 0.0
        %3169 = vmatmul.mubr.f32.gmra.mrb[0].mxu0 %v2901
        %v3170 = vpop.f32.mrb[0].mxu0
        %v3171 = vadd.f32 %v2957, %v3170
        %v3172 = vpop.f32.mrb[0].mxu0
        %3173 = vmatprep.mubr.f32.mxu0 0.0
        %3174 = vmatmul.mubr.f32.gmra.mrb[0].mxu0 %v2902
        %v3175 = vpop.f32.mrb[0].mxu0
        %v3176 = vadd.f32 %v2957, %v3175
        %v3177 = vpop.f32.mrb[0].mxu0
        %3178 = vmatprep.mubr.f32.mxu0 0.0
        %3179 = vmatmul.mubr.f32.gmra.mrb[0].mxu0 %v2903
        %v3180 = vpop.f32.mrb[0].mxu0
        %v3181 = vadd.f32 %v2957, %v3180
        %v3182 = vpop.f32.mrb[0].mxu0
        %3183 = vmatprep.mubr.f32.mxu0 0.0
        %3184 = vmatmul.mubr.f32.gmra.mrb[0].mxu0 %v2904
        %v3185 = vpop.f32.mrb[0].mxu0
        %v3186 = vadd.f32 %v2957, %v3185
        %v3187 = vpop.f32.mrb[0].mxu0
        %3188 = vmatprep.mubr.f32.mxu0 0.0
        %3189 = vmatmul.mubr.f32.gmra.mrb[0].mxu0 %v2905
        %v3190 = vpop.f32.mrb[0].mxu0
        %v3191 = vadd.f32 %v2957, %v3190
        %v3192 = vpop.f32.mrb[0].mxu0
        %3193 = vmatprep.mubr.f32.mxu0 0.0
        %3194 = vmatmul.mubr.f32.gmra.mrb[0].mxu0 %v2906
        %v3195 = vpop.f32.mrb[0].mxu0
        %v3196 = vadd.f32 %v2957, %v3195
        %v3197 = vpop.f32.mrb[0].mxu0
        %3198 = vmatprep.mubr.f32.mxu0 0.0
        %3199 = vmatmul.mubr.f32.gmra.mrb[0].mxu0 %v2907
        %v3200 = vpop.f32.mrb[0].mxu0
        %v3201 = vadd.f32 %v2957, %v3200
        %v3202 = vpop.f32.mrb[0].mxu0
        %3203 = vmatprep.mubr.f32.mxu0 0.0
        %3204 = vmatmul.mubr.f32.gmra.mrb[0].mxu0 %v2908
        %v3205 = vpop.f32.mrb[0].mxu0
        %v3206 = vadd.f32 %v2957, %v3205
        %v3207 = vpop.f32.mrb[0].mxu0
        %3208 = vmatprep.mubr.f32.mxu0 0.0
        %3209 = vmatmul.mubr.f32.gmra.mrb[0].mxu0 %v2909
        %v3210 = vpop.f32.mrb[0].mxu0
        %v3211 = vadd.f32 %v2957, %v3210
        %v3212 = vpop.f32.mrb[0].mxu0
        %3213 = vmatprep.mubr.f32.mxu0 0.0
        %3214 = vmatmul.mubr.f32.gmra.mrb[0].mxu0 %v2910
        %v3215 = vpop.f32.mrb[0].mxu0
        %v3216 = vadd.f32 %v2957, %v3215
        %v3217 = vpop.f32.mrb[0].mxu0
        %3218 = vmatprep.mubr.f32.mxu0 0.0
        %3219 = vmatmul.mubr.f32.gmra.mrb[0].mxu0 %v2911
        %v3220 = vpop.f32.mrb[0].mxu0
        %v3221 = vadd.f32 %v2957, %v3220
        %v3222 = vpop.f32.mrb[0].mxu0
        %3223 = vmatprep.mubr.f32.mxu0 0.0
        %3224 = vmatmul.mubr.f32.gmra.mrb[0].mxu0 %v2912
        %v3225 = vpop.f32.mrb[0].mxu0
        %v3226 = vadd.f32 %v2957, %v3225
        %v3227 = vpop.f32.mrb[0].mxu0
        %3228 = vmatprep.mubr.f32.mxu0 0.0
        %3229 = vmatmul.mubr.f32.gmra.mrb[0].mxu0 %v2913
        %v3230 = vpop.f32.mrb[0].mxu0
        %v3231 = vadd.f32 %v2957, %v3230
        %v3232 = vpop.f32.mrb[0].mxu0
        %3233 = vmatprep.mubr.f32.mxu0 0.0
        %3234 = vmatmul.mubr.f32.gmra.mrb[0].mxu0 %v2914
        %v3235 = vpop.f32.mrb[0].mxu0
        %v3236 = vadd.f32 %v2957, %v3235
        %v3237 = vpop.f32.mrb[0].mxu0
        %3238 = vmatprep.mubr.f32.mxu0 0.0
        %3239 = vmatmul.mubr.f32.gmra.mrb[0].mxu0 %v2915
        %v3240 = vpop.f32.mrb[0].mxu0
        %v3241 = vadd.f32 %v2957, %v3240
        %v3242 = vpop.f32.mrb[0].mxu0
        %3243 = vmatprep.mubr.f32.mxu0 0.0
        %3244 = vmatmul.mubr.f32.gmra.mrb[0].mxu0 %v2916
        %v3245 = vpop.f32.mrb[0].mxu0
        %v3246 = vadd.f32 %v2957, %v3245
        %v3247 = vpop.f32.mrb[0].mxu0
        %3248 = vmatprep.mubr.f32.mxu0 0.0
        %3249 = vmatmul.mubr.f32.gmra.mrb[0].mxu0 %v2917
        %v3250 = vpop.f32.mrb[0].mxu0
        %v3251 = vadd.f32 %v2957, %v3250
        %v3252 = vpop.f32.mrb[0].mxu0
        %3253 = vmatprep.mubr.f32.mxu0 0.0
        %3254 = vmatmul.mubr.f32.gmra.mrb[0].mxu0 %v2918
        %v3255 = vpop.f32.mrb[0].mxu0
        %v3256 = vadd.f32 %v2957, %v3255
        %v3257 = vpop.f32.mrb[0].mxu0
        %3258 = vmatprep.mubr.f32.mxu0 0.0
        %3259 = vmatmul.mubr.f32.gmra.mrb[0].mxu0 %v2919
        %v3260 = vpop.f32.mrb[0].mxu0
        %v3261 = vadd.f32 %v2957, %v3260
        %v3262 = vpop.f32.mrb[0].mxu0
        %3263 = vmatprep.mubr.f32.mxu0 0.0
        %3264 = vmatmul.mubr.f32.gmra.mrb[0].mxu0 %v2920
        %v3265 = vpop.f32.mrb[0].mxu0
        %v3266 = vadd.f32 %v2957, %v3265
        %v3267 = vpop.f32.mrb[0].mxu0
        %3268 = vmatprep.mubr.f32.mxu0 0.0
        %3269 = vmatmul.mubr.f32.gmra.mrb[0].mxu0 %v2921
        %v3270 = vpop.f32.mrb[0].mxu0
        %v3271 = vadd.f32 %v2957, %v3270
        %v3272 = vpop.f32.mrb[0].mxu0
        %3273 = vmatprep.mubr.f32.mxu0 0.0
        %3274 = vmatmul.mubr.f32.gmra.mrb[0].mxu0 %v2922
        %v3275 = vpop.f32.mrb[0].mxu0
        %v3276 = vadd.f32 %v2957, %v3275
        %v3277 = vpop.f32.mrb[0].mxu0
        %3278 = vmatprep.mubr.f32.mxu0 0.0
        %3279 = vmatmul.mubr.f32.gmra.mrb[0].mxu0 %v2923
        %v3280 = vpop.f32.mrb[0].mxu0
        %v3281 = vadd.f32 %v2957, %v3280
        %v3282 = vpop.f32.mrb[0].mxu0
        %3283 = vmatprep.mubr.f32.mxu0 0.0
        %3284 = vmatmul.mubr.f32.gmra.mrb[0].mxu0 %v2924
        %v3285 = vpop.f32.mrb[0].mxu0
        %v3286 = vadd.f32 %v2957, %v3285
        %v3287 = vpop.f32.mrb[0].mxu0
        %3288 = vmatprep.mubr.f32.mxu0 0.0
        %3289 = vmatmul.mubr.f32.gmra.mrb[0].mxu0 %v2925
        %v3290 = vpop.f32.mrb[0].mxu0
        %v3291 = vadd.f32 %v2957, %v3290
        %v3292 = vpop.f32.mrb[0].mxu0
        %3293 = vmatprep.mubr.f32.mxu0 0.0
        %3294 = vmatmul.mubr.f32.gmra.mrb[0].mxu0 %v2926
        %v3295 = vpop.f32.mrb[0].mxu0
        %v3296 = vadd.f32 %v2957, %v3295
        %v3297 = vpop.f32.mrb[0].mxu0
        %3298 = vmatprep.mubr.f32.mxu0 0.0
        %3299 = vmatmul.mubr.f32.gmra.mrb[0].mxu0 %v2927
        %v3300 = vpop.f32.mrb[0].mxu0
        %v3301 = vadd.f32 %v2957, %v3300
        %v3302 = vpop.f32.mrb[0].mxu0
        %3303 = vmatprep.mubr.f32.mxu0 0.0
        %3304 = vmatmul.mubr.f32.gmra.mrb[0].mxu0 %v2928
        %v3305 = vpop.f32.mrb[0].mxu0
        %v3306 = vadd.f32 %v2957, %v3305
        %v3307 = vpop.f32.mrb[0].mxu0
        %3308 = vmatprep.mubr.f32.mxu0 0.0
        %3309 = vmatmul.mubr.f32.gmra.mrb[0].mxu0 %v2929
        %v3310 = vpop.f32.mrb[0].mxu0
        %v3311 = vadd.f32 %v2957, %v3310
        %v3312 = vpop.f32.mrb[0].mxu0
        %3313 = vmatprep.mubr.f32.mxu0 0.0
        %3314 = vmatmul.mubr.f32.gmra.mrb[0].mxu0 %v2930
        %v3315 = vpop.f32.mrb[0].mxu0
        %v3316 = vadd.f32 %v2957, %v3315
        %v3317 = vpop.f32.mrb[0].mxu0
        %3318 = vmatprep.mubr.f32.mxu0 0.0
        %3319 = vmatmul.mubr.f32.gmra.mrb[0].mxu0 %v2931
        %v3320 = vpop.f32.mrb[0].mxu0
        %v3321 = vadd.f32 %v2957, %v3320
        %v3322 = vpop.f32.mrb[0].mxu0
        %3323 = vmatprep.mubr.f32.mxu0 0.0
        %3324 = vmatmul.mubr.f32.gmra.mrb[0].mxu0 %v2932
        %v3325 = vpop.f32.mrb[0].mxu0
        %v3326 = vadd.f32 %v2957, %v3325
        %v3327 = vpop.f32.mrb[0].mxu0
        %3328 = vmatprep.mubr.f32.mxu0 0.0
        %3329 = vmatmul.mubr.f32.gmra.mrb[0].mxu0 %v2933
        %v3330 = vpop.f32.mrb[0].mxu0
        %v3331 = vadd.f32 %v2957, %v3330
        %v3332 = vpop.f32.mrb[0].mxu0
        %3333 = vmatprep.mubr.f32.mxu0 0.0
        %3334 = vmatmul.mubr.f32.gmra.mrb[0].mxu0 %v2934
        %v3335 = vpop.f32.mrb[0].mxu0
        %v3336 = vadd.f32 %v2957, %v3335
        %v3337 = vpop.f32.mrb[0].mxu0
        %3338 = vmatprep.mubr.f32.mxu0 0.0
        %3339 = vmatmul.mubr.f32.gmra.mrb[0].mxu0 %v2935
        %v3340 = vpop.f32.mrb[0].mxu0
        %v3341 = vadd.f32 %v2957, %v3340
        %v3342 = vpop.f32.mrb[0].mxu0
        %3343 = vdwg.mxu0
        %v3344 = vadd.f32 %v2400, %v3026
        %v3345 = vadd.f32 %v2401, %v3031
        %v3346 = vadd.f32 %v2402, %v3036
        %v3347 = vadd.f32 %v2403, %v3041
        %v3348 = vadd.f32 %v2404, %v3046
        %v3349 = vadd.f32 %v2405, %v3051
        %v3350 = vadd.f32 %v2406, %v3056
        %v3351 = vadd.f32 %v2407, %v3061
        %v3352 = vadd.f32 %v2408, %v3066
        %v3353 = vadd.f32 %v2409, %v3071
        %v3354 = vadd.f32 %v2410, %v3076
        %v3355 = vadd.f32 %v2411, %v3081
        %v3356 = vadd.f32 %v2412, %v3086
        %v3357 = vadd.f32 %v2413, %v3091
        %v3358 = vadd.f32 %v2414, %v3096
        %v3359 = vadd.f32 %v2415, %v3101
        %v3360 = vadd.f32 %v2416, %v3106
        %v3361 = vadd.f32 %v2417, %v3111
        %v3362 = vadd.f32 %v2418, %v3116
        %v3363 = vadd.f32 %v2419, %v3121
        %v3364 = vadd.f32 %v2420, %v3126
        %v3365 = vadd.f32 %v2421, %v3131
        %v3366 = vadd.f32 %v2422, %v3136
        %v3367 = vadd.f32 %v2423, %v3141
        %v3368 = vadd.f32 %v2424, %v3146
        %v3369 = vadd.f32 %v2425, %v3151
        %v3370 = vadd.f32 %v2426, %v3156
        %v3371 = vadd.f32 %v2427, %v3161
        %v3372 = vadd.f32 %v2428, %v3166
        %v3373 = vadd.f32 %v2429, %v3171
        %v3374 = vadd.f32 %v2430, %v3176
        %v3375 = vadd.f32 %v2431, %v3181
        %v3376 = vadd.f32 %v2432, %v3186
        %v3377 = vadd.f32 %v2433, %v3191
        %v3378 = vadd.f32 %v2434, %v3196
        %v3379 = vadd.f32 %v2435, %v3201
        %v3380 = vadd.f32 %v2436, %v3206
        %v3381 = vadd.f32 %v2437, %v3211
        %v3382 = vadd.f32 %v2438, %v3216
        %v3383 = vadd.f32 %v2439, %v3221
        %v3384 = vadd.f32 %v2440, %v3226
        %v3385 = vadd.f32 %v2441, %v3231
        %v3386 = vadd.f32 %v2442, %v3236
        %v3387 = vadd.f32 %v2443, %v3241
        %v3388 = vadd.f32 %v2444, %v3246
        %v3389 = vadd.f32 %v2445, %v3251
        %v3390 = vadd.f32 %v2446, %v3256
        %v3391 = vadd.f32 %v2447, %v3261
        %v3392 = vadd.f32 %v2448, %v3266
        %v3393 = vadd.f32 %v2449, %v3271
        %v3394 = vadd.f32 %v2450, %v3276
        %v3395 = vadd.f32 %v2451, %v3281
        %v3396 = vadd.f32 %v2452, %v3286
        %v3397 = vadd.f32 %v2453, %v3291
        %v3398 = vadd.f32 %v2454, %v3296
        %v3399 = vadd.f32 %v2455, %v3301
        %v3400 = vadd.f32 %v2456, %v3306
        %v3401 = vadd.f32 %v2457, %v3311
        %v3402 = vadd.f32 %v2458, %v3316
        %v3403 = vadd.f32 %v2459, %v3321
        %v3404 = vadd.f32 %v2460, %v3326
        %v3405 = vadd.f32 %v2461, %v3331
        %v3406 = vadd.f32 %v2462, %v3336
        %v3407 = vadd.f32 %v2463, %v3341
        %s3408 = scalar_lea.vmem %s2, 640
        %v3409 = vld [vmem:[%s3408] sm:$0xff]
        %v3410 = vld [vmem:[%s3408 + $0x8] sm:$0xff]
        %v3411 = vld [vmem:[%s3408 + $0x10] sm:$0xff]
        %v3412 = vld [vmem:[%s3408 + $0x18] sm:$0xff]
        %v3413 = vld [vmem:[%s3408 + $0x20] sm:$0xff]
        %v3414 = vld [vmem:[%s3408 + $0x28] sm:$0xff]
        %v3415 = vld [vmem:[%s3408 + $0x30] sm:$0xff]
        %v3416 = vld [vmem:[%s3408 + $0x38] sm:$0xff]
        %v3417 = vld [vmem:[%s3408 + $0x40] sm:$0xff]
        %v3418 = vld [vmem:[%s3408 + $0x48] sm:$0xff]
        %v3419 = vld [vmem:[%s3408 + $0x50] sm:$0xff]
        %v3420 = vld [vmem:[%s3408 + $0x58] sm:$0xff]
        %v3421 = vld [vmem:[%s3408 + $0x60] sm:$0xff]
        %v3422 = vld [vmem:[%s3408 + $0x68] sm:$0xff]
        %v3423 = vld [vmem:[%s3408 + $0x70] sm:$0xff]
        %v3424 = vld [vmem:[%s3408 + $0x78] sm:$0xff]
        %v3426 = vlaneseq
        %v3427 = vshrl.u32 %v3426, 7
        %v3428 = vsub.s32 0, %v3427
        %v3429 = vrot.slane %v205, %v3428
        %3431 = vmatprep.subr.mxu0 0.0
        %3432 = vmatpush1.msra.mxu0 %v3409
        %3433 = vmatprep.subr.mxu0 0.0
        %3434 = vmatpush1.msra.mxu0 %v3410
        %3435 = vmatprep.subr.mxu0 0.0
        %3436 = vmatpush1.msra.mxu0 %v3411
        %3437 = vmatprep.subr.mxu0 0.0
        %3438 = vmatpush1.msra.mxu0 %v3412
        %3439 = vmatprep.subr.mxu0 0.0
        %3440 = vmatpush1.msra.mxu0 %v3413
        %3441 = vmatprep.subr.mxu0 0.0
        %3442 = vmatpush1.msra.mxu0 %v3414
        %3443 = vmatprep.subr.mxu0 0.0
        %3444 = vmatpush1.msra.mxu0 %v3415
        %3445 = vmatprep.subr.mxu0 0.0
        %3446 = vmatpush1.msra.mxu0 %v3416
        %3447 = vmatprep.subr.mxu0 0.0
        %3448 = vmatpush1.msra.mxu0 %v3417
        %3449 = vmatprep.subr.mxu0 0.0
        %3450 = vmatpush1.msra.mxu0 %v3418
        %3451 = vmatprep.subr.mxu0 0.0
        %3452 = vmatpush1.msra.mxu0 %v3419
        %3453 = vmatprep.subr.mxu0 0.0
        %3454 = vmatpush1.msra.mxu0 %v3420
        %3455 = vmatprep.subr.mxu0 0.0
        %3456 = vmatpush1.msra.mxu0 %v3421
        %3457 = vmatprep.subr.mxu0 0.0
        %3458 = vmatpush1.msra.mxu0 %v3422
        %3459 = vmatprep.subr.mxu0 0.0
        %3460 = vmatpush1.msra.mxu0 %v3423
        %3461 = vmatprep.subr.mxu0 0.0
        %3462 = vmatpush1.msra.mxu0 %v3424
        %3463 = vmatprep.subr.mxu0 0.0
        %3464 = vmatpush1.msra.mxu0 0.0
        %3465 = vmatprep.subr.mxu0 0.0
        %3466 = vmatpush1.msra.mxu0 0.0
        %3467 = vmatprep.subr.mxu0 0.0
        %3468 = vmatpush1.msra.mxu0 0.0
        %3469 = vmatprep.subr.mxu0 0.0
        %3470 = vmatpush1.msra.mxu0 0.0
        %3471 = vmatprep.subr.mxu0 0.0
        %3472 = vmatpush1.msra.mxu0 0.0
        %3473 = vmatprep.subr.mxu0 0.0
        %3474 = vmatpush1.msra.mxu0 0.0
        %3475 = vmatprep.subr.mxu0 0.0
        %3476 = vmatpush1.msra.mxu0 0.0
        %3477 = vmatprep.subr.mxu0 0.0
        %3478 = vmatpush1.msra.mxu0 0.0
        %3479 = vmatprep.subr.mxu0 0.0
        %3480 = vmatpush1.msra.mxu0 0.0
        %3481 = vmatprep.subr.mxu0 0.0
        %3482 = vmatpush1.msra.mxu0 0.0
        %3483 = vmatprep.subr.mxu0 0.0
        %3484 = vmatpush1.msra.mxu0 0.0
        %3485 = vmatprep.subr.mxu0 0.0
        %3486 = vmatpush1.msra.mxu0 0.0
        %3487 = vmatprep.subr.mxu0 0.0
        %3488 = vmatpush1.msra.mxu0 0.0
        %3489 = vmatprep.subr.mxu0 0.0
        %3490 = vmatpush1.msra.mxu0 0.0
        %3491 = vmatprep.subr.mxu0 0.0
        %3492 = vmatpush1.msra.mxu0 0.0
        %3493 = vmatprep.subr.mxu0 0.0
        %3494 = vmatpush1.msra.mxu0 0.0
        %3495 = vmatprep.mubr.f32.mxu0 0.0
        %3496 = vmatmul.mubr.f32.gmra.mrb[0].mxu0 %v3344
        %v3497 = vpop.f32.mrb[0].mxu0
        %v3498 = vadd.f32 %v3429, %v3497
        %v3499 = vpop.f32.mrb[0].mxu0
        %3500 = vmatprep.mubr.f32.mxu0 0.0
        %3501 = vmatmul.mubr.f32.gmra.mrb[0].mxu0 %v3345
        %v3502 = vpop.f32.mrb[0].mxu0
        %v3503 = vadd.f32 %v3429, %v3502
        %v3504 = vpop.f32.mrb[0].mxu0
        %3505 = vmatprep.mubr.f32.mxu0 0.0
        %3506 = vmatmul.mubr.f32.gmra.mrb[0].mxu0 %v3346
        %v3507 = vpop.f32.mrb[0].mxu0
        %v3508 = vadd.f32 %v3429, %v3507
        %v3509 = vpop.f32.mrb[0].mxu0
        %3510 = vmatprep.mubr.f32.mxu0 0.0
        %3511 = vmatmul.mubr.f32.gmra.mrb[0].mxu0 %v3347
        %v3512 = vpop.f32.mrb[0].mxu0
        %v3513 = vadd.f32 %v3429, %v3512
        %v3514 = vpop.f32.mrb[0].mxu0
        %3515 = vmatprep.mubr.f32.mxu0 0.0
        %3516 = vmatmul.mubr.f32.gmra.mrb[0].mxu0 %v3348
        %v3517 = vpop.f32.mrb[0].mxu0
        %v3518 = vadd.f32 %v3429, %v3517
        %v3519 = vpop.f32.mrb[0].mxu0
        %3520 = vmatprep.mubr.f32.mxu0 0.0
        %3521 = vmatmul.mubr.f32.gmra.mrb[0].mxu0 %v3349
        %v3522 = vpop.f32.mrb[0].mxu0
        %v3523 = vadd.f32 %v3429, %v3522
        %v3524 = vpop.f32.mrb[0].mxu0
        %3525 = vmatprep.mubr.f32.mxu0 0.0
        %3526 = vmatmul.mubr.f32.gmra.mrb[0].mxu0 %v3350
        %v3527 = vpop.f32.mrb[0].mxu0
        %v3528 = vadd.f32 %v3429, %v3527
        %v3529 = vpop.f32.mrb[0].mxu0
        %3530 = vmatprep.mubr.f32.mxu0 0.0
        %3531 = vmatmul.mubr.f32.gmra.mrb[0].mxu0 %v3351
        %v3532 = vpop.f32.mrb[0].mxu0
        %v3533 = vadd.f32 %v3429, %v3532
        %v3534 = vpop.f32.mrb[0].mxu0
        %3535 = vmatprep.mubr.f32.mxu0 0.0
        %3536 = vmatmul.mubr.f32.gmra.mrb[0].mxu0 %v3352
        %v3537 = vpop.f32.mrb[0].mxu0
        %v3538 = vadd.f32 %v3429, %v3537
        %v3539 = vpop.f32.mrb[0].mxu0
        %3540 = vmatprep.mubr.f32.mxu0 0.0
        %3541 = vmatmul.mubr.f32.gmra.mrb[0].mxu0 %v3353
        %v3542 = vpop.f32.mrb[0].mxu0
        %v3543 = vadd.f32 %v3429, %v3542
        %v3544 = vpop.f32.mrb[0].mxu0
        %3545 = vmatprep.mubr.f32.mxu0 0.0
        %3546 = vmatmul.mubr.f32.gmra.mrb[0].mxu0 %v3354
        %v3547 = vpop.f32.mrb[0].mxu0
        %v3548 = vadd.f32 %v3429, %v3547
        %v3549 = vpop.f32.mrb[0].mxu0
        %3550 = vmatprep.mubr.f32.mxu0 0.0
        %3551 = vmatmul.mubr.f32.gmra.mrb[0].mxu0 %v3355
        %v3552 = vpop.f32.mrb[0].mxu0
        %v3553 = vadd.f32 %v3429, %v3552
        %v3554 = vpop.f32.mrb[0].mxu0
        %3555 = vmatprep.mubr.f32.mxu0 0.0
        %3556 = vmatmul.mubr.f32.gmra.mrb[0].mxu0 %v3356
        %v3557 = vpop.f32.mrb[0].mxu0
        %v3558 = vadd.f32 %v3429, %v3557
        %v3559 = vpop.f32.mrb[0].mxu0
        %3560 = vmatprep.mubr.f32.mxu0 0.0
        %3561 = vmatmul.mubr.f32.gmra.mrb[0].mxu0 %v3357
        %v3562 = vpop.f32.mrb[0].mxu0
        %v3563 = vadd.f32 %v3429, %v3562
        %v3564 = vpop.f32.mrb[0].mxu0
        %3565 = vmatprep.mubr.f32.mxu0 0.0
        %3566 = vmatmul.mubr.f32.gmra.mrb[0].mxu0 %v3358
        %v3567 = vpop.f32.mrb[0].mxu0
        %v3568 = vadd.f32 %v3429, %v3567
        %v3569 = vpop.f32.mrb[0].mxu0
        %3570 = vmatprep.mubr.f32.mxu0 0.0
        %3571 = vmatmul.mubr.f32.gmra.mrb[0].mxu0 %v3359
        %v3572 = vpop.f32.mrb[0].mxu0
        %v3573 = vadd.f32 %v3429, %v3572
        %v3574 = vpop.f32.mrb[0].mxu0
        %3575 = vmatprep.mubr.f32.mxu0 0.0
        %3576 = vmatmul.mubr.f32.gmra.mrb[0].mxu0 %v3360
        %v3577 = vpop.f32.mrb[0].mxu0
        %v3578 = vadd.f32 %v3429, %v3577
        %v3579 = vpop.f32.mrb[0].mxu0
        %3580 = vmatprep.mubr.f32.mxu0 0.0
        %3581 = vmatmul.mubr.f32.gmra.mrb[0].mxu0 %v3361
        %v3582 = vpop.f32.mrb[0].mxu0
        %v3583 = vadd.f32 %v3429, %v3582
        %v3584 = vpop.f32.mrb[0].mxu0
        %3585 = vmatprep.mubr.f32.mxu0 0.0
        %3586 = vmatmul.mubr.f32.gmra.mrb[0].mxu0 %v3362
        %v3587 = vpop.f32.mrb[0].mxu0
        %v3588 = vadd.f32 %v3429, %v3587
        %v3589 = vpop.f32.mrb[0].mxu0
        %3590 = vmatprep.mubr.f32.mxu0 0.0
        %3591 = vmatmul.mubr.f32.gmra.mrb[0].mxu0 %v3363
        %v3592 = vpop.f32.mrb[0].mxu0
        %v3593 = vadd.f32 %v3429, %v3592
        %v3594 = vpop.f32.mrb[0].mxu0
        %3595 = vmatprep.mubr.f32.mxu0 0.0
        %3596 = vmatmul.mubr.f32.gmra.mrb[0].mxu0 %v3364
        %v3597 = vpop.f32.mrb[0].mxu0
        %v3598 = vadd.f32 %v3429, %v3597
        %v3599 = vpop.f32.mrb[0].mxu0
        %3600 = vmatprep.mubr.f32.mxu0 0.0
        %3601 = vmatmul.mubr.f32.gmra.mrb[0].mxu0 %v3365
        %v3602 = vpop.f32.mrb[0].mxu0
        %v3603 = vadd.f32 %v3429, %v3602
        %v3604 = vpop.f32.mrb[0].mxu0
        %3605 = vmatprep.mubr.f32.mxu0 0.0
        %3606 = vmatmul.mubr.f32.gmra.mrb[0].mxu0 %v3366
        %v3607 = vpop.f32.mrb[0].mxu0
        %v3608 = vadd.f32 %v3429, %v3607
        %v3609 = vpop.f32.mrb[0].mxu0
        %3610 = vmatprep.mubr.f32.mxu0 0.0
        %3611 = vmatmul.mubr.f32.gmra.mrb[0].mxu0 %v3367
        %v3612 = vpop.f32.mrb[0].mxu0
        %v3613 = vadd.f32 %v3429, %v3612
        %v3614 = vpop.f32.mrb[0].mxu0
        %3615 = vmatprep.mubr.f32.mxu0 0.0
        %3616 = vmatmul.mubr.f32.gmra.mrb[0].mxu0 %v3368
        %v3617 = vpop.f32.mrb[0].mxu0
        %v3618 = vadd.f32 %v3429, %v3617
        %v3619 = vpop.f32.mrb[0].mxu0
        %3620 = vmatprep.mubr.f32.mxu0 0.0
        %3621 = vmatmul.mubr.f32.gmra.mrb[0].mxu0 %v3369
        %v3622 = vpop.f32.mrb[0].mxu0
        %v3623 = vadd.f32 %v3429, %v3622
        %v3624 = vpop.f32.mrb[0].mxu0
        %3625 = vmatprep.mubr.f32.mxu0 0.0
        %3626 = vmatmul.mubr.f32.gmra.mrb[0].mxu0 %v3370
        %v3627 = vpop.f32.mrb[0].mxu0
        %v3628 = vadd.f32 %v3429, %v3627
        %v3629 = vpop.f32.mrb[0].mxu0
        %3630 = vmatprep.mubr.f32.mxu0 0.0
        %3631 = vmatmul.mubr.f32.gmra.mrb[0].mxu0 %v3371
        %v3632 = vpop.f32.mrb[0].mxu0
        %v3633 = vadd.f32 %v3429, %v3632
        %v3634 = vpop.f32.mrb[0].mxu0
        %3635 = vmatprep.mubr.f32.mxu0 0.0
        %3636 = vmatmul.mubr.f32.gmra.mrb[0].mxu0 %v3372
        %v3637 = vpop.f32.mrb[0].mxu0
        %v3638 = vadd.f32 %v3429, %v3637
        %v3639 = vpop.f32.mrb[0].mxu0
        %3640 = vmatprep.mubr.f32.mxu0 0.0
        %3641 = vmatmul.mubr.f32.gmra.mrb[0].mxu0 %v3373
        %v3642 = vpop.f32.mrb[0].mxu0
        %v3643 = vadd.f32 %v3429, %v3642
        %v3644 = vpop.f32.mrb[0].mxu0
        %3645 = vmatprep.mubr.f32.mxu0 0.0
        %3646 = vmatmul.mubr.f32.gmra.mrb[0].mxu0 %v3374
        %v3647 = vpop.f32.mrb[0].mxu0
        %v3648 = vadd.f32 %v3429, %v3647
        %v3649 = vpop.f32.mrb[0].mxu0
        %3650 = vmatprep.mubr.f32.mxu0 0.0
        %3651 = vmatmul.mubr.f32.gmra.mrb[0].mxu0 %v3375
        %v3652 = vpop.f32.mrb[0].mxu0
        %v3653 = vadd.f32 %v3429, %v3652
        %v3654 = vpop.f32.mrb[0].mxu0
        %3655 = vmatprep.mubr.f32.mxu0 0.0
        %3656 = vmatmul.mubr.f32.gmra.mrb[0].mxu0 %v3376
        %v3657 = vpop.f32.mrb[0].mxu0
        %v3658 = vadd.f32 %v3429, %v3657
        %v3659 = vpop.f32.mrb[0].mxu0
        %3660 = vmatprep.mubr.f32.mxu0 0.0
        %3661 = vmatmul.mubr.f32.gmra.mrb[0].mxu0 %v3377
        %v3662 = vpop.f32.mrb[0].mxu0
        %v3663 = vadd.f32 %v3429, %v3662
        %v3664 = vpop.f32.mrb[0].mxu0
        %3665 = vmatprep.mubr.f32.mxu0 0.0
        %3666 = vmatmul.mubr.f32.gmra.mrb[0].mxu0 %v3378
        %v3667 = vpop.f32.mrb[0].mxu0
        %v3668 = vadd.f32 %v3429, %v3667
        %v3669 = vpop.f32.mrb[0].mxu0
        %3670 = vmatprep.mubr.f32.mxu0 0.0
        %3671 = vmatmul.mubr.f32.gmra.mrb[0].mxu0 %v3379
        %v3672 = vpop.f32.mrb[0].mxu0
        %v3673 = vadd.f32 %v3429, %v3672
        %v3674 = vpop.f32.mrb[0].mxu0
        %3675 = vmatprep.mubr.f32.mxu0 0.0
        %3676 = vmatmul.mubr.f32.gmra.mrb[0].mxu0 %v3380
        %v3677 = vpop.f32.mrb[0].mxu0
        %v3678 = vadd.f32 %v3429, %v3677
        %v3679 = vpop.f32.mrb[0].mxu0
        %3680 = vmatprep.mubr.f32.mxu0 0.0
        %3681 = vmatmul.mubr.f32.gmra.mrb[0].mxu0 %v3381
        %v3682 = vpop.f32.mrb[0].mxu0
        %v3683 = vadd.f32 %v3429, %v3682
        %v3684 = vpop.f32.mrb[0].mxu0
        %3685 = vmatprep.mubr.f32.mxu0 0.0
        %3686 = vmatmul.mubr.f32.gmra.mrb[0].mxu0 %v3382
        %v3687 = vpop.f32.mrb[0].mxu0
        %v3688 = vadd.f32 %v3429, %v3687
        %v3689 = vpop.f32.mrb[0].mxu0
        %3690 = vmatprep.mubr.f32.mxu0 0.0
        %3691 = vmatmul.mubr.f32.gmra.mrb[0].mxu0 %v3383
        %v3692 = vpop.f32.mrb[0].mxu0
        %v3693 = vadd.f32 %v3429, %v3692
        %v3694 = vpop.f32.mrb[0].mxu0
        %3695 = vmatprep.mubr.f32.mxu0 0.0
        %3696 = vmatmul.mubr.f32.gmra.mrb[0].mxu0 %v3384
        %v3697 = vpop.f32.mrb[0].mxu0
        %v3698 = vadd.f32 %v3429, %v3697
        %v3699 = vpop.f32.mrb[0].mxu0
        %3700 = vmatprep.mubr.f32.mxu0 0.0
        %3701 = vmatmul.mubr.f32.gmra.mrb[0].mxu0 %v3385
        %v3702 = vpop.f32.mrb[0].mxu0
        %v3703 = vadd.f32 %v3429, %v3702
        %v3704 = vpop.f32.mrb[0].mxu0
        %3705 = vmatprep.mubr.f32.mxu0 0.0
        %3706 = vmatmul.mubr.f32.gmra.mrb[0].mxu0 %v3386
        %v3707 = vpop.f32.mrb[0].mxu0
        %v3708 = vadd.f32 %v3429, %v3707
        %v3709 = vpop.f32.mrb[0].mxu0
        %3710 = vmatprep.mubr.f32.mxu0 0.0
        %3711 = vmatmul.mubr.f32.gmra.mrb[0].mxu0 %v3387
        %v3712 = vpop.f32.mrb[0].mxu0
        %v3713 = vadd.f32 %v3429, %v3712
        %v3714 = vpop.f32.mrb[0].mxu0
        %3715 = vmatprep.mubr.f32.mxu0 0.0
        %3716 = vmatmul.mubr.f32.gmra.mrb[0].mxu0 %v3388
        %v3717 = vpop.f32.mrb[0].mxu0
        %v3718 = vadd.f32 %v3429, %v3717
        %v3719 = vpop.f32.mrb[0].mxu0
        %3720 = vmatprep.mubr.f32.mxu0 0.0
        %3721 = vmatmul.mubr.f32.gmra.mrb[0].mxu0 %v3389
        %v3722 = vpop.f32.mrb[0].mxu0
        %v3723 = vadd.f32 %v3429, %v3722
        %v3724 = vpop.f32.mrb[0].mxu0
        %3725 = vmatprep.mubr.f32.mxu0 0.0
        %3726 = vmatmul.mubr.f32.gmra.mrb[0].mxu0 %v3390
        %v3727 = vpop.f32.mrb[0].mxu0
        %v3728 = vadd.f32 %v3429, %v3727
        %v3729 = vpop.f32.mrb[0].mxu0
        %3730 = vmatprep.mubr.f32.mxu0 0.0
        %3731 = vmatmul.mubr.f32.gmra.mrb[0].mxu0 %v3391
        %v3732 = vpop.f32.mrb[0].mxu0
        %v3733 = vadd.f32 %v3429, %v3732
        %v3734 = vpop.f32.mrb[0].mxu0
        %3735 = vmatprep.mubr.f32.mxu0 0.0
        %3736 = vmatmul.mubr.f32.gmra.mrb[0].mxu0 %v3392
        %v3737 = vpop.f32.mrb[0].mxu0
        %v3738 = vadd.f32 %v3429, %v3737
        %v3739 = vpop.f32.mrb[0].mxu0
        %3740 = vmatprep.mubr.f32.mxu0 0.0
        %3741 = vmatmul.mubr.f32.gmra.mrb[0].mxu0 %v3393
        %v3742 = vpop.f32.mrb[0].mxu0
        %v3743 = vadd.f32 %v3429, %v3742
        %v3744 = vpop.f32.mrb[0].mxu0
        %3745 = vmatprep.mubr.f32.mxu0 0.0
        %3746 = vmatmul.mubr.f32.gmra.mrb[0].mxu0 %v3394
        %v3747 = vpop.f32.mrb[0].mxu0
        %v3748 = vadd.f32 %v3429, %v3747
        %v3749 = vpop.f32.mrb[0].mxu0
        %3750 = vmatprep.mubr.f32.mxu0 0.0
        %3751 = vmatmul.mubr.f32.gmra.mrb[0].mxu0 %v3395
        %v3752 = vpop.f32.mrb[0].mxu0
        %v3753 = vadd.f32 %v3429, %v3752
        %v3754 = vpop.f32.mrb[0].mxu0
        %3755 = vmatprep.mubr.f32.mxu0 0.0
        %3756 = vmatmul.mubr.f32.gmra.mrb[0].mxu0 %v3396
        %v3757 = vpop.f32.mrb[0].mxu0
        %v3758 = vadd.f32 %v3429, %v3757
        %v3759 = vpop.f32.mrb[0].mxu0
        %3760 = vmatprep.mubr.f32.mxu0 0.0
        %3761 = vmatmul.mubr.f32.gmra.mrb[0].mxu0 %v3397
        %v3762 = vpop.f32.mrb[0].mxu0
        %v3763 = vadd.f32 %v3429, %v3762
        %v3764 = vpop.f32.mrb[0].mxu0
        %3765 = vmatprep.mubr.f32.mxu0 0.0
        %3766 = vmatmul.mubr.f32.gmra.mrb[0].mxu0 %v3398
        %v3767 = vpop.f32.mrb[0].mxu0
        %v3768 = vadd.f32 %v3429, %v3767
        %v3769 = vpop.f32.mrb[0].mxu0
        %3770 = vmatprep.mubr.f32.mxu0 0.0
        %3771 = vmatmul.mubr.f32.gmra.mrb[0].mxu0 %v3399
        %v3772 = vpop.f32.mrb[0].mxu0
        %v3773 = vadd.f32 %v3429, %v3772
        %v3774 = vpop.f32.mrb[0].mxu0
        %3775 = vmatprep.mubr.f32.mxu0 0.0
        %3776 = vmatmul.mubr.f32.gmra.mrb[0].mxu0 %v3400
        %v3777 = vpop.f32.mrb[0].mxu0
        %v3778 = vadd.f32 %v3429, %v3777
        %v3779 = vpop.f32.mrb[0].mxu0
        %3780 = vmatprep.mubr.f32.mxu0 0.0
        %3781 = vmatmul.mubr.f32.gmra.mrb[0].mxu0 %v3401
        %v3782 = vpop.f32.mrb[0].mxu0
        %v3783 = vadd.f32 %v3429, %v3782
        %v3784 = vpop.f32.mrb[0].mxu0
        %3785 = vmatprep.mubr.f32.mxu0 0.0
        %3786 = vmatmul.mubr.f32.gmra.mrb[0].mxu0 %v3402
        %v3787 = vpop.f32.mrb[0].mxu0
        %v3788 = vadd.f32 %v3429, %v3787
        %v3789 = vpop.f32.mrb[0].mxu0
        %3790 = vmatprep.mubr.f32.mxu0 0.0
        %3791 = vmatmul.mubr.f32.gmra.mrb[0].mxu0 %v3403
        %v3792 = vpop.f32.mrb[0].mxu0
        %v3793 = vadd.f32 %v3429, %v3792
        %v3794 = vpop.f32.mrb[0].mxu0
        %3795 = vmatprep.mubr.f32.mxu0 0.0
        %3796 = vmatmul.mubr.f32.gmra.mrb[0].mxu0 %v3404
        %v3797 = vpop.f32.mrb[0].mxu0
        %v3798 = vadd.f32 %v3429, %v3797
        %v3799 = vpop.f32.mrb[0].mxu0
        %3800 = vmatprep.mubr.f32.mxu0 0.0
        %3801 = vmatmul.mubr.f32.gmra.mrb[0].mxu0 %v3405
        %v3802 = vpop.f32.mrb[0].mxu0
        %v3803 = vadd.f32 %v3429, %v3802
        %v3804 = vpop.f32.mrb[0].mxu0
        %3805 = vmatprep.mubr.f32.mxu0 0.0
        %3806 = vmatmul.mubr.f32.gmra.mrb[0].mxu0 %v3406
        %v3807 = vpop.f32.mrb[0].mxu0
        %v3808 = vadd.f32 %v3429, %v3807
        %v3809 = vpop.f32.mrb[0].mxu0
        %3810 = vmatprep.mubr.f32.mxu0 0.0
        %3811 = vmatmul.mubr.f32.gmra.mrb[0].mxu0 %v3407
        %v3812 = vpop.f32.mrb[0].mxu0
        %v3813 = vadd.f32 %v3429, %v3812
        %v3814 = vpop.f32.mrb[0].mxu0
        %3815 = vdwg.mxu0
        %v3816 = vmax.f32 %v3498, 0.0
        %v3817 = vmax.f32 %v3503, 0.0
        %v3818 = vmax.f32 %v3508, 0.0
        %v3819 = vmax.f32 %v3513, 0.0
        %v3820 = vmax.f32 %v3518, 0.0
        %v3821 = vmax.f32 %v3523, 0.0
        %v3822 = vmax.f32 %v3528, 0.0
        %v3823 = vmax.f32 %v3533, 0.0
        %v3824 = vmax.f32 %v3538, 0.0
        %v3825 = vmax.f32 %v3543, 0.0
        %v3826 = vmax.f32 %v3548, 0.0
        %v3827 = vmax.f32 %v3553, 0.0
        %v3828 = vmax.f32 %v3558, 0.0
        %v3829 = vmax.f32 %v3563, 0.0
        %v3830 = vmax.f32 %v3568, 0.0
        %v3831 = vmax.f32 %v3573, 0.0
        %v3832 = vmax.f32 %v3578, 0.0
        %v3833 = vmax.f32 %v3583, 0.0
        %v3834 = vmax.f32 %v3588, 0.0
        %v3835 = vmax.f32 %v3593, 0.0
        %v3836 = vmax.f32 %v3598, 0.0
        %v3837 = vmax.f32 %v3603, 0.0
        %v3838 = vmax.f32 %v3608, 0.0
        %v3839 = vmax.f32 %v3613, 0.0
        %v3840 = vmax.f32 %v3618, 0.0
        %v3841 = vmax.f32 %v3623, 0.0
        %v3842 = vmax.f32 %v3628, 0.0
        %v3843 = vmax.f32 %v3633, 0.0
        %v3844 = vmax.f32 %v3638, 0.0
        %v3845 = vmax.f32 %v3643, 0.0
        %v3846 = vmax.f32 %v3648, 0.0
        %v3847 = vmax.f32 %v3653, 0.0
        %v3848 = vmax.f32 %v3658, 0.0
        %v3849 = vmax.f32 %v3663, 0.0
        %v3850 = vmax.f32 %v3668, 0.0
        %v3851 = vmax.f32 %v3673, 0.0
        %v3852 = vmax.f32 %v3678, 0.0
        %v3853 = vmax.f32 %v3683, 0.0
        %v3854 = vmax.f32 %v3688, 0.0
        %v3855 = vmax.f32 %v3693, 0.0
        %v3856 = vmax.f32 %v3698, 0.0
        %v3857 = vmax.f32 %v3703, 0.0
        %v3858 = vmax.f32 %v3708, 0.0
        %v3859 = vmax.f32 %v3713, 0.0
        %v3860 = vmax.f32 %v3718, 0.0
        %v3861 = vmax.f32 %v3723, 0.0
        %v3862 = vmax.f32 %v3728, 0.0
        %v3863 = vmax.f32 %v3733, 0.0
        %v3864 = vmax.f32 %v3738, 0.0
        %v3865 = vmax.f32 %v3743, 0.0
        %v3866 = vmax.f32 %v3748, 0.0
        %v3867 = vmax.f32 %v3753, 0.0
        %v3868 = vmax.f32 %v3758, 0.0
        %v3869 = vmax.f32 %v3763, 0.0
        %v3870 = vmax.f32 %v3768, 0.0
        %v3871 = vmax.f32 %v3773, 0.0
        %v3872 = vmax.f32 %v3778, 0.0
        %v3873 = vmax.f32 %v3783, 0.0
        %v3874 = vmax.f32 %v3788, 0.0
        %v3875 = vmax.f32 %v3793, 0.0
        %v3876 = vmax.f32 %v3798, 0.0
        %v3877 = vmax.f32 %v3803, 0.0
        %v3878 = vmax.f32 %v3808, 0.0
        %v3879 = vmax.f32 %v3813, 0.0
        %s3880 = scalar_lea.vmem %s2, 768
        %v3881 = vld [vmem:[%s3880] sm:$0xff]
        %v3882 = vld [vmem:[%s3880 + $0x8] sm:$0xff]
        %v3883 = vld [vmem:[%s3880 + $0x10] sm:$0xff]
        %v3884 = vld [vmem:[%s3880 + $0x18] sm:$0xff]
        %v3885 = vld [vmem:[%s3880 + $0x20] sm:$0xff]
        %v3886 = vld [vmem:[%s3880 + $0x28] sm:$0xff]
        %v3887 = vld [vmem:[%s3880 + $0x30] sm:$0xff]
        %v3888 = vld [vmem:[%s3880 + $0x38] sm:$0xff]
        %v3889 = vld [vmem:[%s3880 + $0x40] sm:$0xff]
        %v3890 = vld [vmem:[%s3880 + $0x48] sm:$0xff]
        %v3891 = vld [vmem:[%s3880 + $0x50] sm:$0xff]
        %v3892 = vld [vmem:[%s3880 + $0x58] sm:$0xff]
        %v3893 = vld [vmem:[%s3880 + $0x60] sm:$0xff]
        %v3894 = vld [vmem:[%s3880 + $0x68] sm:$0xff]
        %v3895 = vld [vmem:[%s3880 + $0x70] sm:$0xff]
        %v3896 = vld [vmem:[%s3880 + $0x78] sm:$0xff]
        %v3898 = vlaneseq
        %v3899 = vshrl.u32 %v3898, 7
        %v3900 = vsub.s32 0, %v3899
        %v3901 = vrot.slane %v206, %v3900
        %3903 = vmatprep.subr.mxu0 0.0
        %3904 = vmatpush1.msra.mxu0 %v3881
        %3905 = vmatprep.subr.mxu0 0.0
        %3906 = vmatpush1.msra.mxu0 %v3882
        %3907 = vmatprep.subr.mxu0 0.0
        %3908 = vmatpush1.msra.mxu0 %v3883
        %3909 = vmatprep.subr.mxu0 0.0
        %3910 = vmatpush1.msra.mxu0 %v3884
        %3911 = vmatprep.subr.mxu0 0.0
        %3912 = vmatpush1.msra.mxu0 %v3885
        %3913 = vmatprep.subr.mxu0 0.0
        %3914 = vmatpush1.msra.mxu0 %v3886
        %3915 = vmatprep.subr.mxu0 0.0
        %3916 = vmatpush1.msra.mxu0 %v3887
        %3917 = vmatprep.subr.mxu0 0.0
        %3918 = vmatpush1.msra.mxu0 %v3888
        %3919 = vmatprep.subr.mxu0 0.0
        %3920 = vmatpush1.msra.mxu0 %v3889
        %3921 = vmatprep.subr.mxu0 0.0
        %3922 = vmatpush1.msra.mxu0 %v3890
        %3923 = vmatprep.subr.mxu0 0.0
        %3924 = vmatpush1.msra.mxu0 %v3891
        %3925 = vmatprep.subr.mxu0 0.0
        %3926 = vmatpush1.msra.mxu0 %v3892
        %3927 = vmatprep.subr.mxu0 0.0
        %3928 = vmatpush1.msra.mxu0 %v3893
        %3929 = vmatprep.subr.mxu0 0.0
        %3930 = vmatpush1.msra.mxu0 %v3894
        %3931 = vmatprep.subr.mxu0 0.0
        %3932 = vmatpush1.msra.mxu0 %v3895
        %3933 = vmatprep.subr.mxu0 0.0
        %3934 = vmatpush1.msra.mxu0 %v3896
        %3935 = vmatprep.subr.mxu0 0.0
        %3936 = vmatpush1.msra.mxu0 0.0
        %3937 = vmatprep.subr.mxu0 0.0
        %3938 = vmatpush1.msra.mxu0 0.0
        %3939 = vmatprep.subr.mxu0 0.0
        %3940 = vmatpush1.msra.mxu0 0.0
        %3941 = vmatprep.subr.mxu0 0.0
        %3942 = vmatpush1.msra.mxu0 0.0
        %3943 = vmatprep.subr.mxu0 0.0
        %3944 = vmatpush1.msra.mxu0 0.0
        %3945 = vmatprep.subr.mxu0 0.0
        %3946 = vmatpush1.msra.mxu0 0.0
        %3947 = vmatprep.subr.mxu0 0.0
        %3948 = vmatpush1.msra.mxu0 0.0
        %3949 = vmatprep.subr.mxu0 0.0
        %3950 = vmatpush1.msra.mxu0 0.0
        %3951 = vmatprep.subr.mxu0 0.0
        %3952 = vmatpush1.msra.mxu0 0.0
        %3953 = vmatprep.subr.mxu0 0.0
        %3954 = vmatpush1.msra.mxu0 0.0
        %3955 = vmatprep.subr.mxu0 0.0
        %3956 = vmatpush1.msra.mxu0 0.0
        %3957 = vmatprep.subr.mxu0 0.0
        %3958 = vmatpush1.msra.mxu0 0.0
        %3959 = vmatprep.subr.mxu0 0.0
        %3960 = vmatpush1.msra.mxu0 0.0
        %3961 = vmatprep.subr.mxu0 0.0
        %3962 = vmatpush1.msra.mxu0 0.0
        %3963 = vmatprep.subr.mxu0 0.0
        %3964 = vmatpush1.msra.mxu0 0.0
        %3965 = vmatprep.subr.mxu0 0.0
        %3966 = vmatpush1.msra.mxu0 0.0
        %3967 = vmatprep.mubr.f32.mxu0 0.0
        %3968 = vmatmul.mubr.f32.gmra.mrb[0].mxu0 %v3816
        %v3969 = vpop.f32.mrb[0].mxu0
        %v3970 = vadd.f32 %v3901, %v3969
        %v3971 = vpop.f32.mrb[0].mxu0
        %3972 = vmatprep.mubr.f32.mxu0 0.0
        %3973 = vmatmul.mubr.f32.gmra.mrb[0].mxu0 %v3817
        %v3974 = vpop.f32.mrb[0].mxu0
        %v3975 = vadd.f32 %v3901, %v3974
        %v3976 = vpop.f32.mrb[0].mxu0
        %3977 = vmatprep.mubr.f32.mxu0 0.0
        %3978 = vmatmul.mubr.f32.gmra.mrb[0].mxu0 %v3818
        %v3979 = vpop.f32.mrb[0].mxu0
        %v3980 = vadd.f32 %v3901, %v3979
        %v3981 = vpop.f32.mrb[0].mxu0
        %3982 = vmatprep.mubr.f32.mxu0 0.0
        %3983 = vmatmul.mubr.f32.gmra.mrb[0].mxu0 %v3819
        %v3984 = vpop.f32.mrb[0].mxu0
        %v3985 = vadd.f32 %v3901, %v3984
        %v3986 = vpop.f32.mrb[0].mxu0
        %3987 = vmatprep.mubr.f32.mxu0 0.0
        %3988 = vmatmul.mubr.f32.gmra.mrb[0].mxu0 %v3820
        %v3989 = vpop.f32.mrb[0].mxu0
        %v3990 = vadd.f32 %v3901, %v3989
        %v3991 = vpop.f32.mrb[0].mxu0
        %3992 = vmatprep.mubr.f32.mxu0 0.0
        %3993 = vmatmul.mubr.f32.gmra.mrb[0].mxu0 %v3821
        %v3994 = vpop.f32.mrb[0].mxu0
        %v3995 = vadd.f32 %v3901, %v3994
        %v3996 = vpop.f32.mrb[0].mxu0
        %3997 = vmatprep.mubr.f32.mxu0 0.0
        %3998 = vmatmul.mubr.f32.gmra.mrb[0].mxu0 %v3822
        %v3999 = vpop.f32.mrb[0].mxu0
        %v4000 = vadd.f32 %v3901, %v3999
        %v4001 = vpop.f32.mrb[0].mxu0
        %4002 = vmatprep.mubr.f32.mxu0 0.0
        %4003 = vmatmul.mubr.f32.gmra.mrb[0].mxu0 %v3823
        %v4004 = vpop.f32.mrb[0].mxu0
        %v4005 = vadd.f32 %v3901, %v4004
        %v4006 = vpop.f32.mrb[0].mxu0
        %4007 = vmatprep.mubr.f32.mxu0 0.0
        %4008 = vmatmul.mubr.f32.gmra.mrb[0].mxu0 %v3824
        %v4009 = vpop.f32.mrb[0].mxu0
        %v4010 = vadd.f32 %v3901, %v4009
        %v4011 = vpop.f32.mrb[0].mxu0
        %4012 = vmatprep.mubr.f32.mxu0 0.0
        %4013 = vmatmul.mubr.f32.gmra.mrb[0].mxu0 %v3825
        %v4014 = vpop.f32.mrb[0].mxu0
        %v4015 = vadd.f32 %v3901, %v4014
        %v4016 = vpop.f32.mrb[0].mxu0
        %4017 = vmatprep.mubr.f32.mxu0 0.0
        %4018 = vmatmul.mubr.f32.gmra.mrb[0].mxu0 %v3826
        %v4019 = vpop.f32.mrb[0].mxu0
        %v4020 = vadd.f32 %v3901, %v4019
        %v4021 = vpop.f32.mrb[0].mxu0
        %4022 = vmatprep.mubr.f32.mxu0 0.0
        %4023 = vmatmul.mubr.f32.gmra.mrb[0].mxu0 %v3827
        %v4024 = vpop.f32.mrb[0].mxu0
        %v4025 = vadd.f32 %v3901, %v4024
        %v4026 = vpop.f32.mrb[0].mxu0
        %4027 = vmatprep.mubr.f32.mxu0 0.0
        %4028 = vmatmul.mubr.f32.gmra.mrb[0].mxu0 %v3828
        %v4029 = vpop.f32.mrb[0].mxu0
        %v4030 = vadd.f32 %v3901, %v4029
        %v4031 = vpop.f32.mrb[0].mxu0
        %4032 = vmatprep.mubr.f32.mxu0 0.0
        %4033 = vmatmul.mubr.f32.gmra.mrb[0].mxu0 %v3829
        %v4034 = vpop.f32.mrb[0].mxu0
        %v4035 = vadd.f32 %v3901, %v4034
        %v4036 = vpop.f32.mrb[0].mxu0
        %4037 = vmatprep.mubr.f32.mxu0 0.0
        %4038 = vmatmul.mubr.f32.gmra.mrb[0].mxu0 %v3830
        %v4039 = vpop.f32.mrb[0].mxu0
        %v4040 = vadd.f32 %v3901, %v4039
        %v4041 = vpop.f32.mrb[0].mxu0
        %4042 = vmatprep.mubr.f32.mxu0 0.0
        %4043 = vmatmul.mubr.f32.gmra.mrb[0].mxu0 %v3831
        %v4044 = vpop.f32.mrb[0].mxu0
        %v4045 = vadd.f32 %v3901, %v4044
        %v4046 = vpop.f32.mrb[0].mxu0
        %4047 = vmatprep.mubr.f32.mxu0 0.0
        %4048 = vmatmul.mubr.f32.gmra.mrb[0].mxu0 %v3832
        %v4049 = vpop.f32.mrb[0].mxu0
        %v4050 = vadd.f32 %v3901, %v4049
        %v4051 = vpop.f32.mrb[0].mxu0
        %4052 = vmatprep.mubr.f32.mxu0 0.0
        %4053 = vmatmul.mubr.f32.gmra.mrb[0].mxu0 %v3833
        %v4054 = vpop.f32.mrb[0].mxu0
        %v4055 = vadd.f32 %v3901, %v4054
        %v4056 = vpop.f32.mrb[0].mxu0
        %4057 = vmatprep.mubr.f32.mxu0 0.0
        %4058 = vmatmul.mubr.f32.gmra.mrb[0].mxu0 %v3834
        %v4059 = vpop.f32.mrb[0].mxu0
        %v4060 = vadd.f32 %v3901, %v4059
        %v4061 = vpop.f32.mrb[0].mxu0
        %4062 = vmatprep.mubr.f32.mxu0 0.0
        %4063 = vmatmul.mubr.f32.gmra.mrb[0].mxu0 %v3835
        %v4064 = vpop.f32.mrb[0].mxu0
        %v4065 = vadd.f32 %v3901, %v4064
        %v4066 = vpop.f32.mrb[0].mxu0
        %4067 = vmatprep.mubr.f32.mxu0 0.0
        %4068 = vmatmul.mubr.f32.gmra.mrb[0].mxu0 %v3836
        %v4069 = vpop.f32.mrb[0].mxu0
        %v4070 = vadd.f32 %v3901, %v4069
        %v4071 = vpop.f32.mrb[0].mxu0
        %4072 = vmatprep.mubr.f32.mxu0 0.0
        %4073 = vmatmul.mubr.f32.gmra.mrb[0].mxu0 %v3837
        %v4074 = vpop.f32.mrb[0].mxu0
        %v4075 = vadd.f32 %v3901, %v4074
        %v4076 = vpop.f32.mrb[0].mxu0
        %4077 = vmatprep.mubr.f32.mxu0 0.0
        %4078 = vmatmul.mubr.f32.gmra.mrb[0].mxu0 %v3838
        %v4079 = vpop.f32.mrb[0].mxu0
        %v4080 = vadd.f32 %v3901, %v4079
        %v4081 = vpop.f32.mrb[0].mxu0
        %4082 = vmatprep.mubr.f32.mxu0 0.0
        %4083 = vmatmul.mubr.f32.gmra.mrb[0].mxu0 %v3839
        %v4084 = vpop.f32.mrb[0].mxu0
        %v4085 = vadd.f32 %v3901, %v4084
        %v4086 = vpop.f32.mrb[0].mxu0
        %4087 = vmatprep.mubr.f32.mxu0 0.0
        %4088 = vmatmul.mubr.f32.gmra.mrb[0].mxu0 %v3840
        %v4089 = vpop.f32.mrb[0].mxu0
        %v4090 = vadd.f32 %v3901, %v4089
        %v4091 = vpop.f32.mrb[0].mxu0
        %4092 = vmatprep.mubr.f32.mxu0 0.0
        %4093 = vmatmul.mubr.f32.gmra.mrb[0].mxu0 %v3841
        %v4094 = vpop.f32.mrb[0].mxu0
        %v4095 = vadd.f32 %v3901, %v4094
        %v4096 = vpop.f32.mrb[0].mxu0
        %4097 = vmatprep.mubr.f32.mxu0 0.0
        %4098 = vmatmul.mubr.f32.gmra.mrb[0].mxu0 %v3842
        %v4099 = vpop.f32.mrb[0].mxu0
        %v4100 = vadd.f32 %v3901, %v4099
        %v4101 = vpop.f32.mrb[0].mxu0
        %4102 = vmatprep.mubr.f32.mxu0 0.0
        %4103 = vmatmul.mubr.f32.gmra.mrb[0].mxu0 %v3843
        %v4104 = vpop.f32.mrb[0].mxu0
        %v4105 = vadd.f32 %v3901, %v4104
        %v4106 = vpop.f32.mrb[0].mxu0
        %4107 = vmatprep.mubr.f32.mxu0 0.0
        %4108 = vmatmul.mubr.f32.gmra.mrb[0].mxu0 %v3844
        %v4109 = vpop.f32.mrb[0].mxu0
        %v4110 = vadd.f32 %v3901, %v4109
        %v4111 = vpop.f32.mrb[0].mxu0
        %4112 = vmatprep.mubr.f32.mxu0 0.0
        %4113 = vmatmul.mubr.f32.gmra.mrb[0].mxu0 %v3845
        %v4114 = vpop.f32.mrb[0].mxu0
        %v4115 = vadd.f32 %v3901, %v4114
        %v4116 = vpop.f32.mrb[0].mxu0
        %4117 = vmatprep.mubr.f32.mxu0 0.0
        %4118 = vmatmul.mubr.f32.gmra.mrb[0].mxu0 %v3846
        %v4119 = vpop.f32.mrb[0].mxu0
        %v4120 = vadd.f32 %v3901, %v4119
        %v4121 = vpop.f32.mrb[0].mxu0
        %4122 = vmatprep.mubr.f32.mxu0 0.0
        %4123 = vmatmul.mubr.f32.gmra.mrb[0].mxu0 %v3847
        %v4124 = vpop.f32.mrb[0].mxu0
        %v4125 = vadd.f32 %v3901, %v4124
        %v4126 = vpop.f32.mrb[0].mxu0
        %4127 = vmatprep.mubr.f32.mxu0 0.0
        %4128 = vmatmul.mubr.f32.gmra.mrb[0].mxu0 %v3848
        %v4129 = vpop.f32.mrb[0].mxu0
        %v4130 = vadd.f32 %v3901, %v4129
        %v4131 = vpop.f32.mrb[0].mxu0
        %4132 = vmatprep.mubr.f32.mxu0 0.0
        %4133 = vmatmul.mubr.f32.gmra.mrb[0].mxu0 %v3849
        %v4134 = vpop.f32.mrb[0].mxu0
        %v4135 = vadd.f32 %v3901, %v4134
        %v4136 = vpop.f32.mrb[0].mxu0
        %4137 = vmatprep.mubr.f32.mxu0 0.0
        %4138 = vmatmul.mubr.f32.gmra.mrb[0].mxu0 %v3850
        %v4139 = vpop.f32.mrb[0].mxu0
        %v4140 = vadd.f32 %v3901, %v4139
        %v4141 = vpop.f32.mrb[0].mxu0
        %4142 = vmatprep.mubr.f32.mxu0 0.0
        %4143 = vmatmul.mubr.f32.gmra.mrb[0].mxu0 %v3851
        %v4144 = vpop.f32.mrb[0].mxu0
        %v4145 = vadd.f32 %v3901, %v4144
        %v4146 = vpop.f32.mrb[0].mxu0
        %4147 = vmatprep.mubr.f32.mxu0 0.0
        %4148 = vmatmul.mubr.f32.gmra.mrb[0].mxu0 %v3852
        %v4149 = vpop.f32.mrb[0].mxu0
        %v4150 = vadd.f32 %v3901, %v4149
        %v4151 = vpop.f32.mrb[0].mxu0
        %4152 = vmatprep.mubr.f32.mxu0 0.0
        %4153 = vmatmul.mubr.f32.gmra.mrb[0].mxu0 %v3853
        %v4154 = vpop.f32.mrb[0].mxu0
        %v4155 = vadd.f32 %v3901, %v4154
        %v4156 = vpop.f32.mrb[0].mxu0
        %4157 = vmatprep.mubr.f32.mxu0 0.0
        %4158 = vmatmul.mubr.f32.gmra.mrb[0].mxu0 %v3854
        %v4159 = vpop.f32.mrb[0].mxu0
        %v4160 = vadd.f32 %v3901, %v4159
        %v4161 = vpop.f32.mrb[0].mxu0
        %4162 = vmatprep.mubr.f32.mxu0 0.0
        %4163 = vmatmul.mubr.f32.gmra.mrb[0].mxu0 %v3855
        %v4164 = vpop.f32.mrb[0].mxu0
        %v4165 = vadd.f32 %v3901, %v4164
        %v4166 = vpop.f32.mrb[0].mxu0
        %4167 = vmatprep.mubr.f32.mxu0 0.0
        %4168 = vmatmul.mubr.f32.gmra.mrb[0].mxu0 %v3856
        %v4169 = vpop.f32.mrb[0].mxu0
        %v4170 = vadd.f32 %v3901, %v4169
        %v4171 = vpop.f32.mrb[0].mxu0
        %4172 = vmatprep.mubr.f32.mxu0 0.0
        %4173 = vmatmul.mubr.f32.gmra.mrb[0].mxu0 %v3857
        %v4174 = vpop.f32.mrb[0].mxu0
        %v4175 = vadd.f32 %v3901, %v4174
        %v4176 = vpop.f32.mrb[0].mxu0
        %4177 = vmatprep.mubr.f32.mxu0 0.0
        %4178 = vmatmul.mubr.f32.gmra.mrb[0].mxu0 %v3858
        %v4179 = vpop.f32.mrb[0].mxu0
        %v4180 = vadd.f32 %v3901, %v4179
        %v4181 = vpop.f32.mrb[0].mxu0
        %4182 = vmatprep.mubr.f32.mxu0 0.0
        %4183 = vmatmul.mubr.f32.gmra.mrb[0].mxu0 %v3859
        %v4184 = vpop.f32.mrb[0].mxu0
        %v4185 = vadd.f32 %v3901, %v4184
        %v4186 = vpop.f32.mrb[0].mxu0
        %4187 = vmatprep.mubr.f32.mxu0 0.0
        %4188 = vmatmul.mubr.f32.gmra.mrb[0].mxu0 %v3860
        %v4189 = vpop.f32.mrb[0].mxu0
        %v4190 = vadd.f32 %v3901, %v4189
        %v4191 = vpop.f32.mrb[0].mxu0
        %4192 = vmatprep.mubr.f32.mxu0 0.0
        %4193 = vmatmul.mubr.f32.gmra.mrb[0].mxu0 %v3861
        %v4194 = vpop.f32.mrb[0].mxu0
        %v4195 = vadd.f32 %v3901, %v4194
        %v4196 = vpop.f32.mrb[0].mxu0
        %4197 = vmatprep.mubr.f32.mxu0 0.0
        %4198 = vmatmul.mubr.f32.gmra.mrb[0].mxu0 %v3862
        %v4199 = vpop.f32.mrb[0].mxu0
        %v4200 = vadd.f32 %v3901, %v4199
        %v4201 = vpop.f32.mrb[0].mxu0
        %4202 = vmatprep.mubr.f32.mxu0 0.0
        %4203 = vmatmul.mubr.f32.gmra.mrb[0].mxu0 %v3863
        %v4204 = vpop.f32.mrb[0].mxu0
        %v4205 = vadd.f32 %v3901, %v4204
        %v4206 = vpop.f32.mrb[0].mxu0
        %4207 = vmatprep.mubr.f32.mxu0 0.0
        %4208 = vmatmul.mubr.f32.gmra.mrb[0].mxu0 %v3864
        %v4209 = vpop.f32.mrb[0].mxu0
        %v4210 = vadd.f32 %v3901, %v4209
        %v4211 = vpop.f32.mrb[0].mxu0
        %4212 = vmatprep.mubr.f32.mxu0 0.0
        %4213 = vmatmul.mubr.f32.gmra.mrb[0].mxu0 %v3865
        %v4214 = vpop.f32.mrb[0].mxu0
        %v4215 = vadd.f32 %v3901, %v4214
        %v4216 = vpop.f32.mrb[0].mxu0
        %4217 = vmatprep.mubr.f32.mxu0 0.0
        %4218 = vmatmul.mubr.f32.gmra.mrb[0].mxu0 %v3866
        %v4219 = vpop.f32.mrb[0].mxu0
        %v4220 = vadd.f32 %v3901, %v4219
        %v4221 = vpop.f32.mrb[0].mxu0
        %4222 = vmatprep.mubr.f32.mxu0 0.0
        %4223 = vmatmul.mubr.f32.gmra.mrb[0].mxu0 %v3867
        %v4224 = vpop.f32.mrb[0].mxu0
        %v4225 = vadd.f32 %v3901, %v4224
        %v4226 = vpop.f32.mrb[0].mxu0
        %4227 = vmatprep.mubr.f32.mxu0 0.0
        %4228 = vmatmul.mubr.f32.gmra.mrb[0].mxu0 %v3868
        %v4229 = vpop.f32.mrb[0].mxu0
        %v4230 = vadd.f32 %v3901, %v4229
        %v4231 = vpop.f32.mrb[0].mxu0
        %4232 = vmatprep.mubr.f32.mxu0 0.0
        %4233 = vmatmul.mubr.f32.gmra.mrb[0].mxu0 %v3869
        %v4234 = vpop.f32.mrb[0].mxu0
        %v4235 = vadd.f32 %v3901, %v4234
        %v4236 = vpop.f32.mrb[0].mxu0
        %4237 = vmatprep.mubr.f32.mxu0 0.0
        %4238 = vmatmul.mubr.f32.gmra.mrb[0].mxu0 %v3870
        %v4239 = vpop.f32.mrb[0].mxu0
        %v4240 = vadd.f32 %v3901, %v4239
        %v4241 = vpop.f32.mrb[0].mxu0
        %4242 = vmatprep.mubr.f32.mxu0 0.0
        %4243 = vmatmul.mubr.f32.gmra.mrb[0].mxu0 %v3871
        %v4244 = vpop.f32.mrb[0].mxu0
        %v4245 = vadd.f32 %v3901, %v4244
        %v4246 = vpop.f32.mrb[0].mxu0
        %4247 = vmatprep.mubr.f32.mxu0 0.0
        %4248 = vmatmul.mubr.f32.gmra.mrb[0].mxu0 %v3872
        %v4249 = vpop.f32.mrb[0].mxu0
        %v4250 = vadd.f32 %v3901, %v4249
        %v4251 = vpop.f32.mrb[0].mxu0
        %4252 = vmatprep.mubr.f32.mxu0 0.0
        %4253 = vmatmul.mubr.f32.gmra.mrb[0].mxu0 %v3873
        %v4254 = vpop.f32.mrb[0].mxu0
        %v4255 = vadd.f32 %v3901, %v4254
        %v4256 = vpop.f32.mrb[0].mxu0
        %4257 = vmatprep.mubr.f32.mxu0 0.0
        %4258 = vmatmul.mubr.f32.gmra.mrb[0].mxu0 %v3874
        %v4259 = vpop.f32.mrb[0].mxu0
        %v4260 = vadd.f32 %v3901, %v4259
        %v4261 = vpop.f32.mrb[0].mxu0
        %4262 = vmatprep.mubr.f32.mxu0 0.0
        %4263 = vmatmul.mubr.f32.gmra.mrb[0].mxu0 %v3875
        %v4264 = vpop.f32.mrb[0].mxu0
        %v4265 = vadd.f32 %v3901, %v4264
        %v4266 = vpop.f32.mrb[0].mxu0
        %4267 = vmatprep.mubr.f32.mxu0 0.0
        %4268 = vmatmul.mubr.f32.gmra.mrb[0].mxu0 %v3876
        %v4269 = vpop.f32.mrb[0].mxu0
        %v4270 = vadd.f32 %v3901, %v4269
        %v4271 = vpop.f32.mrb[0].mxu0
        %4272 = vmatprep.mubr.f32.mxu0 0.0
        %4273 = vmatmul.mubr.f32.gmra.mrb[0].mxu0 %v3877
        %v4274 = vpop.f32.mrb[0].mxu0
        %v4275 = vadd.f32 %v3901, %v4274
        %v4276 = vpop.f32.mrb[0].mxu0
        %4277 = vmatprep.mubr.f32.mxu0 0.0
        %4278 = vmatmul.mubr.f32.gmra.mrb[0].mxu0 %v3878
        %v4279 = vpop.f32.mrb[0].mxu0
        %v4280 = vadd.f32 %v3901, %v4279
        %v4281 = vpop.f32.mrb[0].mxu0
        %4282 = vmatprep.mubr.f32.mxu0 0.0
        %4283 = vmatmul.mubr.f32.gmra.mrb[0].mxu0 %v3879
        %v4284 = vpop.f32.mrb[0].mxu0
        %v4285 = vadd.f32 %v3901, %v4284
        %v4286 = vpop.f32.mrb[0].mxu0
        %4287 = vdwg.mxu0
        %v4288 = vadd.f32 %v3344, %v3970
        %v4289 = vadd.f32 %v3345, %v3975
        %v4290 = vadd.f32 %v3346, %v3980
        %v4291 = vadd.f32 %v3347, %v3985
        %v4292 = vadd.f32 %v3348, %v3990
        %v4293 = vadd.f32 %v3349, %v3995
        %v4294 = vadd.f32 %v3350, %v4000
        %v4295 = vadd.f32 %v3351, %v4005
        %v4296 = vadd.f32 %v3352, %v4010
        %v4297 = vadd.f32 %v3353, %v4015
        %v4298 = vadd.f32 %v3354, %v4020
        %v4299 = vadd.f32 %v3355, %v4025
        %v4300 = vadd.f32 %v3356, %v4030
        %v4301 = vadd.f32 %v3357, %v4035
        %v4302 = vadd.f32 %v3358, %v4040
        %v4303 = vadd.f32 %v3359, %v4045
        %v4304 = vadd.f32 %v3360, %v4050
        %v4305 = vadd.f32 %v3361, %v4055
        %v4306 = vadd.f32 %v3362, %v4060
        %v4307 = vadd.f32 %v3363, %v4065
        %v4308 = vadd.f32 %v3364, %v4070
        %v4309 = vadd.f32 %v3365, %v4075
        %v4310 = vadd.f32 %v3366, %v4080
        %v4311 = vadd.f32 %v3367, %v4085
        %v4312 = vadd.f32 %v3368, %v4090
        %v4313 = vadd.f32 %v3369, %v4095
        %v4314 = vadd.f32 %v3370, %v4100
        %v4315 = vadd.f32 %v3371, %v4105
        %v4316 = vadd.f32 %v3372, %v4110
        %v4317 = vadd.f32 %v3373, %v4115
        %v4318 = vadd.f32 %v3374, %v4120
        %v4319 = vadd.f32 %v3375, %v4125
        %v4320 = vadd.f32 %v3376, %v4130
        %v4321 = vadd.f32 %v3377, %v4135
        %v4322 = vadd.f32 %v3378, %v4140
        %v4323 = vadd.f32 %v3379, %v4145
        %v4324 = vadd.f32 %v3380, %v4150
        %v4325 = vadd.f32 %v3381, %v4155
        %v4326 = vadd.f32 %v3382, %v4160
        %v4327 = vadd.f32 %v3383, %v4165
        %v4328 = vadd.f32 %v3384, %v4170
        %v4329 = vadd.f32 %v3385, %v4175
        %v4330 = vadd.f32 %v3386, %v4180
        %v4331 = vadd.f32 %v3387, %v4185
        %v4332 = vadd.f32 %v3388, %v4190
        %v4333 = vadd.f32 %v3389, %v4195
        %v4334 = vadd.f32 %v3390, %v4200
        %v4335 = vadd.f32 %v3391, %v4205
        %v4336 = vadd.f32 %v3392, %v4210
        %v4337 = vadd.f32 %v3393, %v4215
        %v4338 = vadd.f32 %v3394, %v4220
        %v4339 = vadd.f32 %v3395, %v4225
        %v4340 = vadd.f32 %v3396, %v4230
        %v4341 = vadd.f32 %v3397, %v4235
        %v4342 = vadd.f32 %v3398, %v4240
        %v4343 = vadd.f32 %v3399, %v4245
        %v4344 = vadd.f32 %v3400, %v4250
        %v4345 = vadd.f32 %v3401, %v4255
        %v4346 = vadd.f32 %v3402, %v4260
        %v4347 = vadd.f32 %v3403, %v4265
        %v4348 = vadd.f32 %v3404, %v4270
        %v4349 = vadd.f32 %v3405, %v4275
        %v4350 = vadd.f32 %v3406, %v4280
        %v4351 = vadd.f32 %v3407, %v4285
        %4352 = vst [vmem:[%s191] sm:$0xff] %v4288
        %4353 = vst [vmem:[%s191 + $0x8] sm:$0xff] %v4289
        %4354 = vst [vmem:[%s191 + $0x10] sm:$0xff] %v4290
        %4355 = vst [vmem:[%s191 + $0x18] sm:$0xff] %v4291
        %4356 = vst [vmem:[%s191 + $0x20] sm:$0xff] %v4292
        %4357 = vst [vmem:[%s191 + $0x28] sm:$0xff] %v4293
        %4358 = vst [vmem:[%s191 + $0x30] sm:$0xff] %v4294
        %4359 = vst [vmem:[%s191 + $0x38] sm:$0xff] %v4295
        %4360 = vst [vmem:[%s191 + $0x40] sm:$0xff] %v4296
        %4361 = vst [vmem:[%s191 + $0x48] sm:$0xff] %v4297
        %4362 = vst [vmem:[%s191 + $0x50] sm:$0xff] %v4298
        %4363 = vst [vmem:[%s191 + $0x58] sm:$0xff] %v4299
        %4364 = vst [vmem:[%s191 + $0x60] sm:$0xff] %v4300
        %4365 = vst [vmem:[%s191 + $0x68] sm:$0xff] %v4301
        %4366 = vst [vmem:[%s191 + $0x70] sm:$0xff] %v4302
        %4367 = vst [vmem:[%s191 + $0x78] sm:$0xff] %v4303
        %4368 = vst [vmem:[%s191 + $0x80] sm:$0xff] %v4304
        %4369 = vst [vmem:[%s191 + $0x88] sm:$0xff] %v4305
        %4370 = vst [vmem:[%s191 + $0x90] sm:$0xff] %v4306
        %4371 = vst [vmem:[%s191 + $0x98] sm:$0xff] %v4307
        %4372 = vst [vmem:[%s191 + $0xa0] sm:$0xff] %v4308
        %4373 = vst [vmem:[%s191 + $0xa8] sm:$0xff] %v4309
        %4374 = vst [vmem:[%s191 + $0xb0] sm:$0xff] %v4310
        %4375 = vst [vmem:[%s191 + $0xb8] sm:$0xff] %v4311
        %4376 = vst [vmem:[%s191 + $0xc0] sm:$0xff] %v4312
        %4377 = vst [vmem:[%s191 + $0xc8] sm:$0xff] %v4313
        %4378 = vst [vmem:[%s191 + $0xd0] sm:$0xff] %v4314
        %4379 = vst [vmem:[%s191 + $0xd8] sm:$0xff] %v4315
        %4380 = vst [vmem:[%s191 + $0xe0] sm:$0xff] %v4316
        %4381 = vst [vmem:[%s191 + $0xe8] sm:$0xff] %v4317
        %4382 = vst [vmem:[%s191 + $0xf0] sm:$0xff] %v4318
        %4383 = vst [vmem:[%s191 + $0xf8] sm:$0xff] %v4319
        %4384 = vst [vmem:[%s191 + $0x100] sm:$0xff] %v4320
        %4385 = vst [vmem:[%s191 + $0x108] sm:$0xff] %v4321
        %4386 = vst [vmem:[%s191 + $0x110] sm:$0xff] %v4322
        %4387 = vst [vmem:[%s191 + $0x118] sm:$0xff] %v4323
        %4388 = vst [vmem:[%s191 + $0x120] sm:$0xff] %v4324
        %4389 = vst [vmem:[%s191 + $0x128] sm:$0xff] %v4325
        %4390 = vst [vmem:[%s191 + $0x130] sm:$0xff] %v4326
        %4391 = vst [vmem:[%s191 + $0x138] sm:$0xff] %v4327
        %4392 = vst [vmem:[%s191 + $0x140] sm:$0xff] %v4328
        %4393 = vst [vmem:[%s191 + $0x148] sm:$0xff] %v4329
        %4394 = vst [vmem:[%s191 + $0x150] sm:$0xff] %v4330
        %4395 = vst [vmem:[%s191 + $0x158] sm:$0xff] %v4331
        %4396 = vst [vmem:[%s191 + $0x160] sm:$0xff] %v4332
        %4397 = vst [vmem:[%s191 + $0x168] sm:$0xff] %v4333
        %4398 = vst [vmem:[%s191 + $0x170] sm:$0xff] %v4334
        %4399 = vst [vmem:[%s191 + $0x178] sm:$0xff] %v4335
        %4400 = vst [vmem:[%s191 + $0x180] sm:$0xff] %v4336
        %4401 = vst [vmem:[%s191 + $0x188] sm:$0xff] %v4337
        %4402 = vst [vmem:[%s191 + $0x190] sm:$0xff] %v4338
        %4403 = vst [vmem:[%s191 + $0x198] sm:$0xff] %v4339
        %4404 = vst [vmem:[%s191 + $0x1a0] sm:$0xff] %v4340
        %4405 = vst [vmem:[%s191 + $0x1a8] sm:$0xff] %v4341
        %4406 = vst [vmem:[%s191 + $0x1b0] sm:$0xff] %v4342
        %4407 = vst [vmem:[%s191 + $0x1b8] sm:$0xff] %v4343
        %4408 = vst [vmem:[%s191 + $0x1c0] sm:$0xff] %v4344
        %4409 = vst [vmem:[%s191 + $0x1c8] sm:$0xff] %v4345
        %4410 = vst [vmem:[%s191 + $0x1d0] sm:$0xff] %v4346
        %4411 = vst [vmem:[%s191 + $0x1d8] sm:$0xff] %v4347
        %4412 = vst [vmem:[%s191 + $0x1e0] sm:$0xff] %v4348
        %4413 = vst [vmem:[%s191 + $0x1e8] sm:$0xff] %v4349
        %4414 = vst [vmem:[%s191 + $0x1f0] sm:$0xff] %v4350
        %4415 = vst [vmem:[%s191 + $0x1f8] sm:$0xff] %v4351
        %s4416 = sand.u32 %s115, 1
        %s4417 = scalar_lea.sflag [#allocation3], %s4416
        %s4418 = sand.u32 %s115, 1
        %s4419 = smul.addr %s4418, 512
        %s4420 = scalar_lea.vmem [#allocation2], %s4419
        // Predicated region
        $region37: #{tpu_custom_call.1} parent=35 // pred_check
          %p4421 = pneg %p125
        $region38: #{tpu_custom_call.1} parent=35 // pred_check_branch
          %4423 = sbr.rel (%p4421) target = $region40
        $region39: #{tpu_custom_call.1} parent=35 // pred_region
          %s4424 = smul.u32 64, %s18
          %s4426 = ssub.s32 8192, 8192
          %4427 = vsyncadd %s4417, %s4426
          %s4428 = smul.addr %s4424, 128
          %s4429 = scalar_lea.hbm %s4, %s4428
          %s4430 = sshll.u32 %s4420, 4
          %s4431 = int_to_ptr.vmem [resolvable:$true] %s4430
          %4436 = dma.vmem_to_hbm [thread:$0]  %s4431, 8192, %s4429, %s4417, 128, 128, 8
        $region40: #{tpu_custom_call.1} parent=35 // pred_fallthru
          _
      $region36: #{tpu_custom_call.1} parent=5 // pred_fallthru
        _
      %p4437 = scmp.le.s32.totalorder 2, %s13
      // Predicated region
      $region41: #{tpu_custom_call.1} parent=5 // pred_check
        %p4438 = pneg %p4437
      $region42: #{tpu_custom_call.1} parent=5 // pred_check_branch
        %4440 = sbr.rel (%p4438) target = $region44
      $region43: #{tpu_custom_call.1} parent=5 // pred_region
        %s4441 = ssub.s32 %s13, 2
        // Predicated region
        $region45: #{tpu_custom_call.1} parent=43 // pred_check
          %p4442 = pneg %p131
        $region46: #{tpu_custom_call.1} parent=43 // pred_check_branch
          %4444 = sbr.rel (%p4442) target = $region48
        $region47: #{tpu_custom_call.1} parent=43 // pred_region
          %s4445 = sand.u32 %s116, 1
          %s4446 = scalar_lea.sflag [#allocation3], %s4445
          %s4447 = sand.u32 %s116, 1
          %s4448 = smul.addr %s4447, 512
          %s4449 = scalar_lea.vmem [#allocation2], %s4448
          %4450 = dma.done %s4446, 8192
        $region48: #{tpu_custom_call.1} parent=43 // pred_fallthru
          _
      $region44: #{tpu_custom_call.1} parent=5 // pred_fallthru
        _
    $region6: #{tpu_custom_call.1} parent=1 // loop_footer
      %s17 = sadd.s32 1, %s13
    $region7: #{tpu_custom_call.1} parent=1 // loop_footer_branch
      %12 = sbr.rel target = $region3
    $region8: #{tpu_custom_call.1} parent=1 // loop_exit
      _
    %4451 = vsyncpa [#allocation3], 1
    %s4452 = scalar_lea.sflag [#allocation3], 1
    %4453 = vsyncpa %s4452, 1

</llo_original>
